<compile_context>
chip_gen: v7x
topology: tpu7x:2x2x1
jax: 0.10.0
libtpu: 0.0.40
codegen_flags: <defaults>
</compile_context>

<pallas_src>
import functools

import jax
import jax.numpy as jnp
from jax import lax
from jax.experimental import pallas as pl
from jax.experimental.pallas import tpu as pltpu


# ----------------------------------------------------------------------------
# Pallas kernel
# ----------------------------------------------------------------------------

def _shift_rows(x, s, hw, hid):
    """Return y with y[r] = x[r + s] for 0 <= r + s < hw, else 0 (static shift)."""
    if s == 0:
        return x
    if s > 0:
        pad = jnp.zeros((s, hid), x.dtype)
        return jnp.concatenate([x[s:], pad], axis=0)
    pad = jnp.zeros((-s, hid), x.dtype)
    return jnp.concatenate([pad, x[:hw + s]], axis=0)


def _csp_kernel(x_ref, w12_ref, b12_ref, w1s_ref, b1s_ref, w2s_ref, w3_ref,
                b3_ref, o_ref, col_ref, *, n_bn, use_add, H, W, hid):
    """Whole AMFFCSPLayer forward for one image block, fully resident in VMEM."""
    HW = H * W

    # ---- stem: conv1 & conv2 fused as ONE packed 1x1 matmul (+ folded BN + SiLU)
    x = x_ref[0]                                                   # (HW, cin) bf16
    stem = jnp.dot(x, w12_ref[...], preferred_element_type=jnp.float32)
    stem = stem + b12_ref[...]
    stem = stem * jax.nn.sigmoid(stem)                             # SiLU, f32
    y = stem[:, :hid]                                              # x_1 path, f32
    x2 = stem[:, hid:].astype(jnp.bfloat16)                        # x_2 path, bf16

    # column-validity masks for the 3x3 taps (hoisted out of all loops)
    j_idx = lax.broadcasted_iota(jnp.int32, (HW, 1), 0) % W
    mask_l = j_idx >= 1            # reading column j-1 is valid
    mask_r = j_idx <= W - 2        # reading column j+1 is valid

    # ---- n AMFF bottlenecks (1x1+BN -> 3x3 conv -> SiLU -> +residual), in VMEM
    for b in range(n_bn):
        y_bf = y.astype(jnp.bfloat16)
        t = jnp.dot(y_bf, w1s_ref[b], preferred_element_type=jnp.float32)
        t = t + b1s_ref[b]                       # 1x1 conv + folded BN (no act here)
        t_bf = t.astype(jnp.bfloat16)

        # in-VMEM im2col: build (HW, 9*hid) from nine zero-filled row shifts
        for ki in range(3):
            for kj in range(3):
                s = (ki - 1) * W + (kj - 1)
                sh = _shift_rows(t_bf, s, HW, hid)
                if kj == 0:
                    sh = jnp.where(mask_l, sh, jnp.zeros_like(sh))
                elif kj == 2:
                    sh = jnp.where(mask_r, sh, jnp.zeros_like(sh))
                p = ki * 3 + kj
                col_ref[:, p * hid:(p + 1) * hid] = sh

        # single K = 9*hid dot for the whole 3x3 conv
        conv = jnp.dot(col_ref[...], w2s_ref[b],
                       preferred_element_type=jnp.float32)
        out = conv * jax.nn.sigmoid(conv)                          # SiLU, f32
        if use_add:
            out = out + y                                          # residual in f32
        y = out

    # ---- head: conv3 on concat(y, x_2), single K = 2*hid dot (+BN +SiLU)
    cat = jnp.concatenate([y.astype(jnp.bfloat16), x2], axis=-1)   # (HW, 2*hid)
    acc = jnp.dot(cat, w3_ref[...], preferred_element_type=jnp.float32)
    acc = acc + b3_ref[...]
    o_ref[0] = (acc * jax.nn.sigmoid(acc)).astype(o_ref.dtype)


# ----------------------------------------------------------------------------
# pallas_call wrapper
# ----------------------------------------------------------------------------

def amff_csp_forward(x_nchw, kp):
    N, cin, H, W = x_nchw.shape
    HW = H * W
    hid = kp['hid']
    out_ch = kp['w3'].shape[1]
    n_bn = int(kp['w1s'].shape[0])
    assert n_bn >= 1

    x = jnp.transpose(x_nchw, (0, 2, 3, 1)).reshape(N, HW, cin).astype(jnp.bfloat16)

    kern = functools.partial(_csp_kernel, n_bn=n_bn, use_add=kp['use_add'],
                             H=H, W=W, hid=hid)

    out = pl.pallas_call(
        kern,
        out_shape=jax.ShapeDtypeStruct((N, HW, out_ch), jnp.bfloat16),
        grid_spec=pltpu.PrefetchScalarGridSpec(
            num_scalar_prefetch=0,
            grid=(N,),
            in_specs=[
                pl.BlockSpec((1, HW, cin), lambda n: (n, 0, 0)),          # x image
                pl.BlockSpec((cin, 2 * hid), lambda n: (0, 0)),           # packed w1||w2
                pl.BlockSpec((1, 2 * hid), lambda n: (0, 0)),             # packed bias
                pl.BlockSpec((n_bn, hid, hid), lambda n: (0, 0, 0)),      # bneck 1x1 w
                pl.BlockSpec((n_bn, 1, hid), lambda n: (0, 0, 0)),        # bneck 1x1 bias
                pl.BlockSpec((n_bn, 9 * hid, hid), lambda n: (0, 0, 0)),  # bneck 3x3 w
                pl.BlockSpec((2 * hid, out_ch), lambda n: (0, 0)),        # head w3
                pl.BlockSpec((1, out_ch), lambda n: (0, 0)),              # head bias
            ],
            out_specs=pl.BlockSpec((1, HW, out_ch), lambda n: (n, 0, 0)),
            scratch_shapes=[pltpu.VMEM((HW, 9 * hid), jnp.bfloat16)],     # im2col buf
        ),
        compiler_params=pltpu.CompilerParams(
            dimension_semantics=("parallel",)),
    )(x, kp['w12'], kp['b12'], kp['w1s'], kp['b1s'], kp['w2s'], kp['w3'], kp['b3'])

    return out.reshape(N, H, W, out_ch).transpose(0, 3, 1, 2).astype(jnp.float32)


# ----------------------------------------------------------------------------
# Parameter construction (f32 reference params + folded bf16 kernel params)
# ----------------------------------------------------------------------------

def _fold_bn(key, c, eps=1e-5):
    k1, k2, k3, k4 = jax.random.split(key, 4)
    gamma = jax.random.uniform(k1, (c,), jnp.float32, 0.5, 1.5)
    beta = jax.random.normal(k2, (c,), jnp.float32) * 0.1
    mean = jax.random.normal(k3, (c,), jnp.float32) * 0.1
    var = jax.random.uniform(k4, (c,), jnp.float32, 0.5, 1.5)
    scale = gamma / jnp.sqrt(var + eps)
    bias = beta - mean * scale
    return scale.reshape(1, c), bias.reshape(1, c)


def make_params(key, in_ch, out_ch, n=1, shortcut=True, expansion=0.5):
    hid = int(out_ch * expansion)

    def nxt():
        nonlocal key
        key, sub = jax.random.split(key)
        return sub

    p = {'hidden': hid, 'bottlenecks': []}
    for name in ('conv1', 'conv2'):
        p[f'{name}_w'] = jax.random.normal(nxt(), (in_ch, hid), jnp.float32) / jnp.sqrt(in_ch)
        p[f'{name}_s'], p[f'{name}_b'] = _fold_bn(nxt(), hid)

    for _ in range(n):
        w1 = jax.random.normal(nxt(), (hid, hid), jnp.float32) / jnp.sqrt(hid)
        s1, b1 = _fold_bn(nxt(), hid)
        w2_hwio = jax.random.normal(nxt(), (3, 3, hid, hid), jnp.float32) / jnp.sqrt(9.0 * hid)
        p['bottlenecks'].append({'w1': w1, 's1': s1, 'b1': b1,
                                 'w2_hwio': w2_hwio,
                                 'use_add': bool(shortcut)})   # in==out==hid here

    p['conv3_w'] = jax.random.normal(nxt(), (2 * hid, out_ch), jnp.float32) / jnp.sqrt(2.0 * hid)
    p['conv3_s'], p['conv3_b'] = _fold_bn(nxt(), out_ch)
    return p


def fold_for_kernels(p):
    """Fold BN scales into weights, pack conv1||conv2, stack bottleneck weights, cast bf16."""
    bf = jnp.bfloat16
    hid = p['hidden']
    assert len(p['bottlenecks']) >= 1
    kp = {'hid': hid}
    w1 = p['conv1_w'] * p['conv1_s']
    w2 = p['conv2_w'] * p['conv2_s']
    kp['w12'] = jnp.concatenate([w1, w2], axis=1).astype(bf)                 # (cin, 2*hid)
    kp['b12'] = jnp.concatenate([p['conv1_b'], p['conv2_b']], axis=1)        # (1, 2*hid) f32
    kp['w3'] = (p['conv3_w'] * p['conv3_s']).astype(bf)                      # (2*hid, out_ch)
    kp['b3'] = p['conv3_b']                                                  # (1, out_ch) f32
    kp['w1s'] = jnp.stack([(bp['w1'] * bp['s1']).astype(bf)
                           for bp in p['bottlenecks']])                      # (n, hid, hid)
    kp['b1s'] = jnp.stack([bp['b1'] for bp in p['bottlenecks']])             # (n, 1, hid) f32
    kp['w2s'] = jnp.stack([bp['w2_hwio'].reshape(9 * hid, hid).astype(bf)
                           for bp in p['bottlenecks']])                      # (n, 9*hid, hid)
    kp['use_add'] = p['bottlenecks'][0]['use_add']
    return kp


# ----------------------------------------------------------------------------
# Pure-JAX f32 reference (module semantics, for correctness check)
# ----------------------------------------------------------------------------

def ref_forward(x_nchw, params):
    silu = lambda v: v * jax.nn.sigmoid(v)
    x = jnp.transpose(x_nchw, (0, 2, 3, 1))
    N, H, W, cin = x.shape
    hid = params['hidden']
    x2d = x.reshape(-1, cin)

    x1 = silu((x2d @ params['conv1_w']) * params['conv1_s'] + params['conv1_b'])
    x2 = silu((x2d @ params['conv2_w']) * params['conv2_s'] + params['conv2_b'])

    y = x1
    for bp in params['bottlenecks']:
        t = (y @ bp['w1']) * bp['s1'] + bp['b1']
        c = lax.conv_general_dilated(
            t.reshape(N, H, W, hid), bp['w2_hwio'], (1, 1), 'SAME',
            dimension_numbers=('NHWC', 'HWIO', 'NHWC'))
        yy = silu(c).reshape(-1, hid)
        if bp['use_add']:
            yy = yy + y
        y = yy

    cat = jnp.concatenate([y, x2], axis=-1)
    out2d = silu((cat @ params['conv3_w']) * params['conv3_s'] + params['conv3_b'])
    return out2d.reshape(N, H, W, -1).transpose(0, 3, 1, 2)


# ----------------------------------------------------------------------------

if __name__ == "__main__":
    key = jax.random.PRNGKey(0)
    in_ch, out_ch, n_bottleneck = 128, 128, 2          # hid = 64
    N, H, W = 2, 16, 16

    kx, kparam_key = jax.random.split(key)
    x = jax.random.normal(kx, (N, in_ch, H, W), jnp.float32)   # NCHW, like PyTorch
    params = make_params(kparam_key, in_ch, out_ch, n=n_bottleneck,
                         shortcut=True, expansion=0.5)
    kparams = fold_for_kernels(params)

    out = amff_csp_forward(x, kparams)
    out = jax.block_until_ready(out)
    assert out.shape == (N, out_ch, H, W), out.shape

    ref = ref_forward(x, params)
    max_err = float(jnp.max(jnp.abs(out - ref)))
    scale = float(jnp.max(jnp.abs(ref)))
    assert max_err <= 5e-2 * max(1.0, scale), f"max abs error {max_err} (ref max {scale})"

    print("KERNEL_OK")
</pallas_src>

<mosaic_0001>
module attributes {stable_mosaic.version = 11 : i64} {
  func.func @_csp_kernel(%arg0: i32, %arg1: memref<1x256x128xbf16, #tpu.memory_space<vmem>>, %arg2: memref<128x128xbf16, #tpu.memory_space<vmem>>, %arg3: memref<1x128xf32, #tpu.memory_space<vmem>>, %arg4: memref<2x64x64xbf16, #tpu.memory_space<vmem>>, %arg5: memref<2x1x64xf32, #tpu.memory_space<vmem>>, %arg6: memref<2x576x64xbf16, #tpu.memory_space<vmem>>, %arg7: memref<128x128xbf16, #tpu.memory_space<vmem>>, %arg8: memref<1x128xf32, #tpu.memory_space<vmem>>, %arg9: memref<1x256x128xbf16, #tpu.memory_space<vmem>>, %arg10: memref<256x576xbf16, #tpu.memory_space<vmem>>) attributes {dimension_semantics = [#tpu.dimension_semantics<parallel>], iteration_bounds = array<i64: 2>, scalar_prefetch = 0 : i64, scratch_operands = 1 : i64, tpu.core_type = #tpu.core_type<tc>, window_params = [{transform_indices = @transform_0, window_bounds = array<i64: 1, 256, 128>}, {pipeline_mode = #tpu.pipeline_mode<synchronous>, transform_indices = @transform_1, window_bounds = array<i64: 128, 128>}, {pipeline_mode = #tpu.pipeline_mode<synchronous>, transform_indices = @transform_2, window_bounds = array<i64: 1, 128>}, {pipeline_mode = #tpu.pipeline_mode<synchronous>, transform_indices = @transform_3, window_bounds = array<i64: 2, 64, 64>}, {pipeline_mode = #tpu.pipeline_mode<synchronous>, transform_indices = @transform_4, window_bounds = array<i64: 2, 1, 64>}, {pipeline_mode = #tpu.pipeline_mode<synchronous>, transform_indices = @transform_5, window_bounds = array<i64: 2, 576, 64>}, {pipeline_mode = #tpu.pipeline_mode<synchronous>, transform_indices = @transform_6, window_bounds = array<i64: 128, 128>}, {pipeline_mode = #tpu.pipeline_mode<synchronous>, transform_indices = @transform_7, window_bounds = array<i64: 1, 128>}, {transform_indices = @transform_8, window_bounds = array<i64: 1, 256, 128>}]} {
    %c0 = arith.constant 0 : index
    %c0_0 = arith.constant 0 : index
    %c0_1 = arith.constant 0 : index
    %0 = vector.load %arg1[%c0, %c0_0, %c0_1] : memref<1x256x128xbf16, #tpu.memory_space<vmem>>, vector<1x256x128xbf16>
    %1 = vector.shape_cast %0 : vector<1x256x128xbf16> to vector<256x128xbf16>
    %c0_2 = arith.constant 0 : index
    %c0_3 = arith.constant 0 : index
    %2 = vector.load %arg2[%c0_2, %c0_3] : memref<128x128xbf16, #tpu.memory_space<vmem>>, vector<128x128xbf16>
    %cst = arith.constant dense<0.000000e+00> : vector<256x128xf32>
    %3 = tpu.matmul %1, %2, %cst {dimension_numbers = #tpu.dot_dimension_numbers<[1], [0], [0], [1], [0, 0, 1, 1], [], []>} : vector<256x128xbf16>, vector<128x128xbf16>, vector<256x128xf32> -> vector<256x128xf32>
    %c0_4 = arith.constant 0 : index
    %c0_5 = arith.constant 0 : index
    %4 = vector.load %arg3[%c0_4, %c0_5] : memref<1x128xf32, #tpu.memory_space<vmem>>, vector<1x128xf32>
    %5 = vector.broadcast %4 : vector<1x128xf32> to vector<256x128xf32>
    %6 = arith.addf %3, %5 : vector<256x128xf32>
    %7 = arith.negf %6 : vector<256x128xf32>
    %8 = math.exp %7 : vector<256x128xf32>
    %cst_6 = arith.constant 1.000000e+00 : f32
    %9 = vector.broadcast %cst_6 : f32 to vector<256x128xf32>
    %10 = arith.addf %9, %8 : vector<256x128xf32>
    %11 = arith.divf %9, %10 : vector<256x128xf32>
    %12 = arith.mulf %6, %11 : vector<256x128xf32>
    %13 = vector.extract_strided_slice %12 {offsets = [0, 0], sizes = [256, 64], strides = [1, 1]} : vector<256x128xf32> to vector<256x64xf32>
    %14 = vector.extract_strided_slice %12 {offsets = [0, 64], sizes = [256, 64], strides = [1, 1]} : vector<256x128xf32> to vector<256x64xf32>
    %15 = arith.truncf %14 : vector<256x64xf32> to vector<256x64xbf16>
    %16 = tpu.iota {dimensions = array<i32: 0>} : vector<256x1xi32>
    %c16_i32 = arith.constant 16 : i32
    %c0_i32 = arith.constant 0 : i32
    %17 = arith.cmpi eq, %c16_i32, %c0_i32 : i32
    %c1_i32 = arith.constant 1 : i32
    %18 = arith.select %17, %c1_i32, %c16_i32 : i32
    %19 = vector.broadcast %18 : i32 to vector<256x1xi32>
    %20 = arith.remsi %16, %19 : vector<256x1xi32>
    %c0_i32_7 = arith.constant 0 : i32
    %21 = vector.broadcast %c0_i32_7 : i32 to vector<256x1xi32>
    %22 = arith.cmpi ne, %20, %21 : vector<256x1xi32>
    %c0_i32_8 = arith.constant 0 : i32
    %23 = vector.broadcast %c0_i32_8 : i32 to vector<256x1xi32>
    %24 = arith.cmpi slt, %20, %23 : vector<256x1xi32>
    %c0_i32_9 = arith.constant 0 : i32
    %25 = arith.cmpi slt, %18, %c0_i32_9 : i32
    %26 = vector.broadcast %25 : i1 to vector<256x1xi1>
    %27 = vector.broadcast %26 : vector<256x1xi1> to vector<256x1xi1>
    %28 = arith.xori %24, %27 : vector<256x1xi1>
    %29 = arith.andi %28, %22 : vector<256x1xi1>
    %30 = vector.broadcast %18 : i32 to vector<256x1xi32>
    %31 = arith.addi %20, %30 : vector<256x1xi32>
    %32 = arith.select %29, %31, %20 : vector<256x1xi1>, vector<256x1xi32>
    %c1_i32_10 = arith.constant 1 : i32
    %33 = vector.broadcast %c1_i32_10 : i32 to vector<256x1xi32>
    %34 = arith.cmpi sge, %32, %33 : vector<256x1xi32>
    %c14_i32 = arith.constant 14 : i32
    %35 = vector.broadcast %c14_i32 : i32 to vector<256x1xi32>
    %36 = arith.cmpi sle, %32, %35 : vector<256x1xi32>
    %37 = arith.truncf %13 : vector<256x64xf32> to vector<256x64xbf16>
    %c0_11 = arith.constant 0 : index
    %c0_12 = arith.constant 0 : index
    %c0_13 = arith.constant 0 : index
    %38 = vector.load %arg4[%c0_11, %c0_12, %c0_13] : memref<2x64x64xbf16, #tpu.memory_space<vmem>>, vector<1x64x64xbf16>
    %39 = vector.shape_cast %38 : vector<1x64x64xbf16> to vector<64x64xbf16>
    %cst_14 = arith.constant dense<0.000000e+00> : vector<256x64xf32>
    %40 = tpu.matmul %37, %39, %cst_14 {dimension_numbers = #tpu.dot_dimension_numbers<[1], [0], [0], [1], [0, 0, 1, 1], [], []>} : vector<256x64xbf16>, vector<64x64xbf16>, vector<256x64xf32> -> vector<256x64xf32>
    %c0_15 = arith.constant 0 : index
    %c0_16 = arith.constant 0 : index
    %c0_17 = arith.constant 0 : index
    %41 = vector.load %arg5[%c0_15, %c0_16, %c0_17] : memref<2x1x64xf32, #tpu.memory_space<vmem>>, vector<1x1x64xf32>
    %42 = vector.shape_cast %41 : vector<1x1x64xf32> to vector<1x64xf32>
    %43 = vector.broadcast %42 : vector<1x64xf32> to vector<256x64xf32>
    %44 = arith.addf %40, %43 : vector<256x64xf32>
    %45 = arith.truncf %44 : vector<256x64xf32> to vector<256x64xbf16>
    %cst_18 = arith.constant 0.000000e+00 : bf16
    %46 = vector.broadcast %cst_18 : bf16 to vector<17x64xbf16>
    %47 = vector.extract_strided_slice %45 {offsets = [0, 0], sizes = [239, 64], strides = [1, 1]} : vector<256x64xbf16> to vector<239x64xbf16>
    %48 = tpu.concatenate %46, %47 in 0 : vector<17x64xbf16>, vector<239x64xbf16> -> vector<256x64xbf16>
    %cst_19 = arith.constant 0.000000e+00 : bf16
    %49 = vector.broadcast %cst_19 : bf16 to vector<256x64xbf16>
    %50 = vector.shape_cast %34 : vector<256x1xi1> to vector<256x1xi1>
    %51 = vector.broadcast %50 : vector<256x1xi1> to vector<256x64xi1>
    %52 = arith.select %51, %48, %49 : vector<256x64xi1>, vector<256x64xbf16>
    %c0_20 = arith.constant 0 : index
    %c0_21 = arith.constant 0 : index
    %53 = vector.load %arg10[%c0_20, %c0_21] : memref<256x576xbf16, #tpu.memory_space<vmem>>, vector<256x64xbf16>
    tpu.vector_store %arg10[%c0_20, %c0_21], %52 {strides = array<i32>} : memref<256x576xbf16, #tpu.memory_space<vmem>>, vector<256x64xbf16>,
    %cst_22 = arith.constant 0.000000e+00 : bf16
    %54 = vector.broadcast %cst_22 : bf16 to vector<16x64xbf16>
    %55 = vector.extract_strided_slice %45 {offsets = [0, 0], sizes = [240, 64], strides = [1, 1]} : vector<256x64xbf16> to vector<240x64xbf16>
    %56 = tpu.concatenate %54, %55 in 0 : vector<16x64xbf16>, vector<240x64xbf16> -> vector<256x64xbf16>
    %c0_23 = arith.constant 0 : index
    %c64 = arith.constant 64 : index
    %57 = vector.load %arg10[%c0_23, %c64] : memref<256x576xbf16, #tpu.memory_space<vmem>>, vector<256x64xbf16>
    tpu.vector_store %arg10[%c0_23, %c64], %56 {strides = array<i32>} : memref<256x576xbf16, #tpu.memory_space<vmem>>, vector<256x64xbf16>,
    %cst_24 = arith.constant 0.000000e+00 : bf16
    %58 = vector.broadcast %cst_24 : bf16 to vector<15x64xbf16>
    %59 = vector.extract_strided_slice %45 {offsets = [0, 0], sizes = [241, 64], strides = [1, 1]} : vector<256x64xbf16> to vector<241x64xbf16>
    %60 = tpu.concatenate %58, %59 in 0 : vector<15x64xbf16>, vector<241x64xbf16> -> vector<256x64xbf16>
    %cst_25 = arith.constant 0.000000e+00 : bf16
    %61 = vector.broadcast %cst_25 : bf16 to vector<256x64xbf16>
    %62 = vector.shape_cast %36 : vector<256x1xi1> to vector<256x1xi1>
    %63 = vector.broadcast %62 : vector<256x1xi1> to vector<256x64xi1>
    %64 = arith.select %63, %60, %61 : vector<256x64xi1>, vector<256x64xbf16>
    %c0_26 = arith.constant 0 : index
    %c128 = arith.constant 128 : index
    %65 = vector.load %arg10[%c0_26, %c128] : memref<256x576xbf16, #tpu.memory_space<vmem>>, vector<256x64xbf16>
    tpu.vector_store %arg10[%c0_26, %c128], %64 {strides = array<i32>} : memref<256x576xbf16, #tpu.memory_space<vmem>>, vector<256x64xbf16>,
    %cst_27 = arith.constant 0.000000e+00 : bf16
    %66 = vector.broadcast %cst_27 : bf16 to vector<1x64xbf16>
    %67 = vector.extract_strided_slice %45 {offsets = [0, 0], sizes = [255, 64], strides = [1, 1]} : vector<256x64xbf16> to vector<255x64xbf16>
    %68 = tpu.concatenate %66, %67 in 0 : vector<1x64xbf16>, vector<255x64xbf16> -> vector<256x64xbf16>
    %cst_28 = arith.constant 0.000000e+00 : bf16
    %69 = vector.broadcast %cst_28 : bf16 to vector<256x64xbf16>
    %70 = vector.shape_cast %34 : vector<256x1xi1> to vector<256x1xi1>
    %71 = vector.broadcast %70 : vector<256x1xi1> to vector<256x64xi1>
    %72 = arith.select %71, %68, %69 : vector<256x64xi1>, vector<256x64xbf16>
    %c0_29 = arith.constant 0 : index
    %c192 = arith.constant 192 : index
    %73 = vector.load %arg10[%c0_29, %c192] : memref<256x576xbf16, #tpu.memory_space<vmem>>, vector<256x64xbf16>
    tpu.vector_store %arg10[%c0_29, %c192], %72 {strides = array<i32>} : memref<256x576xbf16, #tpu.memory_space<vmem>>, vector<256x64xbf16>,
    %c0_30 = arith.constant 0 : index
    %c256 = arith.constant 256 : index
    %74 = vector.load %arg10[%c0_30, %c256] : memref<256x576xbf16, #tpu.memory_space<vmem>>, vector<256x64xbf16>
    tpu.vector_store %arg10[%c0_30, %c256], %45 {strides = array<i32>} : memref<256x576xbf16, #tpu.memory_space<vmem>>, vector<256x64xbf16>,
    %cst_31 = arith.constant 0.000000e+00 : bf16
    %75 = vector.broadcast %cst_31 : bf16 to vector<1x64xbf16>
    %76 = vector.extract_strided_slice %45 {offsets = [1, 0], sizes = [255, 64], strides = [1, 1]} : vector<256x64xbf16> to vector<255x64xbf16>
    %77 = tpu.concatenate %76, %75 in 0 : vector<255x64xbf16>, vector<1x64xbf16> -> vector<256x64xbf16>
    %cst_32 = arith.constant 0.000000e+00 : bf16
    %78 = vector.broadcast %cst_32 : bf16 to vector<256x64xbf16>
    %79 = vector.shape_cast %36 : vector<256x1xi1> to vector<256x1xi1>
    %80 = vector.broadcast %79 : vector<256x1xi1> to vector<256x64xi1>
    %81 = arith.select %80, %77, %78 : vector<256x64xi1>, vector<256x64xbf16>
    %c0_33 = arith.constant 0 : index
    %c320 = arith.constant 320 : index
    %82 = vector.load %arg10[%c0_33, %c320] : memref<256x576xbf16, #tpu.memory_space<vmem>>, vector<256x64xbf16>
    tpu.vector_store %arg10[%c0_33, %c320], %81 {strides = array<i32>} : memref<256x576xbf16, #tpu.memory_space<vmem>>, vector<256x64xbf16>,
    %cst_34 = arith.constant 0.000000e+00 : bf16
    %83 = vector.broadcast %cst_34 : bf16 to vector<15x64xbf16>
    %84 = vector.extract_strided_slice %45 {offsets = [15, 0], sizes = [241, 64], strides = [1, 1]} : vector<256x64xbf16> to vector<241x64xbf16>
    %85 = tpu.concatenate %84, %83 in 0 : vector<241x64xbf16>, vector<15x64xbf16> -> vector<256x64xbf16>
    %cst_35 = arith.constant 0.000000e+00 : bf16
    %86 = vector.broadcast %cst_35 : bf16 to vector<256x64xbf16>
    %87 = vector.shape_cast %34 : vector<256x1xi1> to vector<256x1xi1>
    %88 = vector.broadcast %87 : vector<256x1xi1> to vector<256x64xi1>
    %89 = arith.select %88, %85, %86 : vector<256x64xi1>, vector<256x64xbf16>
    %c0_36 = arith.constant 0 : index
    %c384 = arith.constant 384 : index
    %90 = vector.load %arg10[%c0_36, %c384] : memref<256x576xbf16, #tpu.memory_space<vmem>>, vector<256x64xbf16>
    tpu.vector_store %arg10[%c0_36, %c384], %89 {strides = array<i32>} : memref<256x576xbf16, #tpu.memory_space<vmem>>, vector<256x64xbf16>,
    %cst_37 = arith.constant 0.000000e+00 : bf16
    %91 = vector.broadcast %cst_37 : bf16 to vector<16x64xbf16>
    %92 = vector.extract_strided_slice %45 {offsets = [16, 0], sizes = [240, 64], strides = [1, 1]} : vector<256x64xbf16> to vector<240x64xbf16>
    %93 = tpu.concatenate %92, %91 in 0 : vector<240x64xbf16>, vector<16x64xbf16> -> vector<256x64xbf16>
    %c0_38 = arith.constant 0 : index
    %c448 = arith.constant 448 : index
    %94 = vector.load %arg10[%c0_38, %c448] : memref<256x576xbf16, #tpu.memory_space<vmem>>, vector<256x64xbf16>
    tpu.vector_store %arg10[%c0_38, %c448], %93 {strides = array<i32>} : memref<256x576xbf16, #tpu.memory_space<vmem>>, vector<256x64xbf16>,
    %cst_39 = arith.constant 0.000000e+00 : bf16
    %95 = vector.broadcast %cst_39 : bf16 to vector<17x64xbf16>
    %96 = vector.extract_strided_slice %45 {offsets = [17, 0], sizes = [239, 64], strides = [1, 1]} : vector<256x64xbf16> to vector<239x64xbf16>
    %97 = tpu.concatenate %96, %95 in 0 : vector<239x64xbf16>, vector<17x64xbf16> -> vector<256x64xbf16>
    %cst_40 = arith.constant 0.000000e+00 : bf16
    %98 = vector.broadcast %cst_40 : bf16 to vector<256x64xbf16>
    %99 = vector.shape_cast %36 : vector<256x1xi1> to vector<256x1xi1>
    %100 = vector.broadcast %99 : vector<256x1xi1> to vector<256x64xi1>
    %101 = arith.select %100, %97, %98 : vector<256x64xi1>, vector<256x64xbf16>
    %c0_41 = arith.constant 0 : index
    %c512 = arith.constant 512 : index
    %102 = vector.load %arg10[%c0_41, %c512] : memref<256x576xbf16, #tpu.memory_space<vmem>>, vector<256x64xbf16>
    tpu.vector_store %arg10[%c0_41, %c512], %101 {strides = array<i32>} : memref<256x576xbf16, #tpu.memory_space<vmem>>, vector<256x64xbf16>,
    %c0_42 = arith.constant 0 : index
    %c0_43 = arith.constant 0 : index
    %103 = vector.load %arg10[%c0_42, %c0_43] : memref<256x576xbf16, #tpu.memory_space<vmem>>, vector<256x576xbf16>
    %c0_44 = arith.constant 0 : index
    %c0_45 = arith.constant 0 : index
    %c0_46 = arith.constant 0 : index
    %104 = vector.load %arg6[%c0_44, %c0_45, %c0_46] : memref<2x576x64xbf16, #tpu.memory_space<vmem>>, vector<1x576x64xbf16>
    %105 = vector.shape_cast %104 : vector<1x576x64xbf16> to vector<576x64xbf16>
    %cst_47 = arith.constant dense<0.000000e+00> : vector<256x64xf32>
    %106 = tpu.matmul %103, %105, %cst_47 {dimension_numbers = #tpu.dot_dimension_numbers<[1], [0], [0], [1], [0, 0, 1, 1], [], []>} : vector<256x576xbf16>, vector<576x64xbf16>, vector<256x64xf32> -> vector<256x64xf32>
    %107 = arith.negf %106 : vector<256x64xf32>
    %108 = math.exp %107 : vector<256x64xf32>
    %cst_48 = arith.constant 1.000000e+00 : f32
    %109 = vector.broadcast %cst_48 : f32 to vector<256x64xf32>
    %110 = arith.addf %109, %108 : vector<256x64xf32>
    %111 = arith.divf %109, %110 : vector<256x64xf32>
    %112 = arith.mulf %106, %111 : vector<256x64xf32>
    %113 = arith.addf %112, %13 : vector<256x64xf32>
    %114 = arith.truncf %113 : vector<256x64xf32> to vector<256x64xbf16>
    %c1 = arith.constant 1 : index
    %c0_49 = arith.constant 0 : index
    %c0_50 = arith.constant 0 : index
    %115 = vector.load %arg4[%c1, %c0_49, %c0_50] : memref<2x64x64xbf16, #tpu.memory_space<vmem>>, vector<1x64x64xbf16>
    %116 = vector.shape_cast %115 : vector<1x64x64xbf16> to vector<64x64xbf16>
    %cst_51 = arith.constant dense<0.000000e+00> : vector<256x64xf32>
    %117 = tpu.matmul %114, %116, %cst_51 {dimension_numbers = #tpu.dot_dimension_numbers<[1], [0], [0], [1], [0, 0, 1, 1], [], []>} : vector<256x64xbf16>, vector<64x64xbf16>, vector<256x64xf32> -> vector<256x64xf32>
    %c1_52 = arith.constant 1 : index
    %c0_53 = arith.constant 0 : index
    %c0_54 = arith.constant 0 : index
    %118 = vector.load %arg5[%c1_52, %c0_53, %c0_54] : memref<2x1x64xf32, #tpu.memory_space<vmem>>, vector<1x1x64xf32>
    %119 = vector.shape_cast %118 : vector<1x1x64xf32> to vector<1x64xf32>
    %120 = vector.broadcast %119 : vector<1x64xf32> to vector<256x64xf32>
    %121 = arith.addf %117, %120 : vector<256x64xf32>
    %122 = arith.truncf %121 : vector<256x64xf32> to vector<256x64xbf16>
    %cst_55 = arith.constant 0.000000e+00 : bf16
    %123 = vector.broadcast %cst_55 : bf16 to vector<17x64xbf16>
    %124 = vector.extract_strided_slice %122 {offsets = [0, 0], sizes = [239, 64], strides = [1, 1]} : vector<256x64xbf16> to vector<239x64xbf16>
    %125 = tpu.concatenate %123, %124 in 0 : vector<17x64xbf16>, vector<239x64xbf16> -> vector<256x64xbf16>
    %cst_56 = arith.constant 0.000000e+00 : bf16
    %126 = vector.broadcast %cst_56 : bf16 to vector<256x64xbf16>
    %127 = vector.shape_cast %34 : vector<256x1xi1> to vector<256x1xi1>
    %128 = vector.broadcast %127 : vector<256x1xi1> to vector<256x64xi1>
    %129 = arith.select %128, %125, %126 : vector<256x64xi1>, vector<256x64xbf16>
    %c0_57 = arith.constant 0 : index
    %c0_58 = arith.constant 0 : index
    %130 = vector.load %arg10[%c0_57, %c0_58] : memref<256x576xbf16, #tpu.memory_space<vmem>>, vector<256x64xbf16>
    tpu.vector_store %arg10[%c0_57, %c0_58], %129 {strides = array<i32>} : memref<256x576xbf16, #tpu.memory_space<vmem>>, vector<256x64xbf16>,
    %cst_59 = arith.constant 0.000000e+00 : bf16
    %131 = vector.broadcast %cst_59 : bf16 to vector<16x64xbf16>
    %132 = vector.extract_strided_slice %122 {offsets = [0, 0], sizes = [240, 64], strides = [1, 1]} : vector<256x64xbf16> to vector<240x64xbf16>
    %133 = tpu.concatenate %131, %132 in 0 : vector<16x64xbf16>, vector<240x64xbf16> -> vector<256x64xbf16>
    %c0_60 = arith.constant 0 : index
    %c64_61 = arith.constant 64 : index
    %134 = vector.load %arg10[%c0_60, %c64_61] : memref<256x576xbf16, #tpu.memory_space<vmem>>, vector<256x64xbf16>
    tpu.vector_store %arg10[%c0_60, %c64_61], %133 {strides = array<i32>} : memref<256x576xbf16, #tpu.memory_space<vmem>>, vector<256x64xbf16>,
    %cst_62 = arith.constant 0.000000e+00 : bf16
    %135 = vector.broadcast %cst_62 : bf16 to vector<15x64xbf16>
    %136 = vector.extract_strided_slice %122 {offsets = [0, 0], sizes = [241, 64], strides = [1, 1]} : vector<256x64xbf16> to vector<241x64xbf16>
    %137 = tpu.concatenate %135, %136 in 0 : vector<15x64xbf16>, vector<241x64xbf16> -> vector<256x64xbf16>
    %cst_63 = arith.constant 0.000000e+00 : bf16
    %138 = vector.broadcast %cst_63 : bf16 to vector<256x64xbf16>
    %139 = vector.shape_cast %36 : vector<256x1xi1> to vector<256x1xi1>
    %140 = vector.broadcast %139 : vector<256x1xi1> to vector<256x64xi1>
    %141 = arith.select %140, %137, %138 : vector<256x64xi1>, vector<256x64xbf16>
    %c0_64 = arith.constant 0 : index
    %c128_65 = arith.constant 128 : index
    %142 = vector.load %arg10[%c0_64, %c128_65] : memref<256x576xbf16, #tpu.memory_space<vmem>>, vector<256x64xbf16>
    tpu.vector_store %arg10[%c0_64, %c128_65], %141 {strides = array<i32>} : memref<256x576xbf16, #tpu.memory_space<vmem>>, vector<256x64xbf16>,
    %cst_66 = arith.constant 0.000000e+00 : bf16
    %143 = vector.broadcast %cst_66 : bf16 to vector<1x64xbf16>
    %144 = vector.extract_strided_slice %122 {offsets = [0, 0], sizes = [255, 64], strides = [1, 1]} : vector<256x64xbf16> to vector<255x64xbf16>
    %145 = tpu.concatenate %143, %144 in 0 : vector<1x64xbf16>, vector<255x64xbf16> -> vector<256x64xbf16>
    %cst_67 = arith.constant 0.000000e+00 : bf16
    %146 = vector.broadcast %cst_67 : bf16 to vector<256x64xbf16>
    %147 = vector.shape_cast %34 : vector<256x1xi1> to vector<256x1xi1>
    %148 = vector.broadcast %147 : vector<256x1xi1> to vector<256x64xi1>
    %149 = arith.select %148, %145, %146 : vector<256x64xi1>, vector<256x64xbf16>
    %c0_68 = arith.constant 0 : index
    %c192_69 = arith.constant 192 : index
    %150 = vector.load %arg10[%c0_68, %c192_69] : memref<256x576xbf16, #tpu.memory_space<vmem>>, vector<256x64xbf16>
    tpu.vector_store %arg10[%c0_68, %c192_69], %149 {strides = array<i32>} : memref<256x576xbf16, #tpu.memory_space<vmem>>, vector<256x64xbf16>,
    %c0_70 = arith.constant 0 : index
    %c256_71 = arith.constant 256 : index
    %151 = vector.load %arg10[%c0_70, %c256_71] : memref<256x576xbf16, #tpu.memory_space<vmem>>, vector<256x64xbf16>
    tpu.vector_store %arg10[%c0_70, %c256_71], %122 {strides = array<i32>} : memref<256x576xbf16, #tpu.memory_space<vmem>>, vector<256x64xbf16>,
    %cst_72 = arith.constant 0.000000e+00 : bf16
    %152 = vector.broadcast %cst_72 : bf16 to vector<1x64xbf16>
    %153 = vector.extract_strided_slice %122 {offsets = [1, 0], sizes = [255, 64], strides = [1, 1]} : vector<256x64xbf16> to vector<255x64xbf16>
    %154 = tpu.concatenate %153, %152 in 0 : vector<255x64xbf16>, vector<1x64xbf16> -> vector<256x64xbf16>
    %cst_73 = arith.constant 0.000000e+00 : bf16
    %155 = vector.broadcast %cst_73 : bf16 to vector<256x64xbf16>
    %156 = vector.shape_cast %36 : vector<256x1xi1> to vector<256x1xi1>
    %157 = vector.broadcast %156 : vector<256x1xi1> to vector<256x64xi1>
    %158 = arith.select %157, %154, %155 : vector<256x64xi1>, vector<256x64xbf16>
    %c0_74 = arith.constant 0 : index
    %c320_75 = arith.constant 320 : index
    %159 = vector.load %arg10[%c0_74, %c320_75] : memref<256x576xbf16, #tpu.memory_space<vmem>>, vector<256x64xbf16>
    tpu.vector_store %arg10[%c0_74, %c320_75], %158 {strides = array<i32>} : memref<256x576xbf16, #tpu.memory_space<vmem>>, vector<256x64xbf16>,
    %cst_76 = arith.constant 0.000000e+00 : bf16
    %160 = vector.broadcast %cst_76 : bf16 to vector<15x64xbf16>
    %161 = vector.extract_strided_slice %122 {offsets = [15, 0], sizes = [241, 64], strides = [1, 1]} : vector<256x64xbf16> to vector<241x64xbf16>
    %162 = tpu.concatenate %161, %160 in 0 : vector<241x64xbf16>, vector<15x64xbf16> -> vector<256x64xbf16>
    %cst_77 = arith.constant 0.000000e+00 : bf16
    %163 = vector.broadcast %cst_77 : bf16 to vector<256x64xbf16>
    %164 = vector.shape_cast %34 : vector<256x1xi1> to vector<256x1xi1>
    %165 = vector.broadcast %164 : vector<256x1xi1> to vector<256x64xi1>
    %166 = arith.select %165, %162, %163 : vector<256x64xi1>, vector<256x64xbf16>
    %c0_78 = arith.constant 0 : index
    %c384_79 = arith.constant 384 : index
    %167 = vector.load %arg10[%c0_78, %c384_79] : memref<256x576xbf16, #tpu.memory_space<vmem>>, vector<256x64xbf16>
    tpu.vector_store %arg10[%c0_78, %c384_79], %166 {strides = array<i32>} : memref<256x576xbf16, #tpu.memory_space<vmem>>, vector<256x64xbf16>,
    %cst_80 = arith.constant 0.000000e+00 : bf16
    %168 = vector.broadcast %cst_80 : bf16 to vector<16x64xbf16>
    %169 = vector.extract_strided_slice %122 {offsets = [16, 0], sizes = [240, 64], strides = [1, 1]} : vector<256x64xbf16> to vector<240x64xbf16>
    %170 = tpu.concatenate %169, %168 in 0 : vector<240x64xbf16>, vector<16x64xbf16> -> vector<256x64xbf16>
    %c0_81 = arith.constant 0 : index
    %c448_82 = arith.constant 448 : index
    %171 = vector.load %arg10[%c0_81, %c448_82] : memref<256x576xbf16, #tpu.memory_space<vmem>>, vector<256x64xbf16>
    tpu.vector_store %arg10[%c0_81, %c448_82], %170 {strides = array<i32>} : memref<256x576xbf16, #tpu.memory_space<vmem>>, vector<256x64xbf16>,
    %cst_83 = arith.constant 0.000000e+00 : bf16
    %172 = vector.broadcast %cst_83 : bf16 to vector<17x64xbf16>
    %173 = vector.extract_strided_slice %122 {offsets = [17, 0], sizes = [239, 64], strides = [1, 1]} : vector<256x64xbf16> to vector<239x64xbf16>
    %174 = tpu.concatenate %173, %172 in 0 : vector<239x64xbf16>, vector<17x64xbf16> -> vector<256x64xbf16>
    %cst_84 = arith.constant 0.000000e+00 : bf16
    %175 = vector.broadcast %cst_84 : bf16 to vector<256x64xbf16>
    %176 = vector.shape_cast %36 : vector<256x1xi1> to vector<256x1xi1>
    %177 = vector.broadcast %176 : vector<256x1xi1> to vector<256x64xi1>
    %178 = arith.select %177, %174, %175 : vector<256x64xi1>, vector<256x64xbf16>
    %c0_85 = arith.constant 0 : index
    %c512_86 = arith.constant 512 : index
    %179 = vector.load %arg10[%c0_85, %c512_86] : memref<256x576xbf16, #tpu.memory_space<vmem>>, vector<256x64xbf16>
    tpu.vector_store %arg10[%c0_85, %c512_86], %178 {strides = array<i32>} : memref<256x576xbf16, #tpu.memory_space<vmem>>, vector<256x64xbf16>,
    %c0_87 = arith.constant 0 : index
    %c0_88 = arith.constant 0 : index
    %180 = vector.load %arg10[%c0_87, %c0_88] : memref<256x576xbf16, #tpu.memory_space<vmem>>, vector<256x576xbf16>
    %c1_89 = arith.constant 1 : index
    %c0_90 = arith.constant 0 : index
    %c0_91 = arith.constant 0 : index
    %181 = vector.load %arg6[%c1_89, %c0_90, %c0_91] : memref<2x576x64xbf16, #tpu.memory_space<vmem>>, vector<1x576x64xbf16>
    %182 = vector.shape_cast %181 : vector<1x576x64xbf16> to vector<576x64xbf16>
    %cst_92 = arith.constant dense<0.000000e+00> : vector<256x64xf32>
    %183 = tpu.matmul %180, %182, %cst_92 {dimension_numbers = #tpu.dot_dimension_numbers<[1], [0], [0], [1], [0, 0, 1, 1], [], []>} : vector<256x576xbf16>, vector<576x64xbf16>, vector<256x64xf32> -> vector<256x64xf32>
    %184 = arith.negf %183 : vector<256x64xf32>
    %185 = math.exp %184 : vector<256x64xf32>
    %cst_93 = arith.constant 1.000000e+00 : f32
    %186 = vector.broadcast %cst_93 : f32 to vector<256x64xf32>
    %187 = arith.addf %186, %185 : vector<256x64xf32>
    %188 = arith.divf %186, %187 : vector<256x64xf32>
    %189 = arith.mulf %183, %188 : vector<256x64xf32>
    %190 = arith.addf %189, %113 : vector<256x64xf32>
    %191 = arith.truncf %190 : vector<256x64xf32> to vector<256x64xbf16>
    %192 = tpu.concatenate %191, %15 in 1 : vector<256x64xbf16>, vector<256x64xbf16> -> vector<256x128xbf16>
    %c0_94 = arith.constant 0 : index
    %c0_95 = arith.constant 0 : index
    %193 = vector.load %arg7[%c0_94, %c0_95] : memref<128x128xbf16, #tpu.memory_space<vmem>>, vector<128x128xbf16>
    %cst_96 = arith.constant dense<0.000000e+00> : vector<256x128xf32>
    %194 = tpu.matmul %192, %193, %cst_96 {dimension_numbers = #tpu.dot_dimension_numbers<[1], [0], [0], [1], [0, 0, 1, 1], [], []>} : vector<256x128xbf16>, vector<128x128xbf16>, vector<256x128xf32> -> vector<256x128xf32>
    %c0_97 = arith.constant 0 : index
    %c0_98 = arith.constant 0 : index
    %195 = vector.load %arg8[%c0_97, %c0_98] : memref<1x128xf32, #tpu.memory_space<vmem>>, vector<1x128xf32>
    %196 = vector.broadcast %195 : vector<1x128xf32> to vector<256x128xf32>
    %197 = arith.addf %194, %196 : vector<256x128xf32>
    %198 = arith.negf %197 : vector<256x128xf32>
    %199 = math.exp %198 : vector<256x128xf32>
    %cst_99 = arith.constant 1.000000e+00 : f32
    %200 = vector.broadcast %cst_99 : f32 to vector<256x128xf32>
    %201 = arith.addf %200, %199 : vector<256x128xf32>
    %202 = arith.divf %200, %201 : vector<256x128xf32>
    %203 = arith.mulf %197, %202 : vector<256x128xf32>
    %204 = arith.truncf %203 : vector<256x128xf32> to vector<256x128xbf16>
    %c0_100 = arith.constant 0 : index
    %c0_101 = arith.constant 0 : index
    %c0_102 = arith.constant 0 : index
    %205 = vector.load %arg9[%c0_100, %c0_101, %c0_102] : memref<1x256x128xbf16, #tpu.memory_space<vmem>>, vector<1x256x128xbf16>
    %206 = vector.shape_cast %205 : vector<1x256x128xbf16> to vector<256x128xbf16>
    %207 = vector.shape_cast %204 : vector<256x128xbf16> to vector<1x256x128xbf16>
    tpu.vector_store %arg9[%c0_100, %c0_101, %c0_102], %207 {strides = array<i32>} : memref<1x256x128xbf16, #tpu.memory_space<vmem>>, vector<1x256x128xbf16>,
    return
  }
  func.func @transform_0(%arg0: i32) -> (i32, i32, i32) {
    %c0_i32 = arith.constant 0 : i32
    %c0_i32_0 = arith.constant 0 : i32
    %c0_i32_1 = arith.constant 0 : i32
    return %arg0, %c0_i32, %c0_i32_0 : i32, i32, i32
  }
  func.func @transform_1(%arg0: i32) -> (i32, i32) {
    %c0_i32 = arith.constant 0 : i32
    %c0_i32_0 = arith.constant 0 : i32
    %c0_i32_1 = arith.constant 0 : i32
    return %c0_i32, %c0_i32_0 : i32, i32
  }
  func.func @transform_2(%arg0: i32) -> (i32, i32) {
    %c0_i32 = arith.constant 0 : i32
    %c0_i32_0 = arith.constant 0 : i32
    %c0_i32_1 = arith.constant 0 : i32
    return %c0_i32, %c0_i32_0 : i32, i32
  }
  func.func @transform_3(%arg0: i32) -> (i32, i32, i32) {
    %c0_i32 = arith.constant 0 : i32
    %c0_i32_0 = arith.constant 0 : i32
    %c0_i32_1 = arith.constant 0 : i32
    %c0_i32_2 = arith.constant 0 : i32
    return %c0_i32, %c0_i32_0, %c0_i32_1 : i32, i32, i32
  }
  func.func @transform_4(%arg0: i32) -> (i32, i32, i32) {
    %c0_i32 = arith.constant 0 : i32
    %c0_i32_0 = arith.constant 0 : i32
    %c0_i32_1 = arith.constant 0 : i32
    %c0_i32_2 = arith.constant 0 : i32
    return %c0_i32, %c0_i32_0, %c0_i32_1 : i32, i32, i32
  }
  func.func @transform_5(%arg0: i32) -> (i32, i32, i32) {
    %c0_i32 = arith.constant 0 : i32
    %c0_i32_0 = arith.constant 0 : i32
    %c0_i32_1 = arith.constant 0 : i32
    %c0_i32_2 = arith.constant 0 : i32
    return %c0_i32, %c0_i32_0, %c0_i32_1 : i32, i32, i32
  }
  func.func @transform_6(%arg0: i32) -> (i32, i32) {
    %c0_i32 = arith.constant 0 : i32
    %c0_i32_0 = arith.constant 0 : i32
    %c0_i32_1 = arith.constant 0 : i32
    return %c0_i32, %c0_i32_0 : i32, i32
  }
  func.func @transform_7(%arg0: i32) -> (i32, i32) {
    %c0_i32 = arith.constant 0 : i32
    %c0_i32_0 = arith.constant 0 : i32
    %c0_i32_1 = arith.constant 0 : i32
    return %c0_i32, %c0_i32_0 : i32, i32
  }
  func.func @transform_8(%arg0: i32) -> (i32, i32, i32) {
    %c0_i32 = arith.constant 0 : i32
    %c0_i32_0 = arith.constant 0 : i32
    %c0_i32_1 = arith.constant 0 : i32
    return %arg0, %c0_i32, %c0_i32_0 : i32, i32, i32
  }
}

</mosaic_0001>

<llo_original>
// kernel: tpu_custom_call.1
$region0: #{tpu_custom_call.1}
  #allocation0 [shape = 'u32[]', space=smem, size = 0x4, offset = 0x4, fixed_abs, tag = 'smem constant byte address 0x4 - core index']
  #allocation1 [shape = 'u32[144,128]{1,0:T(1,128)}', space=vmem, size = 0x12000, scoped, tag = 'internal scratch']
  #allocation2 [shape = 'bf16[256,576]{1,0:T(16,128)(2,1)}', space=vmem, size = 0x50000, scoped, tag = 'scratch operand']
  %s0 = inlined_call_operand.vmem [shape: bf16[2,256,128], index: 0, kind: input, shape index: {}]
  %s1 = inlined_call_operand.vmem [shape: bf16[128,128], index: 1, kind: input, shape index: {}]
  %s2 = inlined_call_operand.vmem [shape: f32[1,128], index: 2, kind: input, shape index: {}]
  %s3 = inlined_call_operand.vmem [shape: bf16[2,64,64], index: 3, kind: input, shape index: {}]
  %s4 = inlined_call_operand.vmem [shape: f32[2,1,64], index: 4, kind: input, shape index: {}]
  %s5 = inlined_call_operand.vmem [shape: bf16[2,576,64], index: 5, kind: input, shape index: {}]
  %s6 = inlined_call_operand.vmem [shape: bf16[128,128], index: 6, kind: input, shape index: {}]
  %s7 = inlined_call_operand.vmem [shape: f32[1,128], index: 7, kind: input, shape index: {}]
  %s8 = inlined_call_operand.hbm [shape: bf16[2,256,128], index: 8, kind: output, shape index: {}]
  %s9 = sld [smem:[#allocation0]]
  $region65: #{tpu_custom_call.1} parent=0
    _
  %s11 = ssub.s32 1, %s9
  %s12 = scalar_select 0, %s11, %s9
  $region1: #{tpu_custom_call.1} parent=0
    #allocation3 [shape = 'u8[131072]{0}', space=vmem, size = 0x20000, scoped, tag = 'output window, operand 0']
    #allocation4 [shape = 's32[2]{0}', space=sflag, size = 0x8, scoped, tag = 'scoped memory for tpu_custom_call.1']
    %13 = vsyncpa [#allocation4], 0
    %s14 = scalar_lea.sflag [#allocation4], 1
    %15 = vsyncpa %s14, 0
    loop: start=0, step=1, limit=4
    $region2: #{tpu_custom_call.1} parent=1 // loop_pre_header
      _
    $region3: #{tpu_custom_call.1} parent=1 // loop_header
      %s17 = sphi 0, %s21
      %p18 = scmp.ge.s32.totalorder %s17, 4
      %s27 = sphi 0, %s29
      %s30 = sphi 0, %s27
      %s31 = sphi 0, %s30
      %s47 = sphi 0, %s31
      %s51 = sphi 0, %s51
      %s53 = sphi 0, %s51
      %s54 = sphi 0, %s53
      %s68 = sphi 0, %s54
      %s72 = sphi 0, %s72
      %s74 = sphi 0, %s72
      %s75 = sphi 0, %s74
      %s89 = sphi 0, %s75
      %s93 = sphi 0, %s93
      %s95 = sphi 0, %s93
      %s96 = sphi 0, %s95
      %s110 = sphi 0, %s96
      %s114 = sphi 0, %s114
      %s116 = sphi 0, %s114
      %s117 = sphi 0, %s116
      %s131 = sphi 0, %s117
      %s135 = sphi 0, %s135
      %s137 = sphi 0, %s135
      %s138 = sphi 0, %s137
      %s152 = sphi 0, %s138
      %s156 = sphi 0, %s156
      %s158 = sphi 0, %s156
      %s159 = sphi 0, %s158
      %s173 = sphi 0, %s159
      %s177 = sphi 0, %s177
      %s179 = sphi 0, %s177
      %s180 = sphi 0, %s179
      %s194 = sphi 0, %s180
      %s200 = sphi 0, %s202
      %s203 = sphi 0, %s200
      %s204 = sphi 0, %s203
      %s220 = sphi 0, %s204
    $region4: #{tpu_custom_call.1} parent=1 // loop_header_branch
      %20 = sbr.rel (%p18) target = $region8
    $region5: #{tpu_custom_call.1} parent=1 // loop_body
      %s22 = ssub.s32 %s17, 1
      %s23 = ssub.s32 %s17, 2
      %s24 = sadd.s32 %s17, 1
      %s25 = ssub.s32 %s17, %s24
      %p26 = scmp.eq.s32.totalorder %s25, 0
      %s28 = sadd.s32 %s27, 1
      %s29 = scalar_select %p26, %s27, %s28
      %p32 = pneg %p26
      %p33 = scmp.eq.s32.totalorder %s17, 1
      %p34 = por %p32, %p33
      %p35 = scmp.ne.s32.totalorder %s27, %s30
      %p36 = scmp.eq.s32.totalorder %s17, 0
      %p37 = por %p35, %p36
      %p38 = scmp.ne.s32.totalorder %s27, %s30
      %p39 = scmp.eq.s32.totalorder %s22, 1
      %p40 = por %p38, %p39
      %p41 = scmp.ne.s32.totalorder %s30, %s31
      %p42 = scmp.eq.s32.totalorder %s22, 0
      %p43 = por %p41, %p42
      %p44 = scmp.ne.s32.totalorder %s30, %s31
      %p45 = scmp.eq.s32.totalorder %s23, 1
      %p46 = por %p44, %p45
      %p48 = scmp.ne.s32.totalorder %s31, %s47
      %p49 = scmp.eq.s32.totalorder %s23, 0
      %p50 = por %p48, %p49
      %s52 = sadd.s32 %s51, 1
      %p55 = scmp.eq.s32.totalorder %s17, 1
      %p56 = scmp.ne.s32.totalorder %s51, %s53
      %p57 = scmp.eq.s32.totalorder %s17, 0
      %p58 = por %p56, %p57
      %p59 = scmp.ne.s32.totalorder %s51, %s53
      %p60 = scmp.eq.s32.totalorder %s22, 1
      %p61 = por %p59, %p60
      %p62 = scmp.ne.s32.totalorder %s53, %s54
      %p63 = scmp.eq.s32.totalorder %s22, 0
      %p64 = por %p62, %p63
      %p65 = scmp.ne.s32.totalorder %s53, %s54
      %p66 = scmp.eq.s32.totalorder %s23, 1
      %p67 = por %p65, %p66
      %p69 = scmp.ne.s32.totalorder %s54, %s68
      %p70 = scmp.eq.s32.totalorder %s23, 0
      %p71 = por %p69, %p70
      %s73 = sadd.s32 %s72, 1
      %p76 = scmp.eq.s32.totalorder %s17, 1
      %p77 = scmp.ne.s32.totalorder %s72, %s74
      %p78 = scmp.eq.s32.totalorder %s17, 0
      %p79 = por %p77, %p78
      %p80 = scmp.ne.s32.totalorder %s72, %s74
      %p81 = scmp.eq.s32.totalorder %s22, 1
      %p82 = por %p80, %p81
      %p83 = scmp.ne.s32.totalorder %s74, %s75
      %p84 = scmp.eq.s32.totalorder %s22, 0
      %p85 = por %p83, %p84
      %p86 = scmp.ne.s32.totalorder %s74, %s75
      %p87 = scmp.eq.s32.totalorder %s23, 1
      %p88 = por %p86, %p87
      %p90 = scmp.ne.s32.totalorder %s75, %s89
      %p91 = scmp.eq.s32.totalorder %s23, 0
      %p92 = por %p90, %p91
      %s94 = sadd.s32 %s93, 1
      %p97 = scmp.eq.s32.totalorder %s17, 1
      %p98 = scmp.ne.s32.totalorder %s93, %s95
      %p99 = scmp.eq.s32.totalorder %s17, 0
      %p100 = por %p98, %p99
      %p101 = scmp.ne.s32.totalorder %s93, %s95
      %p102 = scmp.eq.s32.totalorder %s22, 1
      %p103 = por %p101, %p102
      %p104 = scmp.ne.s32.totalorder %s95, %s96
      %p105 = scmp.eq.s32.totalorder %s22, 0
      %p106 = por %p104, %p105
      %p107 = scmp.ne.s32.totalorder %s95, %s96
      %p108 = scmp.eq.s32.totalorder %s23, 1
      %p109 = por %p107, %p108
      %p111 = scmp.ne.s32.totalorder %s96, %s110
      %p112 = scmp.eq.s32.totalorder %s23, 0
      %p113 = por %p111, %p112
      %s115 = sadd.s32 %s114, 1
      %p118 = scmp.eq.s32.totalorder %s17, 1
      %p119 = scmp.ne.s32.totalorder %s114, %s116
      %p120 = scmp.eq.s32.totalorder %s17, 0
      %p121 = por %p119, %p120
      %p122 = scmp.ne.s32.totalorder %s114, %s116
      %p123 = scmp.eq.s32.totalorder %s22, 1
      %p124 = por %p122, %p123
      %p125 = scmp.ne.s32.totalorder %s116, %s117
      %p126 = scmp.eq.s32.totalorder %s22, 0
      %p127 = por %p125, %p126
      %p128 = scmp.ne.s32.totalorder %s116, %s117
      %p129 = scmp.eq.s32.totalorder %s23, 1
      %p130 = por %p128, %p129
      %p132 = scmp.ne.s32.totalorder %s117, %s131
      %p133 = scmp.eq.s32.totalorder %s23, 0
      %p134 = por %p132, %p133
      %s136 = sadd.s32 %s135, 1
      %p139 = scmp.eq.s32.totalorder %s17, 1
      %p140 = scmp.ne.s32.totalorder %s135, %s137
      %p141 = scmp.eq.s32.totalorder %s17, 0
      %p142 = por %p140, %p141
      %p143 = scmp.ne.s32.totalorder %s135, %s137
      %p144 = scmp.eq.s32.totalorder %s22, 1
      %p145 = por %p143, %p144
      %p146 = scmp.ne.s32.totalorder %s137, %s138
      %p147 = scmp.eq.s32.totalorder %s22, 0
      %p148 = por %p146, %p147
      %p149 = scmp.ne.s32.totalorder %s137, %s138
      %p150 = scmp.eq.s32.totalorder %s23, 1
      %p151 = por %p149, %p150
      %p153 = scmp.ne.s32.totalorder %s138, %s152
      %p154 = scmp.eq.s32.totalorder %s23, 0
      %p155 = por %p153, %p154
      %s157 = sadd.s32 %s156, 1
      %p160 = scmp.eq.s32.totalorder %s17, 1
      %p161 = scmp.ne.s32.totalorder %s156, %s158
      %p162 = scmp.eq.s32.totalorder %s17, 0
      %p163 = por %p161, %p162
      %p164 = scmp.ne.s32.totalorder %s156, %s158
      %p165 = scmp.eq.s32.totalorder %s22, 1
      %p166 = por %p164, %p165
      %p167 = scmp.ne.s32.totalorder %s158, %s159
      %p168 = scmp.eq.s32.totalorder %s22, 0
      %p169 = por %p167, %p168
      %p170 = scmp.ne.s32.totalorder %s158, %s159
      %p171 = scmp.eq.s32.totalorder %s23, 1
      %p172 = por %p170, %p171
      %p174 = scmp.ne.s32.totalorder %s159, %s173
      %p175 = scmp.eq.s32.totalorder %s23, 0
      %p176 = por %p174, %p175
      %s178 = sadd.s32 %s177, 1
      %p181 = scmp.eq.s32.totalorder %s17, 1
      %p182 = scmp.ne.s32.totalorder %s177, %s179
      %p183 = scmp.eq.s32.totalorder %s17, 0
      %p184 = por %p182, %p183
      %p185 = scmp.ne.s32.totalorder %s177, %s179
      %p186 = scmp.eq.s32.totalorder %s22, 1
      %p187 = por %p185, %p186
      %p188 = scmp.ne.s32.totalorder %s179, %s180
      %p189 = scmp.eq.s32.totalorder %s22, 0
      %p190 = por %p188, %p189
      %p191 = scmp.ne.s32.totalorder %s179, %s180
      %p192 = scmp.eq.s32.totalorder %s23, 1
      %p193 = por %p191, %p192
      %p195 = scmp.ne.s32.totalorder %s180, %s194
      %p196 = scmp.eq.s32.totalorder %s23, 0
      %p197 = por %p195, %p196
      %s198 = ssub.s32 %s17, %s24
      %p199 = scmp.eq.s32.totalorder %s198, 0
      %s201 = sadd.s32 %s200, 1
      %s202 = scalar_select %p199, %s200, %s201
      %p205 = pneg %p199
      %p206 = scmp.eq.s32.totalorder %s17, 1
      %p207 = por %p205, %p206
      %p208 = scmp.ne.s32.totalorder %s200, %s203
      %p209 = scmp.eq.s32.totalorder %s17, 0
      %p210 = por %p208, %p209
      %p211 = scmp.ne.s32.totalorder %s200, %s203
      %p212 = scmp.eq.s32.totalorder %s22, 1
      %p213 = por %p211, %p212
      %p214 = scmp.ne.s32.totalorder %s203, %s204
      %p215 = scmp.eq.s32.totalorder %s22, 0
      %p216 = por %p214, %p215
      %p217 = scmp.ne.s32.totalorder %s203, %s204
      %p218 = scmp.eq.s32.totalorder %s23, 1
      %p219 = por %p217, %p218
      %p221 = scmp.ne.s32.totalorder %s204, %s220
      %p222 = scmp.eq.s32.totalorder %s23, 0
      %p223 = por %p221, %p222
      %p224 = scmp.le.s32.totalorder 1, %s17
      %p225 = scmp.lt.s32.totalorder %s17, 3
      %p226 = pnand %p224, %p225
      %p227 = pneg %p226
      // Predicated region
      $region9: #{tpu_custom_call.1} parent=5 // pred_check
        _
      $region10: #{tpu_custom_call.1} parent=5 // pred_check_branch
        %229 = sbr.rel (%p226) target = $region12
      $region11: #{tpu_custom_call.1} parent=5 // pred_region
        %s230 = ssub.s32 %s17, 1
        // Predicated region
        $region13: #{tpu_custom_call.1} parent=11 // pred_check
          %p231 = pneg %p64
        $region14: #{tpu_custom_call.1} parent=11 // pred_check_branch
          %233 = sbr.rel (%p231) target = $region16
        $region15: #{tpu_custom_call.1} parent=11 // pred_region
          _
        $region16: #{tpu_custom_call.1} parent=11 // pred_fallthru
          _
        // Predicated region
        $region17: #{tpu_custom_call.1} parent=11 // pred_check
          %p234 = pneg %p85
        $region18: #{tpu_custom_call.1} parent=11 // pred_check_branch
          %236 = sbr.rel (%p234) target = $region20
        $region19: #{tpu_custom_call.1} parent=11 // pred_region
          _
        $region20: #{tpu_custom_call.1} parent=11 // pred_fallthru
          _
        // Predicated region
        $region21: #{tpu_custom_call.1} parent=11 // pred_check
          %p237 = pneg %p106
        $region22: #{tpu_custom_call.1} parent=11 // pred_check_branch
          %239 = sbr.rel (%p237) target = $region24
        $region23: #{tpu_custom_call.1} parent=11 // pred_region
          _
        $region24: #{tpu_custom_call.1} parent=11 // pred_fallthru
          _
        // Predicated region
        $region25: #{tpu_custom_call.1} parent=11 // pred_check
          %p240 = pneg %p127
        $region26: #{tpu_custom_call.1} parent=11 // pred_check_branch
          %242 = sbr.rel (%p240) target = $region28
        $region27: #{tpu_custom_call.1} parent=11 // pred_region
          _
        $region28: #{tpu_custom_call.1} parent=11 // pred_fallthru
          _
        // Predicated region
        $region29: #{tpu_custom_call.1} parent=11 // pred_check
          %p243 = pneg %p148
        $region30: #{tpu_custom_call.1} parent=11 // pred_check_branch
          %245 = sbr.rel (%p243) target = $region32
        $region31: #{tpu_custom_call.1} parent=11 // pred_region
          _
        $region32: #{tpu_custom_call.1} parent=11 // pred_fallthru
          _
        // Predicated region
        $region33: #{tpu_custom_call.1} parent=11 // pred_check
          %p246 = pneg %p169
        $region34: #{tpu_custom_call.1} parent=11 // pred_check_branch
          %248 = sbr.rel (%p246) target = $region36
        $region35: #{tpu_custom_call.1} parent=11 // pred_region
          _
        $region36: #{tpu_custom_call.1} parent=11 // pred_fallthru
          _
        // Predicated region
        $region37: #{tpu_custom_call.1} parent=11 // pred_check
          %p249 = pneg %p190
        $region38: #{tpu_custom_call.1} parent=11 // pred_check_branch
          %251 = sbr.rel (%p249) target = $region40
        $region39: #{tpu_custom_call.1} parent=11 // pred_region
          _
        $region40: #{tpu_custom_call.1} parent=11 // pred_fallthru
          _
      $region12: #{tpu_custom_call.1} parent=5 // pred_fallthru
        _
      %p252 = scmp.lt.s32.totalorder %s17, 2
      // Predicated region
      $region41: #{tpu_custom_call.1} parent=5 // pred_check
        %p253 = pneg %p252
      $region42: #{tpu_custom_call.1} parent=5 // pred_check_branch
        %255 = sbr.rel (%p253) target = $region44
      $region43: #{tpu_custom_call.1} parent=5 // pred_region
        // Predicated region
        $region45: #{tpu_custom_call.1} parent=43 // pred_check
          %p256 = pneg %p37
        $region46: #{tpu_custom_call.1} parent=43 // pred_check_branch
          %258 = sbr.rel (%p256) target = $region48
        $region47: #{tpu_custom_call.1} parent=43 // pred_region
          %p259 = scmp.lt.s32.totalorder %s17, 1
          %s260 = scalar_select %p259, %s17, 1
          %s261 = smul.addr %s260, 32
          %s262 = smul.addr %s261, 4
          %s263 = scalar_lea.vmem %s0, %s262
        $region48: #{tpu_custom_call.1} parent=43 // pred_fallthru
          _
      $region44: #{tpu_custom_call.1} parent=5 // pred_fallthru
        _
      %p264 = scmp.le.s32.totalorder 1, %s17
      %p265 = scmp.lt.s32.totalorder %s17, 3
      %p266 = pnand %p264, %p265
      %p267 = pneg %p266
      // Predicated region
      $region49: #{tpu_custom_call.1} parent=5 // pred_check
        _
      $region50: #{tpu_custom_call.1} parent=5 // pred_check_branch
        %269 = sbr.rel (%p266) target = $region52
      $region51: #{tpu_custom_call.1} parent=5 // pred_region
        %s270 = ssub.s32 %s17, 1
        %p271 = scmp.lt.s32.totalorder %s22, 1
        %s272 = scalar_select %p271, %s22, 1
        %s273 = smul.addr %s272, 32
        %s274 = smul.addr %s273, 4
        %s275 = scalar_lea.vmem %s0, %s274
        %p276 = pneg %p43
        %p277 = pneg %p40
        %p278 = pneg %p64
        %p279 = pneg %p61
        %p280 = pneg %p85
        %p281 = pneg %p82
        %p282 = pneg %p106
        %p283 = pneg %p103
        %p284 = pneg %p127
        %p285 = pneg %p124
        %p286 = pneg %p148
        %p287 = pneg %p145
        %p288 = pneg %p169
        %p289 = pneg %p166
        %p290 = pneg %p190
        %p291 = pneg %p187
        %p292 = pneg %p216
        %p293 = pneg %p213
        %s294 = sand.u32 %s203, 1
        %s295 = scalar_lea.sflag [#allocation4], %s294
        %s296 = sand.u32 %s203, 1
        %s297 = smul.addr %s296, 128
        %s298 = scalar_lea.vmem [#allocation3], %s297
        %p299 = scmp.lt.s32.totalorder %s22, 1
        %s300 = scalar_select %p299, %s22, 1
        %s301 = smul.addr %s300, 32
        %s302 = smul.addr %s301, 4
        %s303 = scalar_lea.vmem %s0, %s302
        %v307 = vld [vmem:[%s303] sm:$0xf]
        %v308 = vld [vmem:[%s303 + $0x4] sm:$0xf]
        %v309 = vld [vmem:[%s303 + $0x8] sm:$0xf]
        %v310 = vld [vmem:[%s303 + $0xc] sm:$0xf]
        %v311 = vld [vmem:[%s303 + $0x10] sm:$0xf]
        %v312 = vld [vmem:[%s303 + $0x14] sm:$0xf]
        %v313 = vld [vmem:[%s303 + $0x18] sm:$0xf]
        %v314 = vld [vmem:[%s303 + $0x1c] sm:$0xf]
        %v315 = vld [vmem:[%s303 + $0x20] sm:$0xf]
        %v316 = vld [vmem:[%s303 + $0x24] sm:$0xf]
        %v317 = vld [vmem:[%s303 + $0x28] sm:$0xf]
        %v318 = vld [vmem:[%s303 + $0x2c] sm:$0xf]
        %v319 = vld [vmem:[%s303 + $0x30] sm:$0xf]
        %v320 = vld [vmem:[%s303 + $0x34] sm:$0xf]
        %v321 = vld [vmem:[%s303 + $0x38] sm:$0xf]
        %v322 = vld [vmem:[%s303 + $0x3c] sm:$0xf]
        %v323 = vld [vmem:[%s303 + $0x40] sm:$0xf]
        %v324 = vld [vmem:[%s303 + $0x44] sm:$0xf]
        %v325 = vld [vmem:[%s303 + $0x48] sm:$0xf]
        %v326 = vld [vmem:[%s303 + $0x4c] sm:$0xf]
        %v327 = vld [vmem:[%s303 + $0x50] sm:$0xf]
        %v328 = vld [vmem:[%s303 + $0x54] sm:$0xf]
        %v329 = vld [vmem:[%s303 + $0x58] sm:$0xf]
        %v330 = vld [vmem:[%s303 + $0x5c] sm:$0xf]
        %v331 = vld [vmem:[%s303 + $0x60] sm:$0xf]
        %v332 = vld [vmem:[%s303 + $0x64] sm:$0xf]
        %v333 = vld [vmem:[%s303 + $0x68] sm:$0xf]
        %v334 = vld [vmem:[%s303 + $0x6c] sm:$0xf]
        %v335 = vld [vmem:[%s303 + $0x70] sm:$0xf]
        %v336 = vld [vmem:[%s303 + $0x74] sm:$0xf]
        %v337 = vld [vmem:[%s303 + $0x78] sm:$0xf]
        %v338 = vld [vmem:[%s303 + $0x7c] sm:$0xf]
        %v339 = vld [vmem:[%s1] sm:$0xf]
        %v340 = vld [vmem:[%s1 + $0x4] sm:$0xf]
        %v341 = vld [vmem:[%s1 + $0x8] sm:$0xf]
        %v342 = vld [vmem:[%s1 + $0xc] sm:$0xf]
        %v343 = vld [vmem:[%s1 + $0x10] sm:$0xf]
        %v344 = vld [vmem:[%s1 + $0x14] sm:$0xf]
        %v345 = vld [vmem:[%s1 + $0x18] sm:$0xf]
        %v346 = vld [vmem:[%s1 + $0x1c] sm:$0xf]
        %v347 = vld [vmem:[%s1 + $0x20] sm:$0xf]
        %v348 = vld [vmem:[%s1 + $0x24] sm:$0xf]
        %v349 = vld [vmem:[%s1 + $0x28] sm:$0xf]
        %v350 = vld [vmem:[%s1 + $0x2c] sm:$0xf]
        %v351 = vld [vmem:[%s1 + $0x30] sm:$0xf]
        %v352 = vld [vmem:[%s1 + $0x34] sm:$0xf]
        %v353 = vld [vmem:[%s1 + $0x38] sm:$0xf]
        %v354 = vld [vmem:[%s1 + $0x3c] sm:$0xf]
        %v355 = vld [vmem:[%s2] sm:$0x1]
        %v357 = vlaneseq
        %v358 = vshrl.u32 %v357, 7
        %v359 = vsub.s32 0, %v358
        %v360 = vrot.slane %v355, %v359
        %v394 = vunpack.c.l.b16 %v307
        %v395 = vunpack.c.l.b16 %v308
        %v396 = vunpack.c.l.b16 %v309
        %v397 = vunpack.c.l.b16 %v310
        %v398 = vunpack.c.l.b16 %v311
        %v399 = vunpack.c.l.b16 %v312
        %v400 = vunpack.c.l.b16 %v313
        %v401 = vunpack.c.l.b16 %v314
        %v402 = vunpack.c.l.b16 %v315
        %v403 = vunpack.c.l.b16 %v316
        %v404 = vunpack.c.l.b16 %v317
        %v405 = vunpack.c.l.b16 %v318
        %v406 = vunpack.c.l.b16 %v319
        %v407 = vunpack.c.l.b16 %v320
        %v408 = vunpack.c.l.b16 %v321
        %v409 = vunpack.c.l.b16 %v322
        %v410 = vunpack.c.l.b16 %v323
        %v411 = vunpack.c.l.b16 %v324
        %v412 = vunpack.c.l.b16 %v325
        %v413 = vunpack.c.l.b16 %v326
        %v414 = vunpack.c.l.b16 %v327
        %v415 = vunpack.c.l.b16 %v328
        %v416 = vunpack.c.l.b16 %v329
        %v417 = vunpack.c.l.b16 %v330
        %v418 = vunpack.c.l.b16 %v331
        %v419 = vunpack.c.l.b16 %v332
        %v420 = vunpack.c.l.b16 %v333
        %v421 = vunpack.c.l.b16 %v334
        %v422 = vunpack.c.l.b16 %v335
        %v423 = vunpack.c.l.b16 %v336
        %v424 = vunpack.c.l.b16 %v337
        %v425 = vunpack.c.l.b16 %v338
        %v426 = vpack.c.b16 %v395, %v394
        %v427 = vpack.c.b16 %v397, %v396
        %v428 = vpack.c.b16 %v399, %v398
        %v429 = vpack.c.b16 %v401, %v400
        %v430 = vpack.c.b16 %v403, %v402
        %v431 = vpack.c.b16 %v405, %v404
        %v432 = vpack.c.b16 %v407, %v406
        %v433 = vpack.c.b16 %v409, %v408
        %v434 = vpack.c.b16 %v411, %v410
        %v435 = vpack.c.b16 %v413, %v412
        %v436 = vpack.c.b16 %v415, %v414
        %v437 = vpack.c.b16 %v417, %v416
        %v438 = vpack.c.b16 %v419, %v418
        %v439 = vpack.c.b16 %v421, %v420
        %v440 = vpack.c.b16 %v423, %v422
        %v441 = vpack.c.b16 %v425, %v424
        %v474 = vunpack.c.l.b16 %v339
        %v475 = vunpack.c.l.b16 %v340
        %v476 = vunpack.c.l.b16 %v341
        %v477 = vunpack.c.l.b16 %v342
        %v478 = vunpack.c.l.b16 %v343
        %v479 = vunpack.c.l.b16 %v344
        %v480 = vunpack.c.l.b16 %v345
        %v481 = vunpack.c.l.b16 %v346
        %v482 = vunpack.c.l.b16 %v347
        %v483 = vunpack.c.l.b16 %v348
        %v484 = vunpack.c.l.b16 %v349
        %v485 = vunpack.c.l.b16 %v350
        %v486 = vunpack.c.l.b16 %v351
        %v487 = vunpack.c.l.b16 %v352
        %v488 = vunpack.c.l.b16 %v353
        %v489 = vunpack.c.l.b16 %v354
        %v490 = vpack.c.b16 %v475, %v474
        %v491 = vpack.c.b16 %v477, %v476
        %v492 = vpack.c.b16 %v479, %v478
        %v493 = vpack.c.b16 %v481, %v480
        %v494 = vpack.c.b16 %v483, %v482
        %v495 = vpack.c.b16 %v485, %v484
        %v496 = vpack.c.b16 %v487, %v486
        %v497 = vpack.c.b16 %v489, %v488
        %506 = vmatprep.subr.bf16.mxu0 0
        %507 = vmatpush1.bf16.msra.mxu0 %v490
        %508 = vmatprep.subr.bf16.mxu0 0
        %509 = vmatpush1.bf16.msra.mxu0 %v491
        %510 = vmatprep.subr.bf16.mxu0 0
        %511 = vmatpush1.bf16.msra.mxu0 %v492
        %512 = vmatprep.subr.bf16.mxu0 0
        %513 = vmatpush1.bf16.msra.mxu0 %v493
        %514 = vmatprep.subr.bf16.mxu0 0
        %515 = vmatpush1.bf16.msra.mxu0 %v494
        %516 = vmatprep.subr.bf16.mxu0 0
        %517 = vmatpush1.bf16.msra.mxu0 %v495
        %518 = vmatprep.subr.bf16.mxu0 0
        %519 = vmatpush1.bf16.msra.mxu0 %v496
        %520 = vmatprep.subr.bf16.mxu0 0
        %521 = vmatpush1.bf16.msra.mxu0 %v497
        %522 = vmatprep.subr.bf16.mxu0 0
        %523 = vmatpush1.bf16.msra.mxu0 0
        %524 = vmatprep.subr.bf16.mxu0 0
        %525 = vmatpush1.bf16.msra.mxu0 0
        %526 = vmatprep.subr.bf16.mxu0 0
        %527 = vmatpush1.bf16.msra.mxu0 0
        %528 = vmatprep.subr.bf16.mxu0 0
        %529 = vmatpush1.bf16.msra.mxu0 0
        %530 = vmatprep.subr.bf16.mxu0 0
        %531 = vmatpush1.bf16.msra.mxu0 0
        %532 = vmatprep.subr.bf16.mxu0 0
        %533 = vmatpush1.bf16.msra.mxu0 0
        %534 = vmatprep.subr.bf16.mxu0 0
        %535 = vmatpush1.bf16.msra.mxu0 0
        %536 = vmatprep.subr.bf16.mxu0 0
        %537 = vmatpush1.bf16.msra.mxu0 0
        %538 = vmatprep.mubr.bf16.mxu0 0
        %539 = vmatmul.mubr.bf16.gmra.mrb[0].mxu0 %v426
        %v540 = vpop.f32.mrb[0].mxu0
        %v541 = vadd.f32 %v360, %v540
        %v542 = vpop.f32.mrb[0].mxu0
        %v543 = vpop.f32.mrb[0].mxu0
        %v544 = vadd.f32 %v360, %v543
        %v545 = vpop.f32.mrb[0].mxu0
        %546 = vmatprep.mubr.bf16.mxu0 0
        %547 = vmatmul.mubr.bf16.gmra.mrb[0].mxu0 %v427
        %v548 = vpop.f32.mrb[0].mxu0
        %v549 = vadd.f32 %v360, %v548
        %v550 = vpop.f32.mrb[0].mxu0
        %v551 = vpop.f32.mrb[0].mxu0
        %v552 = vadd.f32 %v360, %v551
        %v553 = vpop.f32.mrb[0].mxu0
        %554 = vmatprep.mubr.bf16.mxu0 0
        %555 = vmatmul.mubr.bf16.gmra.mrb[0].mxu0 %v428
        %v556 = vpop.f32.mrb[0].mxu0
        %v557 = vadd.f32 %v360, %v556
        %v558 = vpop.f32.mrb[0].mxu0
        %v559 = vpop.f32.mrb[0].mxu0
        %v560 = vadd.f32 %v360, %v559
        %v561 = vpop.f32.mrb[0].mxu0
        %562 = vmatprep.mubr.bf16.mxu0 0
        %563 = vmatmul.mubr.bf16.gmra.mrb[0].mxu0 %v429
        %v564 = vpop.f32.mrb[0].mxu0
        %v565 = vadd.f32 %v360, %v564
        %v566 = vpop.f32.mrb[0].mxu0
        %v567 = vpop.f32.mrb[0].mxu0
        %v568 = vadd.f32 %v360, %v567
        %v569 = vpop.f32.mrb[0].mxu0
        %570 = vmatprep.mubr.bf16.mxu0 0
        %571 = vmatmul.mubr.bf16.gmra.mrb[0].mxu0 %v430
        %v572 = vpop.f32.mrb[0].mxu0
        %v573 = vadd.f32 %v360, %v572
        %v574 = vpop.f32.mrb[0].mxu0
        %v575 = vpop.f32.mrb[0].mxu0
        %v576 = vadd.f32 %v360, %v575
        %v577 = vpop.f32.mrb[0].mxu0
        %578 = vmatprep.mubr.bf16.mxu0 0
        %579 = vmatmul.mubr.bf16.gmra.mrb[0].mxu0 %v431
        %v580 = vpop.f32.mrb[0].mxu0
        %v581 = vadd.f32 %v360, %v580
        %v582 = vpop.f32.mrb[0].mxu0
        %v583 = vpop.f32.mrb[0].mxu0
        %v584 = vadd.f32 %v360, %v583
        %v585 = vpop.f32.mrb[0].mxu0
        %586 = vmatprep.mubr.bf16.mxu0 0
        %587 = vmatmul.mubr.bf16.gmra.mrb[0].mxu0 %v432
        %v588 = vpop.f32.mrb[0].mxu0
        %v589 = vadd.f32 %v360, %v588
        %v590 = vpop.f32.mrb[0].mxu0
        %v591 = vpop.f32.mrb[0].mxu0
        %v592 = vadd.f32 %v360, %v591
        %v593 = vpop.f32.mrb[0].mxu0
        %594 = vmatprep.mubr.bf16.mxu0 0
        %595 = vmatmul.mubr.bf16.gmra.mrb[0].mxu0 %v433
        %v596 = vpop.f32.mrb[0].mxu0
        %v597 = vadd.f32 %v360, %v596
        %v598 = vpop.f32.mrb[0].mxu0
        %v599 = vpop.f32.mrb[0].mxu0
        %v600 = vadd.f32 %v360, %v599
        %v601 = vpop.f32.mrb[0].mxu0
        %602 = vmatprep.mubr.bf16.mxu0 0
        %603 = vmatmul.mubr.bf16.gmra.mrb[0].mxu0 %v434
        %v604 = vpop.f32.mrb[0].mxu0
        %v605 = vadd.f32 %v360, %v604
        %v606 = vpop.f32.mrb[0].mxu0
        %v607 = vpop.f32.mrb[0].mxu0
        %v608 = vadd.f32 %v360, %v607
        %v609 = vpop.f32.mrb[0].mxu0
        %610 = vmatprep.mubr.bf16.mxu0 0
        %611 = vmatmul.mubr.bf16.gmra.mrb[0].mxu0 %v435
        %v612 = vpop.f32.mrb[0].mxu0
        %v613 = vadd.f32 %v360, %v612
        %v614 = vpop.f32.mrb[0].mxu0
        %v615 = vpop.f32.mrb[0].mxu0
        %v616 = vadd.f32 %v360, %v615
        %v617 = vpop.f32.mrb[0].mxu0
        %618 = vmatprep.mubr.bf16.mxu0 0
        %619 = vmatmul.mubr.bf16.gmra.mrb[0].mxu0 %v436
        %v620 = vpop.f32.mrb[0].mxu0
        %v621 = vadd.f32 %v360, %v620
        %v622 = vpop.f32.mrb[0].mxu0
        %v623 = vpop.f32.mrb[0].mxu0
        %v624 = vadd.f32 %v360, %v623
        %v625 = vpop.f32.mrb[0].mxu0
        %626 = vmatprep.mubr.bf16.mxu0 0
        %627 = vmatmul.mubr.bf16.gmra.mrb[0].mxu0 %v437
        %v628 = vpop.f32.mrb[0].mxu0
        %v629 = vadd.f32 %v360, %v628
        %v630 = vpop.f32.mrb[0].mxu0
        %v631 = vpop.f32.mrb[0].mxu0
        %v632 = vadd.f32 %v360, %v631
        %v633 = vpop.f32.mrb[0].mxu0
        %634 = vmatprep.mubr.bf16.mxu0 0
        %635 = vmatmul.mubr.bf16.gmra.mrb[0].mxu0 %v438
        %v636 = vpop.f32.mrb[0].mxu0
        %v637 = vadd.f32 %v360, %v636
        %v638 = vpop.f32.mrb[0].mxu0
        %v639 = vpop.f32.mrb[0].mxu0
        %v640 = vadd.f32 %v360, %v639
        %v641 = vpop.f32.mrb[0].mxu0
        %642 = vmatprep.mubr.bf16.mxu0 0
        %643 = vmatmul.mubr.bf16.gmra.mrb[0].mxu0 %v439
        %v644 = vpop.f32.mrb[0].mxu0
        %v645 = vadd.f32 %v360, %v644
        %v646 = vpop.f32.mrb[0].mxu0
        %v647 = vpop.f32.mrb[0].mxu0
        %v648 = vadd.f32 %v360, %v647
        %v649 = vpop.f32.mrb[0].mxu0
        %650 = vmatprep.mubr.bf16.mxu0 0
        %651 = vmatmul.mubr.bf16.gmra.mrb[0].mxu0 %v440
        %v652 = vpop.f32.mrb[0].mxu0
        %v653 = vadd.f32 %v360, %v652
        %v654 = vpop.f32.mrb[0].mxu0
        %v655 = vpop.f32.mrb[0].mxu0
        %v656 = vadd.f32 %v360, %v655
        %v657 = vpop.f32.mrb[0].mxu0
        %658 = vmatprep.mubr.bf16.mxu0 0
        %659 = vmatmul.mubr.bf16.gmra.mrb[0].mxu0 %v441
        %v660 = vpop.f32.mrb[0].mxu0
        %v661 = vadd.f32 %v360, %v660
        %v662 = vpop.f32.mrb[0].mxu0
        %v663 = vpop.f32.mrb[0].mxu0
        %v664 = vadd.f32 %v360, %v663
        %v665 = vpop.f32.mrb[0].mxu0
        %666 = vdwg.mxu0
        %v667 = vxor.u32 %v541, 2147483648
        %v668 = vxor.u32 %v544, 2147483648
        %v669 = vxor.u32 %v549, 2147483648
        %v670 = vxor.u32 %v552, 2147483648
        %v671 = vxor.u32 %v557, 2147483648
        %v672 = vxor.u32 %v560, 2147483648
        %v673 = vxor.u32 %v565, 2147483648
        %v674 = vxor.u32 %v568, 2147483648
        %v675 = vxor.u32 %v573, 2147483648
        %v676 = vxor.u32 %v576, 2147483648
        %v677 = vxor.u32 %v581, 2147483648
        %v678 = vxor.u32 %v584, 2147483648
        %v679 = vxor.u32 %v589, 2147483648
        %v680 = vxor.u32 %v592, 2147483648
        %v681 = vxor.u32 %v597, 2147483648
        %v682 = vxor.u32 %v600, 2147483648
        %v683 = vxor.u32 %v605, 2147483648
        %v684 = vxor.u32 %v608, 2147483648
        %v685 = vxor.u32 %v613, 2147483648
        %v686 = vxor.u32 %v616, 2147483648
        %v687 = vxor.u32 %v621, 2147483648
        %v688 = vxor.u32 %v624, 2147483648
        %v689 = vxor.u32 %v629, 2147483648
        %v690 = vxor.u32 %v632, 2147483648
        %v691 = vxor.u32 %v637, 2147483648
        %v692 = vxor.u32 %v640, 2147483648
        %v693 = vxor.u32 %v645, 2147483648
        %v694 = vxor.u32 %v648, 2147483648
        %v695 = vxor.u32 %v653, 2147483648
        %v696 = vxor.u32 %v656, 2147483648
        %v697 = vxor.u32 %v661, 2147483648
        %v698 = vxor.u32 %v664, 2147483648
        %v699 = vmul.f32 %v667, 1.442695
        %v700 = vpow.pop %v699
        %v701 = vmul.f32 %v668, 1.442695
        %v702 = vpow.pop %v701
        %v703 = vmul.f32 %v669, 1.442695
        %v704 = vpow.pop %v703
        %v705 = vmul.f32 %v670, 1.442695
        %v706 = vpow.pop %v705
        %v707 = vmul.f32 %v671, 1.442695
        %v708 = vpow.pop %v707
        %v709 = vmul.f32 %v672, 1.442695
        %v710 = vpow.pop %v709
        %v711 = vmul.f32 %v673, 1.442695
        %v712 = vpow.pop %v711
        %v713 = vmul.f32 %v674, 1.442695
        %v714 = vpow.pop %v713
        %v715 = vmul.f32 %v675, 1.442695
        %v716 = vpow.pop %v715
        %v717 = vmul.f32 %v676, 1.442695
        %v718 = vpow.pop %v717
        %v719 = vmul.f32 %v677, 1.442695
        %v720 = vpow.pop %v719
        %v721 = vmul.f32 %v678, 1.442695
        %v722 = vpow.pop %v721
        %v723 = vmul.f32 %v679, 1.442695
        %v724 = vpow.pop %v723
        %v725 = vmul.f32 %v680, 1.442695
        %v726 = vpow.pop %v725
        %v727 = vmul.f32 %v681, 1.442695
        %v728 = vpow.pop %v727
        %v729 = vmul.f32 %v682, 1.442695
        %v730 = vpow.pop %v729
        %v731 = vmul.f32 %v683, 1.442695
        %v732 = vpow.pop %v731
        %v733 = vmul.f32 %v684, 1.442695
        %v734 = vpow.pop %v733
        %v735 = vmul.f32 %v685, 1.442695
        %v736 = vpow.pop %v735
        %v737 = vmul.f32 %v686, 1.442695
        %v738 = vpow.pop %v737
        %v739 = vmul.f32 %v687, 1.442695
        %v740 = vpow.pop %v739
        %v741 = vmul.f32 %v688, 1.442695
        %v742 = vpow.pop %v741
        %v743 = vmul.f32 %v689, 1.442695
        %v744 = vpow.pop %v743
        %v745 = vmul.f32 %v690, 1.442695
        %v746 = vpow.pop %v745
        %v747 = vmul.f32 %v691, 1.442695
        %v748 = vpow.pop %v747
        %v749 = vmul.f32 %v692, 1.442695
        %v750 = vpow.pop %v749
        %v751 = vmul.f32 %v693, 1.442695
        %v752 = vpow.pop %v751
        %v753 = vmul.f32 %v694, 1.442695
        %v754 = vpow.pop %v753
        %v755 = vmul.f32 %v695, 1.442695
        %v756 = vpow.pop %v755
        %v757 = vmul.f32 %v696, 1.442695
        %v758 = vpow.pop %v757
        %v759 = vmul.f32 %v697, 1.442695
        %v760 = vpow.pop %v759
        %v761 = vmul.f32 %v698, 1.442695
        %v762 = vpow.pop %v761
        %v763 = vadd.f32 %v700, 1.0
        %v764 = vadd.f32 %v702, 1.0
        %v765 = vadd.f32 %v704, 1.0
        %v766 = vadd.f32 %v706, 1.0
        %v767 = vadd.f32 %v708, 1.0
        %v768 = vadd.f32 %v710, 1.0
        %v769 = vadd.f32 %v712, 1.0
        %v770 = vadd.f32 %v714, 1.0
        %v771 = vadd.f32 %v716, 1.0
        %v772 = vadd.f32 %v718, 1.0
        %v773 = vadd.f32 %v720, 1.0
        %v774 = vadd.f32 %v722, 1.0
        %v775 = vadd.f32 %v724, 1.0
        %v776 = vadd.f32 %v726, 1.0
        %v777 = vadd.f32 %v728, 1.0
        %v778 = vadd.f32 %v730, 1.0
        %v779 = vadd.f32 %v732, 1.0
        %v780 = vadd.f32 %v734, 1.0
        %v781 = vadd.f32 %v736, 1.0
        %v782 = vadd.f32 %v738, 1.0
        %v783 = vadd.f32 %v740, 1.0
        %v784 = vadd.f32 %v742, 1.0
        %v785 = vadd.f32 %v744, 1.0
        %v786 = vadd.f32 %v746, 1.0
        %v787 = vadd.f32 %v748, 1.0
        %v788 = vadd.f32 %v750, 1.0
        %v789 = vadd.f32 %v752, 1.0
        %v790 = vadd.f32 %v754, 1.0
        %v791 = vadd.f32 %v756, 1.0
        %v792 = vadd.f32 %v758, 1.0
        %v793 = vadd.f32 %v760, 1.0
        %v794 = vadd.f32 %v762, 1.0
        %v795 = vrcp.pop %v763
        %v796 = vmul.f32 1.0, %v795
        %v797 = vrcp.pop %v764
        %v798 = vmul.f32 1.0, %v797
        %v799 = vrcp.pop %v765
        %v800 = vmul.f32 1.0, %v799
        %v801 = vrcp.pop %v766
        %v802 = vmul.f32 1.0, %v801
        %v803 = vrcp.pop %v767
        %v804 = vmul.f32 1.0, %v803
        %v805 = vrcp.pop %v768
        %v806 = vmul.f32 1.0, %v805
        %v807 = vrcp.pop %v769
        %v808 = vmul.f32 1.0, %v807
        %v809 = vrcp.pop %v770
        %v810 = vmul.f32 1.0, %v809
        %v811 = vrcp.pop %v771
        %v812 = vmul.f32 1.0, %v811
        %v813 = vrcp.pop %v772
        %v814 = vmul.f32 1.0, %v813
        %v815 = vrcp.pop %v773
        %v816 = vmul.f32 1.0, %v815
        %v817 = vrcp.pop %v774
        %v818 = vmul.f32 1.0, %v817
        %v819 = vrcp.pop %v775
        %v820 = vmul.f32 1.0, %v819
        %v821 = vrcp.pop %v776
        %v822 = vmul.f32 1.0, %v821
        %v823 = vrcp.pop %v777
        %v824 = vmul.f32 1.0, %v823
        %v825 = vrcp.pop %v778
        %v826 = vmul.f32 1.0, %v825
        %v827 = vrcp.pop %v779
        %v828 = vmul.f32 1.0, %v827
        %v829 = vrcp.pop %v780
        %v830 = vmul.f32 1.0, %v829
        %v831 = vrcp.pop %v781
        %v832 = vmul.f32 1.0, %v831
        %v833 = vrcp.pop %v782
        %v834 = vmul.f32 1.0, %v833
        %v835 = vrcp.pop %v783
        %v836 = vmul.f32 1.0, %v835
        %v837 = vrcp.pop %v784
        %v838 = vmul.f32 1.0, %v837
        %v839 = vrcp.pop %v785
        %v840 = vmul.f32 1.0, %v839
        %v841 = vrcp.pop %v786
        %v842 = vmul.f32 1.0, %v841
        %v843 = vrcp.pop %v787
        %v844 = vmul.f32 1.0, %v843
        %v845 = vrcp.pop %v788
        %v846 = vmul.f32 1.0, %v845
        %v847 = vrcp.pop %v789
        %v848 = vmul.f32 1.0, %v847
        %v849 = vrcp.pop %v790
        %v850 = vmul.f32 1.0, %v849
        %v851 = vrcp.pop %v791
        %v852 = vmul.f32 1.0, %v851
        %v853 = vrcp.pop %v792
        %v854 = vmul.f32 1.0, %v853
        %v855 = vrcp.pop %v793
        %v856 = vmul.f32 1.0, %v855
        %v857 = vrcp.pop %v794
        %v858 = vmul.f32 1.0, %v857
        %v859 = vmul.f32 %v541, %v796
        %v860 = vmul.f32 %v544, %v798
        %v861 = vmul.f32 %v549, %v800
        %v862 = vmul.f32 %v552, %v802
        %v863 = vmul.f32 %v557, %v804
        %v864 = vmul.f32 %v560, %v806
        %v865 = vmul.f32 %v565, %v808
        %v866 = vmul.f32 %v568, %v810
        %v867 = vmul.f32 %v573, %v812
        %v868 = vmul.f32 %v576, %v814
        %v869 = vmul.f32 %v581, %v816
        %v870 = vmul.f32 %v584, %v818
        %v871 = vmul.f32 %v589, %v820
        %v872 = vmul.f32 %v592, %v822
        %v873 = vmul.f32 %v597, %v824
        %v874 = vmul.f32 %v600, %v826
        %v875 = vmul.f32 %v605, %v828
        %v876 = vmul.f32 %v608, %v830
        %v877 = vmul.f32 %v613, %v832
        %v878 = vmul.f32 %v616, %v834
        %v879 = vmul.f32 %v621, %v836
        %v880 = vmul.f32 %v624, %v838
        %v881 = vmul.f32 %v629, %v840
        %v882 = vmul.f32 %v632, %v842
        %v883 = vmul.f32 %v637, %v844
        %v884 = vmul.f32 %v640, %v846
        %v885 = vmul.f32 %v645, %v848
        %v886 = vmul.f32 %v648, %v850
        %v887 = vmul.f32 %v653, %v852
        %v888 = vmul.f32 %v656, %v854
        %v889 = vmul.f32 %v661, %v856
        %v890 = vmul.f32 %v664, %v858
        %v891 = vpack.c.bf16 %v860, %v859
        %v892 = vpack.c.bf16 %v862, %v861
        %v893 = vpack.c.bf16 %v864, %v863
        %v894 = vpack.c.bf16 %v866, %v865
        %v895 = vpack.c.bf16 %v868, %v867
        %v896 = vpack.c.bf16 %v870, %v869
        %v897 = vpack.c.bf16 %v872, %v871
        %v898 = vpack.c.bf16 %v874, %v873
        %v899 = vpack.c.bf16 %v876, %v875
        %v900 = vpack.c.bf16 %v878, %v877
        %v901 = vpack.c.bf16 %v880, %v879
        %v902 = vpack.c.bf16 %v882, %v881
        %v903 = vpack.c.bf16 %v884, %v883
        %v904 = vpack.c.bf16 %v886, %v885
        %v905 = vpack.c.bf16 %v888, %v887
        %v906 = vpack.c.bf16 %v890, %v889
        %v907 = vlaneseq
        %v908 = vshrl.u32 %v907, 7
        %v909 = vadd.s32 %v908, 8
        %v910 = vadd.s32 %v908, 16
        %v911 = vadd.s32 %v908, 24
        %v912 = vadd.s32 %v908, 32
        %v913 = vadd.s32 %v908, 40
        %v914 = vadd.s32 %v908, 48
        %v915 = vadd.s32 %v908, 56
        %v916 = vadd.s32 %v908, 64
        %v917 = vadd.s32 %v908, 72
        %v918 = vadd.s32 %v908, 80
        %v919 = vadd.s32 %v908, 88
        %v920 = vadd.s32 %v908, 96
        %v921 = vadd.s32 %v908, 104
        %v922 = vadd.s32 %v908, 112
        %v923 = vadd.s32 %v908, 120
        %v924 = vadd.s32 %v908, 128
        %v925 = vadd.s32 %v908, 136
        %v926 = vadd.s32 %v908, 144
        %v927 = vadd.s32 %v908, 152
        %v928 = vadd.s32 %v908, 160
        %v929 = vadd.s32 %v908, 168
        %v930 = vadd.s32 %v908, 176
        %v931 = vadd.s32 %v908, 184
        %v932 = vadd.s32 %v908, 192
        %v933 = vadd.s32 %v908, 200
        %v934 = vadd.s32 %v908, 208
        %v935 = vadd.s32 %v908, 216
        %v936 = vadd.s32 %v908, 224
        %v937 = vadd.s32 %v908, 232
        %v938 = vadd.s32 %v908, 240
        %v939 = vadd.s32 %v908, 248
        %vm940 = vcmp.lt.s32.totalorder %v908, 0
        %v941 = vsub.s32 0, %v908
        %v942 = vsel %vm940, %v941, %v908
        %v943 = vshrl.u32 %v942, 4
        %v944 = vand.u32 %v942, 15
        %v945 = vsub.s32 0, %v944
        %v946 = vsel %vm940, %v945, %v944
        %vm947 = vcmp.lt.s32.totalorder %v909, 0
        %v948 = vsub.s32 0, %v909
        %v949 = vsel %vm947, %v948, %v909
        %v950 = vshrl.u32 %v949, 4
        %v951 = vand.u32 %v949, 15
        %v952 = vsub.s32 0, %v951
        %v953 = vsel %vm947, %v952, %v951
        %vm954 = vcmp.lt.s32.totalorder %v910, 0
        %v955 = vsub.s32 0, %v910
        %v956 = vsel %vm954, %v955, %v910
        %v957 = vshrl.u32 %v956, 4
        %v958 = vand.u32 %v956, 15
        %v959 = vsub.s32 0, %v958
        %v960 = vsel %vm954, %v959, %v958
        %vm961 = vcmp.lt.s32.totalorder %v911, 0
        %v962 = vsub.s32 0, %v911
        %v963 = vsel %vm961, %v962, %v911
        %v964 = vshrl.u32 %v963, 4
        %v965 = vand.u32 %v963, 15
        %v966 = vsub.s32 0, %v965
        %v967 = vsel %vm961, %v966, %v965
        %vm968 = vcmp.lt.s32.totalorder %v912, 0
        %v969 = vsub.s32 0, %v912
        %v970 = vsel %vm968, %v969, %v912
        %v971 = vshrl.u32 %v970, 4
        %v972 = vand.u32 %v970, 15
        %v973 = vsub.s32 0, %v972
        %v974 = vsel %vm968, %v973, %v972
        %vm975 = vcmp.lt.s32.totalorder %v913, 0
        %v976 = vsub.s32 0, %v913
        %v977 = vsel %vm975, %v976, %v913
        %v978 = vshrl.u32 %v977, 4
        %v979 = vand.u32 %v977, 15
        %v980 = vsub.s32 0, %v979
        %v981 = vsel %vm975, %v980, %v979
        %vm982 = vcmp.lt.s32.totalorder %v914, 0
        %v983 = vsub.s32 0, %v914
        %v984 = vsel %vm982, %v983, %v914
        %v985 = vshrl.u32 %v984, 4
        %v986 = vand.u32 %v984, 15
        %v987 = vsub.s32 0, %v986
        %v988 = vsel %vm982, %v987, %v986
        %vm989 = vcmp.lt.s32.totalorder %v915, 0
        %v990 = vsub.s32 0, %v915
        %v991 = vsel %vm989, %v990, %v915
        %v992 = vshrl.u32 %v991, 4
        %v993 = vand.u32 %v991, 15
        %v994 = vsub.s32 0, %v993
        %v995 = vsel %vm989, %v994, %v993
        %vm996 = vcmp.lt.s32.totalorder %v916, 0
        %v997 = vsub.s32 0, %v916
        %v998 = vsel %vm996, %v997, %v916
        %v999 = vshrl.u32 %v998, 4
        %v1000 = vand.u32 %v998, 15
        %v1001 = vsub.s32 0, %v1000
        %v1002 = vsel %vm996, %v1001, %v1000
        %vm1003 = vcmp.lt.s32.totalorder %v917, 0
        %v1004 = vsub.s32 0, %v917
        %v1005 = vsel %vm1003, %v1004, %v917
        %v1006 = vshrl.u32 %v1005, 4
        %v1007 = vand.u32 %v1005, 15
        %v1008 = vsub.s32 0, %v1007
        %v1009 = vsel %vm1003, %v1008, %v1007
        %vm1010 = vcmp.lt.s32.totalorder %v918, 0
        %v1011 = vsub.s32 0, %v918
        %v1012 = vsel %vm1010, %v1011, %v918
        %v1013 = vshrl.u32 %v1012, 4
        %v1014 = vand.u32 %v1012, 15
        %v1015 = vsub.s32 0, %v1014
        %v1016 = vsel %vm1010, %v1015, %v1014
        %vm1017 = vcmp.lt.s32.totalorder %v919, 0
        %v1018 = vsub.s32 0, %v919
        %v1019 = vsel %vm1017, %v1018, %v919
        %v1020 = vshrl.u32 %v1019, 4
        %v1021 = vand.u32 %v1019, 15
        %v1022 = vsub.s32 0, %v1021
        %v1023 = vsel %vm1017, %v1022, %v1021
        %vm1024 = vcmp.lt.s32.totalorder %v920, 0
        %v1025 = vsub.s32 0, %v920
        %v1026 = vsel %vm1024, %v1025, %v920
        %v1027 = vshrl.u32 %v1026, 4
        %v1028 = vand.u32 %v1026, 15
        %v1029 = vsub.s32 0, %v1028
        %v1030 = vsel %vm1024, %v1029, %v1028
        %vm1031 = vcmp.lt.s32.totalorder %v921, 0
        %v1032 = vsub.s32 0, %v921
        %v1033 = vsel %vm1031, %v1032, %v921
        %v1034 = vshrl.u32 %v1033, 4
        %v1035 = vand.u32 %v1033, 15
        %v1036 = vsub.s32 0, %v1035
        %v1037 = vsel %vm1031, %v1036, %v1035
        %vm1038 = vcmp.lt.s32.totalorder %v922, 0
        %v1039 = vsub.s32 0, %v922
        %v1040 = vsel %vm1038, %v1039, %v922
        %v1041 = vshrl.u32 %v1040, 4
        %v1042 = vand.u32 %v1040, 15
        %v1043 = vsub.s32 0, %v1042
        %v1044 = vsel %vm1038, %v1043, %v1042
        %vm1045 = vcmp.lt.s32.totalorder %v923, 0
        %v1046 = vsub.s32 0, %v923
        %v1047 = vsel %vm1045, %v1046, %v923
        %v1048 = vshrl.u32 %v1047, 4
        %v1049 = vand.u32 %v1047, 15
        %v1050 = vsub.s32 0, %v1049
        %v1051 = vsel %vm1045, %v1050, %v1049
        %vm1052 = vcmp.lt.s32.totalorder %v924, 0
        %v1053 = vsub.s32 0, %v924
        %v1054 = vsel %vm1052, %v1053, %v924
        %v1055 = vshrl.u32 %v1054, 4
        %v1056 = vand.u32 %v1054, 15
        %v1057 = vsub.s32 0, %v1056
        %v1058 = vsel %vm1052, %v1057, %v1056
        %vm1059 = vcmp.lt.s32.totalorder %v925, 0
        %v1060 = vsub.s32 0, %v925
        %v1061 = vsel %vm1059, %v1060, %v925
        %v1062 = vshrl.u32 %v1061, 4
        %v1063 = vand.u32 %v1061, 15
        %v1064 = vsub.s32 0, %v1063
        %v1065 = vsel %vm1059, %v1064, %v1063
        %vm1066 = vcmp.lt.s32.totalorder %v926, 0
        %v1067 = vsub.s32 0, %v926
        %v1068 = vsel %vm1066, %v1067, %v926
        %v1069 = vshrl.u32 %v1068, 4
        %v1070 = vand.u32 %v1068, 15
        %v1071 = vsub.s32 0, %v1070
        %v1072 = vsel %vm1066, %v1071, %v1070
        %vm1073 = vcmp.lt.s32.totalorder %v927, 0
        %v1074 = vsub.s32 0, %v927
        %v1075 = vsel %vm1073, %v1074, %v927
        %v1076 = vshrl.u32 %v1075, 4
        %v1077 = vand.u32 %v1075, 15
        %v1078 = vsub.s32 0, %v1077
        %v1079 = vsel %vm1073, %v1078, %v1077
        %vm1080 = vcmp.lt.s32.totalorder %v928, 0
        %v1081 = vsub.s32 0, %v928
        %v1082 = vsel %vm1080, %v1081, %v928
        %v1083 = vshrl.u32 %v1082, 4
        %v1084 = vand.u32 %v1082, 15
        %v1085 = vsub.s32 0, %v1084
        %v1086 = vsel %vm1080, %v1085, %v1084
        %vm1087 = vcmp.lt.s32.totalorder %v929, 0
        %v1088 = vsub.s32 0, %v929
        %v1089 = vsel %vm1087, %v1088, %v929
        %v1090 = vshrl.u32 %v1089, 4
        %v1091 = vand.u32 %v1089, 15
        %v1092 = vsub.s32 0, %v1091
        %v1093 = vsel %vm1087, %v1092, %v1091
        %vm1094 = vcmp.lt.s32.totalorder %v930, 0
        %v1095 = vsub.s32 0, %v930
        %v1096 = vsel %vm1094, %v1095, %v930
        %v1097 = vshrl.u32 %v1096, 4
        %v1098 = vand.u32 %v1096, 15
        %v1099 = vsub.s32 0, %v1098
        %v1100 = vsel %vm1094, %v1099, %v1098
        %vm1101 = vcmp.lt.s32.totalorder %v931, 0
        %v1102 = vsub.s32 0, %v931
        %v1103 = vsel %vm1101, %v1102, %v931
        %v1104 = vshrl.u32 %v1103, 4
        %v1105 = vand.u32 %v1103, 15
        %v1106 = vsub.s32 0, %v1105
        %v1107 = vsel %vm1101, %v1106, %v1105
        %vm1108 = vcmp.lt.s32.totalorder %v932, 0
        %v1109 = vsub.s32 0, %v932
        %v1110 = vsel %vm1108, %v1109, %v932
        %v1111 = vshrl.u32 %v1110, 4
        %v1112 = vand.u32 %v1110, 15
        %v1113 = vsub.s32 0, %v1112
        %v1114 = vsel %vm1108, %v1113, %v1112
        %vm1115 = vcmp.lt.s32.totalorder %v933, 0
        %v1116 = vsub.s32 0, %v933
        %v1117 = vsel %vm1115, %v1116, %v933
        %v1118 = vshrl.u32 %v1117, 4
        %v1119 = vand.u32 %v1117, 15
        %v1120 = vsub.s32 0, %v1119
        %v1121 = vsel %vm1115, %v1120, %v1119
        %vm1122 = vcmp.lt.s32.totalorder %v934, 0
        %v1123 = vsub.s32 0, %v934
        %v1124 = vsel %vm1122, %v1123, %v934
        %v1125 = vshrl.u32 %v1124, 4
        %v1126 = vand.u32 %v1124, 15
        %v1127 = vsub.s32 0, %v1126
        %v1128 = vsel %vm1122, %v1127, %v1126
        %vm1129 = vcmp.lt.s32.totalorder %v935, 0
        %v1130 = vsub.s32 0, %v935
        %v1131 = vsel %vm1129, %v1130, %v935
        %v1132 = vshrl.u32 %v1131, 4
        %v1133 = vand.u32 %v1131, 15
        %v1134 = vsub.s32 0, %v1133
        %v1135 = vsel %vm1129, %v1134, %v1133
        %vm1136 = vcmp.lt.s32.totalorder %v936, 0
        %v1137 = vsub.s32 0, %v936
        %v1138 = vsel %vm1136, %v1137, %v936
        %v1139 = vshrl.u32 %v1138, 4
        %v1140 = vand.u32 %v1138, 15
        %v1141 = vsub.s32 0, %v1140
        %v1142 = vsel %vm1136, %v1141, %v1140
        %vm1143 = vcmp.lt.s32.totalorder %v937, 0
        %v1144 = vsub.s32 0, %v937
        %v1145 = vsel %vm1143, %v1144, %v937
        %v1146 = vshrl.u32 %v1145, 4
        %v1147 = vand.u32 %v1145, 15
        %v1148 = vsub.s32 0, %v1147
        %v1149 = vsel %vm1143, %v1148, %v1147
        %vm1150 = vcmp.lt.s32.totalorder %v938, 0
        %v1151 = vsub.s32 0, %v938
        %v1152 = vsel %vm1150, %v1151, %v938
        %v1153 = vshrl.u32 %v1152, 4
        %v1154 = vand.u32 %v1152, 15
        %v1155 = vsub.s32 0, %v1154
        %v1156 = vsel %vm1150, %v1155, %v1154
        %vm1157 = vcmp.lt.s32.totalorder %v939, 0
        %v1158 = vsub.s32 0, %v939
        %v1159 = vsel %vm1157, %v1158, %v939
        %v1160 = vshrl.u32 %v1159, 4
        %v1161 = vand.u32 %v1159, 15
        %v1162 = vsub.s32 0, %v1161
        %v1163 = vsel %vm1157, %v1162, %v1161
        %vm1164 = vcmp.ne.s32.totalorder %v946, 0
        %vm1165 = vcmp.ne.s32.totalorder %v953, 0
        %vm1166 = vcmp.ne.s32.totalorder %v960, 0
        %vm1167 = vcmp.ne.s32.totalorder %v967, 0
        %vm1168 = vcmp.ne.s32.totalorder %v974, 0
        %vm1169 = vcmp.ne.s32.totalorder %v981, 0
        %vm1170 = vcmp.ne.s32.totalorder %v988, 0
        %vm1171 = vcmp.ne.s32.totalorder %v995, 0
        %vm1172 = vcmp.ne.s32.totalorder %v1002, 0
        %vm1173 = vcmp.ne.s32.totalorder %v1009, 0
        %vm1174 = vcmp.ne.s32.totalorder %v1016, 0
        %vm1175 = vcmp.ne.s32.totalorder %v1023, 0
        %vm1176 = vcmp.ne.s32.totalorder %v1030, 0
        %vm1177 = vcmp.ne.s32.totalorder %v1037, 0
        %vm1178 = vcmp.ne.s32.totalorder %v1044, 0
        %vm1179 = vcmp.ne.s32.totalorder %v1051, 0
        %vm1180 = vcmp.ne.s32.totalorder %v1058, 0
        %vm1181 = vcmp.ne.s32.totalorder %v1065, 0
        %vm1182 = vcmp.ne.s32.totalorder %v1072, 0
        %vm1183 = vcmp.ne.s32.totalorder %v1079, 0
        %vm1184 = vcmp.ne.s32.totalorder %v1086, 0
        %vm1185 = vcmp.ne.s32.totalorder %v1093, 0
        %vm1186 = vcmp.ne.s32.totalorder %v1100, 0
        %vm1187 = vcmp.ne.s32.totalorder %v1107, 0
        %vm1188 = vcmp.ne.s32.totalorder %v1114, 0
        %vm1189 = vcmp.ne.s32.totalorder %v1121, 0
        %vm1190 = vcmp.ne.s32.totalorder %v1128, 0
        %vm1191 = vcmp.ne.s32.totalorder %v1135, 0
        %vm1192 = vcmp.ne.s32.totalorder %v1142, 0
        %vm1193 = vcmp.ne.s32.totalorder %v1149, 0
        %vm1194 = vcmp.ne.s32.totalorder %v1156, 0
        %vm1195 = vcmp.ne.s32.totalorder %v1163, 0
        %vm1196 = vcmp.lt.s32.totalorder %v946, 0
        %vm1197 = vcmp.lt.s32.totalorder %v953, 0
        %vm1198 = vcmp.lt.s32.totalorder %v960, 0
        %vm1199 = vcmp.lt.s32.totalorder %v967, 0
        %vm1200 = vcmp.lt.s32.totalorder %v974, 0
        %vm1201 = vcmp.lt.s32.totalorder %v981, 0
        %vm1202 = vcmp.lt.s32.totalorder %v988, 0
        %vm1203 = vcmp.lt.s32.totalorder %v995, 0
        %vm1204 = vcmp.lt.s32.totalorder %v1002, 0
        %vm1205 = vcmp.lt.s32.totalorder %v1009, 0
        %vm1206 = vcmp.lt.s32.totalorder %v1016, 0
        %vm1207 = vcmp.lt.s32.totalorder %v1023, 0
        %vm1208 = vcmp.lt.s32.totalorder %v1030, 0
        %vm1209 = vcmp.lt.s32.totalorder %v1037, 0
        %vm1210 = vcmp.lt.s32.totalorder %v1044, 0
        %vm1211 = vcmp.lt.s32.totalorder %v1051, 0
        %vm1212 = vcmp.lt.s32.totalorder %v1058, 0
        %vm1213 = vcmp.lt.s32.totalorder %v1065, 0
        %vm1214 = vcmp.lt.s32.totalorder %v1072, 0
        %vm1215 = vcmp.lt.s32.totalorder %v1079, 0
        %vm1216 = vcmp.lt.s32.totalorder %v1086, 0
        %vm1217 = vcmp.lt.s32.totalorder %v1093, 0
        %vm1218 = vcmp.lt.s32.totalorder %v1100, 0
        %vm1219 = vcmp.lt.s32.totalorder %v1107, 0
        %vm1220 = vcmp.lt.s32.totalorder %v1114, 0
        %vm1221 = vcmp.lt.s32.totalorder %v1121, 0
        %vm1222 = vcmp.lt.s32.totalorder %v1128, 0
        %vm1223 = vcmp.lt.s32.totalorder %v1135, 0
        %vm1224 = vcmp.lt.s32.totalorder %v1142, 0
        %vm1225 = vcmp.lt.s32.totalorder %v1149, 0
        %vm1226 = vcmp.lt.s32.totalorder %v1156, 0
        %vm1227 = vcmp.lt.s32.totalorder %v1163, 0
        %vm1228 = vmand %vm1196, %vm1164
        %vm1229 = vmand %vm1197, %vm1165
        %vm1230 = vmand %vm1198, %vm1166
        %vm1231 = vmand %vm1199, %vm1167
        %vm1232 = vmand %vm1200, %vm1168
        %vm1233 = vmand %vm1201, %vm1169
        %vm1234 = vmand %vm1202, %vm1170
        %vm1235 = vmand %vm1203, %vm1171
        %vm1236 = vmand %vm1204, %vm1172
        %vm1237 = vmand %vm1205, %vm1173
        %vm1238 = vmand %vm1206, %vm1174
        %vm1239 = vmand %vm1207, %vm1175
        %vm1240 = vmand %vm1208, %vm1176
        %vm1241 = vmand %vm1209, %vm1177
        %vm1242 = vmand %vm1210, %vm1178
        %vm1243 = vmand %vm1211, %vm1179
        %vm1244 = vmand %vm1212, %vm1180
        %vm1245 = vmand %vm1213, %vm1181
        %vm1246 = vmand %vm1214, %vm1182
        %vm1247 = vmand %vm1215, %vm1183
        %vm1248 = vmand %vm1216, %vm1184
        %vm1249 = vmand %vm1217, %vm1185
        %vm1250 = vmand %vm1218, %vm1186
        %vm1251 = vmand %vm1219, %vm1187
        %vm1252 = vmand %vm1220, %vm1188
        %vm1253 = vmand %vm1221, %vm1189
        %vm1254 = vmand %vm1222, %vm1190
        %vm1255 = vmand %vm1223, %vm1191
        %vm1256 = vmand %vm1224, %vm1192
        %vm1257 = vmand %vm1225, %vm1193
        %vm1258 = vmand %vm1226, %vm1194
        %vm1259 = vmand %vm1227, %vm1195
        %v1260 = vadd.s32 %v946, 16
        %v1261 = vadd.s32 %v953, 16
        %v1262 = vadd.s32 %v960, 16
        %v1263 = vadd.s32 %v967, 16
        %v1264 = vadd.s32 %v974, 16
        %v1265 = vadd.s32 %v981, 16
        %v1266 = vadd.s32 %v988, 16
        %v1267 = vadd.s32 %v995, 16
        %v1268 = vadd.s32 %v1002, 16
        %v1269 = vadd.s32 %v1009, 16
        %v1270 = vadd.s32 %v1016, 16
        %v1271 = vadd.s32 %v1023, 16
        %v1272 = vadd.s32 %v1030, 16
        %v1273 = vadd.s32 %v1037, 16
        %v1274 = vadd.s32 %v1044, 16
        %v1275 = vadd.s32 %v1051, 16
        %v1276 = vadd.s32 %v1058, 16
        %v1277 = vadd.s32 %v1065, 16
        %v1278 = vadd.s32 %v1072, 16
        %v1279 = vadd.s32 %v1079, 16
        %v1280 = vadd.s32 %v1086, 16
        %v1281 = vadd.s32 %v1093, 16
        %v1282 = vadd.s32 %v1100, 16
        %v1283 = vadd.s32 %v1107, 16
        %v1284 = vadd.s32 %v1114, 16
        %v1285 = vadd.s32 %v1121, 16
        %v1286 = vadd.s32 %v1128, 16
        %v1287 = vadd.s32 %v1135, 16
        %v1288 = vadd.s32 %v1142, 16
        %v1289 = vadd.s32 %v1149, 16
        %v1290 = vadd.s32 %v1156, 16
        %v1291 = vadd.s32 %v1163, 16
        %v1292 = vsel %vm1228, %v1260, %v946
        %v1293 = vsel %vm1229, %v1261, %v953
        %v1294 = vsel %vm1230, %v1262, %v960
        %v1295 = vsel %vm1231, %v1263, %v967
        %v1296 = vsel %vm1232, %v1264, %v974
        %v1297 = vsel %vm1233, %v1265, %v981
        %v1298 = vsel %vm1234, %v1266, %v988
        %v1299 = vsel %vm1235, %v1267, %v995
        %v1300 = vsel %vm1236, %v1268, %v1002
        %v1301 = vsel %vm1237, %v1269, %v1009
        %v1302 = vsel %vm1238, %v1270, %v1016
        %v1303 = vsel %vm1239, %v1271, %v1023
        %v1304 = vsel %vm1240, %v1272, %v1030
        %v1305 = vsel %vm1241, %v1273, %v1037
        %v1306 = vsel %vm1242, %v1274, %v1044
        %v1307 = vsel %vm1243, %v1275, %v1051
        %v1308 = vsel %vm1244, %v1276, %v1058
        %v1309 = vsel %vm1245, %v1277, %v1065
        %v1310 = vsel %vm1246, %v1278, %v1072
        %v1311 = vsel %vm1247, %v1279, %v1079
        %v1312 = vsel %vm1248, %v1280, %v1086
        %v1313 = vsel %vm1249, %v1281, %v1093
        %v1314 = vsel %vm1250, %v1282, %v1100
        %v1315 = vsel %vm1251, %v1283, %v1107
        %v1316 = vsel %vm1252, %v1284, %v1114
        %v1317 = vsel %vm1253, %v1285, %v1121
        %v1318 = vsel %vm1254, %v1286, %v1128
        %v1319 = vsel %vm1255, %v1287, %v1135
        %v1320 = vsel %vm1256, %v1288, %v1142
        %v1321 = vsel %vm1257, %v1289, %v1149
        %v1322 = vsel %vm1258, %v1290, %v1156
        %v1323 = vsel %vm1259, %v1291, %v1163
        %vm1324 = vcmp.ge.s32.totalorder %v1292, 1
        %vm1325 = vcmp.ge.s32.totalorder %v1293, 1
        %vm1326 = vcmp.ge.s32.totalorder %v1294, 1
        %vm1327 = vcmp.ge.s32.totalorder %v1295, 1
        %vm1328 = vcmp.ge.s32.totalorder %v1296, 1
        %vm1329 = vcmp.ge.s32.totalorder %v1297, 1
        %vm1330 = vcmp.ge.s32.totalorder %v1298, 1
        %vm1331 = vcmp.ge.s32.totalorder %v1299, 1
        %vm1332 = vcmp.ge.s32.totalorder %v1300, 1
        %vm1333 = vcmp.ge.s32.totalorder %v1301, 1
        %vm1334 = vcmp.ge.s32.totalorder %v1302, 1
        %vm1335 = vcmp.ge.s32.totalorder %v1303, 1
        %vm1336 = vcmp.ge.s32.totalorder %v1304, 1
        %vm1337 = vcmp.ge.s32.totalorder %v1305, 1
        %vm1338 = vcmp.ge.s32.totalorder %v1306, 1
        %vm1339 = vcmp.ge.s32.totalorder %v1307, 1
        %vm1340 = vcmp.ge.s32.totalorder %v1308, 1
        %vm1341 = vcmp.ge.s32.totalorder %v1309, 1
        %vm1342 = vcmp.ge.s32.totalorder %v1310, 1
        %vm1343 = vcmp.ge.s32.totalorder %v1311, 1
        %vm1344 = vcmp.ge.s32.totalorder %v1312, 1
        %vm1345 = vcmp.ge.s32.totalorder %v1313, 1
        %vm1346 = vcmp.ge.s32.totalorder %v1314, 1
        %vm1347 = vcmp.ge.s32.totalorder %v1315, 1
        %vm1348 = vcmp.ge.s32.totalorder %v1316, 1
        %vm1349 = vcmp.ge.s32.totalorder %v1317, 1
        %vm1350 = vcmp.ge.s32.totalorder %v1318, 1
        %vm1351 = vcmp.ge.s32.totalorder %v1319, 1
        %vm1352 = vcmp.ge.s32.totalorder %v1320, 1
        %vm1353 = vcmp.ge.s32.totalorder %v1321, 1
        %vm1354 = vcmp.ge.s32.totalorder %v1322, 1
        %vm1355 = vcmp.ge.s32.totalorder %v1323, 1
        %vm1356 = vcmp.le.s32.totalorder %v1292, 14
        %vm1357 = vcmp.le.s32.totalorder %v1293, 14
        %vm1358 = vcmp.le.s32.totalorder %v1294, 14
        %vm1359 = vcmp.le.s32.totalorder %v1295, 14
        %vm1360 = vcmp.le.s32.totalorder %v1296, 14
        %vm1361 = vcmp.le.s32.totalorder %v1297, 14
        %vm1362 = vcmp.le.s32.totalorder %v1298, 14
        %vm1363 = vcmp.le.s32.totalorder %v1299, 14
        %vm1364 = vcmp.le.s32.totalorder %v1300, 14
        %vm1365 = vcmp.le.s32.totalorder %v1301, 14
        %vm1366 = vcmp.le.s32.totalorder %v1302, 14
        %vm1367 = vcmp.le.s32.totalorder %v1303, 14
        %vm1368 = vcmp.le.s32.totalorder %v1304, 14
        %vm1369 = vcmp.le.s32.totalorder %v1305, 14
        %vm1370 = vcmp.le.s32.totalorder %v1306, 14
        %vm1371 = vcmp.le.s32.totalorder %v1307, 14
        %vm1372 = vcmp.le.s32.totalorder %v1308, 14
        %vm1373 = vcmp.le.s32.totalorder %v1309, 14
        %vm1374 = vcmp.le.s32.totalorder %v1310, 14
        %vm1375 = vcmp.le.s32.totalorder %v1311, 14
        %vm1376 = vcmp.le.s32.totalorder %v1312, 14
        %vm1377 = vcmp.le.s32.totalorder %v1313, 14
        %vm1378 = vcmp.le.s32.totalorder %v1314, 14
        %vm1379 = vcmp.le.s32.totalorder %v1315, 14
        %vm1380 = vcmp.le.s32.totalorder %v1316, 14
        %vm1381 = vcmp.le.s32.totalorder %v1317, 14
        %vm1382 = vcmp.le.s32.totalorder %v1318, 14
        %vm1383 = vcmp.le.s32.totalorder %v1319, 14
        %vm1384 = vcmp.le.s32.totalorder %v1320, 14
        %vm1385 = vcmp.le.s32.totalorder %v1321, 14
        %vm1386 = vcmp.le.s32.totalorder %v1322, 14
        %vm1387 = vcmp.le.s32.totalorder %v1323, 14
        %v1388 = vld [vmem:[%s3] sm:$0xf]
        %v1389 = vld [vmem:[%s3 + $0x4] sm:$0xf]
        %v1390 = vld [vmem:[%s3 + $0x8] sm:$0xf]
        %v1391 = vld [vmem:[%s3 + $0xc] sm:$0xf]
        %v1392 = vld [vmem:[%s3 + $0x10] sm:$0xf]
        %v1393 = vld [vmem:[%s3 + $0x14] sm:$0xf]
        %v1394 = vld [vmem:[%s3 + $0x18] sm:$0xf]
        %v1395 = vld [vmem:[%s3 + $0x1c] sm:$0xf]
        %v1396 = vld [vmem:[%s4] sm:$0x1]
        %v1398 = vlaneseq
        %v1399 = vshrl.u32 %v1398, 7
        %v1400 = vsub.s32 0, %v1399
        %v1401 = vrot.slane %v1396, %v1400
        %v1411 = vunpack.c.l.b16 %v1388
        %v1412 = vunpack.c.l.b16 %v1389
        %v1413 = vunpack.c.l.b16 %v1390
        %v1414 = vunpack.c.l.b16 %v1391
        %v1415 = vunpack.c.l.b16 %v1392
        %v1416 = vunpack.c.l.b16 %v1393
        %v1417 = vunpack.c.l.b16 %v1394
        %v1418 = vunpack.c.l.b16 %v1395
        %v1419 = vpack.c.b16 %v1412, %v1411
        %v1420 = vpack.c.b16 %v1414, %v1413
        %v1421 = vpack.c.b16 %v1416, %v1415
        %v1422 = vpack.c.b16 %v1418, %v1417
        %vm1427 = vcmask 523264
        %v1429 = vsel %vm1427, %v891, 0
        %v1432 = vsel %vm1427, %v892, 0
        %v1435 = vsel %vm1427, %v893, 0
        %v1438 = vsel %vm1427, %v894, 0
        %v1441 = vsel %vm1427, %v895, 0
        %v1444 = vsel %vm1427, %v896, 0
        %v1447 = vsel %vm1427, %v897, 0
        %v1450 = vsel %vm1427, %v898, 0
        %v1453 = vsel %vm1427, %v899, 0
        %v1456 = vsel %vm1427, %v900, 0
        %v1459 = vsel %vm1427, %v901, 0
        %v1462 = vsel %vm1427, %v902, 0
        %v1465 = vsel %vm1427, %v903, 0
        %v1468 = vsel %vm1427, %v904, 0
        %v1471 = vsel %vm1427, %v905, 0
        %v1474 = vsel %vm1427, %v906, 0
        %1476 = vmatprep.subr.bf16.mxu0 0
        %1477 = vmatpush1.bf16.msra.mxu0 %v1419
        %1478 = vmatprep.subr.bf16.mxu0 0
        %1479 = vmatpush1.bf16.msra.mxu0 %v1420
        %1480 = vmatprep.subr.bf16.mxu0 0
        %1481 = vmatpush1.bf16.msra.mxu0 %v1421
        %1482 = vmatprep.subr.bf16.mxu0 0
        %1483 = vmatpush1.bf16.msra.mxu0 %v1422
        %1484 = vmatprep.subr.bf16.mxu0 0
        %1485 = vmatpush1.bf16.msra.mxu0 0
        %1486 = vmatprep.subr.bf16.mxu0 0
        %1487 = vmatpush1.bf16.msra.mxu0 0
        %1488 = vmatprep.subr.bf16.mxu0 0
        %1489 = vmatpush1.bf16.msra.mxu0 0
        %1490 = vmatprep.subr.bf16.mxu0 0
        %1491 = vmatpush1.bf16.msra.mxu0 0
        %1492 = vmatprep.subr.bf16.mxu0 0
        %1493 = vmatpush1.bf16.msra.mxu0 0
        %1494 = vmatprep.subr.bf16.mxu0 0
        %1495 = vmatpush1.bf16.msra.mxu0 0
        %1496 = vmatprep.subr.bf16.mxu0 0
        %1497 = vmatpush1.bf16.msra.mxu0 0
        %1498 = vmatprep.subr.bf16.mxu0 0
        %1499 = vmatpush1.bf16.msra.mxu0 0
        %1500 = vmatprep.subr.bf16.mxu0 0
        %1501 = vmatpush1.bf16.msra.mxu0 0
        %1502 = vmatprep.subr.bf16.mxu0 0
        %1503 = vmatpush1.bf16.msra.mxu0 0
        %1504 = vmatprep.subr.bf16.mxu0 0
        %1505 = vmatpush1.bf16.msra.mxu0 0
        %1506 = vmatprep.subr.bf16.mxu0 0
        %1507 = vmatpush1.bf16.msra.mxu0 0
        %1508 = vmatprep.mubr.bf16.mxu0 0
        %1509 = vmatmul.mubr.bf16.gmra.mrb[0].mxu0 %v1429
        %v1510 = vpop.f32.mrb[0].mxu0
        %v1511 = vadd.f32 %v1401, %v1510
        %v1512 = vpop.f32.mrb[0].mxu0
        %v1513 = vpop.f32.mrb[0].mxu0
        %v1514 = vadd.f32 %v1401, %v1513
        %v1515 = vpop.f32.mrb[0].mxu0
        %1516 = vmatprep.mubr.bf16.mxu0 0
        %1517 = vmatmul.mubr.bf16.gmra.mrb[0].mxu0 %v1432
        %v1518 = vpop.f32.mrb[0].mxu0
        %v1519 = vadd.f32 %v1401, %v1518
        %v1520 = vpop.f32.mrb[0].mxu0
        %v1521 = vpop.f32.mrb[0].mxu0
        %v1522 = vadd.f32 %v1401, %v1521
        %v1523 = vpop.f32.mrb[0].mxu0
        %1524 = vmatprep.mubr.bf16.mxu0 0
        %1525 = vmatmul.mubr.bf16.gmra.mrb[0].mxu0 %v1435
        %v1526 = vpop.f32.mrb[0].mxu0
        %v1527 = vadd.f32 %v1401, %v1526
        %v1528 = vpop.f32.mrb[0].mxu0
        %v1529 = vpop.f32.mrb[0].mxu0
        %v1530 = vadd.f32 %v1401, %v1529
        %v1531 = vpop.f32.mrb[0].mxu0
        %1532 = vmatprep.mubr.bf16.mxu0 0
        %1533 = vmatmul.mubr.bf16.gmra.mrb[0].mxu0 %v1438
        %v1534 = vpop.f32.mrb[0].mxu0
        %v1535 = vadd.f32 %v1401, %v1534
        %v1536 = vpop.f32.mrb[0].mxu0
        %v1537 = vpop.f32.mrb[0].mxu0
        %v1538 = vadd.f32 %v1401, %v1537
        %v1539 = vpop.f32.mrb[0].mxu0
        %1540 = vmatprep.mubr.bf16.mxu0 0
        %1541 = vmatmul.mubr.bf16.gmra.mrb[0].mxu0 %v1441
        %v1542 = vpop.f32.mrb[0].mxu0
        %v1543 = vadd.f32 %v1401, %v1542
        %v1544 = vpop.f32.mrb[0].mxu0
        %v1545 = vpop.f32.mrb[0].mxu0
        %v1546 = vadd.f32 %v1401, %v1545
        %v1547 = vpop.f32.mrb[0].mxu0
        %1548 = vmatprep.mubr.bf16.mxu0 0
        %1549 = vmatmul.mubr.bf16.gmra.mrb[0].mxu0 %v1444
        %v1550 = vpop.f32.mrb[0].mxu0
        %v1551 = vadd.f32 %v1401, %v1550
        %v1552 = vpop.f32.mrb[0].mxu0
        %v1553 = vpop.f32.mrb[0].mxu0
        %v1554 = vadd.f32 %v1401, %v1553
        %v1555 = vpop.f32.mrb[0].mxu0
        %1556 = vmatprep.mubr.bf16.mxu0 0
        %1557 = vmatmul.mubr.bf16.gmra.mrb[0].mxu0 %v1447
        %v1558 = vpop.f32.mrb[0].mxu0
        %v1559 = vadd.f32 %v1401, %v1558
        %v1560 = vpop.f32.mrb[0].mxu0
        %v1561 = vpop.f32.mrb[0].mxu0
        %v1562 = vadd.f32 %v1401, %v1561
        %v1563 = vpop.f32.mrb[0].mxu0
        %1564 = vmatprep.mubr.bf16.mxu0 0
        %1565 = vmatmul.mubr.bf16.gmra.mrb[0].mxu0 %v1450
        %v1566 = vpop.f32.mrb[0].mxu0
        %v1567 = vadd.f32 %v1401, %v1566
        %v1568 = vpop.f32.mrb[0].mxu0
        %v1569 = vpop.f32.mrb[0].mxu0
        %v1570 = vadd.f32 %v1401, %v1569
        %v1571 = vpop.f32.mrb[0].mxu0
        %1572 = vmatprep.mubr.bf16.mxu0 0
        %1573 = vmatmul.mubr.bf16.gmra.mrb[0].mxu0 %v1453
        %v1574 = vpop.f32.mrb[0].mxu0
        %v1575 = vadd.f32 %v1401, %v1574
        %v1576 = vpop.f32.mrb[0].mxu0
        %v1577 = vpop.f32.mrb[0].mxu0
        %v1578 = vadd.f32 %v1401, %v1577
        %v1579 = vpop.f32.mrb[0].mxu0
        %1580 = vmatprep.mubr.bf16.mxu0 0
        %1581 = vmatmul.mubr.bf16.gmra.mrb[0].mxu0 %v1456
        %v1582 = vpop.f32.mrb[0].mxu0
        %v1583 = vadd.f32 %v1401, %v1582
        %v1584 = vpop.f32.mrb[0].mxu0
        %v1585 = vpop.f32.mrb[0].mxu0
        %v1586 = vadd.f32 %v1401, %v1585
        %v1587 = vpop.f32.mrb[0].mxu0
        %1588 = vmatprep.mubr.bf16.mxu0 0
        %1589 = vmatmul.mubr.bf16.gmra.mrb[0].mxu0 %v1459
        %v1590 = vpop.f32.mrb[0].mxu0
        %v1591 = vadd.f32 %v1401, %v1590
        %v1592 = vpop.f32.mrb[0].mxu0
        %v1593 = vpop.f32.mrb[0].mxu0
        %v1594 = vadd.f32 %v1401, %v1593
        %v1595 = vpop.f32.mrb[0].mxu0
        %1596 = vmatprep.mubr.bf16.mxu0 0
        %1597 = vmatmul.mubr.bf16.gmra.mrb[0].mxu0 %v1462
        %v1598 = vpop.f32.mrb[0].mxu0
        %v1599 = vadd.f32 %v1401, %v1598
        %v1600 = vpop.f32.mrb[0].mxu0
        %v1601 = vpop.f32.mrb[0].mxu0
        %v1602 = vadd.f32 %v1401, %v1601
        %v1603 = vpop.f32.mrb[0].mxu0
        %1604 = vmatprep.mubr.bf16.mxu0 0
        %1605 = vmatmul.mubr.bf16.gmra.mrb[0].mxu0 %v1465
        %v1606 = vpop.f32.mrb[0].mxu0
        %v1607 = vadd.f32 %v1401, %v1606
        %v1608 = vpop.f32.mrb[0].mxu0
        %v1609 = vpop.f32.mrb[0].mxu0
        %v1610 = vadd.f32 %v1401, %v1609
        %v1611 = vpop.f32.mrb[0].mxu0
        %1612 = vmatprep.mubr.bf16.mxu0 0
        %1613 = vmatmul.mubr.bf16.gmra.mrb[0].mxu0 %v1468
        %v1614 = vpop.f32.mrb[0].mxu0
        %v1615 = vadd.f32 %v1401, %v1614
        %v1616 = vpop.f32.mrb[0].mxu0
        %v1617 = vpop.f32.mrb[0].mxu0
        %v1618 = vadd.f32 %v1401, %v1617
        %v1619 = vpop.f32.mrb[0].mxu0
        %1620 = vmatprep.mubr.bf16.mxu0 0
        %1621 = vmatmul.mubr.bf16.gmra.mrb[0].mxu0 %v1471
        %v1622 = vpop.f32.mrb[0].mxu0
        %v1623 = vadd.f32 %v1401, %v1622
        %v1624 = vpop.f32.mrb[0].mxu0
        %v1625 = vpop.f32.mrb[0].mxu0
        %v1626 = vadd.f32 %v1401, %v1625
        %v1627 = vpop.f32.mrb[0].mxu0
        %1628 = vmatprep.mubr.bf16.mxu0 0
        %1629 = vmatmul.mubr.bf16.gmra.mrb[0].mxu0 %v1474
        %v1630 = vpop.f32.mrb[0].mxu0
        %v1631 = vadd.f32 %v1401, %v1630
        %v1632 = vpop.f32.mrb[0].mxu0
        %v1633 = vpop.f32.mrb[0].mxu0
        %v1634 = vadd.f32 %v1401, %v1633
        %v1635 = vpop.f32.mrb[0].mxu0
        %1636 = vdwg.mxu0
        %v1637 = vpack.c.bf16 %v1514, %v1511
        %v1638 = vpack.c.bf16 %v1522, %v1519
        %v1639 = vpack.c.bf16 %v1530, %v1527
        %v1640 = vpack.c.bf16 %v1538, %v1535
        %v1641 = vpack.c.bf16 %v1546, %v1543
        %v1642 = vpack.c.bf16 %v1554, %v1551
        %v1643 = vpack.c.bf16 %v1562, %v1559
        %v1644 = vpack.c.bf16 %v1570, %v1567
        %v1645 = vpack.c.bf16 %v1578, %v1575
        %v1646 = vpack.c.bf16 %v1586, %v1583
        %v1647 = vpack.c.bf16 %v1594, %v1591
        %v1648 = vpack.c.bf16 %v1602, %v1599
        %v1649 = vpack.c.bf16 %v1610, %v1607
        %v1650 = vpack.c.bf16 %v1618, %v1615
        %v1651 = vpack.c.bf16 %v1626, %v1623
        %v1652 = vpack.c.bf16 %v1634, %v1631
        %vm1653 = vsmask.f32 256
        %v1655 = vshrl.u32 %v1637, 16
        %v1657 = vrot.slane %v1655, 7
        %v1658 = vshll.u32 %v1637, 16
        %v1660 = vor.u32 %v1657, %v1658
        %v1662 = vshrl.u32 %v1638, 16
        %v1664 = vrot.slane %v1662, 7
        %v1665 = vshll.u32 %v1638, 16
        %v1667 = vor.u32 %v1664, %v1665
        %v1668 = vsel %vm1653, %v1657, %v1667
        %v1670 = vshrl.u32 %v1639, 16
        %v1672 = vrot.slane %v1670, 7
        %v1673 = vshll.u32 %v1639, 16
        %v1675 = vor.u32 %v1672, %v1673
        %v1676 = vsel %vm1653, %v1664, %v1675
        %v1678 = vshrl.u32 %v1640, 16
        %v1680 = vrot.slane %v1678, 7
        %v1681 = vshll.u32 %v1640, 16
        %v1683 = vor.u32 %v1680, %v1681
        %v1684 = vsel %vm1653, %v1672, %v1683
        %v1686 = vshrl.u32 %v1641, 16
        %v1688 = vrot.slane %v1686, 7
        %v1689 = vshll.u32 %v1641, 16
        %v1691 = vor.u32 %v1688, %v1689
        %v1692 = vsel %vm1653, %v1680, %v1691
        %v1694 = vshrl.u32 %v1642, 16
        %v1696 = vrot.slane %v1694, 7
        %v1697 = vshll.u32 %v1642, 16
        %v1699 = vor.u32 %v1696, %v1697
        %v1700 = vsel %vm1653, %v1688, %v1699
        %v1702 = vshrl.u32 %v1643, 16
        %v1704 = vrot.slane %v1702, 7
        %v1705 = vshll.u32 %v1643, 16
        %v1707 = vor.u32 %v1704, %v1705
        %v1708 = vsel %vm1653, %v1696, %v1707
        %v1710 = vshrl.u32 %v1644, 16
        %v1712 = vrot.slane %v1710, 7
        %v1713 = vshll.u32 %v1644, 16
        %v1715 = vor.u32 %v1712, %v1713
        %v1716 = vsel %vm1653, %v1704, %v1715
        %v1718 = vshrl.u32 %v1645, 16
        %v1720 = vrot.slane %v1718, 7
        %v1721 = vshll.u32 %v1645, 16
        %v1723 = vor.u32 %v1720, %v1721
        %v1724 = vsel %vm1653, %v1712, %v1723
        %v1726 = vshrl.u32 %v1646, 16
        %v1728 = vrot.slane %v1726, 7
        %v1729 = vshll.u32 %v1646, 16
        %v1731 = vor.u32 %v1728, %v1729
        %v1732 = vsel %vm1653, %v1720, %v1731
        %v1734 = vshrl.u32 %v1647, 16
        %v1736 = vrot.slane %v1734, 7
        %v1737 = vshll.u32 %v1647, 16
        %v1739 = vor.u32 %v1736, %v1737
        %v1740 = vsel %vm1653, %v1728, %v1739
        %v1742 = vshrl.u32 %v1648, 16
        %v1744 = vrot.slane %v1742, 7
        %v1745 = vshll.u32 %v1648, 16
        %v1747 = vor.u32 %v1744, %v1745
        %v1748 = vsel %vm1653, %v1736, %v1747
        %v1750 = vshrl.u32 %v1649, 16
        %v1752 = vrot.slane %v1750, 7
        %v1753 = vshll.u32 %v1649, 16
        %v1755 = vor.u32 %v1752, %v1753
        %v1756 = vsel %vm1653, %v1744, %v1755
        %v1758 = vshrl.u32 %v1650, 16
        %v1760 = vrot.slane %v1758, 7
        %v1761 = vshll.u32 %v1650, 16
        %v1763 = vor.u32 %v1760, %v1761
        %v1764 = vsel %vm1653, %v1752, %v1763
        %v1766 = vshrl.u32 %v1651, 16
        %v1768 = vrot.slane %v1766, 7
        %v1769 = vshll.u32 %v1651, 16
        %v1771 = vor.u32 %v1768, %v1769
        %v1772 = vsel %vm1653, %v1760, %v1771
        %vm1788 = vcmask 1040384
        %vm1789 = vmand %vm1788, %vm1653
        %v1790 = vsel %vm1789, 0, %v1660
        %v1791 = vsel %vm1324, 1, 0
        %v1792 = vsel %vm1325, 1, 0
        %v1793 = vsel %vm1326, 1, 0
        %v1794 = vsel %vm1327, 1, 0
        %v1795 = vsel %vm1328, 1, 0
        %v1796 = vsel %vm1329, 1, 0
        %v1797 = vsel %vm1330, 1, 0
        %v1798 = vsel %vm1331, 1, 0
        %v1799 = vsel %vm1332, 1, 0
        %v1800 = vsel %vm1333, 1, 0
        %v1801 = vsel %vm1334, 1, 0
        %v1802 = vsel %vm1335, 1, 0
        %v1803 = vsel %vm1336, 1, 0
        %v1804 = vsel %vm1337, 1, 0
        %v1805 = vsel %vm1338, 1, 0
        %v1806 = vsel %vm1339, 1, 0
        %v1807 = vsel %vm1340, 1, 0
        %v1808 = vsel %vm1341, 1, 0
        %v1809 = vsel %vm1342, 1, 0
        %v1810 = vsel %vm1343, 1, 0
        %v1811 = vsel %vm1344, 1, 0
        %v1812 = vsel %vm1345, 1, 0
        %v1813 = vsel %vm1346, 1, 0
        %v1814 = vsel %vm1347, 1, 0
        %v1815 = vsel %vm1348, 1, 0
        %v1816 = vsel %vm1349, 1, 0
        %v1817 = vsel %vm1350, 1, 0
        %v1818 = vsel %vm1351, 1, 0
        %v1819 = vsel %vm1352, 1, 0
        %v1820 = vsel %vm1353, 1, 0
        %v1821 = vsel %vm1354, 1, 0
        %v1822 = vsel %vm1355, 1, 0
        %vm1823 = vcmp.eq.s32.totalorder %v1791, 1
        %vm1824 = vcmp.eq.s32.totalorder %v1792, 1
        %vm1825 = vcmp.eq.s32.totalorder %v1793, 1
        %vm1826 = vcmp.eq.s32.totalorder %v1794, 1
        %vm1827 = vcmp.eq.s32.totalorder %v1795, 1
        %vm1828 = vcmp.eq.s32.totalorder %v1796, 1
        %vm1829 = vcmp.eq.s32.totalorder %v1797, 1
        %vm1830 = vcmp.eq.s32.totalorder %v1798, 1
        %vm1831 = vcmp.eq.s32.totalorder %v1799, 1
        %vm1832 = vcmp.eq.s32.totalorder %v1800, 1
        %vm1833 = vcmp.eq.s32.totalorder %v1801, 1
        %vm1834 = vcmp.eq.s32.totalorder %v1802, 1
        %vm1835 = vcmp.eq.s32.totalorder %v1803, 1
        %vm1836 = vcmp.eq.s32.totalorder %v1804, 1
        %vm1837 = vcmp.eq.s32.totalorder %v1805, 1
        %vm1838 = vcmp.eq.s32.totalorder %v1806, 1
        %vm1839 = vcmp.eq.s32.totalorder %v1807, 1
        %vm1840 = vcmp.eq.s32.totalorder %v1808, 1
        %vm1841 = vcmp.eq.s32.totalorder %v1809, 1
        %vm1842 = vcmp.eq.s32.totalorder %v1810, 1
        %vm1843 = vcmp.eq.s32.totalorder %v1811, 1
        %vm1844 = vcmp.eq.s32.totalorder %v1812, 1
        %vm1845 = vcmp.eq.s32.totalorder %v1813, 1
        %vm1846 = vcmp.eq.s32.totalorder %v1814, 1
        %vm1847 = vcmp.eq.s32.totalorder %v1815, 1
        %vm1848 = vcmp.eq.s32.totalorder %v1816, 1
        %vm1849 = vcmp.eq.s32.totalorder %v1817, 1
        %vm1850 = vcmp.eq.s32.totalorder %v1818, 1
        %vm1851 = vcmp.eq.s32.totalorder %v1819, 1
        %vm1852 = vcmp.eq.s32.totalorder %v1820, 1
        %vm1853 = vcmp.eq.s32.totalorder %v1821, 1
        %vm1854 = vcmp.eq.s32.totalorder %v1822, 1
        %vm1855 = vmpackc.low %vm1825, %vm1825
        %vm1856 = vmpackc.low %vm1826, %vm1826
        %vm1857 = vmpackc.low %vm1827, %vm1827
        %vm1858 = vmpackc.low %vm1828, %vm1828
        %vm1859 = vmpackc.low %vm1829, %vm1829
        %vm1860 = vmpackc.low %vm1830, %vm1830
        %vm1861 = vmpackc.low %vm1831, %vm1831
        %vm1862 = vmpackc.low %vm1832, %vm1832
        %vm1863 = vmpackc.low %vm1833, %vm1833
        %vm1864 = vmpackc.low %vm1834, %vm1834
        %vm1865 = vmpackc.low %vm1835, %vm1835
        %vm1866 = vmpackc.low %vm1836, %vm1836
        %vm1867 = vmpackc.low %vm1837, %vm1837
        %vm1868 = vmpackc.low %vm1838, %vm1838
        %vm1869 = vmpackc.low %vm1839, %vm1839
        %vm1870 = vmpackc.low %vm1840, %vm1840
        %vm1871 = vmpackc.low %vm1841, %vm1841
        %vm1872 = vmpackc.low %vm1842, %vm1842
        %vm1873 = vmpackc.low %vm1843, %vm1843
        %vm1874 = vmpackc.low %vm1844, %vm1844
        %vm1875 = vmpackc.low %vm1845, %vm1845
        %vm1876 = vmpackc.low %vm1846, %vm1846
        %vm1877 = vmpackc.low %vm1847, %vm1847
        %vm1878 = vmpackc.low %vm1848, %vm1848
        %vm1879 = vmpackc.low %vm1849, %vm1849
        %vm1880 = vmpackc.low %vm1850, %vm1850
        %vm1881 = vmpackc.low %vm1851, %vm1851
        %vm1882 = vmpackc.low %vm1852, %vm1852
        %vm1883 = vmpackc.low %vm1853, %vm1853
        %vm1884 = vmpackc.low %vm1854, %vm1854
        %v1885 = vsel %vm1855, 65537, 0
        %v1886 = vsel %vm1856, 65537, 0
        %v1887 = vsel %vm1857, 65537, 0
        %v1888 = vsel %vm1858, 65537, 0
        %v1889 = vsel %vm1859, 65537, 0
        %v1890 = vsel %vm1860, 65537, 0
        %v1891 = vsel %vm1861, 65537, 0
        %v1892 = vsel %vm1862, 65537, 0
        %v1893 = vsel %vm1863, 65537, 0
        %v1894 = vsel %vm1864, 65537, 0
        %v1895 = vsel %vm1865, 65537, 0
        %v1896 = vsel %vm1866, 65537, 0
        %v1897 = vsel %vm1867, 65537, 0
        %v1898 = vsel %vm1868, 65537, 0
        %v1899 = vsel %vm1869, 65537, 0
        %v1900 = vsel %vm1870, 65537, 0
        %v1901 = vsel %vm1871, 65537, 0
        %v1902 = vsel %vm1872, 65537, 0
        %v1903 = vsel %vm1873, 65537, 0
        %v1904 = vsel %vm1874, 65537, 0
        %v1905 = vsel %vm1875, 65537, 0
        %v1906 = vsel %vm1876, 65537, 0
        %v1907 = vsel %vm1877, 65537, 0
        %v1908 = vsel %vm1878, 65537, 0
        %v1909 = vsel %vm1879, 65537, 0
        %v1910 = vsel %vm1880, 65537, 0
        %v1911 = vsel %vm1881, 65537, 0
        %v1912 = vsel %vm1882, 65537, 0
        %v1913 = vsel %vm1883, 65537, 0
        %v1914 = vsel %vm1884, 65537, 0
        %v1915 = vunpack.c.l.b16 %v1885
        %v1916 = vunpack.c.l.b16 %v1886
        %v1917 = vunpack.c.l.b16 %v1887
        %v1918 = vunpack.c.l.b16 %v1888
        %v1919 = vunpack.c.l.b16 %v1889
        %v1920 = vunpack.c.l.b16 %v1890
        %v1921 = vunpack.c.l.b16 %v1891
        %v1922 = vunpack.c.l.b16 %v1892
        %v1923 = vunpack.c.l.b16 %v1893
        %v1924 = vunpack.c.l.b16 %v1894
        %v1925 = vunpack.c.l.b16 %v1895
        %v1926 = vunpack.c.l.b16 %v1896
        %v1927 = vunpack.c.l.b16 %v1897
        %v1928 = vunpack.c.l.b16 %v1898
        %v1929 = vunpack.c.l.b16 %v1899
        %v1930 = vunpack.c.l.b16 %v1900
        %v1931 = vunpack.c.l.b16 %v1901
        %v1932 = vunpack.c.l.b16 %v1902
        %v1933 = vunpack.c.l.b16 %v1903
        %v1934 = vunpack.c.l.b16 %v1904
        %v1935 = vunpack.c.l.b16 %v1905
        %v1936 = vunpack.c.l.b16 %v1906
        %v1937 = vunpack.c.l.b16 %v1907
        %v1938 = vunpack.c.l.b16 %v1908
        %v1939 = vunpack.c.l.b16 %v1909
        %v1940 = vunpack.c.l.b16 %v1910
        %v1941 = vunpack.c.l.b16 %v1911
        %v1942 = vunpack.c.l.b16 %v1912
        %v1943 = vunpack.c.l.b16 %v1913
        %v1944 = vunpack.c.l.b16 %v1914
        %v1945 = vpack.c.b16 %v1916, %v1915
        %v1946 = vpack.c.b16 %v1918, %v1917
        %v1947 = vpack.c.b16 %v1920, %v1919
        %v1948 = vpack.c.b16 %v1922, %v1921
        %v1949 = vpack.c.b16 %v1924, %v1923
        %v1950 = vpack.c.b16 %v1926, %v1925
        %v1951 = vpack.c.b16 %v1928, %v1927
        %v1952 = vpack.c.b16 %v1930, %v1929
        %v1953 = vpack.c.b16 %v1932, %v1931
        %v1954 = vpack.c.b16 %v1934, %v1933
        %v1955 = vpack.c.b16 %v1936, %v1935
        %v1956 = vpack.c.b16 %v1938, %v1937
        %v1957 = vpack.c.b16 %v1940, %v1939
        %v1958 = vpack.c.b16 %v1942, %v1941
        %v1959 = vpack.c.b16 %v1944, %v1943
        %vm1960 = vcmp.ne.s16.totalorder %v1945, 0
        %vm1961 = vcmp.ne.s16.totalorder %v1946, 0
        %vm1962 = vcmp.ne.s16.totalorder %v1947, 0
        %vm1963 = vcmp.ne.s16.totalorder %v1948, 0
        %vm1964 = vcmp.ne.s16.totalorder %v1949, 0
        %vm1965 = vcmp.ne.s16.totalorder %v1950, 0
        %vm1966 = vcmp.ne.s16.totalorder %v1951, 0
        %vm1967 = vcmp.ne.s16.totalorder %v1952, 0
        %vm1968 = vcmp.ne.s16.totalorder %v1953, 0
        %vm1969 = vcmp.ne.s16.totalorder %v1954, 0
        %vm1970 = vcmp.ne.s16.totalorder %v1955, 0
        %vm1971 = vcmp.ne.s16.totalorder %v1956, 0
        %vm1972 = vcmp.ne.s16.totalorder %v1957, 0
        %vm1973 = vcmp.ne.s16.totalorder %v1958, 0
        %vm1974 = vcmp.ne.s16.totalorder %v1959, 0
        %v1975 = vsel %vm1960, %v1790, 0
        %v1976 = vsel %vm1961, %v1668, 0
        %v1977 = vsel %vm1962, %v1676, 0
        %v1978 = vsel %vm1963, %v1684, 0
        %v1979 = vsel %vm1964, %v1692, 0
        %v1980 = vsel %vm1965, %v1700, 0
        %v1981 = vsel %vm1966, %v1708, 0
        %v1982 = vsel %vm1967, %v1716, 0
        %v1983 = vsel %vm1968, %v1724, 0
        %v1984 = vsel %vm1969, %v1732, 0
        %v1985 = vsel %vm1970, %v1740, 0
        %v1986 = vsel %vm1971, %v1748, 0
        %v1987 = vsel %vm1972, %v1756, 0
        %v1988 = vsel %vm1973, %v1764, 0
        %v1989 = vsel %vm1974, %v1772, 0
        %1990 = vst.msk [vmem:[#allocation2] sm:$0xff] %vm1427, 0
        %1991 = vst.msk [vmem:[#allocation2 + $0x28] sm:$0xff] %vm1427, %v1975
        %1992 = vst.msk [vmem:[#allocation2 + $0x50] sm:$0xff] %vm1427, %v1976
        %1993 = vst.msk [vmem:[#allocation2 + $0x78] sm:$0xff] %vm1427, %v1977
        %1994 = vst.msk [vmem:[#allocation2 + $0xa0] sm:$0xff] %vm1427, %v1978
        %1995 = vst.msk [vmem:[#allocation2 + $0xc8] sm:$0xff] %vm1427, %v1979
        %1996 = vst.msk [vmem:[#allocation2 + $0xf0] sm:$0xff] %vm1427, %v1980
        %1997 = vst.msk [vmem:[#allocation2 + $0x118] sm:$0xff] %vm1427, %v1981
        %1998 = vst.msk [vmem:[#allocation2 + $0x140] sm:$0xff] %vm1427, %v1982
        %1999 = vst.msk [vmem:[#allocation2 + $0x168] sm:$0xff] %vm1427, %v1983
        %2000 = vst.msk [vmem:[#allocation2 + $0x190] sm:$0xff] %vm1427, %v1984
        %2001 = vst.msk [vmem:[#allocation2 + $0x1b8] sm:$0xff] %vm1427, %v1985
        %2002 = vst.msk [vmem:[#allocation2 + $0x1e0] sm:$0xff] %vm1427, %v1986
        %2003 = vst.msk [vmem:[#allocation2 + $0x208] sm:$0xff] %vm1427, %v1987
        %2004 = vst.msk [vmem:[#allocation2 + $0x230] sm:$0xff] %vm1427, %v1988
        %2005 = vst.msk [vmem:[#allocation2 + $0x258] sm:$0xff] %vm1427, %v1989
        %2022 = vrot.lane.b32.xlu0 0, 64
        %v2023 = vpop.permute.xlu0 %2022
        %2024 = vrot.lane.b32.xlu0 %v1637, 64
        %v2025 = vpop.permute.xlu0 %2024
        %2026 = vrot.lane.b32.xlu0 %v1638, 64
        %v2027 = vpop.permute.xlu0 %2026
        %2028 = vrot.lane.b32.xlu0 %v1639, 64
        %v2029 = vpop.permute.xlu0 %2028
        %2030 = vrot.lane.b32.xlu0 %v1640, 64
        %v2031 = vpop.permute.xlu0 %2030
        %2032 = vrot.lane.b32.xlu0 %v1641, 64
        %v2033 = vpop.permute.xlu0 %2032
        %2034 = vrot.lane.b32.xlu0 %v1642, 64
        %v2035 = vpop.permute.xlu0 %2034
        %2036 = vrot.lane.b32.xlu0 %v1643, 64
        %v2037 = vpop.permute.xlu0 %2036
        %2038 = vrot.lane.b32.xlu0 %v1644, 64
        %v2039 = vpop.permute.xlu0 %2038
        %2040 = vrot.lane.b32.xlu0 %v1645, 64
        %v2041 = vpop.permute.xlu0 %2040
        %2042 = vrot.lane.b32.xlu0 %v1646, 64
        %v2043 = vpop.permute.xlu0 %2042
        %2044 = vrot.lane.b32.xlu0 %v1647, 64
        %v2045 = vpop.permute.xlu0 %2044
        %2046 = vrot.lane.b32.xlu0 %v1648, 64
        %v2047 = vpop.permute.xlu0 %2046
        %2048 = vrot.lane.b32.xlu0 %v1649, 64
        %v2049 = vpop.permute.xlu0 %2048
        %2050 = vrot.lane.b32.xlu0 %v1650, 64
        %v2051 = vpop.permute.xlu0 %2050
        %2052 = vrot.lane.b32.xlu0 %v1651, 64
        %v2053 = vpop.permute.xlu0 %2052
        %vm2070 = vcmask 1048064
        %2071 = vst.msk [vmem:[#allocation2] sm:$0xff] %vm2070, %v2023
        %2072 = vst.msk [vmem:[#allocation2 + $0x28] sm:$0xff] %vm2070, %v2025
        %2073 = vst.msk [vmem:[#allocation2 + $0x50] sm:$0xff] %vm2070, %v2027
        %2074 = vst.msk [vmem:[#allocation2 + $0x78] sm:$0xff] %vm2070, %v2029
        %2075 = vst.msk [vmem:[#allocation2 + $0xa0] sm:$0xff] %vm2070, %v2031
        %2076 = vst.msk [vmem:[#allocation2 + $0xc8] sm:$0xff] %vm2070, %v2033
        %2077 = vst.msk [vmem:[#allocation2 + $0xf0] sm:$0xff] %vm2070, %v2035
        %2078 = vst.msk [vmem:[#allocation2 + $0x118] sm:$0xff] %vm2070, %v2037
        %2079 = vst.msk [vmem:[#allocation2 + $0x140] sm:$0xff] %vm2070, %v2039
        %2080 = vst.msk [vmem:[#allocation2 + $0x168] sm:$0xff] %vm2070, %v2041
        %2081 = vst.msk [vmem:[#allocation2 + $0x190] sm:$0xff] %vm2070, %v2043
        %2082 = vst.msk [vmem:[#allocation2 + $0x1b8] sm:$0xff] %vm2070, %v2045
        %2083 = vst.msk [vmem:[#allocation2 + $0x1e0] sm:$0xff] %vm2070, %v2047
        %2084 = vst.msk [vmem:[#allocation2 + $0x208] sm:$0xff] %vm2070, %v2049
        %2085 = vst.msk [vmem:[#allocation2 + $0x230] sm:$0xff] %vm2070, %v2051
        %2086 = vst.msk [vmem:[#allocation2 + $0x258] sm:$0xff] %vm2070, %v2053
        %vm2087 = vsmask.f32 7424
        %v2088 = vrot.slane %v1658, 1
        %v2089 = vor.u32 %v1655, %v2088
        %v2090 = vrot.slane %v1665, 1
        %v2091 = vsel %vm2087, %v2089, %v2090
        %v2092 = vor.u32 %v1662, %v2090
        %v2093 = vrot.slane %v1673, 1
        %v2094 = vsel %vm2087, %v2092, %v2093
        %v2095 = vor.u32 %v1670, %v2093
        %v2096 = vrot.slane %v1681, 1
        %v2097 = vsel %vm2087, %v2095, %v2096
        %v2098 = vor.u32 %v1678, %v2096
        %v2099 = vrot.slane %v1689, 1
        %v2100 = vsel %vm2087, %v2098, %v2099
        %v2101 = vor.u32 %v1686, %v2099
        %v2102 = vrot.slane %v1697, 1
        %v2103 = vsel %vm2087, %v2101, %v2102
        %v2104 = vor.u32 %v1694, %v2102
        %v2105 = vrot.slane %v1705, 1
        %v2106 = vsel %vm2087, %v2104, %v2105
        %v2107 = vor.u32 %v1702, %v2105
        %v2108 = vrot.slane %v1713, 1
        %v2109 = vsel %vm2087, %v2107, %v2108
        %v2110 = vor.u32 %v1710, %v2108
        %v2111 = vrot.slane %v1721, 1
        %v2112 = vsel %vm2087, %v2110, %v2111
        %v2113 = vor.u32 %v1718, %v2111
        %v2114 = vrot.slane %v1729, 1
        %v2115 = vsel %vm2087, %v2113, %v2114
        %v2116 = vor.u32 %v1726, %v2114
        %v2117 = vrot.slane %v1737, 1
        %v2118 = vsel %vm2087, %v2116, %v2117
        %v2119 = vor.u32 %v1734, %v2117
        %v2120 = vrot.slane %v1745, 1
        %v2121 = vsel %vm2087, %v2119, %v2120
        %v2122 = vor.u32 %v1742, %v2120
        %v2123 = vrot.slane %v1753, 1
        %v2124 = vsel %vm2087, %v2122, %v2123
        %v2125 = vor.u32 %v1750, %v2123
        %v2126 = vrot.slane %v1761, 1
        %v2127 = vsel %vm2087, %v2125, %v2126
        %v2128 = vor.u32 %v1758, %v2126
        %v2129 = vrot.slane %v1769, 1
        %v2130 = vsel %vm2087, %v2128, %v2129
        %v2131 = vor.u32 %v1766, %v2129
        %v2133 = vshll.u32 %v1652, 16
        %v2135 = vrot.slane %v2133, 1
        %v2136 = vsel %vm2087, %v2131, %v2135
        %vm2153 = vcmask 1047552
        %vm2154 = vmand %vm2153, %vm2087
        %v2155 = vsel %vm2154, 0, %v2088
        %v2156 = vsel %vm1356, 1, 0
        %v2157 = vsel %vm1357, 1, 0
        %v2158 = vsel %vm1358, 1, 0
        %v2159 = vsel %vm1359, 1, 0
        %v2160 = vsel %vm1360, 1, 0
        %v2161 = vsel %vm1361, 1, 0
        %v2162 = vsel %vm1362, 1, 0
        %v2163 = vsel %vm1363, 1, 0
        %v2164 = vsel %vm1364, 1, 0
        %v2165 = vsel %vm1365, 1, 0
        %v2166 = vsel %vm1366, 1, 0
        %v2167 = vsel %vm1367, 1, 0
        %v2168 = vsel %vm1368, 1, 0
        %v2169 = vsel %vm1369, 1, 0
        %v2170 = vsel %vm1370, 1, 0
        %v2171 = vsel %vm1371, 1, 0
        %v2172 = vsel %vm1372, 1, 0
        %v2173 = vsel %vm1373, 1, 0
        %v2174 = vsel %vm1374, 1, 0
        %v2175 = vsel %vm1375, 1, 0
        %v2176 = vsel %vm1376, 1, 0
        %v2177 = vsel %vm1377, 1, 0
        %v2178 = vsel %vm1378, 1, 0
        %v2179 = vsel %vm1379, 1, 0
        %v2180 = vsel %vm1380, 1, 0
        %v2181 = vsel %vm1381, 1, 0
        %v2182 = vsel %vm1382, 1, 0
        %v2183 = vsel %vm1383, 1, 0
        %v2184 = vsel %vm1384, 1, 0
        %v2185 = vsel %vm1385, 1, 0
        %v2186 = vsel %vm1386, 1, 0
        %v2187 = vsel %vm1387, 1, 0
        %vm2188 = vcmp.eq.s32.totalorder %v2156, 1
        %vm2189 = vcmp.eq.s32.totalorder %v2157, 1
        %vm2190 = vcmp.eq.s32.totalorder %v2158, 1
        %vm2191 = vcmp.eq.s32.totalorder %v2159, 1
        %vm2192 = vcmp.eq.s32.totalorder %v2160, 1
        %vm2193 = vcmp.eq.s32.totalorder %v2161, 1
        %vm2194 = vcmp.eq.s32.totalorder %v2162, 1
        %vm2195 = vcmp.eq.s32.totalorder %v2163, 1
        %vm2196 = vcmp.eq.s32.totalorder %v2164, 1
        %vm2197 = vcmp.eq.s32.totalorder %v2165, 1
        %vm2198 = vcmp.eq.s32.totalorder %v2166, 1
        %vm2199 = vcmp.eq.s32.totalorder %v2167, 1
        %vm2200 = vcmp.eq.s32.totalorder %v2168, 1
        %vm2201 = vcmp.eq.s32.totalorder %v2169, 1
        %vm2202 = vcmp.eq.s32.totalorder %v2170, 1
        %vm2203 = vcmp.eq.s32.totalorder %v2171, 1
        %vm2204 = vcmp.eq.s32.totalorder %v2172, 1
        %vm2205 = vcmp.eq.s32.totalorder %v2173, 1
        %vm2206 = vcmp.eq.s32.totalorder %v2174, 1
        %vm2207 = vcmp.eq.s32.totalorder %v2175, 1
        %vm2208 = vcmp.eq.s32.totalorder %v2176, 1
        %vm2209 = vcmp.eq.s32.totalorder %v2177, 1
        %vm2210 = vcmp.eq.s32.totalorder %v2178, 1
        %vm2211 = vcmp.eq.s32.totalorder %v2179, 1
        %vm2212 = vcmp.eq.s32.totalorder %v2180, 1
        %vm2213 = vcmp.eq.s32.totalorder %v2181, 1
        %vm2214 = vcmp.eq.s32.totalorder %v2182, 1
        %vm2215 = vcmp.eq.s32.totalorder %v2183, 1
        %vm2216 = vcmp.eq.s32.totalorder %v2184, 1
        %vm2217 = vcmp.eq.s32.totalorder %v2185, 1
        %vm2218 = vcmp.eq.s32.totalorder %v2186, 1
        %vm2219 = vcmp.eq.s32.totalorder %v2187, 1
        %vm2220 = vmpackc.low %vm2188, %vm2188
        %vm2221 = vmpackc.low %vm2189, %vm2189
        %vm2222 = vmpackc.low %vm2190, %vm2190
        %vm2223 = vmpackc.low %vm2191, %vm2191
        %vm2224 = vmpackc.low %vm2192, %vm2192
        %vm2225 = vmpackc.low %vm2193, %vm2193
        %vm2226 = vmpackc.low %vm2194, %vm2194
        %vm2227 = vmpackc.low %vm2195, %vm2195
        %vm2228 = vmpackc.low %vm2196, %vm2196
        %vm2229 = vmpackc.low %vm2197, %vm2197
        %vm2230 = vmpackc.low %vm2198, %vm2198
        %vm2231 = vmpackc.low %vm2199, %vm2199
        %vm2232 = vmpackc.low %vm2200, %vm2200
        %vm2233 = vmpackc.low %vm2201, %vm2201
        %vm2234 = vmpackc.low %vm2202, %vm2202
        %vm2235 = vmpackc.low %vm2203, %vm2203
        %vm2236 = vmpackc.low %vm2204, %vm2204
        %vm2237 = vmpackc.low %vm2205, %vm2205
        %vm2238 = vmpackc.low %vm2206, %vm2206
        %vm2239 = vmpackc.low %vm2207, %vm2207
        %vm2240 = vmpackc.low %vm2208, %vm2208
        %vm2241 = vmpackc.low %vm2209, %vm2209
        %vm2242 = vmpackc.low %vm2210, %vm2210
        %vm2243 = vmpackc.low %vm2211, %vm2211
        %vm2244 = vmpackc.low %vm2212, %vm2212
        %vm2245 = vmpackc.low %vm2213, %vm2213
        %vm2246 = vmpackc.low %vm2214, %vm2214
        %vm2247 = vmpackc.low %vm2215, %vm2215
        %vm2248 = vmpackc.low %vm2216, %vm2216
        %vm2249 = vmpackc.low %vm2217, %vm2217
        %vm2250 = vmpackc.low %vm2218, %vm2218
        %vm2251 = vmpackc.low %vm2219, %vm2219
        %v2252 = vsel %vm2220, 65537, 0
        %v2253 = vsel %vm2221, 65537, 0
        %v2254 = vsel %vm2222, 65537, 0
        %v2255 = vsel %vm2223, 65537, 0
        %v2256 = vsel %vm2224, 65537, 0
        %v2257 = vsel %vm2225, 65537, 0
        %v2258 = vsel %vm2226, 65537, 0
        %v2259 = vsel %vm2227, 65537, 0
        %v2260 = vsel %vm2228, 65537, 0
        %v2261 = vsel %vm2229, 65537, 0
        %v2262 = vsel %vm2230, 65537, 0
        %v2263 = vsel %vm2231, 65537, 0
        %v2264 = vsel %vm2232, 65537, 0
        %v2265 = vsel %vm2233, 65537, 0
        %v2266 = vsel %vm2234, 65537, 0
        %v2267 = vsel %vm2235, 65537, 0
        %v2268 = vsel %vm2236, 65537, 0
        %v2269 = vsel %vm2237, 65537, 0
        %v2270 = vsel %vm2238, 65537, 0
        %v2271 = vsel %vm2239, 65537, 0
        %v2272 = vsel %vm2240, 65537, 0
        %v2273 = vsel %vm2241, 65537, 0
        %v2274 = vsel %vm2242, 65537, 0
        %v2275 = vsel %vm2243, 65537, 0
        %v2276 = vsel %vm2244, 65537, 0
        %v2277 = vsel %vm2245, 65537, 0
        %v2278 = vsel %vm2246, 65537, 0
        %v2279 = vsel %vm2247, 65537, 0
        %v2280 = vsel %vm2248, 65537, 0
        %v2281 = vsel %vm2249, 65537, 0
        %v2282 = vsel %vm2250, 65537, 0
        %v2283 = vsel %vm2251, 65537, 0
        %v2284 = vunpack.c.l.b16 %v2252
        %v2285 = vunpack.c.l.b16 %v2253
        %v2286 = vunpack.c.l.b16 %v2254
        %v2287 = vunpack.c.l.b16 %v2255
        %v2288 = vunpack.c.l.b16 %v2256
        %v2289 = vunpack.c.l.b16 %v2257
        %v2290 = vunpack.c.l.b16 %v2258
        %v2291 = vunpack.c.l.b16 %v2259
        %v2292 = vunpack.c.l.b16 %v2260
        %v2293 = vunpack.c.l.b16 %v2261
        %v2294 = vunpack.c.l.b16 %v2262
        %v2295 = vunpack.c.l.b16 %v2263
        %v2296 = vunpack.c.l.b16 %v2264
        %v2297 = vunpack.c.l.b16 %v2265
        %v2298 = vunpack.c.l.b16 %v2266
        %v2299 = vunpack.c.l.b16 %v2267
        %v2300 = vunpack.c.l.b16 %v2268
        %v2301 = vunpack.c.l.b16 %v2269
        %v2302 = vunpack.c.l.b16 %v2270
        %v2303 = vunpack.c.l.b16 %v2271
        %v2304 = vunpack.c.l.b16 %v2272
        %v2305 = vunpack.c.l.b16 %v2273
        %v2306 = vunpack.c.l.b16 %v2274
        %v2307 = vunpack.c.l.b16 %v2275
        %v2308 = vunpack.c.l.b16 %v2276
        %v2309 = vunpack.c.l.b16 %v2277
        %v2310 = vunpack.c.l.b16 %v2278
        %v2311 = vunpack.c.l.b16 %v2279
        %v2312 = vunpack.c.l.b16 %v2280
        %v2313 = vunpack.c.l.b16 %v2281
        %v2314 = vunpack.c.l.b16 %v2282
        %v2315 = vunpack.c.l.b16 %v2283
        %v2316 = vpack.c.b16 %v2285, %v2284
        %v2317 = vpack.c.b16 %v2287, %v2286
        %v2318 = vpack.c.b16 %v2289, %v2288
        %v2319 = vpack.c.b16 %v2291, %v2290
        %v2320 = vpack.c.b16 %v2293, %v2292
        %v2321 = vpack.c.b16 %v2295, %v2294
        %v2322 = vpack.c.b16 %v2297, %v2296
        %v2323 = vpack.c.b16 %v2299, %v2298
        %v2324 = vpack.c.b16 %v2301, %v2300
        %v2325 = vpack.c.b16 %v2303, %v2302
        %v2326 = vpack.c.b16 %v2305, %v2304
        %v2327 = vpack.c.b16 %v2307, %v2306
        %v2328 = vpack.c.b16 %v2309, %v2308
        %v2329 = vpack.c.b16 %v2311, %v2310
        %v2330 = vpack.c.b16 %v2313, %v2312
        %v2331 = vpack.c.b16 %v2315, %v2314
        %vm2332 = vcmp.ne.s16.totalorder %v2316, 0
        %vm2333 = vcmp.ne.s16.totalorder %v2317, 0
        %vm2334 = vcmp.ne.s16.totalorder %v2318, 0
        %vm2335 = vcmp.ne.s16.totalorder %v2319, 0
        %vm2336 = vcmp.ne.s16.totalorder %v2320, 0
        %vm2337 = vcmp.ne.s16.totalorder %v2321, 0
        %vm2338 = vcmp.ne.s16.totalorder %v2322, 0
        %vm2339 = vcmp.ne.s16.totalorder %v2323, 0
        %vm2340 = vcmp.ne.s16.totalorder %v2324, 0
        %vm2341 = vcmp.ne.s16.totalorder %v2325, 0
        %vm2342 = vcmp.ne.s16.totalorder %v2326, 0
        %vm2343 = vcmp.ne.s16.totalorder %v2327, 0
        %vm2344 = vcmp.ne.s16.totalorder %v2328, 0
        %vm2345 = vcmp.ne.s16.totalorder %v2329, 0
        %vm2346 = vcmp.ne.s16.totalorder %v2330, 0
        %vm2347 = vcmp.ne.s16.totalorder %v2331, 0
        %v2348 = vsel %vm2332, %v2155, 0
        %v2349 = vsel %vm2333, %v2091, 0
        %v2350 = vsel %vm2334, %v2094, 0
        %v2351 = vsel %vm2335, %v2097, 0
        %v2352 = vsel %vm2336, %v2100, 0
        %v2353 = vsel %vm2337, %v2103, 0
        %v2354 = vsel %vm2338, %v2106, 0
        %v2355 = vsel %vm2339, %v2109, 0
        %v2356 = vsel %vm2340, %v2112, 0
        %v2357 = vsel %vm2341, %v2115, 0
        %v2358 = vsel %vm2342, %v2118, 0
        %v2359 = vsel %vm2343, %v2121, 0
        %v2360 = vsel %vm2344, %v2124, 0
        %v2361 = vsel %vm2345, %v2127, 0
        %v2362 = vsel %vm2346, %v2130, 0
        %v2363 = vsel %vm2347, %v2136, 0
        %2364 = vst.msk [vmem:[#allocation2 + $0x8] sm:$0xff] %vm1427, %v2348
        %2365 = vst.msk [vmem:[#allocation2 + $0x30] sm:$0xff] %vm1427, %v2349
        %2366 = vst.msk [vmem:[#allocation2 + $0x58] sm:$0xff] %vm1427, %v2350
        %2367 = vst.msk [vmem:[#allocation2 + $0x80] sm:$0xff] %vm1427, %v2351
        %2368 = vst.msk [vmem:[#allocation2 + $0xa8] sm:$0xff] %vm1427, %v2352
        %2369 = vst.msk [vmem:[#allocation2 + $0xd0] sm:$0xff] %vm1427, %v2353
        %2370 = vst.msk [vmem:[#allocation2 + $0xf8] sm:$0xff] %vm1427, %v2354
        %2371 = vst.msk [vmem:[#allocation2 + $0x120] sm:$0xff] %vm1427, %v2355
        %2372 = vst.msk [vmem:[#allocation2 + $0x148] sm:$0xff] %vm1427, %v2356
        %2373 = vst.msk [vmem:[#allocation2 + $0x170] sm:$0xff] %vm1427, %v2357
        %2374 = vst.msk [vmem:[#allocation2 + $0x198] sm:$0xff] %vm1427, %v2358
        %2375 = vst.msk [vmem:[#allocation2 + $0x1c0] sm:$0xff] %vm1427, %v2359
        %2376 = vst.msk [vmem:[#allocation2 + $0x1e8] sm:$0xff] %vm1427, %v2360
        %2377 = vst.msk [vmem:[#allocation2 + $0x210] sm:$0xff] %vm1427, %v2361
        %2378 = vst.msk [vmem:[#allocation2 + $0x238] sm:$0xff] %vm1427, %v2362
        %2379 = vst.msk [vmem:[#allocation2 + $0x260] sm:$0xff] %vm1427, %v2363
        %v2380 = vshrl.u32 %v1652, 16
        %v2382 = vrot.slane %v2380, 7
        %v2383 = vor.u32 %v2382, %v2133
        %v2384 = vsel %vm1653, %v1768, %v2383
        %vm2386 = vmpackc.low %vm1823, %vm1823
        %vm2387 = vmpackc.low %vm1824, %vm1824
        %v2388 = vsel %vm2386, 65537, 0
        %v2389 = vsel %vm2387, 65537, 0
        %v2390 = vunpack.c.l.b16 %v2388
        %v2391 = vunpack.c.l.b16 %v2389
        %v2392 = vpack.c.b16 %v2391, %v2390
        %vm2393 = vcmp.ne.s16.totalorder %v2392, 0
        %v2394 = vsel %vm2393, %v1790, 0
        %v2395 = vsel %vm1960, %v1668, 0
        %v2396 = vsel %vm1961, %v1676, 0
        %v2397 = vsel %vm1962, %v1684, 0
        %v2398 = vsel %vm1963, %v1692, 0
        %v2399 = vsel %vm1964, %v1700, 0
        %v2400 = vsel %vm1965, %v1708, 0
        %v2401 = vsel %vm1966, %v1716, 0
        %v2402 = vsel %vm1967, %v1724, 0
        %v2403 = vsel %vm1968, %v1732, 0
        %v2404 = vsel %vm1969, %v1740, 0
        %v2405 = vsel %vm1970, %v1748, 0
        %v2406 = vsel %vm1971, %v1756, 0
        %v2407 = vsel %vm1972, %v1764, 0
        %v2408 = vsel %vm1973, %v1772, 0
        %v2409 = vsel %vm1974, %v2384, 0
        %2426 = vrot.lane.b32.xlu0 %v2394, 64
        %v2427 = vpop.permute.xlu0 %2426
        %2428 = vrot.lane.b32.xlu0 %v2395, 64
        %v2429 = vpop.permute.xlu0 %2428
        %2430 = vrot.lane.b32.xlu0 %v2396, 64
        %v2431 = vpop.permute.xlu0 %2430
        %2432 = vrot.lane.b32.xlu0 %v2397, 64
        %v2433 = vpop.permute.xlu0 %2432
        %2434 = vrot.lane.b32.xlu0 %v2398, 64
        %v2435 = vpop.permute.xlu0 %2434
        %2436 = vrot.lane.b32.xlu0 %v2399, 64
        %v2437 = vpop.permute.xlu0 %2436
        %2438 = vrot.lane.b32.xlu0 %v2400, 64
        %v2439 = vpop.permute.xlu0 %2438
        %2440 = vrot.lane.b32.xlu0 %v2401, 64
        %v2441 = vpop.permute.xlu0 %2440
        %2442 = vrot.lane.b32.xlu0 %v2402, 64
        %v2443 = vpop.permute.xlu0 %2442
        %2444 = vrot.lane.b32.xlu0 %v2403, 64
        %v2445 = vpop.permute.xlu0 %2444
        %2446 = vrot.lane.b32.xlu0 %v2404, 64
        %v2447 = vpop.permute.xlu0 %2446
        %2448 = vrot.lane.b32.xlu0 %v2405, 64
        %v2449 = vpop.permute.xlu0 %2448
        %2450 = vrot.lane.b32.xlu0 %v2406, 64
        %v2451 = vpop.permute.xlu0 %2450
        %2452 = vrot.lane.b32.xlu0 %v2407, 64
        %v2453 = vpop.permute.xlu0 %2452
        %2454 = vrot.lane.b32.xlu0 %v2408, 64
        %v2455 = vpop.permute.xlu0 %2454
        %2456 = vrot.lane.b32.xlu0 %v2409, 64
        %v2457 = vpop.permute.xlu0 %2456
        %2474 = vst.msk [vmem:[#allocation2 + $0x8] sm:$0xff] %vm2070, %v2427
        %2475 = vst.msk [vmem:[#allocation2 + $0x30] sm:$0xff] %vm2070, %v2429
        %2476 = vst.msk [vmem:[#allocation2 + $0x58] sm:$0xff] %vm2070, %v2431
        %2477 = vst.msk [vmem:[#allocation2 + $0x80] sm:$0xff] %vm2070, %v2433
        %2478 = vst.msk [vmem:[#allocation2 + $0xa8] sm:$0xff] %vm2070, %v2435
        %2479 = vst.msk [vmem:[#allocation2 + $0xd0] sm:$0xff] %vm2070, %v2437
        %2480 = vst.msk [vmem:[#allocation2 + $0xf8] sm:$0xff] %vm2070, %v2439
        %2481 = vst.msk [vmem:[#allocation2 + $0x120] sm:$0xff] %vm2070, %v2441
        %2482 = vst.msk [vmem:[#allocation2 + $0x148] sm:$0xff] %vm2070, %v2443
        %2483 = vst.msk [vmem:[#allocation2 + $0x170] sm:$0xff] %vm2070, %v2445
        %2484 = vst.msk [vmem:[#allocation2 + $0x198] sm:$0xff] %vm2070, %v2447
        %2485 = vst.msk [vmem:[#allocation2 + $0x1c0] sm:$0xff] %vm2070, %v2449
        %2486 = vst.msk [vmem:[#allocation2 + $0x1e8] sm:$0xff] %vm2070, %v2451
        %2487 = vst.msk [vmem:[#allocation2 + $0x210] sm:$0xff] %vm2070, %v2453
        %2488 = vst.msk [vmem:[#allocation2 + $0x238] sm:$0xff] %vm2070, %v2455
        %2489 = vst.msk [vmem:[#allocation2 + $0x260] sm:$0xff] %vm2070, %v2457
        %2490 = vst.msk [vmem:[#allocation2 + $0x10] sm:$0xff] %vm1427, %v1637
        %2491 = vst.msk [vmem:[#allocation2 + $0x38] sm:$0xff] %vm1427, %v1638
        %2492 = vst.msk [vmem:[#allocation2 + $0x60] sm:$0xff] %vm1427, %v1639
        %2493 = vst.msk [vmem:[#allocation2 + $0x88] sm:$0xff] %vm1427, %v1640
        %2494 = vst.msk [vmem:[#allocation2 + $0xb0] sm:$0xff] %vm1427, %v1641
        %2495 = vst.msk [vmem:[#allocation2 + $0xd8] sm:$0xff] %vm1427, %v1642
        %2496 = vst.msk [vmem:[#allocation2 + $0x100] sm:$0xff] %vm1427, %v1643
        %2497 = vst.msk [vmem:[#allocation2 + $0x128] sm:$0xff] %vm1427, %v1644
        %2498 = vst.msk [vmem:[#allocation2 + $0x150] sm:$0xff] %vm1427, %v1645
        %2499 = vst.msk [vmem:[#allocation2 + $0x178] sm:$0xff] %vm1427, %v1646
        %2500 = vst.msk [vmem:[#allocation2 + $0x1a0] sm:$0xff] %vm1427, %v1647
        %2501 = vst.msk [vmem:[#allocation2 + $0x1c8] sm:$0xff] %vm1427, %v1648
        %2502 = vst.msk [vmem:[#allocation2 + $0x1f0] sm:$0xff] %vm1427, %v1649
        %2503 = vst.msk [vmem:[#allocation2 + $0x218] sm:$0xff] %vm1427, %v1650
        %2504 = vst.msk [vmem:[#allocation2 + $0x240] sm:$0xff] %vm1427, %v1651
        %2505 = vst.msk [vmem:[#allocation2 + $0x268] sm:$0xff] %vm1427, %v1652
        %v2506 = vor.u32 %v2380, %v2135
        %v2508 = vsel %vm2154, %v2506, 0
        %v2509 = vsel %vm2332, %v2091, 0
        %v2510 = vsel %vm2333, %v2094, 0
        %v2511 = vsel %vm2334, %v2097, 0
        %v2512 = vsel %vm2335, %v2100, 0
        %v2513 = vsel %vm2336, %v2103, 0
        %v2514 = vsel %vm2337, %v2106, 0
        %v2515 = vsel %vm2338, %v2109, 0
        %v2516 = vsel %vm2339, %v2112, 0
        %v2517 = vsel %vm2340, %v2115, 0
        %v2518 = vsel %vm2341, %v2118, 0
        %v2519 = vsel %vm2342, %v2121, 0
        %v2520 = vsel %vm2343, %v2124, 0
        %v2521 = vsel %vm2344, %v2127, 0
        %v2522 = vsel %vm2345, %v2130, 0
        %v2523 = vsel %vm2346, %v2136, 0
        %v2524 = vsel %vm2347, %v2508, 0
        %2541 = vrot.lane.b32.xlu0 %v2509, 64
        %v2542 = vpop.permute.xlu0 %2541
        %2543 = vrot.lane.b32.xlu0 %v2510, 64
        %v2544 = vpop.permute.xlu0 %2543
        %2545 = vrot.lane.b32.xlu0 %v2511, 64
        %v2546 = vpop.permute.xlu0 %2545
        %2547 = vrot.lane.b32.xlu0 %v2512, 64
        %v2548 = vpop.permute.xlu0 %2547
        %2549 = vrot.lane.b32.xlu0 %v2513, 64
        %v2550 = vpop.permute.xlu0 %2549
        %2551 = vrot.lane.b32.xlu0 %v2514, 64
        %v2552 = vpop.permute.xlu0 %2551
        %2553 = vrot.lane.b32.xlu0 %v2515, 64
        %v2554 = vpop.permute.xlu0 %2553
        %2555 = vrot.lane.b32.xlu0 %v2516, 64
        %v2556 = vpop.permute.xlu0 %2555
        %2557 = vrot.lane.b32.xlu0 %v2517, 64
        %v2558 = vpop.permute.xlu0 %2557
        %2559 = vrot.lane.b32.xlu0 %v2518, 64
        %v2560 = vpop.permute.xlu0 %2559
        %2561 = vrot.lane.b32.xlu0 %v2519, 64
        %v2562 = vpop.permute.xlu0 %2561
        %2563 = vrot.lane.b32.xlu0 %v2520, 64
        %v2564 = vpop.permute.xlu0 %2563
        %2565 = vrot.lane.b32.xlu0 %v2521, 64
        %v2566 = vpop.permute.xlu0 %2565
        %2567 = vrot.lane.b32.xlu0 %v2522, 64
        %v2568 = vpop.permute.xlu0 %2567
        %2569 = vrot.lane.b32.xlu0 %v2523, 64
        %v2570 = vpop.permute.xlu0 %2569
        %2571 = vrot.lane.b32.xlu0 %v2524, 64
        %v2572 = vpop.permute.xlu0 %2571
        %2589 = vst.msk [vmem:[#allocation2 + $0x10] sm:$0xff] %vm2070, %v2542
        %2590 = vst.msk [vmem:[#allocation2 + $0x38] sm:$0xff] %vm2070, %v2544
        %2591 = vst.msk [vmem:[#allocation2 + $0x60] sm:$0xff] %vm2070, %v2546
        %2592 = vst.msk [vmem:[#allocation2 + $0x88] sm:$0xff] %vm2070, %v2548
        %2593 = vst.msk [vmem:[#allocation2 + $0xb0] sm:$0xff] %vm2070, %v2550
        %2594 = vst.msk [vmem:[#allocation2 + $0xd8] sm:$0xff] %vm2070, %v2552
        %2595 = vst.msk [vmem:[#allocation2 + $0x100] sm:$0xff] %vm2070, %v2554
        %2596 = vst.msk [vmem:[#allocation2 + $0x128] sm:$0xff] %vm2070, %v2556
        %2597 = vst.msk [vmem:[#allocation2 + $0x150] sm:$0xff] %vm2070, %v2558
        %2598 = vst.msk [vmem:[#allocation2 + $0x178] sm:$0xff] %vm2070, %v2560
        %2599 = vst.msk [vmem:[#allocation2 + $0x1a0] sm:$0xff] %vm2070, %v2562
        %2600 = vst.msk [vmem:[#allocation2 + $0x1c8] sm:$0xff] %vm2070, %v2564
        %2601 = vst.msk [vmem:[#allocation2 + $0x1f0] sm:$0xff] %vm2070, %v2566
        %2602 = vst.msk [vmem:[#allocation2 + $0x218] sm:$0xff] %vm2070, %v2568
        %2603 = vst.msk [vmem:[#allocation2 + $0x240] sm:$0xff] %vm2070, %v2570
        %2604 = vst.msk [vmem:[#allocation2 + $0x268] sm:$0xff] %vm2070, %v2572
        %v2606 = vsel %vm1789, %v2382, 0
        %v2607 = vsel %vm2393, %v1668, 0
        %v2608 = vsel %vm1960, %v1676, 0
        %v2609 = vsel %vm1961, %v1684, 0
        %v2610 = vsel %vm1962, %v1692, 0
        %v2611 = vsel %vm1963, %v1700, 0
        %v2612 = vsel %vm1964, %v1708, 0
        %v2613 = vsel %vm1965, %v1716, 0
        %v2614 = vsel %vm1966, %v1724, 0
        %v2615 = vsel %vm1967, %v1732, 0
        %v2616 = vsel %vm1968, %v1740, 0
        %v2617 = vsel %vm1969, %v1748, 0
        %v2618 = vsel %vm1970, %v1756, 0
        %v2619 = vsel %vm1971, %v1764, 0
        %v2620 = vsel %vm1972, %v1772, 0
        %v2621 = vsel %vm1973, %v2384, 0
        %v2622 = vsel %vm1974, %v2606, 0
        %2623 = vst.msk [vmem:[#allocation2 + $0x18] sm:$0xff] %vm1427, %v2607
        %2624 = vst.msk [vmem:[#allocation2 + $0x40] sm:$0xff] %vm1427, %v2608
        %2625 = vst.msk [vmem:[#allocation2 + $0x68] sm:$0xff] %vm1427, %v2609
        %2626 = vst.msk [vmem:[#allocation2 + $0x90] sm:$0xff] %vm1427, %v2610
        %2627 = vst.msk [vmem:[#allocation2 + $0xb8] sm:$0xff] %vm1427, %v2611
        %2628 = vst.msk [vmem:[#allocation2 + $0xe0] sm:$0xff] %vm1427, %v2612
        %2629 = vst.msk [vmem:[#allocation2 + $0x108] sm:$0xff] %vm1427, %v2613
        %2630 = vst.msk [vmem:[#allocation2 + $0x130] sm:$0xff] %vm1427, %v2614
        %2631 = vst.msk [vmem:[#allocation2 + $0x158] sm:$0xff] %vm1427, %v2615
        %2632 = vst.msk [vmem:[#allocation2 + $0x180] sm:$0xff] %vm1427, %v2616
        %2633 = vst.msk [vmem:[#allocation2 + $0x1a8] sm:$0xff] %vm1427, %v2617
        %2634 = vst.msk [vmem:[#allocation2 + $0x1d0] sm:$0xff] %vm1427, %v2618
        %2635 = vst.msk [vmem:[#allocation2 + $0x1f8] sm:$0xff] %vm1427, %v2619
        %2636 = vst.msk [vmem:[#allocation2 + $0x220] sm:$0xff] %vm1427, %v2620
        %2637 = vst.msk [vmem:[#allocation2 + $0x248] sm:$0xff] %vm1427, %v2621
        %2638 = vst.msk [vmem:[#allocation2 + $0x270] sm:$0xff] %vm1427, %v2622
        %2640 = vrot.lane.b32.xlu0 %v1652, 64
        %v2641 = vpop.permute.xlu0 %2640
        %2643 = vst.msk [vmem:[#allocation2 + $0x18] sm:$0xff] %vm2070, %v2027
        %2644 = vst.msk [vmem:[#allocation2 + $0x40] sm:$0xff] %vm2070, %v2029
        %2645 = vst.msk [vmem:[#allocation2 + $0x68] sm:$0xff] %vm2070, %v2031
        %2646 = vst.msk [vmem:[#allocation2 + $0x90] sm:$0xff] %vm2070, %v2033
        %2647 = vst.msk [vmem:[#allocation2 + $0xb8] sm:$0xff] %vm2070, %v2035
        %2648 = vst.msk [vmem:[#allocation2 + $0xe0] sm:$0xff] %vm2070, %v2037
        %2649 = vst.msk [vmem:[#allocation2 + $0x108] sm:$0xff] %vm2070, %v2039
        %2650 = vst.msk [vmem:[#allocation2 + $0x130] sm:$0xff] %vm2070, %v2041
        %2651 = vst.msk [vmem:[#allocation2 + $0x158] sm:$0xff] %vm2070, %v2043
        %2652 = vst.msk [vmem:[#allocation2 + $0x180] sm:$0xff] %vm2070, %v2045
        %2653 = vst.msk [vmem:[#allocation2 + $0x1a8] sm:$0xff] %vm2070, %v2047
        %2654 = vst.msk [vmem:[#allocation2 + $0x1d0] sm:$0xff] %vm2070, %v2049
        %2655 = vst.msk [vmem:[#allocation2 + $0x1f8] sm:$0xff] %vm2070, %v2051
        %2656 = vst.msk [vmem:[#allocation2 + $0x220] sm:$0xff] %vm2070, %v2053
        %2657 = vst.msk [vmem:[#allocation2 + $0x248] sm:$0xff] %vm2070, %v2641
        %2658 = vst.msk [vmem:[#allocation2 + $0x270] sm:$0xff] %vm2070, %v2023
        %v2659 = vsel %vm2332, %v2094, 0
        %v2660 = vsel %vm2333, %v2097, 0
        %v2661 = vsel %vm2334, %v2100, 0
        %v2662 = vsel %vm2335, %v2103, 0
        %v2663 = vsel %vm2336, %v2106, 0
        %v2664 = vsel %vm2337, %v2109, 0
        %v2665 = vsel %vm2338, %v2112, 0
        %v2666 = vsel %vm2339, %v2115, 0
        %v2667 = vsel %vm2340, %v2118, 0
        %v2668 = vsel %vm2341, %v2121, 0
        %v2669 = vsel %vm2342, %v2124, 0
        %v2670 = vsel %vm2343, %v2127, 0
        %v2671 = vsel %vm2344, %v2130, 0
        %v2672 = vsel %vm2345, %v2136, 0
        %v2673 = vsel %vm2346, %v2508, 0
        %2674 = vst.msk [vmem:[#allocation2 + $0x20] sm:$0xff] %vm1427, %v2659
        %2675 = vst.msk [vmem:[#allocation2 + $0x48] sm:$0xff] %vm1427, %v2660
        %2676 = vst.msk [vmem:[#allocation2 + $0x70] sm:$0xff] %vm1427, %v2661
        %2677 = vst.msk [vmem:[#allocation2 + $0x98] sm:$0xff] %vm1427, %v2662
        %2678 = vst.msk [vmem:[#allocation2 + $0xc0] sm:$0xff] %vm1427, %v2663
        %2679 = vst.msk [vmem:[#allocation2 + $0xe8] sm:$0xff] %vm1427, %v2664
        %2680 = vst.msk [vmem:[#allocation2 + $0x110] sm:$0xff] %vm1427, %v2665
        %2681 = vst.msk [vmem:[#allocation2 + $0x138] sm:$0xff] %vm1427, %v2666
        %2682 = vst.msk [vmem:[#allocation2 + $0x160] sm:$0xff] %vm1427, %v2667
        %2683 = vst.msk [vmem:[#allocation2 + $0x188] sm:$0xff] %vm1427, %v2668
        %2684 = vst.msk [vmem:[#allocation2 + $0x1b0] sm:$0xff] %vm1427, %v2669
        %2685 = vst.msk [vmem:[#allocation2 + $0x1d8] sm:$0xff] %vm1427, %v2670
        %2686 = vst.msk [vmem:[#allocation2 + $0x200] sm:$0xff] %vm1427, %v2671
        %2687 = vst.msk [vmem:[#allocation2 + $0x228] sm:$0xff] %vm1427, %v2672
        %2688 = vst.msk [vmem:[#allocation2 + $0x250] sm:$0xff] %vm1427, %v2673
        %2689 = vst.msk [vmem:[#allocation2 + $0x278] sm:$0xff] %vm1427, 0
        %v2690 = vld [vmem:[#allocation2] sm:$0xff]
        %v2691 = vld [vmem:[#allocation2 + $0x8] sm:$0xff]
        %v2692 = vld [vmem:[#allocation2 + $0x10] sm:$0xff]
        %v2693 = vld [vmem:[#allocation2 + $0x18] sm:$0xff]
        %v2694 = vld [vmem:[#allocation2 + $0x20] sm:$0xff]
        %v2695 = vld [vmem:[#allocation2 + $0x28] sm:$0xff]
        %v2696 = vld [vmem:[#allocation2 + $0x30] sm:$0xff]
        %v2697 = vld [vmem:[#allocation2 + $0x38] sm:$0xff]
        %v2698 = vld [vmem:[#allocation2 + $0x40] sm:$0xff]
        %v2699 = vld [vmem:[#allocation2 + $0x48] sm:$0xff]
        %v2700 = vld [vmem:[#allocation2 + $0x50] sm:$0xff]
        %v2701 = vld [vmem:[#allocation2 + $0x58] sm:$0xff]
        %v2702 = vld [vmem:[#allocation2 + $0x60] sm:$0xff]
        %v2703 = vld [vmem:[#allocation2 + $0x68] sm:$0xff]
        %v2704 = vld [vmem:[#allocation2 + $0x70] sm:$0xff]
        %v2705 = vld [vmem:[#allocation2 + $0x78] sm:$0xff]
        %v2706 = vld [vmem:[#allocation2 + $0x80] sm:$0xff]
        %v2707 = vld [vmem:[#allocation2 + $0x88] sm:$0xff]
        %v2708 = vld [vmem:[#allocation2 + $0x90] sm:$0xff]
        %v2709 = vld [vmem:[#allocation2 + $0x98] sm:$0xff]
        %v2710 = vld [vmem:[#allocation2 + $0xa0] sm:$0xff]
        %v2711 = vld [vmem:[#allocation2 + $0xa8] sm:$0xff]
        %v2712 = vld [vmem:[#allocation2 + $0xb0] sm:$0xff]
        %v2713 = vld [vmem:[#allocation2 + $0xb8] sm:$0xff]
        %v2714 = vld [vmem:[#allocation2 + $0xc0] sm:$0xff]
        %v2715 = vld [vmem:[#allocation2 + $0xc8] sm:$0xff]
        %v2716 = vld [vmem:[#allocation2 + $0xd0] sm:$0xff]
        %v2717 = vld [vmem:[#allocation2 + $0xd8] sm:$0xff]
        %v2718 = vld [vmem:[#allocation2 + $0xe0] sm:$0xff]
        %v2719 = vld [vmem:[#allocation2 + $0xe8] sm:$0xff]
        %v2720 = vld [vmem:[#allocation2 + $0xf0] sm:$0xff]
        %v2721 = vld [vmem:[#allocation2 + $0xf8] sm:$0xff]
        %v2722 = vld [vmem:[#allocation2 + $0x100] sm:$0xff]
        %v2723 = vld [vmem:[#allocation2 + $0x108] sm:$0xff]
        %v2724 = vld [vmem:[#allocation2 + $0x110] sm:$0xff]
        %v2725 = vld [vmem:[#allocation2 + $0x118] sm:$0xff]
        %v2726 = vld [vmem:[#allocation2 + $0x120] sm:$0xff]
        %v2727 = vld [vmem:[#allocation2 + $0x128] sm:$0xff]
        %v2728 = vld [vmem:[#allocation2 + $0x130] sm:$0xff]
        %v2729 = vld [vmem:[#allocation2 + $0x138] sm:$0xff]
        %v2730 = vld [vmem:[#allocation2 + $0x140] sm:$0xff]
        %v2731 = vld [vmem:[#allocation2 + $0x148] sm:$0xff]
        %v2732 = vld [vmem:[#allocation2 + $0x150] sm:$0xff]
        %v2733 = vld [vmem:[#allocation2 + $0x158] sm:$0xff]
        %v2734 = vld [vmem:[#allocation2 + $0x160] sm:$0xff]
        %v2735 = vld [vmem:[#allocation2 + $0x168] sm:$0xff]
        %v2736 = vld [vmem:[#allocation2 + $0x170] sm:$0xff]
        %v2737 = vld [vmem:[#allocation2 + $0x178] sm:$0xff]
        %v2738 = vld [vmem:[#allocation2 + $0x180] sm:$0xff]
        %v2739 = vld [vmem:[#allocation2 + $0x188] sm:$0xff]
        %v2740 = vld [vmem:[#allocation2 + $0x190] sm:$0xff]
        %v2741 = vld [vmem:[#allocation2 + $0x198] sm:$0xff]
        %v2742 = vld [vmem:[#allocation2 + $0x1a0] sm:$0xff]
        %v2743 = vld [vmem:[#allocation2 + $0x1a8] sm:$0xff]
        %v2744 = vld [vmem:[#allocation2 + $0x1b0] sm:$0xff]
        %v2745 = vld [vmem:[#allocation2 + $0x1b8] sm:$0xff]
        %v2746 = vld [vmem:[#allocation2 + $0x1c0] sm:$0xff]
        %v2747 = vld [vmem:[#allocation2 + $0x1c8] sm:$0xff]
        %v2748 = vld [vmem:[#allocation2 + $0x1d0] sm:$0xff]
        %v2749 = vld [vmem:[#allocation2 + $0x1d8] sm:$0xff]
        %v2750 = vld [vmem:[#allocation2 + $0x1e0] sm:$0xff]
        %v2751 = vld [vmem:[#allocation2 + $0x1e8] sm:$0xff]
        %v2752 = vld [vmem:[#allocation2 + $0x1f0] sm:$0xff]
        %v2753 = vld [vmem:[#allocation2 + $0x1f8] sm:$0xff]
        %v2754 = vld [vmem:[#allocation2 + $0x200] sm:$0xff]
        %v2755 = vld [vmem:[#allocation2 + $0x208] sm:$0xff]
        %v2756 = vld [vmem:[#allocation2 + $0x210] sm:$0xff]
        %v2757 = vld [vmem:[#allocation2 + $0x218] sm:$0xff]
        %v2758 = vld [vmem:[#allocation2 + $0x220] sm:$0xff]
        %v2759 = vld [vmem:[#allocation2 + $0x228] sm:$0xff]
        %v2760 = vld [vmem:[#allocation2 + $0x230] sm:$0xff]
        %v2761 = vld [vmem:[#allocation2 + $0x238] sm:$0xff]
        %v2762 = vld [vmem:[#allocation2 + $0x240] sm:$0xff]
        %v2763 = vld [vmem:[#allocation2 + $0x248] sm:$0xff]
        %v2764 = vld [vmem:[#allocation2 + $0x250] sm:$0xff]
        %v2765 = vld [vmem:[#allocation2 + $0x258] sm:$0xff]
        %v2766 = vld [vmem:[#allocation2 + $0x260] sm:$0xff]
        %v2767 = vld [vmem:[#allocation2 + $0x268] sm:$0xff]
        %v2768 = vld [vmem:[#allocation2 + $0x270] sm:$0xff]
        %v2769 = vld [vmem:[#allocation2 + $0x278] sm:$0xff]
        %v2770 = vld [vmem:[%s5] sm:$0xf]
        %v2771 = vld [vmem:[%s5 + $0x4] sm:$0xf]
        %v2772 = vld [vmem:[%s5 + $0x8] sm:$0xf]
        %v2773 = vld [vmem:[%s5 + $0xc] sm:$0xf]
        %v2774 = vld [vmem:[%s5 + $0x10] sm:$0xf]
        %v2775 = vld [vmem:[%s5 + $0x14] sm:$0xf]
        %v2776 = vld [vmem:[%s5 + $0x18] sm:$0xf]
        %v2777 = vld [vmem:[%s5 + $0x1c] sm:$0xf]
        %v2778 = vld [vmem:[%s5 + $0x20] sm:$0xf]
        %v2779 = vld [vmem:[%s5 + $0x24] sm:$0xf]
        %v2780 = vld [vmem:[%s5 + $0x28] sm:$0xf]
        %v2781 = vld [vmem:[%s5 + $0x2c] sm:$0xf]
        %v2782 = vld [vmem:[%s5 + $0x30] sm:$0xf]
        %v2783 = vld [vmem:[%s5 + $0x34] sm:$0xf]
        %v2784 = vld [vmem:[%s5 + $0x38] sm:$0xf]
        %v2785 = vld [vmem:[%s5 + $0x3c] sm:$0xf]
        %v2786 = vld [vmem:[%s5 + $0x40] sm:$0xf]
        %v2787 = vld [vmem:[%s5 + $0x44] sm:$0xf]
        %v2788 = vld [vmem:[%s5 + $0x48] sm:$0xf]
        %v2789 = vld [vmem:[%s5 + $0x4c] sm:$0xf]
        %v2790 = vld [vmem:[%s5 + $0x50] sm:$0xf]
        %v2791 = vld [vmem:[%s5 + $0x54] sm:$0xf]
        %v2792 = vld [vmem:[%s5 + $0x58] sm:$0xf]
        %v2793 = vld [vmem:[%s5 + $0x5c] sm:$0xf]
        %v2794 = vld [vmem:[%s5 + $0x60] sm:$0xf]
        %v2795 = vld [vmem:[%s5 + $0x64] sm:$0xf]
        %v2796 = vld [vmem:[%s5 + $0x68] sm:$0xf]
        %v2797 = vld [vmem:[%s5 + $0x6c] sm:$0xf]
        %v2798 = vld [vmem:[%s5 + $0x70] sm:$0xf]
        %v2799 = vld [vmem:[%s5 + $0x74] sm:$0xf]
        %v2800 = vld [vmem:[%s5 + $0x78] sm:$0xf]
        %v2801 = vld [vmem:[%s5 + $0x7c] sm:$0xf]
        %v2802 = vld [vmem:[%s5 + $0x80] sm:$0xf]
        %v2803 = vld [vmem:[%s5 + $0x84] sm:$0xf]
        %v2804 = vld [vmem:[%s5 + $0x88] sm:$0xf]
        %v2805 = vld [vmem:[%s5 + $0x8c] sm:$0xf]
        %v2806 = vld [vmem:[%s5 + $0x90] sm:$0xf]
        %v2807 = vld [vmem:[%s5 + $0x94] sm:$0xf]
        %v2808 = vld [vmem:[%s5 + $0x98] sm:$0xf]
        %v2809 = vld [vmem:[%s5 + $0x9c] sm:$0xf]
        %v2810 = vld [vmem:[%s5 + $0xa0] sm:$0xf]
        %v2811 = vld [vmem:[%s5 + $0xa4] sm:$0xf]
        %v2812 = vld [vmem:[%s5 + $0xa8] sm:$0xf]
        %v2813 = vld [vmem:[%s5 + $0xac] sm:$0xf]
        %v2814 = vld [vmem:[%s5 + $0xb0] sm:$0xf]
        %v2815 = vld [vmem:[%s5 + $0xb4] sm:$0xf]
        %v2816 = vld [vmem:[%s5 + $0xb8] sm:$0xf]
        %v2817 = vld [vmem:[%s5 + $0xbc] sm:$0xf]
        %v2818 = vld [vmem:[%s5 + $0xc0] sm:$0xf]
        %v2819 = vld [vmem:[%s5 + $0xc4] sm:$0xf]
        %v2820 = vld [vmem:[%s5 + $0xc8] sm:$0xf]
        %v2821 = vld [vmem:[%s5 + $0xcc] sm:$0xf]
        %v2822 = vld [vmem:[%s5 + $0xd0] sm:$0xf]
        %v2823 = vld [vmem:[%s5 + $0xd4] sm:$0xf]
        %v2824 = vld [vmem:[%s5 + $0xd8] sm:$0xf]
        %v2825 = vld [vmem:[%s5 + $0xdc] sm:$0xf]
        %v2826 = vld [vmem:[%s5 + $0xe0] sm:$0xf]
        %v2827 = vld [vmem:[%s5 + $0xe4] sm:$0xf]
        %v2828 = vld [vmem:[%s5 + $0xe8] sm:$0xf]
        %v2829 = vld [vmem:[%s5 + $0xec] sm:$0xf]
        %v2830 = vld [vmem:[%s5 + $0xf0] sm:$0xf]
        %v2831 = vld [vmem:[%s5 + $0xf4] sm:$0xf]
        %v2832 = vld [vmem:[%s5 + $0xf8] sm:$0xf]
        %v2833 = vld [vmem:[%s5 + $0xfc] sm:$0xf]
        %v2834 = vld [vmem:[%s5 + $0x100] sm:$0xf]
        %v2835 = vld [vmem:[%s5 + $0x104] sm:$0xf]
        %v2836 = vld [vmem:[%s5 + $0x108] sm:$0xf]
        %v2837 = vld [vmem:[%s5 + $0x10c] sm:$0xf]
        %v2838 = vld [vmem:[%s5 + $0x110] sm:$0xf]
        %v2839 = vld [vmem:[%s5 + $0x114] sm:$0xf]
        %v2840 = vld [vmem:[%s5 + $0x118] sm:$0xf]
        %v2841 = vld [vmem:[%s5 + $0x11c] sm:$0xf]
        %v2914 = vunpack.c.l.b16 %v2770
        %v2915 = vunpack.c.l.b16 %v2771
        %v2916 = vunpack.c.l.b16 %v2772
        %v2917 = vunpack.c.l.b16 %v2773
        %v2918 = vunpack.c.l.b16 %v2774
        %v2919 = vunpack.c.l.b16 %v2775
        %v2920 = vunpack.c.l.b16 %v2776
        %v2921 = vunpack.c.l.b16 %v2777
        %v2922 = vunpack.c.l.b16 %v2778
        %v2923 = vunpack.c.l.b16 %v2779
        %v2924 = vunpack.c.l.b16 %v2780
        %v2925 = vunpack.c.l.b16 %v2781
        %v2926 = vunpack.c.l.b16 %v2782
        %v2927 = vunpack.c.l.b16 %v2783
        %v2928 = vunpack.c.l.b16 %v2784
        %v2929 = vunpack.c.l.b16 %v2785
        %v2930 = vunpack.c.l.b16 %v2786
        %v2931 = vunpack.c.l.b16 %v2787
        %v2932 = vunpack.c.l.b16 %v2788
        %v2933 = vunpack.c.l.b16 %v2789
        %v2934 = vunpack.c.l.b16 %v2790
        %v2935 = vunpack.c.l.b16 %v2791
        %v2936 = vunpack.c.l.b16 %v2792
        %v2937 = vunpack.c.l.b16 %v2793
        %v2938 = vunpack.c.l.b16 %v2794
        %v2939 = vunpack.c.l.b16 %v2795
        %v2940 = vunpack.c.l.b16 %v2796
        %v2941 = vunpack.c.l.b16 %v2797
        %v2942 = vunpack.c.l.b16 %v2798
        %v2943 = vunpack.c.l.b16 %v2799
        %v2944 = vunpack.c.l.b16 %v2800
        %v2945 = vunpack.c.l.b16 %v2801
        %v2946 = vunpack.c.l.b16 %v2802
        %v2947 = vunpack.c.l.b16 %v2803
        %v2948 = vunpack.c.l.b16 %v2804
        %v2949 = vunpack.c.l.b16 %v2805
        %v2950 = vunpack.c.l.b16 %v2806
        %v2951 = vunpack.c.l.b16 %v2807
        %v2952 = vunpack.c.l.b16 %v2808
        %v2953 = vunpack.c.l.b16 %v2809
        %v2954 = vunpack.c.l.b16 %v2810
        %v2955 = vunpack.c.l.b16 %v2811
        %v2956 = vunpack.c.l.b16 %v2812
        %v2957 = vunpack.c.l.b16 %v2813
        %v2958 = vunpack.c.l.b16 %v2814
        %v2959 = vunpack.c.l.b16 %v2815
        %v2960 = vunpack.c.l.b16 %v2816
        %v2961 = vunpack.c.l.b16 %v2817
        %v2962 = vunpack.c.l.b16 %v2818
        %v2963 = vunpack.c.l.b16 %v2819
        %v2964 = vunpack.c.l.b16 %v2820
        %v2965 = vunpack.c.l.b16 %v2821
        %v2966 = vunpack.c.l.b16 %v2822
        %v2967 = vunpack.c.l.b16 %v2823
        %v2968 = vunpack.c.l.b16 %v2824
        %v2969 = vunpack.c.l.b16 %v2825
        %v2970 = vunpack.c.l.b16 %v2826
        %v2971 = vunpack.c.l.b16 %v2827
        %v2972 = vunpack.c.l.b16 %v2828
        %v2973 = vunpack.c.l.b16 %v2829
        %v2974 = vunpack.c.l.b16 %v2830
        %v2975 = vunpack.c.l.b16 %v2831
        %v2976 = vunpack.c.l.b16 %v2832
        %v2977 = vunpack.c.l.b16 %v2833
        %v2978 = vunpack.c.l.b16 %v2834
        %v2979 = vunpack.c.l.b16 %v2835
        %v2980 = vunpack.c.l.b16 %v2836
        %v2981 = vunpack.c.l.b16 %v2837
        %v2982 = vunpack.c.l.b16 %v2838
        %v2983 = vunpack.c.l.b16 %v2839
        %v2984 = vunpack.c.l.b16 %v2840
        %v2985 = vunpack.c.l.b16 %v2841
        %v2986 = vpack.c.b16 %v2915, %v2914
        %v2987 = vpack.c.b16 %v2917, %v2916
        %v2988 = vpack.c.b16 %v2919, %v2918
        %v2989 = vpack.c.b16 %v2921, %v2920
        %v2990 = vpack.c.b16 %v2923, %v2922
        %v2991 = vpack.c.b16 %v2925, %v2924
        %v2992 = vpack.c.b16 %v2927, %v2926
        %v2993 = vpack.c.b16 %v2929, %v2928
        %v2994 = vpack.c.b16 %v2931, %v2930
        %v2995 = vpack.c.b16 %v2933, %v2932
        %v2996 = vpack.c.b16 %v2935, %v2934
        %v2997 = vpack.c.b16 %v2937, %v2936
        %v2998 = vpack.c.b16 %v2939, %v2938
        %v2999 = vpack.c.b16 %v2941, %v2940
        %v3000 = vpack.c.b16 %v2943, %v2942
        %v3001 = vpack.c.b16 %v2945, %v2944
        %v3002 = vpack.c.b16 %v2947, %v2946
        %v3003 = vpack.c.b16 %v2949, %v2948
        %v3004 = vpack.c.b16 %v2951, %v2950
        %v3005 = vpack.c.b16 %v2953, %v2952
        %v3006 = vpack.c.b16 %v2955, %v2954
        %v3007 = vpack.c.b16 %v2957, %v2956
        %v3008 = vpack.c.b16 %v2959, %v2958
        %v3009 = vpack.c.b16 %v2961, %v2960
        %v3010 = vpack.c.b16 %v2963, %v2962
        %v3011 = vpack.c.b16 %v2965, %v2964
        %v3012 = vpack.c.b16 %v2967, %v2966
        %v3013 = vpack.c.b16 %v2969, %v2968
        %v3014 = vpack.c.b16 %v2971, %v2970
        %v3015 = vpack.c.b16 %v2973, %v2972
        %v3016 = vpack.c.b16 %v2975, %v2974
        %v3017 = vpack.c.b16 %v2977, %v2976
        %v3018 = vpack.c.b16 %v2979, %v2978
        %v3019 = vpack.c.b16 %v2981, %v2980
        %v3020 = vpack.c.b16 %v2983, %v2982
        %v3021 = vpack.c.b16 %v2985, %v2984
        %v3059 = vsel %vm1427, %v2694, 0
        %v3062 = vsel %vm1427, %v2699, 0
        %v3065 = vsel %vm1427, %v2704, 0
        %v3068 = vsel %vm1427, %v2709, 0
        %v3071 = vsel %vm1427, %v2714, 0
        %v3074 = vsel %vm1427, %v2719, 0
        %v3077 = vsel %vm1427, %v2724, 0
        %v3080 = vsel %vm1427, %v2729, 0
        %v3083 = vsel %vm1427, %v2734, 0
        %v3086 = vsel %vm1427, %v2739, 0
        %v3089 = vsel %vm1427, %v2744, 0
        %v3092 = vsel %vm1427, %v2749, 0
        %v3095 = vsel %vm1427, %v2754, 0
        %v3098 = vsel %vm1427, %v2759, 0
        %v3101 = vsel %vm1427, %v2764, 0
        %v3104 = vsel %vm1427, %v2769, 0
        %3106 = vmatprep.subr.bf16.mxu0 0
        %3107 = vmatpush1.bf16.msra.mxu0 %v2986
        %3108 = vmatprep.subr.bf16.mxu0 0
        %3109 = vmatpush1.bf16.msra.mxu0 %v2987
        %3110 = vmatprep.subr.bf16.mxu0 0
        %3111 = vmatpush1.bf16.msra.mxu0 %v2988
        %3112 = vmatprep.subr.bf16.mxu0 0
        %3113 = vmatpush1.bf16.msra.mxu0 %v2989
        %3114 = vmatprep.subr.bf16.mxu0 0
        %3115 = vmatpush1.bf16.msra.mxu0 %v2990
        %3116 = vmatprep.subr.bf16.mxu0 0
        %3117 = vmatpush1.bf16.msra.mxu0 %v2991
        %3118 = vmatprep.subr.bf16.mxu0 0
        %3119 = vmatpush1.bf16.msra.mxu0 %v2992
        %3120 = vmatprep.subr.bf16.mxu0 0
        %3121 = vmatpush1.bf16.msra.mxu0 %v2993
        %3122 = vmatprep.subr.bf16.mxu0 0
        %3123 = vmatpush1.bf16.msra.mxu0 %v2994
        %3124 = vmatprep.subr.bf16.mxu0 0
        %3125 = vmatpush1.bf16.msra.mxu0 %v2995
        %3126 = vmatprep.subr.bf16.mxu0 0
        %3127 = vmatpush1.bf16.msra.mxu0 %v2996
        %3128 = vmatprep.subr.bf16.mxu0 0
        %3129 = vmatpush1.bf16.msra.mxu0 %v2997
        %3130 = vmatprep.subr.bf16.mxu0 0
        %3131 = vmatpush1.bf16.msra.mxu0 %v2998
        %3132 = vmatprep.subr.bf16.mxu0 0
        %3133 = vmatpush1.bf16.msra.mxu0 %v2999
        %3134 = vmatprep.subr.bf16.mxu0 0
        %3135 = vmatpush1.bf16.msra.mxu0 %v3000
        %3136 = vmatprep.subr.bf16.mxu0 0
        %3137 = vmatpush1.bf16.msra.mxu0 %v3001
        %3138 = vmatprep.mubr.bf16.mxu0 %v2691
        %3139 = vmatmul.mubr.bf16.gmra.mrb[0].mxu0 %v2690
        %v3140 = vpop.f32.mrb[0].mxu0
        %v3141 = vadd.f32 0.0, %v3140
        %v3142 = vpop.f32.mrb[0].mxu0
        %v3143 = vpop.f32.mrb[0].mxu0
        %v3144 = vadd.f32 0.0, %v3143
        %v3145 = vpop.f32.mrb[0].mxu0
        %3146 = vmatprep.mubr.bf16.mxu0 %v2696
        %3147 = vmatmul.mubr.bf16.gmra.mrb[0].mxu0 %v2695
        %v3148 = vpop.f32.mrb[0].mxu0
        %v3149 = vadd.f32 0.0, %v3148
        %v3150 = vpop.f32.mrb[0].mxu0
        %v3151 = vpop.f32.mrb[0].mxu0
        %v3152 = vadd.f32 0.0, %v3151
        %v3153 = vpop.f32.mrb[0].mxu0
        %3154 = vmatprep.mubr.bf16.mxu0 %v2701
        %3155 = vmatmul.mubr.bf16.gmra.mrb[0].mxu0 %v2700
        %v3156 = vpop.f32.mrb[0].mxu0
        %v3157 = vadd.f32 0.0, %v3156
        %v3158 = vpop.f32.mrb[0].mxu0
        %v3159 = vpop.f32.mrb[0].mxu0
        %v3160 = vadd.f32 0.0, %v3159
        %v3161 = vpop.f32.mrb[0].mxu0
        %3162 = vmatprep.mubr.bf16.mxu0 %v2706
        %3163 = vmatmul.mubr.bf16.gmra.mrb[0].mxu0 %v2705
        %v3164 = vpop.f32.mrb[0].mxu0
        %v3165 = vadd.f32 0.0, %v3164
        %v3166 = vpop.f32.mrb[0].mxu0
        %v3167 = vpop.f32.mrb[0].mxu0
        %v3168 = vadd.f32 0.0, %v3167
        %v3169 = vpop.f32.mrb[0].mxu0
        %3170 = vmatprep.mubr.bf16.mxu0 %v2711
        %3171 = vmatmul.mubr.bf16.gmra.mrb[0].mxu0 %v2710
        %v3172 = vpop.f32.mrb[0].mxu0
        %v3173 = vadd.f32 0.0, %v3172
        %v3174 = vpop.f32.mrb[0].mxu0
        %v3175 = vpop.f32.mrb[0].mxu0
        %v3176 = vadd.f32 0.0, %v3175
        %v3177 = vpop.f32.mrb[0].mxu0
        %3178 = vmatprep.mubr.bf16.mxu0 %v2716
        %3179 = vmatmul.mubr.bf16.gmra.mrb[0].mxu0 %v2715
        %v3180 = vpop.f32.mrb[0].mxu0
        %v3181 = vadd.f32 0.0, %v3180
        %v3182 = vpop.f32.mrb[0].mxu0
        %v3183 = vpop.f32.mrb[0].mxu0
        %v3184 = vadd.f32 0.0, %v3183
        %v3185 = vpop.f32.mrb[0].mxu0
        %3186 = vmatprep.mubr.bf16.mxu0 %v2721
        %3187 = vmatmul.mubr.bf16.gmra.mrb[0].mxu0 %v2720
        %v3188 = vpop.f32.mrb[0].mxu0
        %v3189 = vadd.f32 0.0, %v3188
        %v3190 = vpop.f32.mrb[0].mxu0
        %v3191 = vpop.f32.mrb[0].mxu0
        %v3192 = vadd.f32 0.0, %v3191
        %v3193 = vpop.f32.mrb[0].mxu0
        %3194 = vmatprep.mubr.bf16.mxu0 %v2726
        %3195 = vmatmul.mubr.bf16.gmra.mrb[0].mxu0 %v2725
        %v3196 = vpop.f32.mrb[0].mxu0
        %v3197 = vadd.f32 0.0, %v3196
        %v3198 = vpop.f32.mrb[0].mxu0
        %v3199 = vpop.f32.mrb[0].mxu0
        %v3200 = vadd.f32 0.0, %v3199
        %v3201 = vpop.f32.mrb[0].mxu0
        %3202 = vmatprep.mubr.bf16.mxu0 %v2731
        %3203 = vmatmul.mubr.bf16.gmra.mrb[0].mxu0 %v2730
        %v3204 = vpop.f32.mrb[0].mxu0
        %v3205 = vadd.f32 0.0, %v3204
        %v3206 = vpop.f32.mrb[0].mxu0
        %v3207 = vpop.f32.mrb[0].mxu0
        %v3208 = vadd.f32 0.0, %v3207
        %v3209 = vpop.f32.mrb[0].mxu0
        %3210 = vmatprep.mubr.bf16.mxu0 %v2736
        %3211 = vmatmul.mubr.bf16.gmra.mrb[0].mxu0 %v2735
        %v3212 = vpop.f32.mrb[0].mxu0
        %v3213 = vadd.f32 0.0, %v3212
        %v3214 = vpop.f32.mrb[0].mxu0
        %v3215 = vpop.f32.mrb[0].mxu0
        %v3216 = vadd.f32 0.0, %v3215
        %v3217 = vpop.f32.mrb[0].mxu0
        %3218 = vmatprep.mubr.bf16.mxu0 %v2741
        %3219 = vmatmul.mubr.bf16.gmra.mrb[0].mxu0 %v2740
        %v3220 = vpop.f32.mrb[0].mxu0
        %v3221 = vadd.f32 0.0, %v3220
        %v3222 = vpop.f32.mrb[0].mxu0
        %v3223 = vpop.f32.mrb[0].mxu0
        %v3224 = vadd.f32 0.0, %v3223
        %v3225 = vpop.f32.mrb[0].mxu0
        %3226 = vmatprep.mubr.bf16.mxu0 %v2746
        %3227 = vmatmul.mubr.bf16.gmra.mrb[0].mxu0 %v2745
        %v3228 = vpop.f32.mrb[0].mxu0
        %v3229 = vadd.f32 0.0, %v3228
        %v3230 = vpop.f32.mrb[0].mxu0
        %v3231 = vpop.f32.mrb[0].mxu0
        %v3232 = vadd.f32 0.0, %v3231
        %v3233 = vpop.f32.mrb[0].mxu0
        %3234 = vmatprep.mubr.bf16.mxu0 %v2751
        %3235 = vmatmul.mubr.bf16.gmra.mrb[0].mxu0 %v2750
        %v3236 = vpop.f32.mrb[0].mxu0
        %v3237 = vadd.f32 0.0, %v3236
        %v3238 = vpop.f32.mrb[0].mxu0
        %v3239 = vpop.f32.mrb[0].mxu0
        %v3240 = vadd.f32 0.0, %v3239
        %v3241 = vpop.f32.mrb[0].mxu0
        %3242 = vmatprep.mubr.bf16.mxu0 %v2756
        %3243 = vmatmul.mubr.bf16.gmra.mrb[0].mxu0 %v2755
        %v3244 = vpop.f32.mrb[0].mxu0
        %v3245 = vadd.f32 0.0, %v3244
        %v3246 = vpop.f32.mrb[0].mxu0
        %v3247 = vpop.f32.mrb[0].mxu0
        %v3248 = vadd.f32 0.0, %v3247
        %v3249 = vpop.f32.mrb[0].mxu0
        %3250 = vmatprep.mubr.bf16.mxu0 %v2761
        %3251 = vmatmul.mubr.bf16.gmra.mrb[0].mxu0 %v2760
        %v3252 = vpop.f32.mrb[0].mxu0
        %v3253 = vadd.f32 0.0, %v3252
        %v3254 = vpop.f32.mrb[0].mxu0
        %v3255 = vpop.f32.mrb[0].mxu0
        %v3256 = vadd.f32 0.0, %v3255
        %v3257 = vpop.f32.mrb[0].mxu0
        %3258 = vmatprep.mubr.bf16.mxu0 %v2766
        %3259 = vmatmul.mubr.bf16.gmra.mrb[0].mxu0 %v2765
        %v3260 = vpop.f32.mrb[0].mxu0
        %v3261 = vadd.f32 0.0, %v3260
        %v3262 = vpop.f32.mrb[0].mxu0
        %v3263 = vpop.f32.mrb[0].mxu0
        %v3264 = vadd.f32 0.0, %v3263
        %v3265 = vpop.f32.mrb[0].mxu0
        %3266 = vdwg.mxu0
        %3267 = vmatprep.subr.bf16.mxu0 0
        %3268 = vmatpush1.bf16.msra.mxu0 %v3002
        %3269 = vmatprep.subr.bf16.mxu0 0
        %3270 = vmatpush1.bf16.msra.mxu0 %v3003
        %3271 = vmatprep.subr.bf16.mxu0 0
        %3272 = vmatpush1.bf16.msra.mxu0 %v3004
        %3273 = vmatprep.subr.bf16.mxu0 0
        %3274 = vmatpush1.bf16.msra.mxu0 %v3005
        %3275 = vmatprep.subr.bf16.mxu0 0
        %3276 = vmatpush1.bf16.msra.mxu0 %v3006
        %3277 = vmatprep.subr.bf16.mxu0 0
        %3278 = vmatpush1.bf16.msra.mxu0 %v3007
        %3279 = vmatprep.subr.bf16.mxu0 0
        %3280 = vmatpush1.bf16.msra.mxu0 %v3008
        %3281 = vmatprep.subr.bf16.mxu0 0
        %3282 = vmatpush1.bf16.msra.mxu0 %v3009
        %3283 = vmatprep.subr.bf16.mxu0 0
        %3284 = vmatpush1.bf16.msra.mxu0 %v3010
        %3285 = vmatprep.subr.bf16.mxu0 0
        %3286 = vmatpush1.bf16.msra.mxu0 %v3011
        %3287 = vmatprep.subr.bf16.mxu0 0
        %3288 = vmatpush1.bf16.msra.mxu0 %v3012
        %3289 = vmatprep.subr.bf16.mxu0 0
        %3290 = vmatpush1.bf16.msra.mxu0 %v3013
        %3291 = vmatprep.subr.bf16.mxu0 0
        %3292 = vmatpush1.bf16.msra.mxu0 %v3014
        %3293 = vmatprep.subr.bf16.mxu0 0
        %3294 = vmatpush1.bf16.msra.mxu0 %v3015
        %3295 = vmatprep.subr.bf16.mxu0 0
        %3296 = vmatpush1.bf16.msra.mxu0 %v3016
        %3297 = vmatprep.subr.bf16.mxu0 0
        %3298 = vmatpush1.bf16.msra.mxu0 %v3017
        %3299 = vmatprep.mubr.bf16.mxu0 %v2693
        %3300 = vmatmul.mubr.bf16.gmra.mrb[0].mxu0 %v2692
        %v3301 = vpop.f32.mrb[0].mxu0
        %v3302 = vadd.f32 %v3141, %v3301
        %v3303 = vpop.f32.mrb[0].mxu0
        %v3304 = vpop.f32.mrb[0].mxu0
        %v3305 = vadd.f32 %v3144, %v3304
        %v3306 = vpop.f32.mrb[0].mxu0
        %3307 = vmatprep.mubr.bf16.mxu0 %v2698
        %3308 = vmatmul.mubr.bf16.gmra.mrb[0].mxu0 %v2697
        %v3309 = vpop.f32.mrb[0].mxu0
        %v3310 = vadd.f32 %v3149, %v3309
        %v3311 = vpop.f32.mrb[0].mxu0
        %v3312 = vpop.f32.mrb[0].mxu0
        %v3313 = vadd.f32 %v3152, %v3312
        %v3314 = vpop.f32.mrb[0].mxu0
        %3315 = vmatprep.mubr.bf16.mxu0 %v2703
        %3316 = vmatmul.mubr.bf16.gmra.mrb[0].mxu0 %v2702
        %v3317 = vpop.f32.mrb[0].mxu0
        %v3318 = vadd.f32 %v3157, %v3317
        %v3319 = vpop.f32.mrb[0].mxu0
        %v3320 = vpop.f32.mrb[0].mxu0
        %v3321 = vadd.f32 %v3160, %v3320
        %v3322 = vpop.f32.mrb[0].mxu0
        %3323 = vmatprep.mubr.bf16.mxu0 %v2708
        %3324 = vmatmul.mubr.bf16.gmra.mrb[0].mxu0 %v2707
        %v3325 = vpop.f32.mrb[0].mxu0
        %v3326 = vadd.f32 %v3165, %v3325
        %v3327 = vpop.f32.mrb[0].mxu0
        %v3328 = vpop.f32.mrb[0].mxu0
        %v3329 = vadd.f32 %v3168, %v3328
        %v3330 = vpop.f32.mrb[0].mxu0
        %3331 = vmatprep.mubr.bf16.mxu0 %v2713
        %3332 = vmatmul.mubr.bf16.gmra.mrb[0].mxu0 %v2712
        %v3333 = vpop.f32.mrb[0].mxu0
        %v3334 = vadd.f32 %v3173, %v3333
        %v3335 = vpop.f32.mrb[0].mxu0
        %v3336 = vpop.f32.mrb[0].mxu0
        %v3337 = vadd.f32 %v3176, %v3336
        %v3338 = vpop.f32.mrb[0].mxu0
        %3339 = vmatprep.mubr.bf16.mxu0 %v2718
        %3340 = vmatmul.mubr.bf16.gmra.mrb[0].mxu0 %v2717
        %v3341 = vpop.f32.mrb[0].mxu0
        %v3342 = vadd.f32 %v3181, %v3341
        %v3343 = vpop.f32.mrb[0].mxu0
        %v3344 = vpop.f32.mrb[0].mxu0
        %v3345 = vadd.f32 %v3184, %v3344
        %v3346 = vpop.f32.mrb[0].mxu0
        %3347 = vmatprep.mubr.bf16.mxu0 %v2723
        %3348 = vmatmul.mubr.bf16.gmra.mrb[0].mxu0 %v2722
        %v3349 = vpop.f32.mrb[0].mxu0
        %v3350 = vadd.f32 %v3189, %v3349
        %v3351 = vpop.f32.mrb[0].mxu0
        %v3352 = vpop.f32.mrb[0].mxu0
        %v3353 = vadd.f32 %v3192, %v3352
        %v3354 = vpop.f32.mrb[0].mxu0
        %3355 = vmatprep.mubr.bf16.mxu0 %v2728
        %3356 = vmatmul.mubr.bf16.gmra.mrb[0].mxu0 %v2727
        %v3357 = vpop.f32.mrb[0].mxu0
        %v3358 = vadd.f32 %v3197, %v3357
        %v3359 = vpop.f32.mrb[0].mxu0
        %v3360 = vpop.f32.mrb[0].mxu0
        %v3361 = vadd.f32 %v3200, %v3360
        %v3362 = vpop.f32.mrb[0].mxu0
        %3363 = vmatprep.mubr.bf16.mxu0 %v2733
        %3364 = vmatmul.mubr.bf16.gmra.mrb[0].mxu0 %v2732
        %v3365 = vpop.f32.mrb[0].mxu0
        %v3366 = vadd.f32 %v3205, %v3365
        %v3367 = vpop.f32.mrb[0].mxu0
        %v3368 = vpop.f32.mrb[0].mxu0
        %v3369 = vadd.f32 %v3208, %v3368
        %v3370 = vpop.f32.mrb[0].mxu0
        %3371 = vmatprep.mubr.bf16.mxu0 %v2738
        %3372 = vmatmul.mubr.bf16.gmra.mrb[0].mxu0 %v2737
        %v3373 = vpop.f32.mrb[0].mxu0
        %v3374 = vadd.f32 %v3213, %v3373
        %v3375 = vpop.f32.mrb[0].mxu0
        %v3376 = vpop.f32.mrb[0].mxu0
        %v3377 = vadd.f32 %v3216, %v3376
        %v3378 = vpop.f32.mrb[0].mxu0
        %3379 = vmatprep.mubr.bf16.mxu0 %v2743
        %3380 = vmatmul.mubr.bf16.gmra.mrb[0].mxu0 %v2742
        %v3381 = vpop.f32.mrb[0].mxu0
        %v3382 = vadd.f32 %v3221, %v3381
        %v3383 = vpop.f32.mrb[0].mxu0
        %v3384 = vpop.f32.mrb[0].mxu0
        %v3385 = vadd.f32 %v3224, %v3384
        %v3386 = vpop.f32.mrb[0].mxu0
        %3387 = vmatprep.mubr.bf16.mxu0 %v2748
        %3388 = vmatmul.mubr.bf16.gmra.mrb[0].mxu0 %v2747
        %v3389 = vpop.f32.mrb[0].mxu0
        %v3390 = vadd.f32 %v3229, %v3389
        %v3391 = vpop.f32.mrb[0].mxu0
        %v3392 = vpop.f32.mrb[0].mxu0
        %v3393 = vadd.f32 %v3232, %v3392
        %v3394 = vpop.f32.mrb[0].mxu0
        %3395 = vmatprep.mubr.bf16.mxu0 %v2753
        %3396 = vmatmul.mubr.bf16.gmra.mrb[0].mxu0 %v2752
        %v3397 = vpop.f32.mrb[0].mxu0
        %v3398 = vadd.f32 %v3237, %v3397
        %v3399 = vpop.f32.mrb[0].mxu0
        %v3400 = vpop.f32.mrb[0].mxu0
        %v3401 = vadd.f32 %v3240, %v3400
        %v3402 = vpop.f32.mrb[0].mxu0
        %3403 = vmatprep.mubr.bf16.mxu0 %v2758
        %3404 = vmatmul.mubr.bf16.gmra.mrb[0].mxu0 %v2757
        %v3405 = vpop.f32.mrb[0].mxu0
        %v3406 = vadd.f32 %v3245, %v3405
        %v3407 = vpop.f32.mrb[0].mxu0
        %v3408 = vpop.f32.mrb[0].mxu0
        %v3409 = vadd.f32 %v3248, %v3408
        %v3410 = vpop.f32.mrb[0].mxu0
        %3411 = vmatprep.mubr.bf16.mxu0 %v2763
        %3412 = vmatmul.mubr.bf16.gmra.mrb[0].mxu0 %v2762
        %v3413 = vpop.f32.mrb[0].mxu0
        %v3414 = vadd.f32 %v3253, %v3413
        %v3415 = vpop.f32.mrb[0].mxu0
        %v3416 = vpop.f32.mrb[0].mxu0
        %v3417 = vadd.f32 %v3256, %v3416
        %v3418 = vpop.f32.mrb[0].mxu0
        %3419 = vmatprep.mubr.bf16.mxu0 %v2768
        %3420 = vmatmul.mubr.bf16.gmra.mrb[0].mxu0 %v2767
        %v3421 = vpop.f32.mrb[0].mxu0
        %v3422 = vadd.f32 %v3261, %v3421
        %v3423 = vpop.f32.mrb[0].mxu0
        %v3424 = vpop.f32.mrb[0].mxu0
        %v3425 = vadd.f32 %v3264, %v3424
        %v3426 = vpop.f32.mrb[0].mxu0
        %3427 = vdwg.mxu0
        %3428 = vmatprep.subr.bf16.mxu0 0
        %3429 = vmatpush1.bf16.msra.mxu0 %v3018
        %3430 = vmatprep.subr.bf16.mxu0 0
        %3431 = vmatpush1.bf16.msra.mxu0 %v3019
        %3432 = vmatprep.subr.bf16.mxu0 0
        %3433 = vmatpush1.bf16.msra.mxu0 %v3020
        %3434 = vmatprep.subr.bf16.mxu0 0
        %3435 = vmatpush1.bf16.msra.mxu0 %v3021
        %3436 = vmatprep.subr.bf16.mxu0 0
        %3437 = vmatpush1.bf16.msra.mxu0 0
        %3438 = vmatprep.subr.bf16.mxu0 0
        %3439 = vmatpush1.bf16.msra.mxu0 0
        %3440 = vmatprep.subr.bf16.mxu0 0
        %3441 = vmatpush1.bf16.msra.mxu0 0
        %3442 = vmatprep.subr.bf16.mxu0 0
        %3443 = vmatpush1.bf16.msra.mxu0 0
        %3444 = vmatprep.subr.bf16.mxu0 0
        %3445 = vmatpush1.bf16.msra.mxu0 0
        %3446 = vmatprep.subr.bf16.mxu0 0
        %3447 = vmatpush1.bf16.msra.mxu0 0
        %3448 = vmatprep.subr.bf16.mxu0 0
        %3449 = vmatpush1.bf16.msra.mxu0 0
        %3450 = vmatprep.subr.bf16.mxu0 0
        %3451 = vmatpush1.bf16.msra.mxu0 0
        %3452 = vmatprep.subr.bf16.mxu0 0
        %3453 = vmatpush1.bf16.msra.mxu0 0
        %3454 = vmatprep.subr.bf16.mxu0 0
        %3455 = vmatpush1.bf16.msra.mxu0 0
        %3456 = vmatprep.subr.bf16.mxu0 0
        %3457 = vmatpush1.bf16.msra.mxu0 0
        %3458 = vmatprep.subr.bf16.mxu0 0
        %3459 = vmatpush1.bf16.msra.mxu0 0
        %3460 = vmatprep.mubr.bf16.mxu0 0
        %3461 = vmatmul.mubr.bf16.gmra.mrb[0].mxu0 %v3059
        %v3462 = vpop.f32.mrb[0].mxu0
        %v3463 = vadd.f32 %v3302, %v3462
        %v3464 = vpop.f32.mrb[0].mxu0
        %v3465 = vpop.f32.mrb[0].mxu0
        %v3466 = vadd.f32 %v3305, %v3465
        %v3467 = vpop.f32.mrb[0].mxu0
        %3468 = vmatprep.mubr.bf16.mxu0 0
        %3469 = vmatmul.mubr.bf16.gmra.mrb[0].mxu0 %v3062
        %v3470 = vpop.f32.mrb[0].mxu0
        %v3471 = vadd.f32 %v3310, %v3470
        %v3472 = vpop.f32.mrb[0].mxu0
        %v3473 = vpop.f32.mrb[0].mxu0
        %v3474 = vadd.f32 %v3313, %v3473
        %v3475 = vpop.f32.mrb[0].mxu0
        %3476 = vmatprep.mubr.bf16.mxu0 0
        %3477 = vmatmul.mubr.bf16.gmra.mrb[0].mxu0 %v3065
        %v3478 = vpop.f32.mrb[0].mxu0
        %v3479 = vadd.f32 %v3318, %v3478
        %v3480 = vpop.f32.mrb[0].mxu0
        %v3481 = vpop.f32.mrb[0].mxu0
        %v3482 = vadd.f32 %v3321, %v3481
        %v3483 = vpop.f32.mrb[0].mxu0
        %3484 = vmatprep.mubr.bf16.mxu0 0
        %3485 = vmatmul.mubr.bf16.gmra.mrb[0].mxu0 %v3068
        %v3486 = vpop.f32.mrb[0].mxu0
        %v3487 = vadd.f32 %v3326, %v3486
        %v3488 = vpop.f32.mrb[0].mxu0
        %v3489 = vpop.f32.mrb[0].mxu0
        %v3490 = vadd.f32 %v3329, %v3489
        %v3491 = vpop.f32.mrb[0].mxu0
        %3492 = vmatprep.mubr.bf16.mxu0 0
        %3493 = vmatmul.mubr.bf16.gmra.mrb[0].mxu0 %v3071
        %v3494 = vpop.f32.mrb[0].mxu0
        %v3495 = vadd.f32 %v3334, %v3494
        %v3496 = vpop.f32.mrb[0].mxu0
        %v3497 = vpop.f32.mrb[0].mxu0
        %v3498 = vadd.f32 %v3337, %v3497
        %v3499 = vpop.f32.mrb[0].mxu0
        %3500 = vmatprep.mubr.bf16.mxu0 0
        %3501 = vmatmul.mubr.bf16.gmra.mrb[0].mxu0 %v3074
        %v3502 = vpop.f32.mrb[0].mxu0
        %v3503 = vadd.f32 %v3342, %v3502
        %v3504 = vpop.f32.mrb[0].mxu0
        %v3505 = vpop.f32.mrb[0].mxu0
        %v3506 = vadd.f32 %v3345, %v3505
        %v3507 = vpop.f32.mrb[0].mxu0
        %3508 = vmatprep.mubr.bf16.mxu0 0
        %3509 = vmatmul.mubr.bf16.gmra.mrb[0].mxu0 %v3077
        %v3510 = vpop.f32.mrb[0].mxu0
        %v3511 = vadd.f32 %v3350, %v3510
        %v3512 = vpop.f32.mrb[0].mxu0
        %v3513 = vpop.f32.mrb[0].mxu0
        %v3514 = vadd.f32 %v3353, %v3513
        %v3515 = vpop.f32.mrb[0].mxu0
        %3516 = vmatprep.mubr.bf16.mxu0 0
        %3517 = vmatmul.mubr.bf16.gmra.mrb[0].mxu0 %v3080
        %v3518 = vpop.f32.mrb[0].mxu0
        %v3519 = vadd.f32 %v3358, %v3518
        %v3520 = vpop.f32.mrb[0].mxu0
        %v3521 = vpop.f32.mrb[0].mxu0
        %v3522 = vadd.f32 %v3361, %v3521
        %v3523 = vpop.f32.mrb[0].mxu0
        %3524 = vmatprep.mubr.bf16.mxu0 0
        %3525 = vmatmul.mubr.bf16.gmra.mrb[0].mxu0 %v3083
        %v3526 = vpop.f32.mrb[0].mxu0
        %v3527 = vadd.f32 %v3366, %v3526
        %v3528 = vpop.f32.mrb[0].mxu0
        %v3529 = vpop.f32.mrb[0].mxu0
        %v3530 = vadd.f32 %v3369, %v3529
        %v3531 = vpop.f32.mrb[0].mxu0
        %3532 = vmatprep.mubr.bf16.mxu0 0
        %3533 = vmatmul.mubr.bf16.gmra.mrb[0].mxu0 %v3086
        %v3534 = vpop.f32.mrb[0].mxu0
        %v3535 = vadd.f32 %v3374, %v3534
        %v3536 = vpop.f32.mrb[0].mxu0
        %v3537 = vpop.f32.mrb[0].mxu0
        %v3538 = vadd.f32 %v3377, %v3537
        %v3539 = vpop.f32.mrb[0].mxu0
        %3540 = vmatprep.mubr.bf16.mxu0 0
        %3541 = vmatmul.mubr.bf16.gmra.mrb[0].mxu0 %v3089
        %v3542 = vpop.f32.mrb[0].mxu0
        %v3543 = vadd.f32 %v3382, %v3542
        %v3544 = vpop.f32.mrb[0].mxu0
        %v3545 = vpop.f32.mrb[0].mxu0
        %v3546 = vadd.f32 %v3385, %v3545
        %v3547 = vpop.f32.mrb[0].mxu0
        %3548 = vmatprep.mubr.bf16.mxu0 0
        %3549 = vmatmul.mubr.bf16.gmra.mrb[0].mxu0 %v3092
        %v3550 = vpop.f32.mrb[0].mxu0
        %v3551 = vadd.f32 %v3390, %v3550
        %v3552 = vpop.f32.mrb[0].mxu0
        %v3553 = vpop.f32.mrb[0].mxu0
        %v3554 = vadd.f32 %v3393, %v3553
        %v3555 = vpop.f32.mrb[0].mxu0
        %3556 = vmatprep.mubr.bf16.mxu0 0
        %3557 = vmatmul.mubr.bf16.gmra.mrb[0].mxu0 %v3095
        %v3558 = vpop.f32.mrb[0].mxu0
        %v3559 = vadd.f32 %v3398, %v3558
        %v3560 = vpop.f32.mrb[0].mxu0
        %v3561 = vpop.f32.mrb[0].mxu0
        %v3562 = vadd.f32 %v3401, %v3561
        %v3563 = vpop.f32.mrb[0].mxu0
        %3564 = vmatprep.mubr.bf16.mxu0 0
        %3565 = vmatmul.mubr.bf16.gmra.mrb[0].mxu0 %v3098
        %v3566 = vpop.f32.mrb[0].mxu0
        %v3567 = vadd.f32 %v3406, %v3566
        %v3568 = vpop.f32.mrb[0].mxu0
        %v3569 = vpop.f32.mrb[0].mxu0
        %v3570 = vadd.f32 %v3409, %v3569
        %v3571 = vpop.f32.mrb[0].mxu0
        %3572 = vmatprep.mubr.bf16.mxu0 0
        %3573 = vmatmul.mubr.bf16.gmra.mrb[0].mxu0 %v3101
        %v3574 = vpop.f32.mrb[0].mxu0
        %v3575 = vadd.f32 %v3414, %v3574
        %v3576 = vpop.f32.mrb[0].mxu0
        %v3577 = vpop.f32.mrb[0].mxu0
        %v3578 = vadd.f32 %v3417, %v3577
        %v3579 = vpop.f32.mrb[0].mxu0
        %3580 = vmatprep.mubr.bf16.mxu0 0
        %3581 = vmatmul.mubr.bf16.gmra.mrb[0].mxu0 %v3104
        %v3582 = vpop.f32.mrb[0].mxu0
        %v3583 = vadd.f32 %v3422, %v3582
        %v3584 = vpop.f32.mrb[0].mxu0
        %v3585 = vpop.f32.mrb[0].mxu0
        %v3586 = vadd.f32 %v3425, %v3585
        %v3587 = vpop.f32.mrb[0].mxu0
        %3588 = vdwg.mxu0
        %v3589 = vxor.u32 %v3463, 2147483648
        %v3590 = vxor.u32 %v3466, 2147483648
        %v3591 = vxor.u32 %v3471, 2147483648
        %v3592 = vxor.u32 %v3474, 2147483648
        %v3593 = vxor.u32 %v3479, 2147483648
        %v3594 = vxor.u32 %v3482, 2147483648
        %v3595 = vxor.u32 %v3487, 2147483648
        %v3596 = vxor.u32 %v3490, 2147483648
        %v3597 = vxor.u32 %v3495, 2147483648
        %v3598 = vxor.u32 %v3498, 2147483648
        %v3599 = vxor.u32 %v3503, 2147483648
        %v3600 = vxor.u32 %v3506, 2147483648
        %v3601 = vxor.u32 %v3511, 2147483648
        %v3602 = vxor.u32 %v3514, 2147483648
        %v3603 = vxor.u32 %v3519, 2147483648
        %v3604 = vxor.u32 %v3522, 2147483648
        %v3605 = vxor.u32 %v3527, 2147483648
        %v3606 = vxor.u32 %v3530, 2147483648
        %v3607 = vxor.u32 %v3535, 2147483648
        %v3608 = vxor.u32 %v3538, 2147483648
        %v3609 = vxor.u32 %v3543, 2147483648
        %v3610 = vxor.u32 %v3546, 2147483648
        %v3611 = vxor.u32 %v3551, 2147483648
        %v3612 = vxor.u32 %v3554, 2147483648
        %v3613 = vxor.u32 %v3559, 2147483648
        %v3614 = vxor.u32 %v3562, 2147483648
        %v3615 = vxor.u32 %v3567, 2147483648
        %v3616 = vxor.u32 %v3570, 2147483648
        %v3617 = vxor.u32 %v3575, 2147483648
        %v3618 = vxor.u32 %v3578, 2147483648
        %v3619 = vxor.u32 %v3583, 2147483648
        %v3620 = vxor.u32 %v3586, 2147483648
        %v3621 = vmul.f32 %v3589, 1.442695
        %v3622 = vpow.pop %v3621
        %v3623 = vmul.f32 %v3590, 1.442695
        %v3624 = vpow.pop %v3623
        %v3625 = vmul.f32 %v3591, 1.442695
        %v3626 = vpow.pop %v3625
        %v3627 = vmul.f32 %v3592, 1.442695
        %v3628 = vpow.pop %v3627
        %v3629 = vmul.f32 %v3593, 1.442695
        %v3630 = vpow.pop %v3629
        %v3631 = vmul.f32 %v3594, 1.442695
        %v3632 = vpow.pop %v3631
        %v3633 = vmul.f32 %v3595, 1.442695
        %v3634 = vpow.pop %v3633
        %v3635 = vmul.f32 %v3596, 1.442695
        %v3636 = vpow.pop %v3635
        %v3637 = vmul.f32 %v3597, 1.442695
        %v3638 = vpow.pop %v3637
        %v3639 = vmul.f32 %v3598, 1.442695
        %v3640 = vpow.pop %v3639
        %v3641 = vmul.f32 %v3599, 1.442695
        %v3642 = vpow.pop %v3641
        %v3643 = vmul.f32 %v3600, 1.442695
        %v3644 = vpow.pop %v3643
        %v3645 = vmul.f32 %v3601, 1.442695
        %v3646 = vpow.pop %v3645
        %v3647 = vmul.f32 %v3602, 1.442695
        %v3648 = vpow.pop %v3647
        %v3649 = vmul.f32 %v3603, 1.442695
        %v3650 = vpow.pop %v3649
        %v3651 = vmul.f32 %v3604, 1.442695
        %v3652 = vpow.pop %v3651
        %v3653 = vmul.f32 %v3605, 1.442695
        %v3654 = vpow.pop %v3653
        %v3655 = vmul.f32 %v3606, 1.442695
        %v3656 = vpow.pop %v3655
        %v3657 = vmul.f32 %v3607, 1.442695
        %v3658 = vpow.pop %v3657
        %v3659 = vmul.f32 %v3608, 1.442695
        %v3660 = vpow.pop %v3659
        %v3661 = vmul.f32 %v3609, 1.442695
        %v3662 = vpow.pop %v3661
        %v3663 = vmul.f32 %v3610, 1.442695
        %v3664 = vpow.pop %v3663
        %v3665 = vmul.f32 %v3611, 1.442695
        %v3666 = vpow.pop %v3665
        %v3667 = vmul.f32 %v3612, 1.442695
        %v3668 = vpow.pop %v3667
        %v3669 = vmul.f32 %v3613, 1.442695
        %v3670 = vpow.pop %v3669
        %v3671 = vmul.f32 %v3614, 1.442695
        %v3672 = vpow.pop %v3671
        %v3673 = vmul.f32 %v3615, 1.442695
        %v3674 = vpow.pop %v3673
        %v3675 = vmul.f32 %v3616, 1.442695
        %v3676 = vpow.pop %v3675
        %v3677 = vmul.f32 %v3617, 1.442695
        %v3678 = vpow.pop %v3677
        %v3679 = vmul.f32 %v3618, 1.442695
        %v3680 = vpow.pop %v3679
        %v3681 = vmul.f32 %v3619, 1.442695
        %v3682 = vpow.pop %v3681
        %v3683 = vmul.f32 %v3620, 1.442695
        %v3684 = vpow.pop %v3683
        %v3685 = vadd.f32 %v3622, 1.0
        %v3686 = vadd.f32 %v3624, 1.0
        %v3687 = vadd.f32 %v3626, 1.0
        %v3688 = vadd.f32 %v3628, 1.0
        %v3689 = vadd.f32 %v3630, 1.0
        %v3690 = vadd.f32 %v3632, 1.0
        %v3691 = vadd.f32 %v3634, 1.0
        %v3692 = vadd.f32 %v3636, 1.0
        %v3693 = vadd.f32 %v3638, 1.0
        %v3694 = vadd.f32 %v3640, 1.0
        %v3695 = vadd.f32 %v3642, 1.0
        %v3696 = vadd.f32 %v3644, 1.0
        %v3697 = vadd.f32 %v3646, 1.0
        %v3698 = vadd.f32 %v3648, 1.0
        %v3699 = vadd.f32 %v3650, 1.0
        %v3700 = vadd.f32 %v3652, 1.0
        %v3701 = vadd.f32 %v3654, 1.0
        %v3702 = vadd.f32 %v3656, 1.0
        %v3703 = vadd.f32 %v3658, 1.0
        %v3704 = vadd.f32 %v3660, 1.0
        %v3705 = vadd.f32 %v3662, 1.0
        %v3706 = vadd.f32 %v3664, 1.0
        %v3707 = vadd.f32 %v3666, 1.0
        %v3708 = vadd.f32 %v3668, 1.0
        %v3709 = vadd.f32 %v3670, 1.0
        %v3710 = vadd.f32 %v3672, 1.0
        %v3711 = vadd.f32 %v3674, 1.0
        %v3712 = vadd.f32 %v3676, 1.0
        %v3713 = vadd.f32 %v3678, 1.0
        %v3714 = vadd.f32 %v3680, 1.0
        %v3715 = vadd.f32 %v3682, 1.0
        %v3716 = vadd.f32 %v3684, 1.0
        %v3717 = vrcp.pop %v3685
        %v3718 = vmul.f32 1.0, %v3717
        %v3719 = vrcp.pop %v3686
        %v3720 = vmul.f32 1.0, %v3719
        %v3721 = vrcp.pop %v3687
        %v3722 = vmul.f32 1.0, %v3721
        %v3723 = vrcp.pop %v3688
        %v3724 = vmul.f32 1.0, %v3723
        %v3725 = vrcp.pop %v3689
        %v3726 = vmul.f32 1.0, %v3725
        %v3727 = vrcp.pop %v3690
        %v3728 = vmul.f32 1.0, %v3727
        %v3729 = vrcp.pop %v3691
        %v3730 = vmul.f32 1.0, %v3729
        %v3731 = vrcp.pop %v3692
        %v3732 = vmul.f32 1.0, %v3731
        %v3733 = vrcp.pop %v3693
        %v3734 = vmul.f32 1.0, %v3733
        %v3735 = vrcp.pop %v3694
        %v3736 = vmul.f32 1.0, %v3735
        %v3737 = vrcp.pop %v3695
        %v3738 = vmul.f32 1.0, %v3737
        %v3739 = vrcp.pop %v3696
        %v3740 = vmul.f32 1.0, %v3739
        %v3741 = vrcp.pop %v3697
        %v3742 = vmul.f32 1.0, %v3741
        %v3743 = vrcp.pop %v3698
        %v3744 = vmul.f32 1.0, %v3743
        %v3745 = vrcp.pop %v3699
        %v3746 = vmul.f32 1.0, %v3745
        %v3747 = vrcp.pop %v3700
        %v3748 = vmul.f32 1.0, %v3747
        %v3749 = vrcp.pop %v3701
        %v3750 = vmul.f32 1.0, %v3749
        %v3751 = vrcp.pop %v3702
        %v3752 = vmul.f32 1.0, %v3751
        %v3753 = vrcp.pop %v3703
        %v3754 = vmul.f32 1.0, %v3753
        %v3755 = vrcp.pop %v3704
        %v3756 = vmul.f32 1.0, %v3755
        %v3757 = vrcp.pop %v3705
        %v3758 = vmul.f32 1.0, %v3757
        %v3759 = vrcp.pop %v3706
        %v3760 = vmul.f32 1.0, %v3759
        %v3761 = vrcp.pop %v3707
        %v3762 = vmul.f32 1.0, %v3761
        %v3763 = vrcp.pop %v3708
        %v3764 = vmul.f32 1.0, %v3763
        %v3765 = vrcp.pop %v3709
        %v3766 = vmul.f32 1.0, %v3765
        %v3767 = vrcp.pop %v3710
        %v3768 = vmul.f32 1.0, %v3767
        %v3769 = vrcp.pop %v3711
        %v3770 = vmul.f32 1.0, %v3769
        %v3771 = vrcp.pop %v3712
        %v3772 = vmul.f32 1.0, %v3771
        %v3773 = vrcp.pop %v3713
        %v3774 = vmul.f32 1.0, %v3773
        %v3775 = vrcp.pop %v3714
        %v3776 = vmul.f32 1.0, %v3775
        %v3777 = vrcp.pop %v3715
        %v3778 = vmul.f32 1.0, %v3777
        %v3779 = vrcp.pop %v3716
        %v3780 = vmul.f32 1.0, %v3779
        %v3781 = vmul.f32 %v3463, %v3718
        %v3782 = vmul.f32 %v3466, %v3720
        %v3783 = vmul.f32 %v3471, %v3722
        %v3784 = vmul.f32 %v3474, %v3724
        %v3785 = vmul.f32 %v3479, %v3726
        %v3786 = vmul.f32 %v3482, %v3728
        %v3787 = vmul.f32 %v3487, %v3730
        %v3788 = vmul.f32 %v3490, %v3732
        %v3789 = vmul.f32 %v3495, %v3734
        %v3790 = vmul.f32 %v3498, %v3736
        %v3791 = vmul.f32 %v3503, %v3738
        %v3792 = vmul.f32 %v3506, %v3740
        %v3793 = vmul.f32 %v3511, %v3742
        %v3794 = vmul.f32 %v3514, %v3744
        %v3795 = vmul.f32 %v3519, %v3746
        %v3796 = vmul.f32 %v3522, %v3748
        %v3797 = vmul.f32 %v3527, %v3750
        %v3798 = vmul.f32 %v3530, %v3752
        %v3799 = vmul.f32 %v3535, %v3754
        %v3800 = vmul.f32 %v3538, %v3756
        %v3801 = vmul.f32 %v3543, %v3758
        %v3802 = vmul.f32 %v3546, %v3760
        %v3803 = vmul.f32 %v3551, %v3762
        %v3804 = vmul.f32 %v3554, %v3764
        %v3805 = vmul.f32 %v3559, %v3766
        %v3806 = vmul.f32 %v3562, %v3768
        %v3807 = vmul.f32 %v3567, %v3770
        %v3808 = vmul.f32 %v3570, %v3772
        %v3809 = vmul.f32 %v3575, %v3774
        %v3810 = vmul.f32 %v3578, %v3776
        %v3811 = vmul.f32 %v3583, %v3778
        %v3812 = vmul.f32 %v3586, %v3780
        %v3813 = vadd.f32 %v3781, %v859
        %v3814 = vadd.f32 %v3782, %v860
        %v3815 = vadd.f32 %v3783, %v861
        %v3816 = vadd.f32 %v3784, %v862
        %v3817 = vadd.f32 %v3785, %v863
        %v3818 = vadd.f32 %v3786, %v864
        %v3819 = vadd.f32 %v3787, %v865
        %v3820 = vadd.f32 %v3788, %v866
        %v3821 = vadd.f32 %v3789, %v867
        %v3822 = vadd.f32 %v3790, %v868
        %v3823 = vadd.f32 %v3791, %v869
        %v3824 = vadd.f32 %v3792, %v870
        %v3825 = vadd.f32 %v3793, %v871
        %v3826 = vadd.f32 %v3794, %v872
        %v3827 = vadd.f32 %v3795, %v873
        %v3828 = vadd.f32 %v3796, %v874
        %v3829 = vadd.f32 %v3797, %v875
        %v3830 = vadd.f32 %v3798, %v876
        %v3831 = vadd.f32 %v3799, %v877
        %v3832 = vadd.f32 %v3800, %v878
        %v3833 = vadd.f32 %v3801, %v879
        %v3834 = vadd.f32 %v3802, %v880
        %v3835 = vadd.f32 %v3803, %v881
        %v3836 = vadd.f32 %v3804, %v882
        %v3837 = vadd.f32 %v3805, %v883
        %v3838 = vadd.f32 %v3806, %v884
        %v3839 = vadd.f32 %v3807, %v885
        %v3840 = vadd.f32 %v3808, %v886
        %v3841 = vadd.f32 %v3809, %v887
        %v3842 = vadd.f32 %v3810, %v888
        %v3843 = vadd.f32 %v3811, %v889
        %v3844 = vadd.f32 %v3812, %v890
        %v3845 = vpack.c.bf16 %v3814, %v3813
        %v3846 = vpack.c.bf16 %v3816, %v3815
        %v3847 = vpack.c.bf16 %v3818, %v3817
        %v3848 = vpack.c.bf16 %v3820, %v3819
        %v3849 = vpack.c.bf16 %v3822, %v3821
        %v3850 = vpack.c.bf16 %v3824, %v3823
        %v3851 = vpack.c.bf16 %v3826, %v3825
        %v3852 = vpack.c.bf16 %v3828, %v3827
        %v3853 = vpack.c.bf16 %v3830, %v3829
        %v3854 = vpack.c.bf16 %v3832, %v3831
        %v3855 = vpack.c.bf16 %v3834, %v3833
        %v3856 = vpack.c.bf16 %v3836, %v3835
        %v3857 = vpack.c.bf16 %v3838, %v3837
        %v3858 = vpack.c.bf16 %v3840, %v3839
        %v3859 = vpack.c.bf16 %v3842, %v3841
        %v3860 = vpack.c.bf16 %v3844, %v3843
        %s3861 = scalar_lea.vmem %s3, 32
        %v3862 = vld [vmem:[%s3861] sm:$0xf]
        %v3863 = vld [vmem:[%s3861 + $0x4] sm:$0xf]
        %v3864 = vld [vmem:[%s3861 + $0x8] sm:$0xf]
        %v3865 = vld [vmem:[%s3861 + $0xc] sm:$0xf]
        %v3866 = vld [vmem:[%s3861 + $0x10] sm:$0xf]
        %v3867 = vld [vmem:[%s3861 + $0x14] sm:$0xf]
        %v3868 = vld [vmem:[%s3861 + $0x18] sm:$0xf]
        %v3869 = vld [vmem:[%s3861 + $0x1c] sm:$0xf]
        %s3870 = scalar_lea.vmem %s4, 1
        %v3871 = vld [vmem:[%s3870] sm:$0x1]
        %v3873 = vlaneseq
        %v3874 = vshrl.u32 %v3873, 7
        %v3875 = vsub.s32 0, %v3874
        %v3876 = vrot.slane %v3871, %v3875
        %v3886 = vunpack.c.l.b16 %v3862
        %v3887 = vunpack.c.l.b16 %v3863
        %v3888 = vunpack.c.l.b16 %v3864
        %v3889 = vunpack.c.l.b16 %v3865
        %v3890 = vunpack.c.l.b16 %v3866
        %v3891 = vunpack.c.l.b16 %v3867
        %v3892 = vunpack.c.l.b16 %v3868
        %v3893 = vunpack.c.l.b16 %v3869
        %v3894 = vpack.c.b16 %v3887, %v3886
        %v3895 = vpack.c.b16 %v3889, %v3888
        %v3896 = vpack.c.b16 %v3891, %v3890
        %v3897 = vpack.c.b16 %v3893, %v3892
        %v3903 = vsel %vm1427, %v3845, 0
        %v3906 = vsel %vm1427, %v3846, 0
        %v3909 = vsel %vm1427, %v3847, 0
        %v3912 = vsel %vm1427, %v3848, 0
        %v3915 = vsel %vm1427, %v3849, 0
        %v3918 = vsel %vm1427, %v3850, 0
        %v3921 = vsel %vm1427, %v3851, 0
        %v3924 = vsel %vm1427, %v3852, 0
        %v3927 = vsel %vm1427, %v3853, 0
        %v3930 = vsel %vm1427, %v3854, 0
        %v3933 = vsel %vm1427, %v3855, 0
        %v3936 = vsel %vm1427, %v3856, 0
        %v3939 = vsel %vm1427, %v3857, 0
        %v3942 = vsel %vm1427, %v3858, 0
        %v3945 = vsel %vm1427, %v3859, 0
        %v3948 = vsel %vm1427, %v3860, 0
        %3950 = vmatprep.subr.bf16.mxu0 0
        %3951 = vmatpush1.bf16.msra.mxu0 %v3894
        %3952 = vmatprep.subr.bf16.mxu0 0
        %3953 = vmatpush1.bf16.msra.mxu0 %v3895
        %3954 = vmatprep.subr.bf16.mxu0 0
        %3955 = vmatpush1.bf16.msra.mxu0 %v3896
        %3956 = vmatprep.subr.bf16.mxu0 0
        %3957 = vmatpush1.bf16.msra.mxu0 %v3897
        %3958 = vmatprep.subr.bf16.mxu0 0
        %3959 = vmatpush1.bf16.msra.mxu0 0
        %3960 = vmatprep.subr.bf16.mxu0 0
        %3961 = vmatpush1.bf16.msra.mxu0 0
        %3962 = vmatprep.subr.bf16.mxu0 0
        %3963 = vmatpush1.bf16.msra.mxu0 0
        %3964 = vmatprep.subr.bf16.mxu0 0
        %3965 = vmatpush1.bf16.msra.mxu0 0
        %3966 = vmatprep.subr.bf16.mxu0 0
        %3967 = vmatpush1.bf16.msra.mxu0 0
        %3968 = vmatprep.subr.bf16.mxu0 0
        %3969 = vmatpush1.bf16.msra.mxu0 0
        %3970 = vmatprep.subr.bf16.mxu0 0
        %3971 = vmatpush1.bf16.msra.mxu0 0
        %3972 = vmatprep.subr.bf16.mxu0 0
        %3973 = vmatpush1.bf16.msra.mxu0 0
        %3974 = vmatprep.subr.bf16.mxu0 0
        %3975 = vmatpush1.bf16.msra.mxu0 0
        %3976 = vmatprep.subr.bf16.mxu0 0
        %3977 = vmatpush1.bf16.msra.mxu0 0
        %3978 = vmatprep.subr.bf16.mxu0 0
        %3979 = vmatpush1.bf16.msra.mxu0 0
        %3980 = vmatprep.subr.bf16.mxu0 0
        %3981 = vmatpush1.bf16.msra.mxu0 0
        %3982 = vmatprep.mubr.bf16.mxu0 0
        %3983 = vmatmul.mubr.bf16.gmra.mrb[0].mxu0 %v3903
        %v3984 = vpop.f32.mrb[0].mxu0
        %v3985 = vadd.f32 %v3876, %v3984
        %v3986 = vpop.f32.mrb[0].mxu0
        %v3987 = vpop.f32.mrb[0].mxu0
        %v3988 = vadd.f32 %v3876, %v3987
        %v3989 = vpop.f32.mrb[0].mxu0
        %3990 = vmatprep.mubr.bf16.mxu0 0
        %3991 = vmatmul.mubr.bf16.gmra.mrb[0].mxu0 %v3906
        %v3992 = vpop.f32.mrb[0].mxu0
        %v3993 = vadd.f32 %v3876, %v3992
        %v3994 = vpop.f32.mrb[0].mxu0
        %v3995 = vpop.f32.mrb[0].mxu0
        %v3996 = vadd.f32 %v3876, %v3995
        %v3997 = vpop.f32.mrb[0].mxu0
        %3998 = vmatprep.mubr.bf16.mxu0 0
        %3999 = vmatmul.mubr.bf16.gmra.mrb[0].mxu0 %v3909
        %v4000 = vpop.f32.mrb[0].mxu0
        %v4001 = vadd.f32 %v3876, %v4000
        %v4002 = vpop.f32.mrb[0].mxu0
        %v4003 = vpop.f32.mrb[0].mxu0
        %v4004 = vadd.f32 %v3876, %v4003
        %v4005 = vpop.f32.mrb[0].mxu0
        %4006 = vmatprep.mubr.bf16.mxu0 0
        %4007 = vmatmul.mubr.bf16.gmra.mrb[0].mxu0 %v3912
        %v4008 = vpop.f32.mrb[0].mxu0
        %v4009 = vadd.f32 %v3876, %v4008
        %v4010 = vpop.f32.mrb[0].mxu0
        %v4011 = vpop.f32.mrb[0].mxu0
        %v4012 = vadd.f32 %v3876, %v4011
        %v4013 = vpop.f32.mrb[0].mxu0
        %4014 = vmatprep.mubr.bf16.mxu0 0
        %4015 = vmatmul.mubr.bf16.gmra.mrb[0].mxu0 %v3915
        %v4016 = vpop.f32.mrb[0].mxu0
        %v4017 = vadd.f32 %v3876, %v4016
        %v4018 = vpop.f32.mrb[0].mxu0
        %v4019 = vpop.f32.mrb[0].mxu0
        %v4020 = vadd.f32 %v3876, %v4019
        %v4021 = vpop.f32.mrb[0].mxu0
        %4022 = vmatprep.mubr.bf16.mxu0 0
        %4023 = vmatmul.mubr.bf16.gmra.mrb[0].mxu0 %v3918
        %v4024 = vpop.f32.mrb[0].mxu0
        %v4025 = vadd.f32 %v3876, %v4024
        %v4026 = vpop.f32.mrb[0].mxu0
        %v4027 = vpop.f32.mrb[0].mxu0
        %v4028 = vadd.f32 %v3876, %v4027
        %v4029 = vpop.f32.mrb[0].mxu0
        %4030 = vmatprep.mubr.bf16.mxu0 0
        %4031 = vmatmul.mubr.bf16.gmra.mrb[0].mxu0 %v3921
        %v4032 = vpop.f32.mrb[0].mxu0
        %v4033 = vadd.f32 %v3876, %v4032
        %v4034 = vpop.f32.mrb[0].mxu0
        %v4035 = vpop.f32.mrb[0].mxu0
        %v4036 = vadd.f32 %v3876, %v4035
        %v4037 = vpop.f32.mrb[0].mxu0
        %4038 = vmatprep.mubr.bf16.mxu0 0
        %4039 = vmatmul.mubr.bf16.gmra.mrb[0].mxu0 %v3924
        %v4040 = vpop.f32.mrb[0].mxu0
        %v4041 = vadd.f32 %v3876, %v4040
        %v4042 = vpop.f32.mrb[0].mxu0
        %v4043 = vpop.f32.mrb[0].mxu0
        %v4044 = vadd.f32 %v3876, %v4043
        %v4045 = vpop.f32.mrb[0].mxu0
        %4046 = vmatprep.mubr.bf16.mxu0 0
        %4047 = vmatmul.mubr.bf16.gmra.mrb[0].mxu0 %v3927
        %v4048 = vpop.f32.mrb[0].mxu0
        %v4049 = vadd.f32 %v3876, %v4048
        %v4050 = vpop.f32.mrb[0].mxu0
        %v4051 = vpop.f32.mrb[0].mxu0
        %v4052 = vadd.f32 %v3876, %v4051
        %v4053 = vpop.f32.mrb[0].mxu0
        %4054 = vmatprep.mubr.bf16.mxu0 0
        %4055 = vmatmul.mubr.bf16.gmra.mrb[0].mxu0 %v3930
        %v4056 = vpop.f32.mrb[0].mxu0
        %v4057 = vadd.f32 %v3876, %v4056
        %v4058 = vpop.f32.mrb[0].mxu0
        %v4059 = vpop.f32.mrb[0].mxu0
        %v4060 = vadd.f32 %v3876, %v4059
        %v4061 = vpop.f32.mrb[0].mxu0
        %4062 = vmatprep.mubr.bf16.mxu0 0
        %4063 = vmatmul.mubr.bf16.gmra.mrb[0].mxu0 %v3933
        %v4064 = vpop.f32.mrb[0].mxu0
        %v4065 = vadd.f32 %v3876, %v4064
        %v4066 = vpop.f32.mrb[0].mxu0
        %v4067 = vpop.f32.mrb[0].mxu0
        %v4068 = vadd.f32 %v3876, %v4067
        %v4069 = vpop.f32.mrb[0].mxu0
        %4070 = vmatprep.mubr.bf16.mxu0 0
        %4071 = vmatmul.mubr.bf16.gmra.mrb[0].mxu0 %v3936
        %v4072 = vpop.f32.mrb[0].mxu0
        %v4073 = vadd.f32 %v3876, %v4072
        %v4074 = vpop.f32.mrb[0].mxu0
        %v4075 = vpop.f32.mrb[0].mxu0
        %v4076 = vadd.f32 %v3876, %v4075
        %v4077 = vpop.f32.mrb[0].mxu0
        %4078 = vmatprep.mubr.bf16.mxu0 0
        %4079 = vmatmul.mubr.bf16.gmra.mrb[0].mxu0 %v3939
        %v4080 = vpop.f32.mrb[0].mxu0
        %v4081 = vadd.f32 %v3876, %v4080
        %v4082 = vpop.f32.mrb[0].mxu0
        %v4083 = vpop.f32.mrb[0].mxu0
        %v4084 = vadd.f32 %v3876, %v4083
        %v4085 = vpop.f32.mrb[0].mxu0
        %4086 = vmatprep.mubr.bf16.mxu0 0
        %4087 = vmatmul.mubr.bf16.gmra.mrb[0].mxu0 %v3942
        %v4088 = vpop.f32.mrb[0].mxu0
        %v4089 = vadd.f32 %v3876, %v4088
        %v4090 = vpop.f32.mrb[0].mxu0
        %v4091 = vpop.f32.mrb[0].mxu0
        %v4092 = vadd.f32 %v3876, %v4091
        %v4093 = vpop.f32.mrb[0].mxu0
        %4094 = vmatprep.mubr.bf16.mxu0 0
        %4095 = vmatmul.mubr.bf16.gmra.mrb[0].mxu0 %v3945
        %v4096 = vpop.f32.mrb[0].mxu0
        %v4097 = vadd.f32 %v3876, %v4096
        %v4098 = vpop.f32.mrb[0].mxu0
        %v4099 = vpop.f32.mrb[0].mxu0
        %v4100 = vadd.f32 %v3876, %v4099
        %v4101 = vpop.f32.mrb[0].mxu0
        %4102 = vmatprep.mubr.bf16.mxu0 0
        %4103 = vmatmul.mubr.bf16.gmra.mrb[0].mxu0 %v3948
        %v4104 = vpop.f32.mrb[0].mxu0
        %v4105 = vadd.f32 %v3876, %v4104
        %v4106 = vpop.f32.mrb[0].mxu0
        %v4107 = vpop.f32.mrb[0].mxu0
        %v4108 = vadd.f32 %v3876, %v4107
        %v4109 = vpop.f32.mrb[0].mxu0
        %4110 = vdwg.mxu0
        %v4111 = vpack.c.bf16 %v3988, %v3985
        %v4112 = vpack.c.bf16 %v3996, %v3993
        %v4113 = vpack.c.bf16 %v4004, %v4001
        %v4114 = vpack.c.bf16 %v4012, %v4009
        %v4115 = vpack.c.bf16 %v4020, %v4017
        %v4116 = vpack.c.bf16 %v4028, %v4025
        %v4117 = vpack.c.bf16 %v4036, %v4033
        %v4118 = vpack.c.bf16 %v4044, %v4041
        %v4119 = vpack.c.bf16 %v4052, %v4049
        %v4120 = vpack.c.bf16 %v4060, %v4057
        %v4121 = vpack.c.bf16 %v4068, %v4065
        %v4122 = vpack.c.bf16 %v4076, %v4073
        %v4123 = vpack.c.bf16 %v4084, %v4081
        %v4124 = vpack.c.bf16 %v4092, %v4089
        %v4125 = vpack.c.bf16 %v4100, %v4097
        %v4126 = vpack.c.bf16 %v4108, %v4105
        %v4128 = vshrl.u32 %v4111, 16
        %v4130 = vrot.slane %v4128, 7
        %v4131 = vshll.u32 %v4111, 16
        %v4133 = vor.u32 %v4130, %v4131
        %v4135 = vshrl.u32 %v4112, 16
        %v4137 = vrot.slane %v4135, 7
        %v4138 = vshll.u32 %v4112, 16
        %v4140 = vor.u32 %v4137, %v4138
        %v4141 = vsel %vm1653, %v4130, %v4140
        %v4143 = vshrl.u32 %v4113, 16
        %v4145 = vrot.slane %v4143, 7
        %v4146 = vshll.u32 %v4113, 16
        %v4148 = vor.u32 %v4145, %v4146
        %v4149 = vsel %vm1653, %v4137, %v4148
        %v4151 = vshrl.u32 %v4114, 16
        %v4153 = vrot.slane %v4151, 7
        %v4154 = vshll.u32 %v4114, 16
        %v4156 = vor.u32 %v4153, %v4154
        %v4157 = vsel %vm1653, %v4145, %v4156
        %v4159 = vshrl.u32 %v4115, 16
        %v4161 = vrot.slane %v4159, 7
        %v4162 = vshll.u32 %v4115, 16
        %v4164 = vor.u32 %v4161, %v4162
        %v4165 = vsel %vm1653, %v4153, %v4164
        %v4167 = vshrl.u32 %v4116, 16
        %v4169 = vrot.slane %v4167, 7
        %v4170 = vshll.u32 %v4116, 16
        %v4172 = vor.u32 %v4169, %v4170
        %v4173 = vsel %vm1653, %v4161, %v4172
        %v4175 = vshrl.u32 %v4117, 16
        %v4177 = vrot.slane %v4175, 7
        %v4178 = vshll.u32 %v4117, 16
        %v4180 = vor.u32 %v4177, %v4178
        %v4181 = vsel %vm1653, %v4169, %v4180
        %v4183 = vshrl.u32 %v4118, 16
        %v4185 = vrot.slane %v4183, 7
        %v4186 = vshll.u32 %v4118, 16
        %v4188 = vor.u32 %v4185, %v4186
        %v4189 = vsel %vm1653, %v4177, %v4188
        %v4191 = vshrl.u32 %v4119, 16
        %v4193 = vrot.slane %v4191, 7
        %v4194 = vshll.u32 %v4119, 16
        %v4196 = vor.u32 %v4193, %v4194
        %v4197 = vsel %vm1653, %v4185, %v4196
        %v4199 = vshrl.u32 %v4120, 16
        %v4201 = vrot.slane %v4199, 7
        %v4202 = vshll.u32 %v4120, 16
        %v4204 = vor.u32 %v4201, %v4202
        %v4205 = vsel %vm1653, %v4193, %v4204
        %v4207 = vshrl.u32 %v4121, 16
        %v4209 = vrot.slane %v4207, 7
        %v4210 = vshll.u32 %v4121, 16
        %v4212 = vor.u32 %v4209, %v4210
        %v4213 = vsel %vm1653, %v4201, %v4212
        %v4215 = vshrl.u32 %v4122, 16
        %v4217 = vrot.slane %v4215, 7
        %v4218 = vshll.u32 %v4122, 16
        %v4220 = vor.u32 %v4217, %v4218
        %v4221 = vsel %vm1653, %v4209, %v4220
        %v4223 = vshrl.u32 %v4123, 16
        %v4225 = vrot.slane %v4223, 7
        %v4226 = vshll.u32 %v4123, 16
        %v4228 = vor.u32 %v4225, %v4226
        %v4229 = vsel %vm1653, %v4217, %v4228
        %v4231 = vshrl.u32 %v4124, 16
        %v4233 = vrot.slane %v4231, 7
        %v4234 = vshll.u32 %v4124, 16
        %v4236 = vor.u32 %v4233, %v4234
        %v4237 = vsel %vm1653, %v4225, %v4236
        %v4239 = vshrl.u32 %v4125, 16
        %v4241 = vrot.slane %v4239, 7
        %v4242 = vshll.u32 %v4125, 16
        %v4244 = vor.u32 %v4241, %v4242
        %v4245 = vsel %vm1653, %v4233, %v4244
        %v4261 = vsel %vm1789, 0, %v4133
        %v4262 = vsel %vm1960, %v4261, 0
        %v4263 = vsel %vm1961, %v4141, 0
        %v4264 = vsel %vm1962, %v4149, 0
        %v4265 = vsel %vm1963, %v4157, 0
        %v4266 = vsel %vm1964, %v4165, 0
        %v4267 = vsel %vm1965, %v4173, 0
        %v4268 = vsel %vm1966, %v4181, 0
        %v4269 = vsel %vm1967, %v4189, 0
        %v4270 = vsel %vm1968, %v4197, 0
        %v4271 = vsel %vm1969, %v4205, 0
        %v4272 = vsel %vm1970, %v4213, 0
        %v4273 = vsel %vm1971, %v4221, 0
        %v4274 = vsel %vm1972, %v4229, 0
        %v4275 = vsel %vm1973, %v4237, 0
        %v4276 = vsel %vm1974, %v4245, 0
        %4277 = vst.msk [vmem:[#allocation2] sm:$0xff] %vm1427, 0
        %4278 = vst.msk [vmem:[#allocation2 + $0x28] sm:$0xff] %vm1427, %v4262
        %4279 = vst.msk [vmem:[#allocation2 + $0x50] sm:$0xff] %vm1427, %v4263
        %4280 = vst.msk [vmem:[#allocation2 + $0x78] sm:$0xff] %vm1427, %v4264
        %4281 = vst.msk [vmem:[#allocation2 + $0xa0] sm:$0xff] %vm1427, %v4265
        %4282 = vst.msk [vmem:[#allocation2 + $0xc8] sm:$0xff] %vm1427, %v4266
        %4283 = vst.msk [vmem:[#allocation2 + $0xf0] sm:$0xff] %vm1427, %v4267
        %4284 = vst.msk [vmem:[#allocation2 + $0x118] sm:$0xff] %vm1427, %v4268
        %4285 = vst.msk [vmem:[#allocation2 + $0x140] sm:$0xff] %vm1427, %v4269
        %4286 = vst.msk [vmem:[#allocation2 + $0x168] sm:$0xff] %vm1427, %v4270
        %4287 = vst.msk [vmem:[#allocation2 + $0x190] sm:$0xff] %vm1427, %v4271
        %4288 = vst.msk [vmem:[#allocation2 + $0x1b8] sm:$0xff] %vm1427, %v4272
        %4289 = vst.msk [vmem:[#allocation2 + $0x1e0] sm:$0xff] %vm1427, %v4273
        %4290 = vst.msk [vmem:[#allocation2 + $0x208] sm:$0xff] %vm1427, %v4274
        %4291 = vst.msk [vmem:[#allocation2 + $0x230] sm:$0xff] %vm1427, %v4275
        %4292 = vst.msk [vmem:[#allocation2 + $0x258] sm:$0xff] %vm1427, %v4276
        %4308 = vrot.lane.b32.xlu0 %v4111, 64
        %v4309 = vpop.permute.xlu0 %4308
        %4310 = vrot.lane.b32.xlu0 %v4112, 64
        %v4311 = vpop.permute.xlu0 %4310
        %4312 = vrot.lane.b32.xlu0 %v4113, 64
        %v4313 = vpop.permute.xlu0 %4312
        %4314 = vrot.lane.b32.xlu0 %v4114, 64
        %v4315 = vpop.permute.xlu0 %4314
        %4316 = vrot.lane.b32.xlu0 %v4115, 64
        %v4317 = vpop.permute.xlu0 %4316
        %4318 = vrot.lane.b32.xlu0 %v4116, 64
        %v4319 = vpop.permute.xlu0 %4318
        %4320 = vrot.lane.b32.xlu0 %v4117, 64
        %v4321 = vpop.permute.xlu0 %4320
        %4322 = vrot.lane.b32.xlu0 %v4118, 64
        %v4323 = vpop.permute.xlu0 %4322
        %4324 = vrot.lane.b32.xlu0 %v4119, 64
        %v4325 = vpop.permute.xlu0 %4324
        %4326 = vrot.lane.b32.xlu0 %v4120, 64
        %v4327 = vpop.permute.xlu0 %4326
        %4328 = vrot.lane.b32.xlu0 %v4121, 64
        %v4329 = vpop.permute.xlu0 %4328
        %4330 = vrot.lane.b32.xlu0 %v4122, 64
        %v4331 = vpop.permute.xlu0 %4330
        %4332 = vrot.lane.b32.xlu0 %v4123, 64
        %v4333 = vpop.permute.xlu0 %4332
        %4334 = vrot.lane.b32.xlu0 %v4124, 64
        %v4335 = vpop.permute.xlu0 %4334
        %4336 = vrot.lane.b32.xlu0 %v4125, 64
        %v4337 = vpop.permute.xlu0 %4336
        %4353 = vst.msk [vmem:[#allocation2] sm:$0xff] %vm2070, %v2023
        %4354 = vst.msk [vmem:[#allocation2 + $0x28] sm:$0xff] %vm2070, %v4309
        %4355 = vst.msk [vmem:[#allocation2 + $0x50] sm:$0xff] %vm2070, %v4311
        %4356 = vst.msk [vmem:[#allocation2 + $0x78] sm:$0xff] %vm2070, %v4313
        %4357 = vst.msk [vmem:[#allocation2 + $0xa0] sm:$0xff] %vm2070, %v4315
        %4358 = vst.msk [vmem:[#allocation2 + $0xc8] sm:$0xff] %vm2070, %v4317
        %4359 = vst.msk [vmem:[#allocation2 + $0xf0] sm:$0xff] %vm2070, %v4319
        %4360 = vst.msk [vmem:[#allocation2 + $0x118] sm:$0xff] %vm2070, %v4321
        %4361 = vst.msk [vmem:[#allocation2 + $0x140] sm:$0xff] %vm2070, %v4323
        %4362 = vst.msk [vmem:[#allocation2 + $0x168] sm:$0xff] %vm2070, %v4325
        %4363 = vst.msk [vmem:[#allocation2 + $0x190] sm:$0xff] %vm2070, %v4327
        %4364 = vst.msk [vmem:[#allocation2 + $0x1b8] sm:$0xff] %vm2070, %v4329
        %4365 = vst.msk [vmem:[#allocation2 + $0x1e0] sm:$0xff] %vm2070, %v4331
        %4366 = vst.msk [vmem:[#allocation2 + $0x208] sm:$0xff] %vm2070, %v4333
        %4367 = vst.msk [vmem:[#allocation2 + $0x230] sm:$0xff] %vm2070, %v4335
        %4368 = vst.msk [vmem:[#allocation2 + $0x258] sm:$0xff] %vm2070, %v4337
        %v4369 = vrot.slane %v4131, 1
        %v4370 = vor.u32 %v4128, %v4369
        %v4371 = vrot.slane %v4138, 1
        %v4372 = vsel %vm2087, %v4370, %v4371
        %v4373 = vor.u32 %v4135, %v4371
        %v4374 = vrot.slane %v4146, 1
        %v4375 = vsel %vm2087, %v4373, %v4374
        %v4376 = vor.u32 %v4143, %v4374
        %v4377 = vrot.slane %v4154, 1
        %v4378 = vsel %vm2087, %v4376, %v4377
        %v4379 = vor.u32 %v4151, %v4377
        %v4380 = vrot.slane %v4162, 1
        %v4381 = vsel %vm2087, %v4379, %v4380
        %v4382 = vor.u32 %v4159, %v4380
        %v4383 = vrot.slane %v4170, 1
        %v4384 = vsel %vm2087, %v4382, %v4383
        %v4385 = vor.u32 %v4167, %v4383
        %v4386 = vrot.slane %v4178, 1
        %v4387 = vsel %vm2087, %v4385, %v4386
        %v4388 = vor.u32 %v4175, %v4386
        %v4389 = vrot.slane %v4186, 1
        %v4390 = vsel %vm2087, %v4388, %v4389
        %v4391 = vor.u32 %v4183, %v4389
        %v4392 = vrot.slane %v4194, 1
        %v4393 = vsel %vm2087, %v4391, %v4392
        %v4394 = vor.u32 %v4191, %v4392
        %v4395 = vrot.slane %v4202, 1
        %v4396 = vsel %vm2087, %v4394, %v4395
        %v4397 = vor.u32 %v4199, %v4395
        %v4398 = vrot.slane %v4210, 1
        %v4399 = vsel %vm2087, %v4397, %v4398
        %v4400 = vor.u32 %v4207, %v4398
        %v4401 = vrot.slane %v4218, 1
        %v4402 = vsel %vm2087, %v4400, %v4401
        %v4403 = vor.u32 %v4215, %v4401
        %v4404 = vrot.slane %v4226, 1
        %v4405 = vsel %vm2087, %v4403, %v4404
        %v4406 = vor.u32 %v4223, %v4404
        %v4407 = vrot.slane %v4234, 1
        %v4408 = vsel %vm2087, %v4406, %v4407
        %v4409 = vor.u32 %v4231, %v4407
        %v4410 = vrot.slane %v4242, 1
        %v4411 = vsel %vm2087, %v4409, %v4410
        %v4412 = vor.u32 %v4239, %v4410
        %v4414 = vshll.u32 %v4126, 16
        %v4416 = vrot.slane %v4414, 1
        %v4417 = vsel %vm2087, %v4412, %v4416
        %v4434 = vsel %vm2154, 0, %v4369
        %v4435 = vsel %vm2332, %v4434, 0
        %v4436 = vsel %vm2333, %v4372, 0
        %v4437 = vsel %vm2334, %v4375, 0
        %v4438 = vsel %vm2335, %v4378, 0
        %v4439 = vsel %vm2336, %v4381, 0
        %v4440 = vsel %vm2337, %v4384, 0
        %v4441 = vsel %vm2338, %v4387, 0
        %v4442 = vsel %vm2339, %v4390, 0
        %v4443 = vsel %vm2340, %v4393, 0
        %v4444 = vsel %vm2341, %v4396, 0
        %v4445 = vsel %vm2342, %v4399, 0
        %v4446 = vsel %vm2343, %v4402, 0
        %v4447 = vsel %vm2344, %v4405, 0
        %v4448 = vsel %vm2345, %v4408, 0
        %v4449 = vsel %vm2346, %v4411, 0
        %v4450 = vsel %vm2347, %v4417, 0
        %4451 = vst.msk [vmem:[#allocation2 + $0x8] sm:$0xff] %vm1427, %v4435
        %4452 = vst.msk [vmem:[#allocation2 + $0x30] sm:$0xff] %vm1427, %v4436
        %4453 = vst.msk [vmem:[#allocation2 + $0x58] sm:$0xff] %vm1427, %v4437
        %4454 = vst.msk [vmem:[#allocation2 + $0x80] sm:$0xff] %vm1427, %v4438
        %4455 = vst.msk [vmem:[#allocation2 + $0xa8] sm:$0xff] %vm1427, %v4439
        %4456 = vst.msk [vmem:[#allocation2 + $0xd0] sm:$0xff] %vm1427, %v4440
        %4457 = vst.msk [vmem:[#allocation2 + $0xf8] sm:$0xff] %vm1427, %v4441
        %4458 = vst.msk [vmem:[#allocation2 + $0x120] sm:$0xff] %vm1427, %v4442
        %4459 = vst.msk [vmem:[#allocation2 + $0x148] sm:$0xff] %vm1427, %v4443
        %4460 = vst.msk [vmem:[#allocation2 + $0x170] sm:$0xff] %vm1427, %v4444
        %4461 = vst.msk [vmem:[#allocation2 + $0x198] sm:$0xff] %vm1427, %v4445
        %4462 = vst.msk [vmem:[#allocation2 + $0x1c0] sm:$0xff] %vm1427, %v4446
        %4463 = vst.msk [vmem:[#allocation2 + $0x1e8] sm:$0xff] %vm1427, %v4447
        %4464 = vst.msk [vmem:[#allocation2 + $0x210] sm:$0xff] %vm1427, %v4448
        %4465 = vst.msk [vmem:[#allocation2 + $0x238] sm:$0xff] %vm1427, %v4449
        %4466 = vst.msk [vmem:[#allocation2 + $0x260] sm:$0xff] %vm1427, %v4450
        %v4467 = vshrl.u32 %v4126, 16
        %v4469 = vrot.slane %v4467, 7
        %v4470 = vor.u32 %v4469, %v4414
        %v4471 = vsel %vm1653, %v4241, %v4470
        %v4473 = vsel %vm2393, %v4261, 0
        %v4474 = vsel %vm1960, %v4141, 0
        %v4475 = vsel %vm1961, %v4149, 0
        %v4476 = vsel %vm1962, %v4157, 0
        %v4477 = vsel %vm1963, %v4165, 0
        %v4478 = vsel %vm1964, %v4173, 0
        %v4479 = vsel %vm1965, %v4181, 0
        %v4480 = vsel %vm1966, %v4189, 0
        %v4481 = vsel %vm1967, %v4197, 0
        %v4482 = vsel %vm1968, %v4205, 0
        %v4483 = vsel %vm1969, %v4213, 0
        %v4484 = vsel %vm1970, %v4221, 0
        %v4485 = vsel %vm1971, %v4229, 0
        %v4486 = vsel %vm1972, %v4237, 0
        %v4487 = vsel %vm1973, %v4245, 0
        %v4488 = vsel %vm1974, %v4471, 0
        %4505 = vrot.lane.b32.xlu0 %v4473, 64
        %v4506 = vpop.permute.xlu0 %4505
        %4507 = vrot.lane.b32.xlu0 %v4474, 64
        %v4508 = vpop.permute.xlu0 %4507
        %4509 = vrot.lane.b32.xlu0 %v4475, 64
        %v4510 = vpop.permute.xlu0 %4509
        %4511 = vrot.lane.b32.xlu0 %v4476, 64
        %v4512 = vpop.permute.xlu0 %4511
        %4513 = vrot.lane.b32.xlu0 %v4477, 64
        %v4514 = vpop.permute.xlu0 %4513
        %4515 = vrot.lane.b32.xlu0 %v4478, 64
        %v4516 = vpop.permute.xlu0 %4515
        %4517 = vrot.lane.b32.xlu0 %v4479, 64
        %v4518 = vpop.permute.xlu0 %4517
        %4519 = vrot.lane.b32.xlu0 %v4480, 64
        %v4520 = vpop.permute.xlu0 %4519
        %4521 = vrot.lane.b32.xlu0 %v4481, 64
        %v4522 = vpop.permute.xlu0 %4521
        %4523 = vrot.lane.b32.xlu0 %v4482, 64
        %v4524 = vpop.permute.xlu0 %4523
        %4525 = vrot.lane.b32.xlu0 %v4483, 64
        %v4526 = vpop.permute.xlu0 %4525
        %4527 = vrot.lane.b32.xlu0 %v4484, 64
        %v4528 = vpop.permute.xlu0 %4527
        %4529 = vrot.lane.b32.xlu0 %v4485, 64
        %v4530 = vpop.permute.xlu0 %4529
        %4531 = vrot.lane.b32.xlu0 %v4486, 64
        %v4532 = vpop.permute.xlu0 %4531
        %4533 = vrot.lane.b32.xlu0 %v4487, 64
        %v4534 = vpop.permute.xlu0 %4533
        %4535 = vrot.lane.b32.xlu0 %v4488, 64
        %v4536 = vpop.permute.xlu0 %4535
        %4553 = vst.msk [vmem:[#allocation2 + $0x8] sm:$0xff] %vm2070, %v4506
        %4554 = vst.msk [vmem:[#allocation2 + $0x30] sm:$0xff] %vm2070, %v4508
        %4555 = vst.msk [vmem:[#allocation2 + $0x58] sm:$0xff] %vm2070, %v4510
        %4556 = vst.msk [vmem:[#allocation2 + $0x80] sm:$0xff] %vm2070, %v4512
        %4557 = vst.msk [vmem:[#allocation2 + $0xa8] sm:$0xff] %vm2070, %v4514
        %4558 = vst.msk [vmem:[#allocation2 + $0xd0] sm:$0xff] %vm2070, %v4516
        %4559 = vst.msk [vmem:[#allocation2 + $0xf8] sm:$0xff] %vm2070, %v4518
        %4560 = vst.msk [vmem:[#allocation2 + $0x120] sm:$0xff] %vm2070, %v4520
        %4561 = vst.msk [vmem:[#allocation2 + $0x148] sm:$0xff] %vm2070, %v4522
        %4562 = vst.msk [vmem:[#allocation2 + $0x170] sm:$0xff] %vm2070, %v4524
        %4563 = vst.msk [vmem:[#allocation2 + $0x198] sm:$0xff] %vm2070, %v4526
        %4564 = vst.msk [vmem:[#allocation2 + $0x1c0] sm:$0xff] %vm2070, %v4528
        %4565 = vst.msk [vmem:[#allocation2 + $0x1e8] sm:$0xff] %vm2070, %v4530
        %4566 = vst.msk [vmem:[#allocation2 + $0x210] sm:$0xff] %vm2070, %v4532
        %4567 = vst.msk [vmem:[#allocation2 + $0x238] sm:$0xff] %vm2070, %v4534
        %4568 = vst.msk [vmem:[#allocation2 + $0x260] sm:$0xff] %vm2070, %v4536
        %4569 = vst.msk [vmem:[#allocation2 + $0x10] sm:$0xff] %vm1427, %v4111
        %4570 = vst.msk [vmem:[#allocation2 + $0x38] sm:$0xff] %vm1427, %v4112
        %4571 = vst.msk [vmem:[#allocation2 + $0x60] sm:$0xff] %vm1427, %v4113
        %4572 = vst.msk [vmem:[#allocation2 + $0x88] sm:$0xff] %vm1427, %v4114
        %4573 = vst.msk [vmem:[#allocation2 + $0xb0] sm:$0xff] %vm1427, %v4115
        %4574 = vst.msk [vmem:[#allocation2 + $0xd8] sm:$0xff] %vm1427, %v4116
        %4575 = vst.msk [vmem:[#allocation2 + $0x100] sm:$0xff] %vm1427, %v4117
        %4576 = vst.msk [vmem:[#allocation2 + $0x128] sm:$0xff] %vm1427, %v4118
        %4577 = vst.msk [vmem:[#allocation2 + $0x150] sm:$0xff] %vm1427, %v4119
        %4578 = vst.msk [vmem:[#allocation2 + $0x178] sm:$0xff] %vm1427, %v4120
        %4579 = vst.msk [vmem:[#allocation2 + $0x1a0] sm:$0xff] %vm1427, %v4121
        %4580 = vst.msk [vmem:[#allocation2 + $0x1c8] sm:$0xff] %vm1427, %v4122
        %4581 = vst.msk [vmem:[#allocation2 + $0x1f0] sm:$0xff] %vm1427, %v4123
        %4582 = vst.msk [vmem:[#allocation2 + $0x218] sm:$0xff] %vm1427, %v4124
        %4583 = vst.msk [vmem:[#allocation2 + $0x240] sm:$0xff] %vm1427, %v4125
        %4584 = vst.msk [vmem:[#allocation2 + $0x268] sm:$0xff] %vm1427, %v4126
        %v4585 = vor.u32 %v4467, %v4416
        %v4587 = vsel %vm2154, %v4585, 0
        %v4588 = vsel %vm2332, %v4372, 0
        %v4589 = vsel %vm2333, %v4375, 0
        %v4590 = vsel %vm2334, %v4378, 0
        %v4591 = vsel %vm2335, %v4381, 0
        %v4592 = vsel %vm2336, %v4384, 0
        %v4593 = vsel %vm2337, %v4387, 0
        %v4594 = vsel %vm2338, %v4390, 0
        %v4595 = vsel %vm2339, %v4393, 0
        %v4596 = vsel %vm2340, %v4396, 0
        %v4597 = vsel %vm2341, %v4399, 0
        %v4598 = vsel %vm2342, %v4402, 0
        %v4599 = vsel %vm2343, %v4405, 0
        %v4600 = vsel %vm2344, %v4408, 0
        %v4601 = vsel %vm2345, %v4411, 0
        %v4602 = vsel %vm2346, %v4417, 0
        %v4603 = vsel %vm2347, %v4587, 0
        %4620 = vrot.lane.b32.xlu0 %v4588, 64
        %v4621 = vpop.permute.xlu0 %4620
        %4622 = vrot.lane.b32.xlu0 %v4589, 64
        %v4623 = vpop.permute.xlu0 %4622
        %4624 = vrot.lane.b32.xlu0 %v4590, 64
        %v4625 = vpop.permute.xlu0 %4624
        %4626 = vrot.lane.b32.xlu0 %v4591, 64
        %v4627 = vpop.permute.xlu0 %4626
        %4628 = vrot.lane.b32.xlu0 %v4592, 64
        %v4629 = vpop.permute.xlu0 %4628
        %4630 = vrot.lane.b32.xlu0 %v4593, 64
        %v4631 = vpop.permute.xlu0 %4630
        %4632 = vrot.lane.b32.xlu0 %v4594, 64
        %v4633 = vpop.permute.xlu0 %4632
        %4634 = vrot.lane.b32.xlu0 %v4595, 64
        %v4635 = vpop.permute.xlu0 %4634
        %4636 = vrot.lane.b32.xlu0 %v4596, 64
        %v4637 = vpop.permute.xlu0 %4636
        %4638 = vrot.lane.b32.xlu0 %v4597, 64
        %v4639 = vpop.permute.xlu0 %4638
        %4640 = vrot.lane.b32.xlu0 %v4598, 64
        %v4641 = vpop.permute.xlu0 %4640
        %4642 = vrot.lane.b32.xlu0 %v4599, 64
        %v4643 = vpop.permute.xlu0 %4642
        %4644 = vrot.lane.b32.xlu0 %v4600, 64
        %v4645 = vpop.permute.xlu0 %4644
        %4646 = vrot.lane.b32.xlu0 %v4601, 64
        %v4647 = vpop.permute.xlu0 %4646
        %4648 = vrot.lane.b32.xlu0 %v4602, 64
        %v4649 = vpop.permute.xlu0 %4648
        %4650 = vrot.lane.b32.xlu0 %v4603, 64
        %v4651 = vpop.permute.xlu0 %4650
        %4668 = vst.msk [vmem:[#allocation2 + $0x10] sm:$0xff] %vm2070, %v4621
        %4669 = vst.msk [vmem:[#allocation2 + $0x38] sm:$0xff] %vm2070, %v4623
        %4670 = vst.msk [vmem:[#allocation2 + $0x60] sm:$0xff] %vm2070, %v4625
        %4671 = vst.msk [vmem:[#allocation2 + $0x88] sm:$0xff] %vm2070, %v4627
        %4672 = vst.msk [vmem:[#allocation2 + $0xb0] sm:$0xff] %vm2070, %v4629
        %4673 = vst.msk [vmem:[#allocation2 + $0xd8] sm:$0xff] %vm2070, %v4631
        %4674 = vst.msk [vmem:[#allocation2 + $0x100] sm:$0xff] %vm2070, %v4633
        %4675 = vst.msk [vmem:[#allocation2 + $0x128] sm:$0xff] %vm2070, %v4635
        %4676 = vst.msk [vmem:[#allocation2 + $0x150] sm:$0xff] %vm2070, %v4637
        %4677 = vst.msk [vmem:[#allocation2 + $0x178] sm:$0xff] %vm2070, %v4639
        %4678 = vst.msk [vmem:[#allocation2 + $0x1a0] sm:$0xff] %vm2070, %v4641
        %4679 = vst.msk [vmem:[#allocation2 + $0x1c8] sm:$0xff] %vm2070, %v4643
        %4680 = vst.msk [vmem:[#allocation2 + $0x1f0] sm:$0xff] %vm2070, %v4645
        %4681 = vst.msk [vmem:[#allocation2 + $0x218] sm:$0xff] %vm2070, %v4647
        %4682 = vst.msk [vmem:[#allocation2 + $0x240] sm:$0xff] %vm2070, %v4649
        %4683 = vst.msk [vmem:[#allocation2 + $0x268] sm:$0xff] %vm2070, %v4651
        %v4685 = vsel %vm1789, %v4469, 0
        %v4686 = vsel %vm2393, %v4141, 0
        %v4687 = vsel %vm1960, %v4149, 0
        %v4688 = vsel %vm1961, %v4157, 0
        %v4689 = vsel %vm1962, %v4165, 0
        %v4690 = vsel %vm1963, %v4173, 0
        %v4691 = vsel %vm1964, %v4181, 0
        %v4692 = vsel %vm1965, %v4189, 0
        %v4693 = vsel %vm1966, %v4197, 0
        %v4694 = vsel %vm1967, %v4205, 0
        %v4695 = vsel %vm1968, %v4213, 0
        %v4696 = vsel %vm1969, %v4221, 0
        %v4697 = vsel %vm1970, %v4229, 0
        %v4698 = vsel %vm1971, %v4237, 0
        %v4699 = vsel %vm1972, %v4245, 0
        %v4700 = vsel %vm1973, %v4471, 0
        %v4701 = vsel %vm1974, %v4685, 0
        %4702 = vst.msk [vmem:[#allocation2 + $0x18] sm:$0xff] %vm1427, %v4686
        %4703 = vst.msk [vmem:[#allocation2 + $0x40] sm:$0xff] %vm1427, %v4687
        %4704 = vst.msk [vmem:[#allocation2 + $0x68] sm:$0xff] %vm1427, %v4688
        %4705 = vst.msk [vmem:[#allocation2 + $0x90] sm:$0xff] %vm1427, %v4689
        %4706 = vst.msk [vmem:[#allocation2 + $0xb8] sm:$0xff] %vm1427, %v4690
        %4707 = vst.msk [vmem:[#allocation2 + $0xe0] sm:$0xff] %vm1427, %v4691
        %4708 = vst.msk [vmem:[#allocation2 + $0x108] sm:$0xff] %vm1427, %v4692
        %4709 = vst.msk [vmem:[#allocation2 + $0x130] sm:$0xff] %vm1427, %v4693
        %4710 = vst.msk [vmem:[#allocation2 + $0x158] sm:$0xff] %vm1427, %v4694
        %4711 = vst.msk [vmem:[#allocation2 + $0x180] sm:$0xff] %vm1427, %v4695
        %4712 = vst.msk [vmem:[#allocation2 + $0x1a8] sm:$0xff] %vm1427, %v4696
        %4713 = vst.msk [vmem:[#allocation2 + $0x1d0] sm:$0xff] %vm1427, %v4697
        %4714 = vst.msk [vmem:[#allocation2 + $0x1f8] sm:$0xff] %vm1427, %v4698
        %4715 = vst.msk [vmem:[#allocation2 + $0x220] sm:$0xff] %vm1427, %v4699
        %4716 = vst.msk [vmem:[#allocation2 + $0x248] sm:$0xff] %vm1427, %v4700
        %4717 = vst.msk [vmem:[#allocation2 + $0x270] sm:$0xff] %vm1427, %v4701
        %4719 = vrot.lane.b32.xlu0 %v4126, 64
        %v4720 = vpop.permute.xlu0 %4719
        %4722 = vst.msk [vmem:[#allocation2 + $0x18] sm:$0xff] %vm2070, %v4311
        %4723 = vst.msk [vmem:[#allocation2 + $0x40] sm:$0xff] %vm2070, %v4313
        %4724 = vst.msk [vmem:[#allocation2 + $0x68] sm:$0xff] %vm2070, %v4315
        %4725 = vst.msk [vmem:[#allocation2 + $0x90] sm:$0xff] %vm2070, %v4317
        %4726 = vst.msk [vmem:[#allocation2 + $0xb8] sm:$0xff] %vm2070, %v4319
        %4727 = vst.msk [vmem:[#allocation2 + $0xe0] sm:$0xff] %vm2070, %v4321
        %4728 = vst.msk [vmem:[#allocation2 + $0x108] sm:$0xff] %vm2070, %v4323
        %4729 = vst.msk [vmem:[#allocation2 + $0x130] sm:$0xff] %vm2070, %v4325
        %4730 = vst.msk [vmem:[#allocation2 + $0x158] sm:$0xff] %vm2070, %v4327
        %4731 = vst.msk [vmem:[#allocation2 + $0x180] sm:$0xff] %vm2070, %v4329
        %4732 = vst.msk [vmem:[#allocation2 + $0x1a8] sm:$0xff] %vm2070, %v4331
        %4733 = vst.msk [vmem:[#allocation2 + $0x1d0] sm:$0xff] %vm2070, %v4333
        %4734 = vst.msk [vmem:[#allocation2 + $0x1f8] sm:$0xff] %vm2070, %v4335
        %4735 = vst.msk [vmem:[#allocation2 + $0x220] sm:$0xff] %vm2070, %v4337
        %4736 = vst.msk [vmem:[#allocation2 + $0x248] sm:$0xff] %vm2070, %v4720
        %4737 = vst.msk [vmem:[#allocation2 + $0x270] sm:$0xff] %vm2070, %v2023
        %v4738 = vsel %vm2332, %v4375, 0
        %v4739 = vsel %vm2333, %v4378, 0
        %v4740 = vsel %vm2334, %v4381, 0
        %v4741 = vsel %vm2335, %v4384, 0
        %v4742 = vsel %vm2336, %v4387, 0
        %v4743 = vsel %vm2337, %v4390, 0
        %v4744 = vsel %vm2338, %v4393, 0
        %v4745 = vsel %vm2339, %v4396, 0
        %v4746 = vsel %vm2340, %v4399, 0
        %v4747 = vsel %vm2341, %v4402, 0
        %v4748 = vsel %vm2342, %v4405, 0
        %v4749 = vsel %vm2343, %v4408, 0
        %v4750 = vsel %vm2344, %v4411, 0
        %v4751 = vsel %vm2345, %v4417, 0
        %v4752 = vsel %vm2346, %v4587, 0
        %4753 = vst.msk [vmem:[#allocation2 + $0x20] sm:$0xff] %vm1427, %v4738
        %4754 = vst.msk [vmem:[#allocation2 + $0x48] sm:$0xff] %vm1427, %v4739
        %4755 = vst.msk [vmem:[#allocation2 + $0x70] sm:$0xff] %vm1427, %v4740
        %4756 = vst.msk [vmem:[#allocation2 + $0x98] sm:$0xff] %vm1427, %v4741
        %4757 = vst.msk [vmem:[#allocation2 + $0xc0] sm:$0xff] %vm1427, %v4742
        %4758 = vst.msk [vmem:[#allocation2 + $0xe8] sm:$0xff] %vm1427, %v4743
        %4759 = vst.msk [vmem:[#allocation2 + $0x110] sm:$0xff] %vm1427, %v4744
        %4760 = vst.msk [vmem:[#allocation2 + $0x138] sm:$0xff] %vm1427, %v4745
        %4761 = vst.msk [vmem:[#allocation2 + $0x160] sm:$0xff] %vm1427, %v4746
        %4762 = vst.msk [vmem:[#allocation2 + $0x188] sm:$0xff] %vm1427, %v4747
        %4763 = vst.msk [vmem:[#allocation2 + $0x1b0] sm:$0xff] %vm1427, %v4748
        %4764 = vst.msk [vmem:[#allocation2 + $0x1d8] sm:$0xff] %vm1427, %v4749
        %4765 = vst.msk [vmem:[#allocation2 + $0x200] sm:$0xff] %vm1427, %v4750
        %4766 = vst.msk [vmem:[#allocation2 + $0x228] sm:$0xff] %vm1427, %v4751
        %4767 = vst.msk [vmem:[#allocation2 + $0x250] sm:$0xff] %vm1427, %v4752
        %4768 = vst.msk [vmem:[#allocation2 + $0x278] sm:$0xff] %vm1427, 0
        %v4769 = vld [vmem:[#allocation2] sm:$0xff]
        %v4770 = vld [vmem:[#allocation2 + $0x8] sm:$0xff]
        %v4771 = vld [vmem:[#allocation2 + $0x10] sm:$0xff]
        %v4772 = vld [vmem:[#allocation2 + $0x18] sm:$0xff]
        %v4773 = vld [vmem:[#allocation2 + $0x20] sm:$0xff]
        %v4774 = vld [vmem:[#allocation2 + $0x28] sm:$0xff]
        %v4775 = vld [vmem:[#allocation2 + $0x30] sm:$0xff]
        %v4776 = vld [vmem:[#allocation2 + $0x38] sm:$0xff]
        %v4777 = vld [vmem:[#allocation2 + $0x40] sm:$0xff]
        %v4778 = vld [vmem:[#allocation2 + $0x48] sm:$0xff]
        %v4779 = vld [vmem:[#allocation2 + $0x50] sm:$0xff]
        %v4780 = vld [vmem:[#allocation2 + $0x58] sm:$0xff]
        %v4781 = vld [vmem:[#allocation2 + $0x60] sm:$0xff]
        %v4782 = vld [vmem:[#allocation2 + $0x68] sm:$0xff]
        %v4783 = vld [vmem:[#allocation2 + $0x70] sm:$0xff]
        %v4784 = vld [vmem:[#allocation2 + $0x78] sm:$0xff]
        %v4785 = vld [vmem:[#allocation2 + $0x80] sm:$0xff]
        %v4786 = vld [vmem:[#allocation2 + $0x88] sm:$0xff]
        %v4787 = vld [vmem:[#allocation2 + $0x90] sm:$0xff]
        %v4788 = vld [vmem:[#allocation2 + $0x98] sm:$0xff]
        %v4789 = vld [vmem:[#allocation2 + $0xa0] sm:$0xff]
        %v4790 = vld [vmem:[#allocation2 + $0xa8] sm:$0xff]
        %v4791 = vld [vmem:[#allocation2 + $0xb0] sm:$0xff]
        %v4792 = vld [vmem:[#allocation2 + $0xb8] sm:$0xff]
        %v4793 = vld [vmem:[#allocation2 + $0xc0] sm:$0xff]
        %v4794 = vld [vmem:[#allocation2 + $0xc8] sm:$0xff]
        %v4795 = vld [vmem:[#allocation2 + $0xd0] sm:$0xff]
        %v4796 = vld [vmem:[#allocation2 + $0xd8] sm:$0xff]
        %v4797 = vld [vmem:[#allocation2 + $0xe0] sm:$0xff]
        %v4798 = vld [vmem:[#allocation2 + $0xe8] sm:$0xff]
        %v4799 = vld [vmem:[#allocation2 + $0xf0] sm:$0xff]
        %v4800 = vld [vmem:[#allocation2 + $0xf8] sm:$0xff]
        %v4801 = vld [vmem:[#allocation2 + $0x100] sm:$0xff]
        %v4802 = vld [vmem:[#allocation2 + $0x108] sm:$0xff]
        %v4803 = vld [vmem:[#allocation2 + $0x110] sm:$0xff]
        %v4804 = vld [vmem:[#allocation2 + $0x118] sm:$0xff]
        %v4805 = vld [vmem:[#allocation2 + $0x120] sm:$0xff]
        %v4806 = vld [vmem:[#allocation2 + $0x128] sm:$0xff]
        %v4807 = vld [vmem:[#allocation2 + $0x130] sm:$0xff]
        %v4808 = vld [vmem:[#allocation2 + $0x138] sm:$0xff]
        %v4809 = vld [vmem:[#allocation2 + $0x140] sm:$0xff]
        %v4810 = vld [vmem:[#allocation2 + $0x148] sm:$0xff]
        %v4811 = vld [vmem:[#allocation2 + $0x150] sm:$0xff]
        %v4812 = vld [vmem:[#allocation2 + $0x158] sm:$0xff]
        %v4813 = vld [vmem:[#allocation2 + $0x160] sm:$0xff]
        %v4814 = vld [vmem:[#allocation2 + $0x168] sm:$0xff]
        %v4815 = vld [vmem:[#allocation2 + $0x170] sm:$0xff]
        %v4816 = vld [vmem:[#allocation2 + $0x178] sm:$0xff]
        %v4817 = vld [vmem:[#allocation2 + $0x180] sm:$0xff]
        %v4818 = vld [vmem:[#allocation2 + $0x188] sm:$0xff]
        %v4819 = vld [vmem:[#allocation2 + $0x190] sm:$0xff]
        %v4820 = vld [vmem:[#allocation2 + $0x198] sm:$0xff]
        %v4821 = vld [vmem:[#allocation2 + $0x1a0] sm:$0xff]
        %v4822 = vld [vmem:[#allocation2 + $0x1a8] sm:$0xff]
        %v4823 = vld [vmem:[#allocation2 + $0x1b0] sm:$0xff]
        %v4824 = vld [vmem:[#allocation2 + $0x1b8] sm:$0xff]
        %v4825 = vld [vmem:[#allocation2 + $0x1c0] sm:$0xff]
        %v4826 = vld [vmem:[#allocation2 + $0x1c8] sm:$0xff]
        %v4827 = vld [vmem:[#allocation2 + $0x1d0] sm:$0xff]
        %v4828 = vld [vmem:[#allocation2 + $0x1d8] sm:$0xff]
        %v4829 = vld [vmem:[#allocation2 + $0x1e0] sm:$0xff]
        %v4830 = vld [vmem:[#allocation2 + $0x1e8] sm:$0xff]
        %v4831 = vld [vmem:[#allocation2 + $0x1f0] sm:$0xff]
        %v4832 = vld [vmem:[#allocation2 + $0x1f8] sm:$0xff]
        %v4833 = vld [vmem:[#allocation2 + $0x200] sm:$0xff]
        %v4834 = vld [vmem:[#allocation2 + $0x208] sm:$0xff]
        %v4835 = vld [vmem:[#allocation2 + $0x210] sm:$0xff]
        %v4836 = vld [vmem:[#allocation2 + $0x218] sm:$0xff]
        %v4837 = vld [vmem:[#allocation2 + $0x220] sm:$0xff]
        %v4838 = vld [vmem:[#allocation2 + $0x228] sm:$0xff]
        %v4839 = vld [vmem:[#allocation2 + $0x230] sm:$0xff]
        %v4840 = vld [vmem:[#allocation2 + $0x238] sm:$0xff]
        %v4841 = vld [vmem:[#allocation2 + $0x240] sm:$0xff]
        %v4842 = vld [vmem:[#allocation2 + $0x248] sm:$0xff]
        %v4843 = vld [vmem:[#allocation2 + $0x250] sm:$0xff]
        %v4844 = vld [vmem:[#allocation2 + $0x258] sm:$0xff]
        %v4845 = vld [vmem:[#allocation2 + $0x260] sm:$0xff]
        %v4846 = vld [vmem:[#allocation2 + $0x268] sm:$0xff]
        %v4847 = vld [vmem:[#allocation2 + $0x270] sm:$0xff]
        %v4848 = vld [vmem:[#allocation2 + $0x278] sm:$0xff]
        %s4849 = scalar_lea.vmem %s5, 288
        %v4850 = vld [vmem:[%s4849] sm:$0xf]
        %v4851 = vld [vmem:[%s4849 + $0x4] sm:$0xf]
        %v4852 = vld [vmem:[%s4849 + $0x8] sm:$0xf]
        %v4853 = vld [vmem:[%s4849 + $0xc] sm:$0xf]
        %v4854 = vld [vmem:[%s4849 + $0x10] sm:$0xf]
        %v4855 = vld [vmem:[%s4849 + $0x14] sm:$0xf]
        %v4856 = vld [vmem:[%s4849 + $0x18] sm:$0xf]
        %v4857 = vld [vmem:[%s4849 + $0x1c] sm:$0xf]
        %v4858 = vld [vmem:[%s4849 + $0x20] sm:$0xf]
        %v4859 = vld [vmem:[%s4849 + $0x24] sm:$0xf]
        %v4860 = vld [vmem:[%s4849 + $0x28] sm:$0xf]
        %v4861 = vld [vmem:[%s4849 + $0x2c] sm:$0xf]
        %v4862 = vld [vmem:[%s4849 + $0x30] sm:$0xf]
        %v4863 = vld [vmem:[%s4849 + $0x34] sm:$0xf]
        %v4864 = vld [vmem:[%s4849 + $0x38] sm:$0xf]
        %v4865 = vld [vmem:[%s4849 + $0x3c] sm:$0xf]
        %v4866 = vld [vmem:[%s4849 + $0x40] sm:$0xf]
        %v4867 = vld [vmem:[%s4849 + $0x44] sm:$0xf]
        %v4868 = vld [vmem:[%s4849 + $0x48] sm:$0xf]
        %v4869 = vld [vmem:[%s4849 + $0x4c] sm:$0xf]
        %v4870 = vld [vmem:[%s4849 + $0x50] sm:$0xf]
        %v4871 = vld [vmem:[%s4849 + $0x54] sm:$0xf]
        %v4872 = vld [vmem:[%s4849 + $0x58] sm:$0xf]
        %v4873 = vld [vmem:[%s4849 + $0x5c] sm:$0xf]
        %v4874 = vld [vmem:[%s4849 + $0x60] sm:$0xf]
        %v4875 = vld [vmem:[%s4849 + $0x64] sm:$0xf]
        %v4876 = vld [vmem:[%s4849 + $0x68] sm:$0xf]
        %v4877 = vld [vmem:[%s4849 + $0x6c] sm:$0xf]
        %v4878 = vld [vmem:[%s4849 + $0x70] sm:$0xf]
        %v4879 = vld [vmem:[%s4849 + $0x74] sm:$0xf]
        %v4880 = vld [vmem:[%s4849 + $0x78] sm:$0xf]
        %v4881 = vld [vmem:[%s4849 + $0x7c] sm:$0xf]
        %v4882 = vld [vmem:[%s4849 + $0x80] sm:$0xf]
        %v4883 = vld [vmem:[%s4849 + $0x84] sm:$0xf]
        %v4884 = vld [vmem:[%s4849 + $0x88] sm:$0xf]
        %v4885 = vld [vmem:[%s4849 + $0x8c] sm:$0xf]
        %v4886 = vld [vmem:[%s4849 + $0x90] sm:$0xf]
        %v4887 = vld [vmem:[%s4849 + $0x94] sm:$0xf]
        %v4888 = vld [vmem:[%s4849 + $0x98] sm:$0xf]
        %v4889 = vld [vmem:[%s4849 + $0x9c] sm:$0xf]
        %v4890 = vld [vmem:[%s4849 + $0xa0] sm:$0xf]
        %v4891 = vld [vmem:[%s4849 + $0xa4] sm:$0xf]
        %v4892 = vld [vmem:[%s4849 + $0xa8] sm:$0xf]
        %v4893 = vld [vmem:[%s4849 + $0xac] sm:$0xf]
        %v4894 = vld [vmem:[%s4849 + $0xb0] sm:$0xf]
        %v4895 = vld [vmem:[%s4849 + $0xb4] sm:$0xf]
        %v4896 = vld [vmem:[%s4849 + $0xb8] sm:$0xf]
        %v4897 = vld [vmem:[%s4849 + $0xbc] sm:$0xf]
        %v4898 = vld [vmem:[%s4849 + $0xc0] sm:$0xf]
        %v4899 = vld [vmem:[%s4849 + $0xc4] sm:$0xf]
        %v4900 = vld [vmem:[%s4849 + $0xc8] sm:$0xf]
        %v4901 = vld [vmem:[%s4849 + $0xcc] sm:$0xf]
        %v4902 = vld [vmem:[%s4849 + $0xd0] sm:$0xf]
        %v4903 = vld [vmem:[%s4849 + $0xd4] sm:$0xf]
        %v4904 = vld [vmem:[%s4849 + $0xd8] sm:$0xf]
        %v4905 = vld [vmem:[%s4849 + $0xdc] sm:$0xf]
        %v4906 = vld [vmem:[%s4849 + $0xe0] sm:$0xf]
        %v4907 = vld [vmem:[%s4849 + $0xe4] sm:$0xf]
        %v4908 = vld [vmem:[%s4849 + $0xe8] sm:$0xf]
        %v4909 = vld [vmem:[%s4849 + $0xec] sm:$0xf]
        %v4910 = vld [vmem:[%s4849 + $0xf0] sm:$0xf]
        %v4911 = vld [vmem:[%s4849 + $0xf4] sm:$0xf]
        %v4912 = vld [vmem:[%s4849 + $0xf8] sm:$0xf]
        %v4913 = vld [vmem:[%s4849 + $0xfc] sm:$0xf]
        %v4914 = vld [vmem:[%s4849 + $0x100] sm:$0xf]
        %v4915 = vld [vmem:[%s4849 + $0x104] sm:$0xf]
        %v4916 = vld [vmem:[%s4849 + $0x108] sm:$0xf]
        %v4917 = vld [vmem:[%s4849 + $0x10c] sm:$0xf]
        %v4918 = vld [vmem:[%s4849 + $0x110] sm:$0xf]
        %v4919 = vld [vmem:[%s4849 + $0x114] sm:$0xf]
        %v4920 = vld [vmem:[%s4849 + $0x118] sm:$0xf]
        %v4921 = vld [vmem:[%s4849 + $0x11c] sm:$0xf]
        %v4994 = vunpack.c.l.b16 %v4850
        %v4995 = vunpack.c.l.b16 %v4851
        %v4996 = vunpack.c.l.b16 %v4852
        %v4997 = vunpack.c.l.b16 %v4853
        %v4998 = vunpack.c.l.b16 %v4854
        %v4999 = vunpack.c.l.b16 %v4855
        %v5000 = vunpack.c.l.b16 %v4856
        %v5001 = vunpack.c.l.b16 %v4857
        %v5002 = vunpack.c.l.b16 %v4858
        %v5003 = vunpack.c.l.b16 %v4859
        %v5004 = vunpack.c.l.b16 %v4860
        %v5005 = vunpack.c.l.b16 %v4861
        %v5006 = vunpack.c.l.b16 %v4862
        %v5007 = vunpack.c.l.b16 %v4863
        %v5008 = vunpack.c.l.b16 %v4864
        %v5009 = vunpack.c.l.b16 %v4865
        %v5010 = vunpack.c.l.b16 %v4866
        %v5011 = vunpack.c.l.b16 %v4867
        %v5012 = vunpack.c.l.b16 %v4868
        %v5013 = vunpack.c.l.b16 %v4869
        %v5014 = vunpack.c.l.b16 %v4870
        %v5015 = vunpack.c.l.b16 %v4871
        %v5016 = vunpack.c.l.b16 %v4872
        %v5017 = vunpack.c.l.b16 %v4873
        %v5018 = vunpack.c.l.b16 %v4874
        %v5019 = vunpack.c.l.b16 %v4875
        %v5020 = vunpack.c.l.b16 %v4876
        %v5021 = vunpack.c.l.b16 %v4877
        %v5022 = vunpack.c.l.b16 %v4878
        %v5023 = vunpack.c.l.b16 %v4879
        %v5024 = vunpack.c.l.b16 %v4880
        %v5025 = vunpack.c.l.b16 %v4881
        %v5026 = vunpack.c.l.b16 %v4882
        %v5027 = vunpack.c.l.b16 %v4883
        %v5028 = vunpack.c.l.b16 %v4884
        %v5029 = vunpack.c.l.b16 %v4885
        %v5030 = vunpack.c.l.b16 %v4886
        %v5031 = vunpack.c.l.b16 %v4887
        %v5032 = vunpack.c.l.b16 %v4888
        %v5033 = vunpack.c.l.b16 %v4889
        %v5034 = vunpack.c.l.b16 %v4890
        %v5035 = vunpack.c.l.b16 %v4891
        %v5036 = vunpack.c.l.b16 %v4892
        %v5037 = vunpack.c.l.b16 %v4893
        %v5038 = vunpack.c.l.b16 %v4894
        %v5039 = vunpack.c.l.b16 %v4895
        %v5040 = vunpack.c.l.b16 %v4896
        %v5041 = vunpack.c.l.b16 %v4897
        %v5042 = vunpack.c.l.b16 %v4898
        %v5043 = vunpack.c.l.b16 %v4899
        %v5044 = vunpack.c.l.b16 %v4900
        %v5045 = vunpack.c.l.b16 %v4901
        %v5046 = vunpack.c.l.b16 %v4902
        %v5047 = vunpack.c.l.b16 %v4903
        %v5048 = vunpack.c.l.b16 %v4904
        %v5049 = vunpack.c.l.b16 %v4905
        %v5050 = vunpack.c.l.b16 %v4906
        %v5051 = vunpack.c.l.b16 %v4907
        %v5052 = vunpack.c.l.b16 %v4908
        %v5053 = vunpack.c.l.b16 %v4909
        %v5054 = vunpack.c.l.b16 %v4910
        %v5055 = vunpack.c.l.b16 %v4911
        %v5056 = vunpack.c.l.b16 %v4912
        %v5057 = vunpack.c.l.b16 %v4913
        %v5058 = vunpack.c.l.b16 %v4914
        %v5059 = vunpack.c.l.b16 %v4915
        %v5060 = vunpack.c.l.b16 %v4916
        %v5061 = vunpack.c.l.b16 %v4917
        %v5062 = vunpack.c.l.b16 %v4918
        %v5063 = vunpack.c.l.b16 %v4919
        %v5064 = vunpack.c.l.b16 %v4920
        %v5065 = vunpack.c.l.b16 %v4921
        %v5066 = vpack.c.b16 %v4995, %v4994
        %v5067 = vpack.c.b16 %v4997, %v4996
        %v5068 = vpack.c.b16 %v4999, %v4998
        %v5069 = vpack.c.b16 %v5001, %v5000
        %v5070 = vpack.c.b16 %v5003, %v5002
        %v5071 = vpack.c.b16 %v5005, %v5004
        %v5072 = vpack.c.b16 %v5007, %v5006
        %v5073 = vpack.c.b16 %v5009, %v5008
        %v5074 = vpack.c.b16 %v5011, %v5010
        %v5075 = vpack.c.b16 %v5013, %v5012
        %v5076 = vpack.c.b16 %v5015, %v5014
        %v5077 = vpack.c.b16 %v5017, %v5016
        %v5078 = vpack.c.b16 %v5019, %v5018
        %v5079 = vpack.c.b16 %v5021, %v5020
        %v5080 = vpack.c.b16 %v5023, %v5022
        %v5081 = vpack.c.b16 %v5025, %v5024
        %v5082 = vpack.c.b16 %v5027, %v5026
        %v5083 = vpack.c.b16 %v5029, %v5028
        %v5084 = vpack.c.b16 %v5031, %v5030
        %v5085 = vpack.c.b16 %v5033, %v5032
        %v5086 = vpack.c.b16 %v5035, %v5034
        %v5087 = vpack.c.b16 %v5037, %v5036
        %v5088 = vpack.c.b16 %v5039, %v5038
        %v5089 = vpack.c.b16 %v5041, %v5040
        %v5090 = vpack.c.b16 %v5043, %v5042
        %v5091 = vpack.c.b16 %v5045, %v5044
        %v5092 = vpack.c.b16 %v5047, %v5046
        %v5093 = vpack.c.b16 %v5049, %v5048
        %v5094 = vpack.c.b16 %v5051, %v5050
        %v5095 = vpack.c.b16 %v5053, %v5052
        %v5096 = vpack.c.b16 %v5055, %v5054
        %v5097 = vpack.c.b16 %v5057, %v5056
        %v5098 = vpack.c.b16 %v5059, %v5058
        %v5099 = vpack.c.b16 %v5061, %v5060
        %v5100 = vpack.c.b16 %v5063, %v5062
        %v5101 = vpack.c.b16 %v5065, %v5064
        %v5139 = vsel %vm1427, %v4773, 0
        %v5142 = vsel %vm1427, %v4778, 0
        %v5145 = vsel %vm1427, %v4783, 0
        %v5148 = vsel %vm1427, %v4788, 0
        %v5151 = vsel %vm1427, %v4793, 0
        %v5154 = vsel %vm1427, %v4798, 0
        %v5157 = vsel %vm1427, %v4803, 0
        %v5160 = vsel %vm1427, %v4808, 0
        %v5163 = vsel %vm1427, %v4813, 0
        %v5166 = vsel %vm1427, %v4818, 0
        %v5169 = vsel %vm1427, %v4823, 0
        %v5172 = vsel %vm1427, %v4828, 0
        %v5175 = vsel %vm1427, %v4833, 0
        %v5178 = vsel %vm1427, %v4838, 0
        %v5181 = vsel %vm1427, %v4843, 0
        %v5184 = vsel %vm1427, %v4848, 0
        %5186 = vmatprep.subr.bf16.mxu0 0
        %5187 = vmatpush1.bf16.msra.mxu0 %v5066
        %5188 = vmatprep.subr.bf16.mxu0 0
        %5189 = vmatpush1.bf16.msra.mxu0 %v5067
        %5190 = vmatprep.subr.bf16.mxu0 0
        %5191 = vmatpush1.bf16.msra.mxu0 %v5068
        %5192 = vmatprep.subr.bf16.mxu0 0
        %5193 = vmatpush1.bf16.msra.mxu0 %v5069
        %5194 = vmatprep.subr.bf16.mxu0 0
        %5195 = vmatpush1.bf16.msra.mxu0 %v5070
        %5196 = vmatprep.subr.bf16.mxu0 0
        %5197 = vmatpush1.bf16.msra.mxu0 %v5071
        %5198 = vmatprep.subr.bf16.mxu0 0
        %5199 = vmatpush1.bf16.msra.mxu0 %v5072
        %5200 = vmatprep.subr.bf16.mxu0 0
        %5201 = vmatpush1.bf16.msra.mxu0 %v5073
        %5202 = vmatprep.subr.bf16.mxu0 0
        %5203 = vmatpush1.bf16.msra.mxu0 %v5074
        %5204 = vmatprep.subr.bf16.mxu0 0
        %5205 = vmatpush1.bf16.msra.mxu0 %v5075
        %5206 = vmatprep.subr.bf16.mxu0 0
        %5207 = vmatpush1.bf16.msra.mxu0 %v5076
        %5208 = vmatprep.subr.bf16.mxu0 0
        %5209 = vmatpush1.bf16.msra.mxu0 %v5077
        %5210 = vmatprep.subr.bf16.mxu0 0
        %5211 = vmatpush1.bf16.msra.mxu0 %v5078
        %5212 = vmatprep.subr.bf16.mxu0 0
        %5213 = vmatpush1.bf16.msra.mxu0 %v5079
        %5214 = vmatprep.subr.bf16.mxu0 0
        %5215 = vmatpush1.bf16.msra.mxu0 %v5080
        %5216 = vmatprep.subr.bf16.mxu0 0
        %5217 = vmatpush1.bf16.msra.mxu0 %v5081
        %5218 = vmatprep.mubr.bf16.mxu0 %v4770
        %5219 = vmatmul.mubr.bf16.gmra.mrb[0].mxu0 %v4769
        %v5220 = vpop.f32.mrb[0].mxu0
        %v5221 = vadd.f32 0.0, %v5220
        %v5222 = vpop.f32.mrb[0].mxu0
        %v5223 = vpop.f32.mrb[0].mxu0
        %v5224 = vadd.f32 0.0, %v5223
        %v5225 = vpop.f32.mrb[0].mxu0
        %5226 = vmatprep.mubr.bf16.mxu0 %v4775
        %5227 = vmatmul.mubr.bf16.gmra.mrb[0].mxu0 %v4774
        %v5228 = vpop.f32.mrb[0].mxu0
        %v5229 = vadd.f32 0.0, %v5228
        %v5230 = vpop.f32.mrb[0].mxu0
        %v5231 = vpop.f32.mrb[0].mxu0
        %v5232 = vadd.f32 0.0, %v5231
        %v5233 = vpop.f32.mrb[0].mxu0
        %5234 = vmatprep.mubr.bf16.mxu0 %v4780
        %5235 = vmatmul.mubr.bf16.gmra.mrb[0].mxu0 %v4779
        %v5236 = vpop.f32.mrb[0].mxu0
        %v5237 = vadd.f32 0.0, %v5236
        %v5238 = vpop.f32.mrb[0].mxu0
        %v5239 = vpop.f32.mrb[0].mxu0
        %v5240 = vadd.f32 0.0, %v5239
        %v5241 = vpop.f32.mrb[0].mxu0
        %5242 = vmatprep.mubr.bf16.mxu0 %v4785
        %5243 = vmatmul.mubr.bf16.gmra.mrb[0].mxu0 %v4784
        %v5244 = vpop.f32.mrb[0].mxu0
        %v5245 = vadd.f32 0.0, %v5244
        %v5246 = vpop.f32.mrb[0].mxu0
        %v5247 = vpop.f32.mrb[0].mxu0
        %v5248 = vadd.f32 0.0, %v5247
        %v5249 = vpop.f32.mrb[0].mxu0
        %5250 = vmatprep.mubr.bf16.mxu0 %v4790
        %5251 = vmatmul.mubr.bf16.gmra.mrb[0].mxu0 %v4789
        %v5252 = vpop.f32.mrb[0].mxu0
        %v5253 = vadd.f32 0.0, %v5252
        %v5254 = vpop.f32.mrb[0].mxu0
        %v5255 = vpop.f32.mrb[0].mxu0
        %v5256 = vadd.f32 0.0, %v5255
        %v5257 = vpop.f32.mrb[0].mxu0
        %5258 = vmatprep.mubr.bf16.mxu0 %v4795
        %5259 = vmatmul.mubr.bf16.gmra.mrb[0].mxu0 %v4794
        %v5260 = vpop.f32.mrb[0].mxu0
        %v5261 = vadd.f32 0.0, %v5260
        %v5262 = vpop.f32.mrb[0].mxu0
        %v5263 = vpop.f32.mrb[0].mxu0
        %v5264 = vadd.f32 0.0, %v5263
        %v5265 = vpop.f32.mrb[0].mxu0
        %5266 = vmatprep.mubr.bf16.mxu0 %v4800
        %5267 = vmatmul.mubr.bf16.gmra.mrb[0].mxu0 %v4799
        %v5268 = vpop.f32.mrb[0].mxu0
        %v5269 = vadd.f32 0.0, %v5268
        %v5270 = vpop.f32.mrb[0].mxu0
        %v5271 = vpop.f32.mrb[0].mxu0
        %v5272 = vadd.f32 0.0, %v5271
        %v5273 = vpop.f32.mrb[0].mxu0
        %5274 = vmatprep.mubr.bf16.mxu0 %v4805
        %5275 = vmatmul.mubr.bf16.gmra.mrb[0].mxu0 %v4804
        %v5276 = vpop.f32.mrb[0].mxu0
        %v5277 = vadd.f32 0.0, %v5276
        %v5278 = vpop.f32.mrb[0].mxu0
        %v5279 = vpop.f32.mrb[0].mxu0
        %v5280 = vadd.f32 0.0, %v5279
        %v5281 = vpop.f32.mrb[0].mxu0
        %5282 = vmatprep.mubr.bf16.mxu0 %v4810
        %5283 = vmatmul.mubr.bf16.gmra.mrb[0].mxu0 %v4809
        %v5284 = vpop.f32.mrb[0].mxu0
        %v5285 = vadd.f32 0.0, %v5284
        %v5286 = vpop.f32.mrb[0].mxu0
        %v5287 = vpop.f32.mrb[0].mxu0
        %v5288 = vadd.f32 0.0, %v5287
        %v5289 = vpop.f32.mrb[0].mxu0
        %5290 = vmatprep.mubr.bf16.mxu0 %v4815
        %5291 = vmatmul.mubr.bf16.gmra.mrb[0].mxu0 %v4814
        %v5292 = vpop.f32.mrb[0].mxu0
        %v5293 = vadd.f32 0.0, %v5292
        %v5294 = vpop.f32.mrb[0].mxu0
        %v5295 = vpop.f32.mrb[0].mxu0
        %v5296 = vadd.f32 0.0, %v5295
        %v5297 = vpop.f32.mrb[0].mxu0
        %5298 = vmatprep.mubr.bf16.mxu0 %v4820
        %5299 = vmatmul.mubr.bf16.gmra.mrb[0].mxu0 %v4819
        %v5300 = vpop.f32.mrb[0].mxu0
        %v5301 = vadd.f32 0.0, %v5300
        %v5302 = vpop.f32.mrb[0].mxu0
        %v5303 = vpop.f32.mrb[0].mxu0
        %v5304 = vadd.f32 0.0, %v5303
        %v5305 = vpop.f32.mrb[0].mxu0
        %5306 = vmatprep.mubr.bf16.mxu0 %v4825
        %5307 = vmatmul.mubr.bf16.gmra.mrb[0].mxu0 %v4824
        %v5308 = vpop.f32.mrb[0].mxu0
        %v5309 = vadd.f32 0.0, %v5308
        %v5310 = vpop.f32.mrb[0].mxu0
        %v5311 = vpop.f32.mrb[0].mxu0
        %v5312 = vadd.f32 0.0, %v5311
        %v5313 = vpop.f32.mrb[0].mxu0
        %5314 = vmatprep.mubr.bf16.mxu0 %v4830
        %5315 = vmatmul.mubr.bf16.gmra.mrb[0].mxu0 %v4829
        %v5316 = vpop.f32.mrb[0].mxu0
        %v5317 = vadd.f32 0.0, %v5316
        %v5318 = vpop.f32.mrb[0].mxu0
        %v5319 = vpop.f32.mrb[0].mxu0
        %v5320 = vadd.f32 0.0, %v5319
        %v5321 = vpop.f32.mrb[0].mxu0
        %5322 = vmatprep.mubr.bf16.mxu0 %v4835
        %5323 = vmatmul.mubr.bf16.gmra.mrb[0].mxu0 %v4834
        %v5324 = vpop.f32.mrb[0].mxu0
        %v5325 = vadd.f32 0.0, %v5324
        %v5326 = vpop.f32.mrb[0].mxu0
        %v5327 = vpop.f32.mrb[0].mxu0
        %v5328 = vadd.f32 0.0, %v5327
        %v5329 = vpop.f32.mrb[0].mxu0
        %5330 = vmatprep.mubr.bf16.mxu0 %v4840
        %5331 = vmatmul.mubr.bf16.gmra.mrb[0].mxu0 %v4839
        %v5332 = vpop.f32.mrb[0].mxu0
        %v5333 = vadd.f32 0.0, %v5332
        %v5334 = vpop.f32.mrb[0].mxu0
        %v5335 = vpop.f32.mrb[0].mxu0
        %v5336 = vadd.f32 0.0, %v5335
        %v5337 = vpop.f32.mrb[0].mxu0
        %5338 = vmatprep.mubr.bf16.mxu0 %v4845
        %5339 = vmatmul.mubr.bf16.gmra.mrb[0].mxu0 %v4844
        %v5340 = vpop.f32.mrb[0].mxu0
        %v5341 = vadd.f32 0.0, %v5340
        %v5342 = vpop.f32.mrb[0].mxu0
        %v5343 = vpop.f32.mrb[0].mxu0
        %v5344 = vadd.f32 0.0, %v5343
        %v5345 = vpop.f32.mrb[0].mxu0
        %5346 = vdwg.mxu0
        %5347 = vmatprep.subr.bf16.mxu0 0
        %5348 = vmatpush1.bf16.msra.mxu0 %v5082
        %5349 = vmatprep.subr.bf16.mxu0 0
        %5350 = vmatpush1.bf16.msra.mxu0 %v5083
        %5351 = vmatprep.subr.bf16.mxu0 0
        %5352 = vmatpush1.bf16.msra.mxu0 %v5084
        %5353 = vmatprep.subr.bf16.mxu0 0
        %5354 = vmatpush1.bf16.msra.mxu0 %v5085
        %5355 = vmatprep.subr.bf16.mxu0 0
        %5356 = vmatpush1.bf16.msra.mxu0 %v5086
        %5357 = vmatprep.subr.bf16.mxu0 0
        %5358 = vmatpush1.bf16.msra.mxu0 %v5087
        %5359 = vmatprep.subr.bf16.mxu0 0
        %5360 = vmatpush1.bf16.msra.mxu0 %v5088
        %5361 = vmatprep.subr.bf16.mxu0 0
        %5362 = vmatpush1.bf16.msra.mxu0 %v5089
        %5363 = vmatprep.subr.bf16.mxu0 0
        %5364 = vmatpush1.bf16.msra.mxu0 %v5090
        %5365 = vmatprep.subr.bf16.mxu0 0
        %5366 = vmatpush1.bf16.msra.mxu0 %v5091
        %5367 = vmatprep.subr.bf16.mxu0 0
        %5368 = vmatpush1.bf16.msra.mxu0 %v5092
        %5369 = vmatprep.subr.bf16.mxu0 0
        %5370 = vmatpush1.bf16.msra.mxu0 %v5093
        %5371 = vmatprep.subr.bf16.mxu0 0
        %5372 = vmatpush1.bf16.msra.mxu0 %v5094
        %5373 = vmatprep.subr.bf16.mxu0 0
        %5374 = vmatpush1.bf16.msra.mxu0 %v5095
        %5375 = vmatprep.subr.bf16.mxu0 0
        %5376 = vmatpush1.bf16.msra.mxu0 %v5096
        %5377 = vmatprep.subr.bf16.mxu0 0
        %5378 = vmatpush1.bf16.msra.mxu0 %v5097
        %5379 = vmatprep.mubr.bf16.mxu0 %v4772
        %5380 = vmatmul.mubr.bf16.gmra.mrb[0].mxu0 %v4771
        %v5381 = vpop.f32.mrb[0].mxu0
        %v5382 = vadd.f32 %v5221, %v5381
        %v5383 = vpop.f32.mrb[0].mxu0
        %v5384 = vpop.f32.mrb[0].mxu0
        %v5385 = vadd.f32 %v5224, %v5384
        %v5386 = vpop.f32.mrb[0].mxu0
        %5387 = vmatprep.mubr.bf16.mxu0 %v4777
        %5388 = vmatmul.mubr.bf16.gmra.mrb[0].mxu0 %v4776
        %v5389 = vpop.f32.mrb[0].mxu0
        %v5390 = vadd.f32 %v5229, %v5389
        %v5391 = vpop.f32.mrb[0].mxu0
        %v5392 = vpop.f32.mrb[0].mxu0
        %v5393 = vadd.f32 %v5232, %v5392
        %v5394 = vpop.f32.mrb[0].mxu0
        %5395 = vmatprep.mubr.bf16.mxu0 %v4782
        %5396 = vmatmul.mubr.bf16.gmra.mrb[0].mxu0 %v4781
        %v5397 = vpop.f32.mrb[0].mxu0
        %v5398 = vadd.f32 %v5237, %v5397
        %v5399 = vpop.f32.mrb[0].mxu0
        %v5400 = vpop.f32.mrb[0].mxu0
        %v5401 = vadd.f32 %v5240, %v5400
        %v5402 = vpop.f32.mrb[0].mxu0
        %5403 = vmatprep.mubr.bf16.mxu0 %v4787
        %5404 = vmatmul.mubr.bf16.gmra.mrb[0].mxu0 %v4786
        %v5405 = vpop.f32.mrb[0].mxu0
        %v5406 = vadd.f32 %v5245, %v5405
        %v5407 = vpop.f32.mrb[0].mxu0
        %v5408 = vpop.f32.mrb[0].mxu0
        %v5409 = vadd.f32 %v5248, %v5408
        %v5410 = vpop.f32.mrb[0].mxu0
        %5411 = vmatprep.mubr.bf16.mxu0 %v4792
        %5412 = vmatmul.mubr.bf16.gmra.mrb[0].mxu0 %v4791
        %v5413 = vpop.f32.mrb[0].mxu0
        %v5414 = vadd.f32 %v5253, %v5413
        %v5415 = vpop.f32.mrb[0].mxu0
        %v5416 = vpop.f32.mrb[0].mxu0
        %v5417 = vadd.f32 %v5256, %v5416
        %v5418 = vpop.f32.mrb[0].mxu0
        %5419 = vmatprep.mubr.bf16.mxu0 %v4797
        %5420 = vmatmul.mubr.bf16.gmra.mrb[0].mxu0 %v4796
        %v5421 = vpop.f32.mrb[0].mxu0
        %v5422 = vadd.f32 %v5261, %v5421
        %v5423 = vpop.f32.mrb[0].mxu0
        %v5424 = vpop.f32.mrb[0].mxu0
        %v5425 = vadd.f32 %v5264, %v5424
        %v5426 = vpop.f32.mrb[0].mxu0
        %5427 = vmatprep.mubr.bf16.mxu0 %v4802
        %5428 = vmatmul.mubr.bf16.gmra.mrb[0].mxu0 %v4801
        %v5429 = vpop.f32.mrb[0].mxu0
        %v5430 = vadd.f32 %v5269, %v5429
        %v5431 = vpop.f32.mrb[0].mxu0
        %v5432 = vpop.f32.mrb[0].mxu0
        %v5433 = vadd.f32 %v5272, %v5432
        %v5434 = vpop.f32.mrb[0].mxu0
        %5435 = vmatprep.mubr.bf16.mxu0 %v4807
        %5436 = vmatmul.mubr.bf16.gmra.mrb[0].mxu0 %v4806
        %v5437 = vpop.f32.mrb[0].mxu0
        %v5438 = vadd.f32 %v5277, %v5437
        %v5439 = vpop.f32.mrb[0].mxu0
        %v5440 = vpop.f32.mrb[0].mxu0
        %v5441 = vadd.f32 %v5280, %v5440
        %v5442 = vpop.f32.mrb[0].mxu0
        %5443 = vmatprep.mubr.bf16.mxu0 %v4812
        %5444 = vmatmul.mubr.bf16.gmra.mrb[0].mxu0 %v4811
        %v5445 = vpop.f32.mrb[0].mxu0
        %v5446 = vadd.f32 %v5285, %v5445
        %v5447 = vpop.f32.mrb[0].mxu0
        %v5448 = vpop.f32.mrb[0].mxu0
        %v5449 = vadd.f32 %v5288, %v5448
        %v5450 = vpop.f32.mrb[0].mxu0
        %5451 = vmatprep.mubr.bf16.mxu0 %v4817
        %5452 = vmatmul.mubr.bf16.gmra.mrb[0].mxu0 %v4816
        %v5453 = vpop.f32.mrb[0].mxu0
        %v5454 = vadd.f32 %v5293, %v5453
        %v5455 = vpop.f32.mrb[0].mxu0
        %v5456 = vpop.f32.mrb[0].mxu0
        %v5457 = vadd.f32 %v5296, %v5456
        %v5458 = vpop.f32.mrb[0].mxu0
        %5459 = vmatprep.mubr.bf16.mxu0 %v4822
        %5460 = vmatmul.mubr.bf16.gmra.mrb[0].mxu0 %v4821
        %v5461 = vpop.f32.mrb[0].mxu0
        %v5462 = vadd.f32 %v5301, %v5461
        %v5463 = vpop.f32.mrb[0].mxu0
        %v5464 = vpop.f32.mrb[0].mxu0
        %v5465 = vadd.f32 %v5304, %v5464
        %v5466 = vpop.f32.mrb[0].mxu0
        %5467 = vmatprep.mubr.bf16.mxu0 %v4827
        %5468 = vmatmul.mubr.bf16.gmra.mrb[0].mxu0 %v4826
        %v5469 = vpop.f32.mrb[0].mxu0
        %v5470 = vadd.f32 %v5309, %v5469
        %v5471 = vpop.f32.mrb[0].mxu0
        %v5472 = vpop.f32.mrb[0].mxu0
        %v5473 = vadd.f32 %v5312, %v5472
        %v5474 = vpop.f32.mrb[0].mxu0
        %5475 = vmatprep.mubr.bf16.mxu0 %v4832
        %5476 = vmatmul.mubr.bf16.gmra.mrb[0].mxu0 %v4831
        %v5477 = vpop.f32.mrb[0].mxu0
        %v5478 = vadd.f32 %v5317, %v5477
        %v5479 = vpop.f32.mrb[0].mxu0
        %v5480 = vpop.f32.mrb[0].mxu0
        %v5481 = vadd.f32 %v5320, %v5480
        %v5482 = vpop.f32.mrb[0].mxu0
        %5483 = vmatprep.mubr.bf16.mxu0 %v4837
        %5484 = vmatmul.mubr.bf16.gmra.mrb[0].mxu0 %v4836
        %v5485 = vpop.f32.mrb[0].mxu0
        %v5486 = vadd.f32 %v5325, %v5485
        %v5487 = vpop.f32.mrb[0].mxu0
        %v5488 = vpop.f32.mrb[0].mxu0
        %v5489 = vadd.f32 %v5328, %v5488
        %v5490 = vpop.f32.mrb[0].mxu0
        %5491 = vmatprep.mubr.bf16.mxu0 %v4842
        %5492 = vmatmul.mubr.bf16.gmra.mrb[0].mxu0 %v4841
        %v5493 = vpop.f32.mrb[0].mxu0
        %v5494 = vadd.f32 %v5333, %v5493
        %v5495 = vpop.f32.mrb[0].mxu0
        %v5496 = vpop.f32.mrb[0].mxu0
        %v5497 = vadd.f32 %v5336, %v5496
        %v5498 = vpop.f32.mrb[0].mxu0
        %5499 = vmatprep.mubr.bf16.mxu0 %v4847
        %5500 = vmatmul.mubr.bf16.gmra.mrb[0].mxu0 %v4846
        %v5501 = vpop.f32.mrb[0].mxu0
        %v5502 = vadd.f32 %v5341, %v5501
        %v5503 = vpop.f32.mrb[0].mxu0
        %v5504 = vpop.f32.mrb[0].mxu0
        %v5505 = vadd.f32 %v5344, %v5504
        %v5506 = vpop.f32.mrb[0].mxu0
        %5507 = vdwg.mxu0
        %5508 = vmatprep.subr.bf16.mxu0 0
        %5509 = vmatpush1.bf16.msra.mxu0 %v5098
        %5510 = vmatprep.subr.bf16.mxu0 0
        %5511 = vmatpush1.bf16.msra.mxu0 %v5099
        %5512 = vmatprep.subr.bf16.mxu0 0
        %5513 = vmatpush1.bf16.msra.mxu0 %v5100
        %5514 = vmatprep.subr.bf16.mxu0 0
        %5515 = vmatpush1.bf16.msra.mxu0 %v5101
        %5516 = vmatprep.subr.bf16.mxu0 0
        %5517 = vmatpush1.bf16.msra.mxu0 0
        %5518 = vmatprep.subr.bf16.mxu0 0
        %5519 = vmatpush1.bf16.msra.mxu0 0
        %5520 = vmatprep.subr.bf16.mxu0 0
        %5521 = vmatpush1.bf16.msra.mxu0 0
        %5522 = vmatprep.subr.bf16.mxu0 0
        %5523 = vmatpush1.bf16.msra.mxu0 0
        %5524 = vmatprep.subr.bf16.mxu0 0
        %5525 = vmatpush1.bf16.msra.mxu0 0
        %5526 = vmatprep.subr.bf16.mxu0 0
        %5527 = vmatpush1.bf16.msra.mxu0 0
        %5528 = vmatprep.subr.bf16.mxu0 0
        %5529 = vmatpush1.bf16.msra.mxu0 0
        %5530 = vmatprep.subr.bf16.mxu0 0
        %5531 = vmatpush1.bf16.msra.mxu0 0
        %5532 = vmatprep.subr.bf16.mxu0 0
        %5533 = vmatpush1.bf16.msra.mxu0 0
        %5534 = vmatprep.subr.bf16.mxu0 0
        %5535 = vmatpush1.bf16.msra.mxu0 0
        %5536 = vmatprep.subr.bf16.mxu0 0
        %5537 = vmatpush1.bf16.msra.mxu0 0
        %5538 = vmatprep.subr.bf16.mxu0 0
        %5539 = vmatpush1.bf16.msra.mxu0 0
        %5540 = vmatprep.mubr.bf16.mxu0 0
        %5541 = vmatmul.mubr.bf16.gmra.mrb[0].mxu0 %v5139
        %v5542 = vpop.f32.mrb[0].mxu0
        %v5543 = vadd.f32 %v5382, %v5542
        %v5544 = vpop.f32.mrb[0].mxu0
        %v5545 = vpop.f32.mrb[0].mxu0
        %v5546 = vadd.f32 %v5385, %v5545
        %v5547 = vpop.f32.mrb[0].mxu0
        %5548 = vmatprep.mubr.bf16.mxu0 0
        %5549 = vmatmul.mubr.bf16.gmra.mrb[0].mxu0 %v5142
        %v5550 = vpop.f32.mrb[0].mxu0
        %v5551 = vadd.f32 %v5390, %v5550
        %v5552 = vpop.f32.mrb[0].mxu0
        %v5553 = vpop.f32.mrb[0].mxu0
        %v5554 = vadd.f32 %v5393, %v5553
        %v5555 = vpop.f32.mrb[0].mxu0
        %5556 = vmatprep.mubr.bf16.mxu0 0
        %5557 = vmatmul.mubr.bf16.gmra.mrb[0].mxu0 %v5145
        %v5558 = vpop.f32.mrb[0].mxu0
        %v5559 = vadd.f32 %v5398, %v5558
        %v5560 = vpop.f32.mrb[0].mxu0
        %v5561 = vpop.f32.mrb[0].mxu0
        %v5562 = vadd.f32 %v5401, %v5561
        %v5563 = vpop.f32.mrb[0].mxu0
        %5564 = vmatprep.mubr.bf16.mxu0 0
        %5565 = vmatmul.mubr.bf16.gmra.mrb[0].mxu0 %v5148
        %v5566 = vpop.f32.mrb[0].mxu0
        %v5567 = vadd.f32 %v5406, %v5566
        %v5568 = vpop.f32.mrb[0].mxu0
        %v5569 = vpop.f32.mrb[0].mxu0
        %v5570 = vadd.f32 %v5409, %v5569
        %v5571 = vpop.f32.mrb[0].mxu0
        %5572 = vmatprep.mubr.bf16.mxu0 0
        %5573 = vmatmul.mubr.bf16.gmra.mrb[0].mxu0 %v5151
        %v5574 = vpop.f32.mrb[0].mxu0
        %v5575 = vadd.f32 %v5414, %v5574
        %v5576 = vpop.f32.mrb[0].mxu0
        %v5577 = vpop.f32.mrb[0].mxu0
        %v5578 = vadd.f32 %v5417, %v5577
        %v5579 = vpop.f32.mrb[0].mxu0
        %5580 = vmatprep.mubr.bf16.mxu0 0
        %5581 = vmatmul.mubr.bf16.gmra.mrb[0].mxu0 %v5154
        %v5582 = vpop.f32.mrb[0].mxu0
        %v5583 = vadd.f32 %v5422, %v5582
        %v5584 = vpop.f32.mrb[0].mxu0
        %v5585 = vpop.f32.mrb[0].mxu0
        %v5586 = vadd.f32 %v5425, %v5585
        %v5587 = vpop.f32.mrb[0].mxu0
        %5588 = vmatprep.mubr.bf16.mxu0 0
        %5589 = vmatmul.mubr.bf16.gmra.mrb[0].mxu0 %v5157
        %v5590 = vpop.f32.mrb[0].mxu0
        %v5591 = vadd.f32 %v5430, %v5590
        %v5592 = vpop.f32.mrb[0].mxu0
        %v5593 = vpop.f32.mrb[0].mxu0
        %v5594 = vadd.f32 %v5433, %v5593
        %v5595 = vpop.f32.mrb[0].mxu0
        %5596 = vmatprep.mubr.bf16.mxu0 0
        %5597 = vmatmul.mubr.bf16.gmra.mrb[0].mxu0 %v5160
        %v5598 = vpop.f32.mrb[0].mxu0
        %v5599 = vadd.f32 %v5438, %v5598
        %v5600 = vpop.f32.mrb[0].mxu0
        %v5601 = vpop.f32.mrb[0].mxu0
        %v5602 = vadd.f32 %v5441, %v5601
        %v5603 = vpop.f32.mrb[0].mxu0
        %5604 = vmatprep.mubr.bf16.mxu0 0
        %5605 = vmatmul.mubr.bf16.gmra.mrb[0].mxu0 %v5163
        %v5606 = vpop.f32.mrb[0].mxu0
        %v5607 = vadd.f32 %v5446, %v5606
        %v5608 = vpop.f32.mrb[0].mxu0
        %v5609 = vpop.f32.mrb[0].mxu0
        %v5610 = vadd.f32 %v5449, %v5609
        %v5611 = vpop.f32.mrb[0].mxu0
        %5612 = vmatprep.mubr.bf16.mxu0 0
        %5613 = vmatmul.mubr.bf16.gmra.mrb[0].mxu0 %v5166
        %v5614 = vpop.f32.mrb[0].mxu0
        %v5615 = vadd.f32 %v5454, %v5614
        %v5616 = vpop.f32.mrb[0].mxu0
        %v5617 = vpop.f32.mrb[0].mxu0
        %v5618 = vadd.f32 %v5457, %v5617
        %v5619 = vpop.f32.mrb[0].mxu0
        %5620 = vmatprep.mubr.bf16.mxu0 0
        %5621 = vmatmul.mubr.bf16.gmra.mrb[0].mxu0 %v5169
        %v5622 = vpop.f32.mrb[0].mxu0
        %v5623 = vadd.f32 %v5462, %v5622
        %v5624 = vpop.f32.mrb[0].mxu0
        %v5625 = vpop.f32.mrb[0].mxu0
        %v5626 = vadd.f32 %v5465, %v5625
        %v5627 = vpop.f32.mrb[0].mxu0
        %5628 = vmatprep.mubr.bf16.mxu0 0
        %5629 = vmatmul.mubr.bf16.gmra.mrb[0].mxu0 %v5172
        %v5630 = vpop.f32.mrb[0].mxu0
        %v5631 = vadd.f32 %v5470, %v5630
        %v5632 = vpop.f32.mrb[0].mxu0
        %v5633 = vpop.f32.mrb[0].mxu0
        %v5634 = vadd.f32 %v5473, %v5633
        %v5635 = vpop.f32.mrb[0].mxu0
        %5636 = vmatprep.mubr.bf16.mxu0 0
        %5637 = vmatmul.mubr.bf16.gmra.mrb[0].mxu0 %v5175
        %v5638 = vpop.f32.mrb[0].mxu0
        %v5639 = vadd.f32 %v5478, %v5638
        %v5640 = vpop.f32.mrb[0].mxu0
        %v5641 = vpop.f32.mrb[0].mxu0
        %v5642 = vadd.f32 %v5481, %v5641
        %v5643 = vpop.f32.mrb[0].mxu0
        %5644 = vmatprep.mubr.bf16.mxu0 0
        %5645 = vmatmul.mubr.bf16.gmra.mrb[0].mxu0 %v5178
        %v5646 = vpop.f32.mrb[0].mxu0
        %v5647 = vadd.f32 %v5486, %v5646
        %v5648 = vpop.f32.mrb[0].mxu0
        %v5649 = vpop.f32.mrb[0].mxu0
        %v5650 = vadd.f32 %v5489, %v5649
        %v5651 = vpop.f32.mrb[0].mxu0
        %5652 = vmatprep.mubr.bf16.mxu0 0
        %5653 = vmatmul.mubr.bf16.gmra.mrb[0].mxu0 %v5181
        %v5654 = vpop.f32.mrb[0].mxu0
        %v5655 = vadd.f32 %v5494, %v5654
        %v5656 = vpop.f32.mrb[0].mxu0
        %v5657 = vpop.f32.mrb[0].mxu0
        %v5658 = vadd.f32 %v5497, %v5657
        %v5659 = vpop.f32.mrb[0].mxu0
        %5660 = vmatprep.mubr.bf16.mxu0 0
        %5661 = vmatmul.mubr.bf16.gmra.mrb[0].mxu0 %v5184
        %v5662 = vpop.f32.mrb[0].mxu0
        %v5663 = vadd.f32 %v5502, %v5662
        %v5664 = vpop.f32.mrb[0].mxu0
        %v5665 = vpop.f32.mrb[0].mxu0
        %v5666 = vadd.f32 %v5505, %v5665
        %v5667 = vpop.f32.mrb[0].mxu0
        %5668 = vdwg.mxu0
        %v5669 = vxor.u32 %v5543, 2147483648
        %v5670 = vxor.u32 %v5546, 2147483648
        %v5671 = vxor.u32 %v5551, 2147483648
        %v5672 = vxor.u32 %v5554, 2147483648
        %v5673 = vxor.u32 %v5559, 2147483648
        %v5674 = vxor.u32 %v5562, 2147483648
        %v5675 = vxor.u32 %v5567, 2147483648
        %v5676 = vxor.u32 %v5570, 2147483648
        %v5677 = vxor.u32 %v5575, 2147483648
        %v5678 = vxor.u32 %v5578, 2147483648
        %v5679 = vxor.u32 %v5583, 2147483648
        %v5680 = vxor.u32 %v5586, 2147483648
        %v5681 = vxor.u32 %v5591, 2147483648
        %v5682 = vxor.u32 %v5594, 2147483648
        %v5683 = vxor.u32 %v5599, 2147483648
        %v5684 = vxor.u32 %v5602, 2147483648
        %v5685 = vxor.u32 %v5607, 2147483648
        %v5686 = vxor.u32 %v5610, 2147483648
        %v5687 = vxor.u32 %v5615, 2147483648
        %v5688 = vxor.u32 %v5618, 2147483648
        %v5689 = vxor.u32 %v5623, 2147483648
        %v5690 = vxor.u32 %v5626, 2147483648
        %v5691 = vxor.u32 %v5631, 2147483648
        %v5692 = vxor.u32 %v5634, 2147483648
        %v5693 = vxor.u32 %v5639, 2147483648
        %v5694 = vxor.u32 %v5642, 2147483648
        %v5695 = vxor.u32 %v5647, 2147483648
        %v5696 = vxor.u32 %v5650, 2147483648
        %v5697 = vxor.u32 %v5655, 2147483648
        %v5698 = vxor.u32 %v5658, 2147483648
        %v5699 = vxor.u32 %v5663, 2147483648
        %v5700 = vxor.u32 %v5666, 2147483648
        %v5701 = vmul.f32 %v5669, 1.442695
        %v5702 = vpow.pop %v5701
        %v5703 = vmul.f32 %v5670, 1.442695
        %v5704 = vpow.pop %v5703
        %v5705 = vmul.f32 %v5671, 1.442695
        %v5706 = vpow.pop %v5705
        %v5707 = vmul.f32 %v5672, 1.442695
        %v5708 = vpow.pop %v5707
        %v5709 = vmul.f32 %v5673, 1.442695
        %v5710 = vpow.pop %v5709
        %v5711 = vmul.f32 %v5674, 1.442695
        %v5712 = vpow.pop %v5711
        %v5713 = vmul.f32 %v5675, 1.442695
        %v5714 = vpow.pop %v5713
        %v5715 = vmul.f32 %v5676, 1.442695
        %v5716 = vpow.pop %v5715
        %v5717 = vmul.f32 %v5677, 1.442695
        %v5718 = vpow.pop %v5717
        %v5719 = vmul.f32 %v5678, 1.442695
        %v5720 = vpow.pop %v5719
        %v5721 = vmul.f32 %v5679, 1.442695
        %v5722 = vpow.pop %v5721
        %v5723 = vmul.f32 %v5680, 1.442695
        %v5724 = vpow.pop %v5723
        %v5725 = vmul.f32 %v5681, 1.442695
        %v5726 = vpow.pop %v5725
        %v5727 = vmul.f32 %v5682, 1.442695
        %v5728 = vpow.pop %v5727
        %v5729 = vmul.f32 %v5683, 1.442695
        %v5730 = vpow.pop %v5729
        %v5731 = vmul.f32 %v5684, 1.442695
        %v5732 = vpow.pop %v5731
        %v5733 = vmul.f32 %v5685, 1.442695
        %v5734 = vpow.pop %v5733
        %v5735 = vmul.f32 %v5686, 1.442695
        %v5736 = vpow.pop %v5735
        %v5737 = vmul.f32 %v5687, 1.442695
        %v5738 = vpow.pop %v5737
        %v5739 = vmul.f32 %v5688, 1.442695
        %v5740 = vpow.pop %v5739
        %v5741 = vmul.f32 %v5689, 1.442695
        %v5742 = vpow.pop %v5741
        %v5743 = vmul.f32 %v5690, 1.442695
        %v5744 = vpow.pop %v5743
        %v5745 = vmul.f32 %v5691, 1.442695
        %v5746 = vpow.pop %v5745
        %v5747 = vmul.f32 %v5692, 1.442695
        %v5748 = vpow.pop %v5747
        %v5749 = vmul.f32 %v5693, 1.442695
        %v5750 = vpow.pop %v5749
        %v5751 = vmul.f32 %v5694, 1.442695
        %v5752 = vpow.pop %v5751
        %v5753 = vmul.f32 %v5695, 1.442695
        %v5754 = vpow.pop %v5753
        %v5755 = vmul.f32 %v5696, 1.442695
        %v5756 = vpow.pop %v5755
        %v5757 = vmul.f32 %v5697, 1.442695
        %v5758 = vpow.pop %v5757
        %v5759 = vmul.f32 %v5698, 1.442695
        %v5760 = vpow.pop %v5759
        %v5761 = vmul.f32 %v5699, 1.442695
        %v5762 = vpow.pop %v5761
        %v5763 = vmul.f32 %v5700, 1.442695
        %v5764 = vpow.pop %v5763
        %v5765 = vadd.f32 %v5702, 1.0
        %v5766 = vadd.f32 %v5704, 1.0
        %v5767 = vadd.f32 %v5706, 1.0
        %v5768 = vadd.f32 %v5708, 1.0
        %v5769 = vadd.f32 %v5710, 1.0
        %v5770 = vadd.f32 %v5712, 1.0
        %v5771 = vadd.f32 %v5714, 1.0
        %v5772 = vadd.f32 %v5716, 1.0
        %v5773 = vadd.f32 %v5718, 1.0
        %v5774 = vadd.f32 %v5720, 1.0
        %v5775 = vadd.f32 %v5722, 1.0
        %v5776 = vadd.f32 %v5724, 1.0
        %v5777 = vadd.f32 %v5726, 1.0
        %v5778 = vadd.f32 %v5728, 1.0
        %v5779 = vadd.f32 %v5730, 1.0
        %v5780 = vadd.f32 %v5732, 1.0
        %v5781 = vadd.f32 %v5734, 1.0
        %v5782 = vadd.f32 %v5736, 1.0
        %v5783 = vadd.f32 %v5738, 1.0
        %v5784 = vadd.f32 %v5740, 1.0
        %v5785 = vadd.f32 %v5742, 1.0
        %v5786 = vadd.f32 %v5744, 1.0
        %v5787 = vadd.f32 %v5746, 1.0
        %v5788 = vadd.f32 %v5748, 1.0
        %v5789 = vadd.f32 %v5750, 1.0
        %v5790 = vadd.f32 %v5752, 1.0
        %v5791 = vadd.f32 %v5754, 1.0
        %v5792 = vadd.f32 %v5756, 1.0
        %v5793 = vadd.f32 %v5758, 1.0
        %v5794 = vadd.f32 %v5760, 1.0
        %v5795 = vadd.f32 %v5762, 1.0
        %v5796 = vadd.f32 %v5764, 1.0
        %v5797 = vrcp.pop %v5765
        %v5798 = vmul.f32 1.0, %v5797
        %v5799 = vrcp.pop %v5766
        %v5800 = vmul.f32 1.0, %v5799
        %v5801 = vrcp.pop %v5767
        %v5802 = vmul.f32 1.0, %v5801
        %v5803 = vrcp.pop %v5768
        %v5804 = vmul.f32 1.0, %v5803
        %v5805 = vrcp.pop %v5769
        %v5806 = vmul.f32 1.0, %v5805
        %v5807 = vrcp.pop %v5770
        %v5808 = vmul.f32 1.0, %v5807
        %v5809 = vrcp.pop %v5771
        %v5810 = vmul.f32 1.0, %v5809
        %v5811 = vrcp.pop %v5772
        %v5812 = vmul.f32 1.0, %v5811
        %v5813 = vrcp.pop %v5773
        %v5814 = vmul.f32 1.0, %v5813
        %v5815 = vrcp.pop %v5774
        %v5816 = vmul.f32 1.0, %v5815
        %v5817 = vrcp.pop %v5775
        %v5818 = vmul.f32 1.0, %v5817
        %v5819 = vrcp.pop %v5776
        %v5820 = vmul.f32 1.0, %v5819
        %v5821 = vrcp.pop %v5777
        %v5822 = vmul.f32 1.0, %v5821
        %v5823 = vrcp.pop %v5778
        %v5824 = vmul.f32 1.0, %v5823
        %v5825 = vrcp.pop %v5779
        %v5826 = vmul.f32 1.0, %v5825
        %v5827 = vrcp.pop %v5780
        %v5828 = vmul.f32 1.0, %v5827
        %v5829 = vrcp.pop %v5781
        %v5830 = vmul.f32 1.0, %v5829
        %v5831 = vrcp.pop %v5782
        %v5832 = vmul.f32 1.0, %v5831
        %v5833 = vrcp.pop %v5783
        %v5834 = vmul.f32 1.0, %v5833
        %v5835 = vrcp.pop %v5784
        %v5836 = vmul.f32 1.0, %v5835
        %v5837 = vrcp.pop %v5785
        %v5838 = vmul.f32 1.0, %v5837
        %v5839 = vrcp.pop %v5786
        %v5840 = vmul.f32 1.0, %v5839
        %v5841 = vrcp.pop %v5787
        %v5842 = vmul.f32 1.0, %v5841
        %v5843 = vrcp.pop %v5788
        %v5844 = vmul.f32 1.0, %v5843
        %v5845 = vrcp.pop %v5789
        %v5846 = vmul.f32 1.0, %v5845
        %v5847 = vrcp.pop %v5790
        %v5848 = vmul.f32 1.0, %v5847
        %v5849 = vrcp.pop %v5791
        %v5850 = vmul.f32 1.0, %v5849
        %v5851 = vrcp.pop %v5792
        %v5852 = vmul.f32 1.0, %v5851
        %v5853 = vrcp.pop %v5793
        %v5854 = vmul.f32 1.0, %v5853
        %v5855 = vrcp.pop %v5794
        %v5856 = vmul.f32 1.0, %v5855
        %v5857 = vrcp.pop %v5795
        %v5858 = vmul.f32 1.0, %v5857
        %v5859 = vrcp.pop %v5796
        %v5860 = vmul.f32 1.0, %v5859
        %v5861 = vmul.f32 %v5543, %v5798
        %v5862 = vmul.f32 %v5546, %v5800
        %v5863 = vmul.f32 %v5551, %v5802
        %v5864 = vmul.f32 %v5554, %v5804
        %v5865 = vmul.f32 %v5559, %v5806
        %v5866 = vmul.f32 %v5562, %v5808
        %v5867 = vmul.f32 %v5567, %v5810
        %v5868 = vmul.f32 %v5570, %v5812
        %v5869 = vmul.f32 %v5575, %v5814
        %v5870 = vmul.f32 %v5578, %v5816
        %v5871 = vmul.f32 %v5583, %v5818
        %v5872 = vmul.f32 %v5586, %v5820
        %v5873 = vmul.f32 %v5591, %v5822
        %v5874 = vmul.f32 %v5594, %v5824
        %v5875 = vmul.f32 %v5599, %v5826
        %v5876 = vmul.f32 %v5602, %v5828
        %v5877 = vmul.f32 %v5607, %v5830
        %v5878 = vmul.f32 %v5610, %v5832
        %v5879 = vmul.f32 %v5615, %v5834
        %v5880 = vmul.f32 %v5618, %v5836
        %v5881 = vmul.f32 %v5623, %v5838
        %v5882 = vmul.f32 %v5626, %v5840
        %v5883 = vmul.f32 %v5631, %v5842
        %v5884 = vmul.f32 %v5634, %v5844
        %v5885 = vmul.f32 %v5639, %v5846
        %v5886 = vmul.f32 %v5642, %v5848
        %v5887 = vmul.f32 %v5647, %v5850
        %v5888 = vmul.f32 %v5650, %v5852
        %v5889 = vmul.f32 %v5655, %v5854
        %v5890 = vmul.f32 %v5658, %v5856
        %v5891 = vmul.f32 %v5663, %v5858
        %v5892 = vmul.f32 %v5666, %v5860
        %v5893 = vadd.f32 %v5861, %v3813
        %v5894 = vadd.f32 %v5862, %v3814
        %v5895 = vadd.f32 %v5863, %v3815
        %v5896 = vadd.f32 %v5864, %v3816
        %v5897 = vadd.f32 %v5865, %v3817
        %v5898 = vadd.f32 %v5866, %v3818
        %v5899 = vadd.f32 %v5867, %v3819
        %v5900 = vadd.f32 %v5868, %v3820
        %v5901 = vadd.f32 %v5869, %v3821
        %v5902 = vadd.f32 %v5870, %v3822
        %v5903 = vadd.f32 %v5871, %v3823
        %v5904 = vadd.f32 %v5872, %v3824
        %v5905 = vadd.f32 %v5873, %v3825
        %v5906 = vadd.f32 %v5874, %v3826
        %v5907 = vadd.f32 %v5875, %v3827
        %v5908 = vadd.f32 %v5876, %v3828
        %v5909 = vadd.f32 %v5877, %v3829
        %v5910 = vadd.f32 %v5878, %v3830
        %v5911 = vadd.f32 %v5879, %v3831
        %v5912 = vadd.f32 %v5880, %v3832
        %v5913 = vadd.f32 %v5881, %v3833
        %v5914 = vadd.f32 %v5882, %v3834
        %v5915 = vadd.f32 %v5883, %v3835
        %v5916 = vadd.f32 %v5884, %v3836
        %v5917 = vadd.f32 %v5885, %v3837
        %v5918 = vadd.f32 %v5886, %v3838
        %v5919 = vadd.f32 %v5887, %v3839
        %v5920 = vadd.f32 %v5888, %v3840
        %v5921 = vadd.f32 %v5889, %v3841
        %v5922 = vadd.f32 %v5890, %v3842
        %v5923 = vadd.f32 %v5891, %v3843
        %v5924 = vadd.f32 %v5892, %v3844
        %v5925 = vpack.c.bf16 %v5894, %v5893
        %v5926 = vpack.c.bf16 %v5896, %v5895
        %v5927 = vpack.c.bf16 %v5898, %v5897
        %v5928 = vpack.c.bf16 %v5900, %v5899
        %v5929 = vpack.c.bf16 %v5902, %v5901
        %v5930 = vpack.c.bf16 %v5904, %v5903
        %v5931 = vpack.c.bf16 %v5906, %v5905
        %v5932 = vpack.c.bf16 %v5908, %v5907
        %v5933 = vpack.c.bf16 %v5910, %v5909
        %v5934 = vpack.c.bf16 %v5912, %v5911
        %v5935 = vpack.c.bf16 %v5914, %v5913
        %v5936 = vpack.c.bf16 %v5916, %v5915
        %v5937 = vpack.c.bf16 %v5918, %v5917
        %v5938 = vpack.c.bf16 %v5920, %v5919
        %v5939 = vpack.c.bf16 %v5922, %v5921
        %v5940 = vpack.c.bf16 %v5924, %v5923
        %v5942 = vsel %vm1427, %v5925, %v891
        %v5945 = vsel %vm1427, %v5926, %v892
        %v5948 = vsel %vm1427, %v5927, %v893
        %v5951 = vsel %vm1427, %v5928, %v894
        %v5954 = vsel %vm1427, %v5929, %v895
        %v5957 = vsel %vm1427, %v5930, %v896
        %v5960 = vsel %vm1427, %v5931, %v897
        %v5963 = vsel %vm1427, %v5932, %v898
        %v5966 = vsel %vm1427, %v5933, %v899
        %v5969 = vsel %vm1427, %v5934, %v900
        %v5972 = vsel %vm1427, %v5935, %v901
        %v5975 = vsel %vm1427, %v5936, %v902
        %v5978 = vsel %vm1427, %v5937, %v903
        %v5981 = vsel %vm1427, %v5938, %v904
        %v5984 = vsel %vm1427, %v5939, %v905
        %v5987 = vsel %vm1427, %v5940, %v906
        %v5989 = vld [vmem:[%s6] sm:$0xf]
        %v5990 = vld [vmem:[%s6 + $0x4] sm:$0xf]
        %v5991 = vld [vmem:[%s6 + $0x8] sm:$0xf]
        %v5992 = vld [vmem:[%s6 + $0xc] sm:$0xf]
        %v5993 = vld [vmem:[%s6 + $0x10] sm:$0xf]
        %v5994 = vld [vmem:[%s6 + $0x14] sm:$0xf]
        %v5995 = vld [vmem:[%s6 + $0x18] sm:$0xf]
        %v5996 = vld [vmem:[%s6 + $0x1c] sm:$0xf]
        %v5997 = vld [vmem:[%s6 + $0x20] sm:$0xf]
        %v5998 = vld [vmem:[%s6 + $0x24] sm:$0xf]
        %v5999 = vld [vmem:[%s6 + $0x28] sm:$0xf]
        %v6000 = vld [vmem:[%s6 + $0x2c] sm:$0xf]
        %v6001 = vld [vmem:[%s6 + $0x30] sm:$0xf]
        %v6002 = vld [vmem:[%s6 + $0x34] sm:$0xf]
        %v6003 = vld [vmem:[%s6 + $0x38] sm:$0xf]
        %v6004 = vld [vmem:[%s6 + $0x3c] sm:$0xf]
        %v6005 = vld [vmem:[%s7] sm:$0x1]
        %v6007 = vlaneseq
        %v6008 = vshrl.u32 %v6007, 7
        %v6009 = vsub.s32 0, %v6008
        %v6010 = vrot.slane %v6005, %v6009
        %v6028 = vunpack.c.l.b16 %v5989
        %v6029 = vunpack.c.l.b16 %v5990
        %v6030 = vunpack.c.l.b16 %v5991
        %v6031 = vunpack.c.l.b16 %v5992
        %v6032 = vunpack.c.l.b16 %v5993
        %v6033 = vunpack.c.l.b16 %v5994
        %v6034 = vunpack.c.l.b16 %v5995
        %v6035 = vunpack.c.l.b16 %v5996
        %v6036 = vunpack.c.l.b16 %v5997
        %v6037 = vunpack.c.l.b16 %v5998
        %v6038 = vunpack.c.l.b16 %v5999
        %v6039 = vunpack.c.l.b16 %v6000
        %v6040 = vunpack.c.l.b16 %v6001
        %v6041 = vunpack.c.l.b16 %v6002
        %v6042 = vunpack.c.l.b16 %v6003
        %v6043 = vunpack.c.l.b16 %v6004
        %v6044 = vpack.c.b16 %v6029, %v6028
        %v6045 = vpack.c.b16 %v6031, %v6030
        %v6046 = vpack.c.b16 %v6033, %v6032
        %v6047 = vpack.c.b16 %v6035, %v6034
        %v6048 = vpack.c.b16 %v6037, %v6036
        %v6049 = vpack.c.b16 %v6039, %v6038
        %v6050 = vpack.c.b16 %v6041, %v6040
        %v6051 = vpack.c.b16 %v6043, %v6042
        %6060 = vmatprep.subr.bf16.mxu0 0
        %6061 = vmatpush1.bf16.msra.mxu0 %v6044
        %6062 = vmatprep.subr.bf16.mxu0 0
        %6063 = vmatpush1.bf16.msra.mxu0 %v6045
        %6064 = vmatprep.subr.bf16.mxu0 0
        %6065 = vmatpush1.bf16.msra.mxu0 %v6046
        %6066 = vmatprep.subr.bf16.mxu0 0
        %6067 = vmatpush1.bf16.msra.mxu0 %v6047
        %6068 = vmatprep.subr.bf16.mxu0 0
        %6069 = vmatpush1.bf16.msra.mxu0 %v6048
        %6070 = vmatprep.subr.bf16.mxu0 0
        %6071 = vmatpush1.bf16.msra.mxu0 %v6049
        %6072 = vmatprep.subr.bf16.mxu0 0
        %6073 = vmatpush1.bf16.msra.mxu0 %v6050
        %6074 = vmatprep.subr.bf16.mxu0 0
        %6075 = vmatpush1.bf16.msra.mxu0 %v6051
        %6076 = vmatprep.subr.bf16.mxu0 0
        %6077 = vmatpush1.bf16.msra.mxu0 0
        %6078 = vmatprep.subr.bf16.mxu0 0
        %6079 = vmatpush1.bf16.msra.mxu0 0
        %6080 = vmatprep.subr.bf16.mxu0 0
        %6081 = vmatpush1.bf16.msra.mxu0 0
        %6082 = vmatprep.subr.bf16.mxu0 0
        %6083 = vmatpush1.bf16.msra.mxu0 0
        %6084 = vmatprep.subr.bf16.mxu0 0
        %6085 = vmatpush1.bf16.msra.mxu0 0
        %6086 = vmatprep.subr.bf16.mxu0 0
        %6087 = vmatpush1.bf16.msra.mxu0 0
        %6088 = vmatprep.subr.bf16.mxu0 0
        %6089 = vmatpush1.bf16.msra.mxu0 0
        %6090 = vmatprep.subr.bf16.mxu0 0
        %6091 = vmatpush1.bf16.msra.mxu0 0
        %6092 = vmatprep.mubr.bf16.mxu0 0
        %6093 = vmatmul.mubr.bf16.gmra.mrb[0].mxu0 %v5942
        %v6094 = vpop.f32.mrb[0].mxu0
        %v6095 = vadd.f32 %v6010, %v6094
        %v6096 = vpop.f32.mrb[0].mxu0
        %v6097 = vpop.f32.mrb[0].mxu0
        %v6098 = vadd.f32 %v6010, %v6097
        %v6099 = vpop.f32.mrb[0].mxu0
        %6100 = vmatprep.mubr.bf16.mxu0 0
        %6101 = vmatmul.mubr.bf16.gmra.mrb[0].mxu0 %v5945
        %v6102 = vpop.f32.mrb[0].mxu0
        %v6103 = vadd.f32 %v6010, %v6102
        %v6104 = vpop.f32.mrb[0].mxu0
        %v6105 = vpop.f32.mrb[0].mxu0
        %v6106 = vadd.f32 %v6010, %v6105
        %v6107 = vpop.f32.mrb[0].mxu0
        %6108 = vmatprep.mubr.bf16.mxu0 0
        %6109 = vmatmul.mubr.bf16.gmra.mrb[0].mxu0 %v5948
        %v6110 = vpop.f32.mrb[0].mxu0
        %v6111 = vadd.f32 %v6010, %v6110
        %v6112 = vpop.f32.mrb[0].mxu0
        %v6113 = vpop.f32.mrb[0].mxu0
        %v6114 = vadd.f32 %v6010, %v6113
        %v6115 = vpop.f32.mrb[0].mxu0
        %6116 = vmatprep.mubr.bf16.mxu0 0
        %6117 = vmatmul.mubr.bf16.gmra.mrb[0].mxu0 %v5951
        %v6118 = vpop.f32.mrb[0].mxu0
        %v6119 = vadd.f32 %v6010, %v6118
        %v6120 = vpop.f32.mrb[0].mxu0
        %v6121 = vpop.f32.mrb[0].mxu0
        %v6122 = vadd.f32 %v6010, %v6121
        %v6123 = vpop.f32.mrb[0].mxu0
        %6124 = vmatprep.mubr.bf16.mxu0 0
        %6125 = vmatmul.mubr.bf16.gmra.mrb[0].mxu0 %v5954
        %v6126 = vpop.f32.mrb[0].mxu0
        %v6127 = vadd.f32 %v6010, %v6126
        %v6128 = vpop.f32.mrb[0].mxu0
        %v6129 = vpop.f32.mrb[0].mxu0
        %v6130 = vadd.f32 %v6010, %v6129
        %v6131 = vpop.f32.mrb[0].mxu0
        %6132 = vmatprep.mubr.bf16.mxu0 0
        %6133 = vmatmul.mubr.bf16.gmra.mrb[0].mxu0 %v5957
        %v6134 = vpop.f32.mrb[0].mxu0
        %v6135 = vadd.f32 %v6010, %v6134
        %v6136 = vpop.f32.mrb[0].mxu0
        %v6137 = vpop.f32.mrb[0].mxu0
        %v6138 = vadd.f32 %v6010, %v6137
        %v6139 = vpop.f32.mrb[0].mxu0
        %6140 = vmatprep.mubr.bf16.mxu0 0
        %6141 = vmatmul.mubr.bf16.gmra.mrb[0].mxu0 %v5960
        %v6142 = vpop.f32.mrb[0].mxu0
        %v6143 = vadd.f32 %v6010, %v6142
        %v6144 = vpop.f32.mrb[0].mxu0
        %v6145 = vpop.f32.mrb[0].mxu0
        %v6146 = vadd.f32 %v6010, %v6145
        %v6147 = vpop.f32.mrb[0].mxu0
        %6148 = vmatprep.mubr.bf16.mxu0 0
        %6149 = vmatmul.mubr.bf16.gmra.mrb[0].mxu0 %v5963
        %v6150 = vpop.f32.mrb[0].mxu0
        %v6151 = vadd.f32 %v6010, %v6150
        %v6152 = vpop.f32.mrb[0].mxu0
        %v6153 = vpop.f32.mrb[0].mxu0
        %v6154 = vadd.f32 %v6010, %v6153
        %v6155 = vpop.f32.mrb[0].mxu0
        %6156 = vmatprep.mubr.bf16.mxu0 0
        %6157 = vmatmul.mubr.bf16.gmra.mrb[0].mxu0 %v5966
        %v6158 = vpop.f32.mrb[0].mxu0
        %v6159 = vadd.f32 %v6010, %v6158
        %v6160 = vpop.f32.mrb[0].mxu0
        %v6161 = vpop.f32.mrb[0].mxu0
        %v6162 = vadd.f32 %v6010, %v6161
        %v6163 = vpop.f32.mrb[0].mxu0
        %6164 = vmatprep.mubr.bf16.mxu0 0
        %6165 = vmatmul.mubr.bf16.gmra.mrb[0].mxu0 %v5969
        %v6166 = vpop.f32.mrb[0].mxu0
        %v6167 = vadd.f32 %v6010, %v6166
        %v6168 = vpop.f32.mrb[0].mxu0
        %v6169 = vpop.f32.mrb[0].mxu0
        %v6170 = vadd.f32 %v6010, %v6169
        %v6171 = vpop.f32.mrb[0].mxu0
        %6172 = vmatprep.mubr.bf16.mxu0 0
        %6173 = vmatmul.mubr.bf16.gmra.mrb[0].mxu0 %v5972
        %v6174 = vpop.f32.mrb[0].mxu0
        %v6175 = vadd.f32 %v6010, %v6174
        %v6176 = vpop.f32.mrb[0].mxu0
        %v6177 = vpop.f32.mrb[0].mxu0
        %v6178 = vadd.f32 %v6010, %v6177
        %v6179 = vpop.f32.mrb[0].mxu0
        %6180 = vmatprep.mubr.bf16.mxu0 0
        %6181 = vmatmul.mubr.bf16.gmra.mrb[0].mxu0 %v5975
        %v6182 = vpop.f32.mrb[0].mxu0
        %v6183 = vadd.f32 %v6010, %v6182
        %v6184 = vpop.f32.mrb[0].mxu0
        %v6185 = vpop.f32.mrb[0].mxu0
        %v6186 = vadd.f32 %v6010, %v6185
        %v6187 = vpop.f32.mrb[0].mxu0
        %6188 = vmatprep.mubr.bf16.mxu0 0
        %6189 = vmatmul.mubr.bf16.gmra.mrb[0].mxu0 %v5978
        %v6190 = vpop.f32.mrb[0].mxu0
        %v6191 = vadd.f32 %v6010, %v6190
        %v6192 = vpop.f32.mrb[0].mxu0
        %v6193 = vpop.f32.mrb[0].mxu0
        %v6194 = vadd.f32 %v6010, %v6193
        %v6195 = vpop.f32.mrb[0].mxu0
        %6196 = vmatprep.mubr.bf16.mxu0 0
        %6197 = vmatmul.mubr.bf16.gmra.mrb[0].mxu0 %v5981
        %v6198 = vpop.f32.mrb[0].mxu0
        %v6199 = vadd.f32 %v6010, %v6198
        %v6200 = vpop.f32.mrb[0].mxu0
        %v6201 = vpop.f32.mrb[0].mxu0
        %v6202 = vadd.f32 %v6010, %v6201
        %v6203 = vpop.f32.mrb[0].mxu0
        %6204 = vmatprep.mubr.bf16.mxu0 0
        %6205 = vmatmul.mubr.bf16.gmra.mrb[0].mxu0 %v5984
        %v6206 = vpop.f32.mrb[0].mxu0
        %v6207 = vadd.f32 %v6010, %v6206
        %v6208 = vpop.f32.mrb[0].mxu0
        %v6209 = vpop.f32.mrb[0].mxu0
        %v6210 = vadd.f32 %v6010, %v6209
        %v6211 = vpop.f32.mrb[0].mxu0
        %6212 = vmatprep.mubr.bf16.mxu0 0
        %6213 = vmatmul.mubr.bf16.gmra.mrb[0].mxu0 %v5987
        %v6214 = vpop.f32.mrb[0].mxu0
        %v6215 = vadd.f32 %v6010, %v6214
        %v6216 = vpop.f32.mrb[0].mxu0
        %v6217 = vpop.f32.mrb[0].mxu0
        %v6218 = vadd.f32 %v6010, %v6217
        %v6219 = vpop.f32.mrb[0].mxu0
        %6220 = vdwg.mxu0
        %v6221 = vxor.u32 %v6095, 2147483648
        %v6222 = vxor.u32 %v6098, 2147483648
        %v6223 = vxor.u32 %v6103, 2147483648
        %v6224 = vxor.u32 %v6106, 2147483648
        %v6225 = vxor.u32 %v6111, 2147483648
        %v6226 = vxor.u32 %v6114, 2147483648
        %v6227 = vxor.u32 %v6119, 2147483648
        %v6228 = vxor.u32 %v6122, 2147483648
        %v6229 = vxor.u32 %v6127, 2147483648
        %v6230 = vxor.u32 %v6130, 2147483648
        %v6231 = vxor.u32 %v6135, 2147483648
        %v6232 = vxor.u32 %v6138, 2147483648
        %v6233 = vxor.u32 %v6143, 2147483648
        %v6234 = vxor.u32 %v6146, 2147483648
        %v6235 = vxor.u32 %v6151, 2147483648
        %v6236 = vxor.u32 %v6154, 2147483648
        %v6237 = vxor.u32 %v6159, 2147483648
        %v6238 = vxor.u32 %v6162, 2147483648
        %v6239 = vxor.u32 %v6167, 2147483648
        %v6240 = vxor.u32 %v6170, 2147483648
        %v6241 = vxor.u32 %v6175, 2147483648
        %v6242 = vxor.u32 %v6178, 2147483648
        %v6243 = vxor.u32 %v6183, 2147483648
        %v6244 = vxor.u32 %v6186, 2147483648
        %v6245 = vxor.u32 %v6191, 2147483648
        %v6246 = vxor.u32 %v6194, 2147483648
        %v6247 = vxor.u32 %v6199, 2147483648
        %v6248 = vxor.u32 %v6202, 2147483648
        %v6249 = vxor.u32 %v6207, 2147483648
        %v6250 = vxor.u32 %v6210, 2147483648
        %v6251 = vxor.u32 %v6215, 2147483648
        %v6252 = vxor.u32 %v6218, 2147483648
        %v6253 = vmul.f32 %v6221, 1.442695
        %v6254 = vpow.pop %v6253
        %v6255 = vmul.f32 %v6222, 1.442695
        %v6256 = vpow.pop %v6255
        %v6257 = vmul.f32 %v6223, 1.442695
        %v6258 = vpow.pop %v6257
        %v6259 = vmul.f32 %v6224, 1.442695
        %v6260 = vpow.pop %v6259
        %v6261 = vmul.f32 %v6225, 1.442695
        %v6262 = vpow.pop %v6261
        %v6263 = vmul.f32 %v6226, 1.442695
        %v6264 = vpow.pop %v6263
        %v6265 = vmul.f32 %v6227, 1.442695
        %v6266 = vpow.pop %v6265
        %v6267 = vmul.f32 %v6228, 1.442695
        %v6268 = vpow.pop %v6267
        %v6269 = vmul.f32 %v6229, 1.442695
        %v6270 = vpow.pop %v6269
        %v6271 = vmul.f32 %v6230, 1.442695
        %v6272 = vpow.pop %v6271
        %v6273 = vmul.f32 %v6231, 1.442695
        %v6274 = vpow.pop %v6273
        %v6275 = vmul.f32 %v6232, 1.442695
        %v6276 = vpow.pop %v6275
        %v6277 = vmul.f32 %v6233, 1.442695
        %v6278 = vpow.pop %v6277
        %v6279 = vmul.f32 %v6234, 1.442695
        %v6280 = vpow.pop %v6279
        %v6281 = vmul.f32 %v6235, 1.442695
        %v6282 = vpow.pop %v6281
        %v6283 = vmul.f32 %v6236, 1.442695
        %v6284 = vpow.pop %v6283
        %v6285 = vmul.f32 %v6237, 1.442695
        %v6286 = vpow.pop %v6285
        %v6287 = vmul.f32 %v6238, 1.442695
        %v6288 = vpow.pop %v6287
        %v6289 = vmul.f32 %v6239, 1.442695
        %v6290 = vpow.pop %v6289
        %v6291 = vmul.f32 %v6240, 1.442695
        %v6292 = vpow.pop %v6291
        %v6293 = vmul.f32 %v6241, 1.442695
        %v6294 = vpow.pop %v6293
        %v6295 = vmul.f32 %v6242, 1.442695
        %v6296 = vpow.pop %v6295
        %v6297 = vmul.f32 %v6243, 1.442695
        %v6298 = vpow.pop %v6297
        %v6299 = vmul.f32 %v6244, 1.442695
        %v6300 = vpow.pop %v6299
        %v6301 = vmul.f32 %v6245, 1.442695
        %v6302 = vpow.pop %v6301
        %v6303 = vmul.f32 %v6246, 1.442695
        %v6304 = vpow.pop %v6303
        %v6305 = vmul.f32 %v6247, 1.442695
        %v6306 = vpow.pop %v6305
        %v6307 = vmul.f32 %v6248, 1.442695
        %v6308 = vpow.pop %v6307
        %v6309 = vmul.f32 %v6249, 1.442695
        %v6310 = vpow.pop %v6309
        %v6311 = vmul.f32 %v6250, 1.442695
        %v6312 = vpow.pop %v6311
        %v6313 = vmul.f32 %v6251, 1.442695
        %v6314 = vpow.pop %v6313
        %v6315 = vmul.f32 %v6252, 1.442695
        %v6316 = vpow.pop %v6315
        %v6317 = vadd.f32 %v6254, 1.0
        %v6318 = vadd.f32 %v6256, 1.0
        %v6319 = vadd.f32 %v6258, 1.0
        %v6320 = vadd.f32 %v6260, 1.0
        %v6321 = vadd.f32 %v6262, 1.0
        %v6322 = vadd.f32 %v6264, 1.0
        %v6323 = vadd.f32 %v6266, 1.0
        %v6324 = vadd.f32 %v6268, 1.0
        %v6325 = vadd.f32 %v6270, 1.0
        %v6326 = vadd.f32 %v6272, 1.0
        %v6327 = vadd.f32 %v6274, 1.0
        %v6328 = vadd.f32 %v6276, 1.0
        %v6329 = vadd.f32 %v6278, 1.0
        %v6330 = vadd.f32 %v6280, 1.0
        %v6331 = vadd.f32 %v6282, 1.0
        %v6332 = vadd.f32 %v6284, 1.0
        %v6333 = vadd.f32 %v6286, 1.0
        %v6334 = vadd.f32 %v6288, 1.0
        %v6335 = vadd.f32 %v6290, 1.0
        %v6336 = vadd.f32 %v6292, 1.0
        %v6337 = vadd.f32 %v6294, 1.0
        %v6338 = vadd.f32 %v6296, 1.0
        %v6339 = vadd.f32 %v6298, 1.0
        %v6340 = vadd.f32 %v6300, 1.0
        %v6341 = vadd.f32 %v6302, 1.0
        %v6342 = vadd.f32 %v6304, 1.0
        %v6343 = vadd.f32 %v6306, 1.0
        %v6344 = vadd.f32 %v6308, 1.0
        %v6345 = vadd.f32 %v6310, 1.0
        %v6346 = vadd.f32 %v6312, 1.0
        %v6347 = vadd.f32 %v6314, 1.0
        %v6348 = vadd.f32 %v6316, 1.0
        %v6349 = vrcp.pop %v6317
        %v6350 = vmul.f32 1.0, %v6349
        %v6351 = vrcp.pop %v6318
        %v6352 = vmul.f32 1.0, %v6351
        %v6353 = vrcp.pop %v6319
        %v6354 = vmul.f32 1.0, %v6353
        %v6355 = vrcp.pop %v6320
        %v6356 = vmul.f32 1.0, %v6355
        %v6357 = vrcp.pop %v6321
        %v6358 = vmul.f32 1.0, %v6357
        %v6359 = vrcp.pop %v6322
        %v6360 = vmul.f32 1.0, %v6359
        %v6361 = vrcp.pop %v6323
        %v6362 = vmul.f32 1.0, %v6361
        %v6363 = vrcp.pop %v6324
        %v6364 = vmul.f32 1.0, %v6363
        %v6365 = vrcp.pop %v6325
        %v6366 = vmul.f32 1.0, %v6365
        %v6367 = vrcp.pop %v6326
        %v6368 = vmul.f32 1.0, %v6367
        %v6369 = vrcp.pop %v6327
        %v6370 = vmul.f32 1.0, %v6369
        %v6371 = vrcp.pop %v6328
        %v6372 = vmul.f32 1.0, %v6371
        %v6373 = vrcp.pop %v6329
        %v6374 = vmul.f32 1.0, %v6373
        %v6375 = vrcp.pop %v6330
        %v6376 = vmul.f32 1.0, %v6375
        %v6377 = vrcp.pop %v6331
        %v6378 = vmul.f32 1.0, %v6377
        %v6379 = vrcp.pop %v6332
        %v6380 = vmul.f32 1.0, %v6379
        %v6381 = vrcp.pop %v6333
        %v6382 = vmul.f32 1.0, %v6381
        %v6383 = vrcp.pop %v6334
        %v6384 = vmul.f32 1.0, %v6383
        %v6385 = vrcp.pop %v6335
        %v6386 = vmul.f32 1.0, %v6385
        %v6387 = vrcp.pop %v6336
        %v6388 = vmul.f32 1.0, %v6387
        %v6389 = vrcp.pop %v6337
        %v6390 = vmul.f32 1.0, %v6389
        %v6391 = vrcp.pop %v6338
        %v6392 = vmul.f32 1.0, %v6391
        %v6393 = vrcp.pop %v6339
        %v6394 = vmul.f32 1.0, %v6393
        %v6395 = vrcp.pop %v6340
        %v6396 = vmul.f32 1.0, %v6395
        %v6397 = vrcp.pop %v6341
        %v6398 = vmul.f32 1.0, %v6397
        %v6399 = vrcp.pop %v6342
        %v6400 = vmul.f32 1.0, %v6399
        %v6401 = vrcp.pop %v6343
        %v6402 = vmul.f32 1.0, %v6401
        %v6403 = vrcp.pop %v6344
        %v6404 = vmul.f32 1.0, %v6403
        %v6405 = vrcp.pop %v6345
        %v6406 = vmul.f32 1.0, %v6405
        %v6407 = vrcp.pop %v6346
        %v6408 = vmul.f32 1.0, %v6407
        %v6409 = vrcp.pop %v6347
        %v6410 = vmul.f32 1.0, %v6409
        %v6411 = vrcp.pop %v6348
        %v6412 = vmul.f32 1.0, %v6411
        %v6413 = vmul.f32 %v6095, %v6350
        %v6414 = vmul.f32 %v6098, %v6352
        %v6415 = vmul.f32 %v6103, %v6354
        %v6416 = vmul.f32 %v6106, %v6356
        %v6417 = vmul.f32 %v6111, %v6358
        %v6418 = vmul.f32 %v6114, %v6360
        %v6419 = vmul.f32 %v6119, %v6362
        %v6420 = vmul.f32 %v6122, %v6364
        %v6421 = vmul.f32 %v6127, %v6366
        %v6422 = vmul.f32 %v6130, %v6368
        %v6423 = vmul.f32 %v6135, %v6370
        %v6424 = vmul.f32 %v6138, %v6372
        %v6425 = vmul.f32 %v6143, %v6374
        %v6426 = vmul.f32 %v6146, %v6376
        %v6427 = vmul.f32 %v6151, %v6378
        %v6428 = vmul.f32 %v6154, %v6380
        %v6429 = vmul.f32 %v6159, %v6382
        %v6430 = vmul.f32 %v6162, %v6384
        %v6431 = vmul.f32 %v6167, %v6386
        %v6432 = vmul.f32 %v6170, %v6388
        %v6433 = vmul.f32 %v6175, %v6390
        %v6434 = vmul.f32 %v6178, %v6392
        %v6435 = vmul.f32 %v6183, %v6394
        %v6436 = vmul.f32 %v6186, %v6396
        %v6437 = vmul.f32 %v6191, %v6398
        %v6438 = vmul.f32 %v6194, %v6400
        %v6439 = vmul.f32 %v6199, %v6402
        %v6440 = vmul.f32 %v6202, %v6404
        %v6441 = vmul.f32 %v6207, %v6406
        %v6442 = vmul.f32 %v6210, %v6408
        %v6443 = vmul.f32 %v6215, %v6410
        %v6444 = vmul.f32 %v6218, %v6412
        %v6445 = vpack.c.bf16 %v6414, %v6413
        %v6446 = vpack.c.bf16 %v6416, %v6415
        %v6447 = vpack.c.bf16 %v6418, %v6417
        %v6448 = vpack.c.bf16 %v6420, %v6419
        %v6449 = vpack.c.bf16 %v6422, %v6421
        %v6450 = vpack.c.bf16 %v6424, %v6423
        %v6451 = vpack.c.bf16 %v6426, %v6425
        %v6452 = vpack.c.bf16 %v6428, %v6427
        %v6453 = vpack.c.bf16 %v6430, %v6429
        %v6454 = vpack.c.bf16 %v6432, %v6431
        %v6455 = vpack.c.bf16 %v6434, %v6433
        %v6456 = vpack.c.bf16 %v6436, %v6435
        %v6457 = vpack.c.bf16 %v6438, %v6437
        %v6458 = vpack.c.bf16 %v6440, %v6439
        %v6459 = vpack.c.bf16 %v6442, %v6441
        %v6460 = vpack.c.bf16 %v6444, %v6443
        %v6477 = vunpack.c.l.b16 %v6445
        %v6478 = vunpack.c.h.b16 %v6445
        %v6479 = vunpack.c.l.b16 %v6446
        %v6480 = vunpack.c.h.b16 %v6446
        %v6481 = vunpack.c.l.b16 %v6447
        %v6482 = vunpack.c.h.b16 %v6447
        %v6483 = vunpack.c.l.b16 %v6448
        %v6484 = vunpack.c.h.b16 %v6448
        %v6485 = vunpack.c.l.b16 %v6449
        %v6486 = vunpack.c.h.b16 %v6449
        %v6487 = vunpack.c.l.b16 %v6450
        %v6488 = vunpack.c.h.b16 %v6450
        %v6489 = vunpack.c.l.b16 %v6451
        %v6490 = vunpack.c.h.b16 %v6451
        %v6491 = vunpack.c.l.b16 %v6452
        %v6492 = vunpack.c.h.b16 %v6452
        %v6493 = vunpack.c.l.b16 %v6453
        %v6494 = vunpack.c.h.b16 %v6453
        %v6495 = vunpack.c.l.b16 %v6454
        %v6496 = vunpack.c.h.b16 %v6454
        %v6497 = vunpack.c.l.b16 %v6455
        %v6498 = vunpack.c.h.b16 %v6455
        %v6499 = vunpack.c.l.b16 %v6456
        %v6500 = vunpack.c.h.b16 %v6456
        %v6501 = vunpack.c.l.b16 %v6457
        %v6502 = vunpack.c.h.b16 %v6457
        %v6503 = vunpack.c.l.b16 %v6458
        %v6504 = vunpack.c.h.b16 %v6458
        %v6505 = vunpack.c.l.b16 %v6459
        %v6506 = vunpack.c.h.b16 %v6459
        %v6507 = vunpack.c.l.b16 %v6460
        %v6508 = vunpack.c.h.b16 %v6460
        %v6509 = vpack.c.b16 %v6477, %v6477
        %v6510 = vpack.c.b16 %v6478, %v6478
        %v6511 = vpack.c.b16 %v6479, %v6479
        %v6512 = vpack.c.b16 %v6480, %v6480
        %v6513 = vpack.c.b16 %v6481, %v6481
        %v6514 = vpack.c.b16 %v6482, %v6482
        %v6515 = vpack.c.b16 %v6483, %v6483
        %v6516 = vpack.c.b16 %v6484, %v6484
        %v6517 = vpack.c.b16 %v6485, %v6485
        %v6518 = vpack.c.b16 %v6486, %v6486
        %v6519 = vpack.c.b16 %v6487, %v6487
        %v6520 = vpack.c.b16 %v6488, %v6488
        %v6521 = vpack.c.b16 %v6489, %v6489
        %v6522 = vpack.c.b16 %v6490, %v6490
        %v6523 = vpack.c.b16 %v6491, %v6491
        %v6524 = vpack.c.b16 %v6492, %v6492
        %v6525 = vpack.c.b16 %v6493, %v6493
        %v6526 = vpack.c.b16 %v6494, %v6494
        %v6527 = vpack.c.b16 %v6495, %v6495
        %v6528 = vpack.c.b16 %v6496, %v6496
        %v6529 = vpack.c.b16 %v6497, %v6497
        %v6530 = vpack.c.b16 %v6498, %v6498
        %v6531 = vpack.c.b16 %v6499, %v6499
        %v6532 = vpack.c.b16 %v6500, %v6500
        %v6533 = vpack.c.b16 %v6501, %v6501
        %v6534 = vpack.c.b16 %v6502, %v6502
        %v6535 = vpack.c.b16 %v6503, %v6503
        %v6536 = vpack.c.b16 %v6504, %v6504
        %v6537 = vpack.c.b16 %v6505, %v6505
        %v6538 = vpack.c.b16 %v6506, %v6506
        %v6539 = vpack.c.b16 %v6507, %v6507
        %v6540 = vpack.c.b16 %v6508, %v6508
        %6573 = vst [vmem:[%s298] sm:$0xf] %v6509
        %6574 = vst [vmem:[%s298 + $0x4] sm:$0xf] %v6510
        %6575 = vst [vmem:[%s298 + $0x8] sm:$0xf] %v6511
        %6576 = vst [vmem:[%s298 + $0xc] sm:$0xf] %v6512
        %6577 = vst [vmem:[%s298 + $0x10] sm:$0xf] %v6513
        %6578 = vst [vmem:[%s298 + $0x14] sm:$0xf] %v6514
        %6579 = vst [vmem:[%s298 + $0x18] sm:$0xf] %v6515
        %6580 = vst [vmem:[%s298 + $0x1c] sm:$0xf] %v6516
        %6581 = vst [vmem:[%s298 + $0x20] sm:$0xf] %v6517
        %6582 = vst [vmem:[%s298 + $0x24] sm:$0xf] %v6518
        %6583 = vst [vmem:[%s298 + $0x28] sm:$0xf] %v6519
        %6584 = vst [vmem:[%s298 + $0x2c] sm:$0xf] %v6520
        %6585 = vst [vmem:[%s298 + $0x30] sm:$0xf] %v6521
        %6586 = vst [vmem:[%s298 + $0x34] sm:$0xf] %v6522
        %6587 = vst [vmem:[%s298 + $0x38] sm:$0xf] %v6523
        %6588 = vst [vmem:[%s298 + $0x3c] sm:$0xf] %v6524
        %6589 = vst [vmem:[%s298 + $0x40] sm:$0xf] %v6525
        %6590 = vst [vmem:[%s298 + $0x44] sm:$0xf] %v6526
        %6591 = vst [vmem:[%s298 + $0x48] sm:$0xf] %v6527
        %6592 = vst [vmem:[%s298 + $0x4c] sm:$0xf] %v6528
        %6593 = vst [vmem:[%s298 + $0x50] sm:$0xf] %v6529
        %6594 = vst [vmem:[%s298 + $0x54] sm:$0xf] %v6530
        %6595 = vst [vmem:[%s298 + $0x58] sm:$0xf] %v6531
        %6596 = vst [vmem:[%s298 + $0x5c] sm:$0xf] %v6532
        %6597 = vst [vmem:[%s298 + $0x60] sm:$0xf] %v6533
        %6598 = vst [vmem:[%s298 + $0x64] sm:$0xf] %v6534
        %6599 = vst [vmem:[%s298 + $0x68] sm:$0xf] %v6535
        %6600 = vst [vmem:[%s298 + $0x6c] sm:$0xf] %v6536
        %6601 = vst [vmem:[%s298 + $0x70] sm:$0xf] %v6537
        %6602 = vst [vmem:[%s298 + $0x74] sm:$0xf] %v6538
        %6603 = vst [vmem:[%s298 + $0x78] sm:$0xf] %v6539
        %6604 = vst [vmem:[%s298 + $0x7c] sm:$0xf] %v6540
        %s6605 = sand.u32 %s203, 1
        %s6606 = scalar_lea.sflag [#allocation4], %s6605
        %s6607 = sand.u32 %s203, 1
        %s6608 = smul.addr %s6607, 128
        %s6609 = scalar_lea.vmem [#allocation3], %s6608
        // Predicated region
        $region53: #{tpu_custom_call.1} parent=51 // pred_check
          %p6610 = pneg %p213
        $region54: #{tpu_custom_call.1} parent=51 // pred_check_branch
          %6612 = sbr.rel (%p6610) target = $region56
        $region55: #{tpu_custom_call.1} parent=51 // pred_region
          %s6614 = ssub.s32 2048, 2048
          %6615 = vsyncadd %s6606, %s6614
          %s6616 = smul.addr %s22, 32
          %s6617 = smul.addr %s6616, 64
          %s6618 = scalar_lea.hbm %s8, %s6617
          %s6619 = sshll.u32 %s6609, 4
          %s6620 = int_to_ptr.vmem [resolvable:$true] %s6619
          %6625 = dma.vmem_to_hbm [thread:$0]  %s6620, 2048, %s6618, %s6606, 64, 64, 4
        $region56: #{tpu_custom_call.1} parent=51 // pred_fallthru
          _
      $region52: #{tpu_custom_call.1} parent=5 // pred_fallthru
        _
      %p6626 = scmp.le.s32.totalorder 2, %s17
      // Predicated region
      $region57: #{tpu_custom_call.1} parent=5 // pred_check
        %p6627 = pneg %p6626
      $region58: #{tpu_custom_call.1} parent=5 // pred_check_branch
        %6629 = sbr.rel (%p6627) target = $region60
      $region59: #{tpu_custom_call.1} parent=5 // pred_region
        %s6630 = ssub.s32 %s17, 2
        // Predicated region
        $region61: #{tpu_custom_call.1} parent=59 // pred_check
          %p6631 = pneg %p219
        $region62: #{tpu_custom_call.1} parent=59 // pred_check_branch
          %6633 = sbr.rel (%p6631) target = $region64
        $region63: #{tpu_custom_call.1} parent=59 // pred_region
          %s6634 = sand.u32 %s204, 1
          %s6635 = scalar_lea.sflag [#allocation4], %s6634
          %s6636 = sand.u32 %s204, 1
          %s6637 = smul.addr %s6636, 128
          %s6638 = scalar_lea.vmem [#allocation3], %s6637
          %6639 = dma.done %s6635, 2048
        $region64: #{tpu_custom_call.1} parent=59 // pred_fallthru
          _
      $region60: #{tpu_custom_call.1} parent=5 // pred_fallthru
        _
    $region6: #{tpu_custom_call.1} parent=1 // loop_footer
      %s21 = sadd.s32 1, %s17
    $region7: #{tpu_custom_call.1} parent=1 // loop_footer_branch
      %16 = sbr.rel target = $region3
    $region8: #{tpu_custom_call.1} parent=1 // loop_exit
      _
    %6640 = vsyncpa [#allocation4], 1
    %s6641 = scalar_lea.sflag [#allocation4], 1
    %6642 = vsyncpa %s6641, 1

</llo_original>
